<compile_context>
chip_gen: v7x
topology: tpu7x:2x2x1
jax: 0.10.0
libtpu: 0.0.40
codegen_flags: <defaults>
</compile_context>

<pallas_src>
import functools
import math

import jax
import jax.numpy as jnp
from jax import lax
from jax.experimental import pallas as pl
from jax.experimental.pallas import tpu as pltpu


_NEG_INF = -1e30  # finite mask fill; diagonal is always unmasked -> exp()==0 for masked


def _mha_fused_kernel(x_ref, wqkv_ref, wproj_ref, b_ref, o_ref, *,
                      n_heads, head_size):
    """One grid step = one block of batch elements, all heads fused.

    x_ref:     (b_blk, T, C)
    wqkv_ref:  (C, 3C) bf16 = [Wq*scale | Wk | Wv], head-concatenated columns
    wproj_ref: (C, C)  bf16
    b_ref:     (1, C)  f32
    o_ref:     (b_blk, T, C)
    """
    b_blk, T, C = x_ref.shape
    rows = b_blk * T

    # ---- One wide QKV matmul on the MXU: (b_blk*T, C) @ (C, 3C).
    # bf16 operands, f32 accumulation. 1/sqrt(C) is pre-folded into Wq.
    x = x_ref[...].reshape(rows, C).astype(jnp.bfloat16)
    qkv = jnp.dot(x, wqkv_ref[...], preferred_element_type=jnp.float32)

    def split_heads(m):
        # (rows, C) -> (b_blk*H, T, hs); bf16 for the batched MXU dots.
        m = m.reshape(b_blk, T, n_heads, head_size)
        m = m.transpose(0, 2, 1, 3)                     # (b_blk, H, T, hs)
        return m.reshape(b_blk * n_heads, T, head_size).astype(jnp.bfloat16)

    q = split_heads(qkv[:, :C])          # slices are 128-lane aligned (C=384)
    k = split_heads(qkv[:, C:2 * C])
    v = split_heads(qkv[:, 2 * C:])

    # ---- Head-batched causal attention: scores for all (batch, head) pairs
    # in one batched matmul; softmax math in f32.
    s = jnp.einsum('bqd,bkd->bqk', q, k,
                   preferred_element_type=jnp.float32)   # (b_blk*H, T, T)
    row = lax.broadcasted_iota(jnp.int32, (T, T), 0)
    col = lax.broadcasted_iota(jnp.int32, (T, T), 1)
    s = jnp.where((col <= row)[None], s, _NEG_INF)

    # Numerically-stable softmax; EUP approx reciprocal + one Newton step.
    s = s - jnp.max(s, axis=-1, keepdims=True)
    p = jnp.exp(s)
    denom = jnp.sum(p, axis=-1, keepdims=True)           # >= 1 (diag term)
    r = pl.reciprocal(denom, approx=True)
    r = r * (2.0 - denom * r)                             # Newton refinement
    p = p * r
    # TODO(synk): training-mode dropout on p (pltpu.prng_random_bits mask).

    o = jnp.einsum('bqk,bkd->bqd', p.astype(jnp.bfloat16), v,
                   preferred_element_type=jnp.float32)    # (b_blk*H, T, hs)

    # ---- Head concat (layout only) + fused output projection + bias.
    concat = o.reshape(b_blk, n_heads, T, head_size).transpose(0, 2, 1, 3)
    concat = concat.reshape(rows, C).astype(jnp.bfloat16)
    y = jnp.dot(concat, wproj_ref[...], preferred_element_type=jnp.float32)
    y = y + b_ref[...]
    # TODO(synk): training-mode dropout on y (eval-mode identity here).
    o_ref[...] = y.reshape(b_blk, T, C).astype(o_ref.dtype)


def pack_mha_weights(wq, wk, wv, w_proj):
    """Pre-pack (once, at init) per-head weights into MXU-friendly bf16 slabs.

    wq/wk/wv: (H, C, hs) in the "x @ W" convention; w_proj: (C, C).
    Returns (w_qkv (C, 3C) bf16 with the 1/sqrt(C) scale folded into the Wq
    columns, w_proj bf16).
    """
    H, C, hs = wq.shape
    scale = C ** (-0.5)          # reference scales by full embedding dim C

    def stack(w):                # (H, C, hs) -> (C, H*hs); cols of head h contiguous
        return jnp.transpose(w, (1, 0, 2)).reshape(C, H * hs)

    w_qkv = jnp.concatenate([stack(wq) * scale, stack(wk), stack(wv)], axis=-1)
    return w_qkv.astype(jnp.bfloat16), w_proj.astype(jnp.bfloat16)


def _pick_batch_block(B, T, target_rows=256):
    """Largest divisor of B whose block holds <= target_rows query rows,
    backed off so the grid keeps >= 2 parallel steps when B > 1 (v7x 2 TCs)."""
    divisors = [d for d in range(1, B + 1) if B % d == 0]
    fitting = [d for d in divisors if d * T <= target_rows] or [1]
    b_blk = max(fitting)
    if B > 1 and B // b_blk < 2:
        b_blk = max(d for d in fitting if B // d >= 2)
    return b_blk


def multi_head_attention(x, w_qkv, w_proj, b_proj, *, n_heads, head_size):
    """x: (B, T, C); w_qkv: (C, 3C) bf16 (packed); w_proj: (C, C) bf16;
    b_proj: (1, C) f32."""
    B, T, C = x.shape
    assert n_heads * head_size == C
    assert w_qkv.shape == (C, 3 * C)

    b_blk = _pick_batch_block(B, T)
    grid = (B // b_blk,)

    kernel = functools.partial(
        _mha_fused_kernel, n_heads=n_heads, head_size=head_size)

    return pl.pallas_call(
        kernel,
        out_shape=jax.ShapeDtypeStruct((B, T, C), x.dtype),
        grid_spec=pltpu.PrefetchScalarGridSpec(
            num_scalar_prefetch=0,
            grid=grid,
            in_specs=[
                pl.BlockSpec((b_blk, T, C), lambda b: (b, 0, 0)),   # x
                pl.BlockSpec((C, 3 * C), lambda b: (0, 0)),         # W_qkv (resident)
                pl.BlockSpec((C, C), lambda b: (0, 0)),             # W_proj (resident)
                pl.BlockSpec((1, C), lambda b: (0, 0)),             # b_proj
            ],
            out_specs=pl.BlockSpec((b_blk, T, C), lambda b: (b, 0, 0)),
        ),
        compiler_params=pltpu.CompilerParams(
            dimension_semantics=("parallel",)),   # batch blocks split across TCs
    )(x, w_qkv, w_proj, b_proj)


if __name__ == "__main__":
    # Module hyperparameters: n_heads = 6, head_size = 64, n_embed = 384.
    # Small batch / sequence for the test (C = 384 = 3*128 is lane-dense).
    B, T = 4, 16
    n_heads = 6
    head_size = 64
    n_embed = n_heads * head_size   # 384

    key = jax.random.PRNGKey(0)
    kx, kq, kk, kv, kw, kb = jax.random.split(key, 6)

    bound = 1.0 / math.sqrt(n_embed)
    x = jax.random.normal(kx, (B, T, n_embed), dtype=jnp.float32)
    wq = jax.random.uniform(kq, (n_heads, n_embed, head_size),
                            minval=-bound, maxval=bound, dtype=jnp.float32)
    wk = jax.random.uniform(kk, (n_heads, n_embed, head_size),
                            minval=-bound, maxval=bound, dtype=jnp.float32)
    wv = jax.random.uniform(kv, (n_heads, n_embed, head_size),
                            minval=-bound, maxval=bound, dtype=jnp.float32)
    w_proj = jax.random.uniform(kw, (n_embed, n_embed),
                                minval=-bound, maxval=bound, dtype=jnp.float32)
    b_proj = jax.random.uniform(kb, (1, n_embed),
                                minval=-bound, maxval=bound, dtype=jnp.float32)

    # Pack once at "init" time (hoisted out of the per-forward path).
    w_qkv, w_proj_bf16 = pack_mha_weights(wq, wk, wv, w_proj)

    out = multi_head_attention(x, w_qkv, w_proj_bf16, b_proj,
                               n_heads=n_heads, head_size=head_size)
    out = jax.block_until_ready(out)

    # Pure-JAX f32 reference (eval-mode dropout = identity).
    def ref(x, wq, wk, wv, w_proj, b_proj):
        B, T, C = x.shape
        q = jnp.einsum("btc,hcs->bhts", x, wq)
        k = jnp.einsum("btc,hcs->bhts", x, wk)
        v = jnp.einsum("btc,hcs->bhts", x, wv)
        wei = jnp.einsum("bhts,bhus->bhtu", q, k) * (C ** -0.5)
        mask = jnp.tril(jnp.ones((T, T), bool))
        wei = jnp.where(mask, wei, -jnp.inf)
        wei = jax.nn.softmax(wei, axis=-1)
        o = jnp.einsum("bhtu,bhus->bhts", wei, v)
        o = jnp.transpose(o, (0, 2, 1, 3)).reshape(B, T, C)
        return o @ w_proj + b_proj

    expected = ref(x, wq, wk, wv, w_proj, b_proj)
    assert out.shape == (B, T, n_embed)
    # Tolerance accounts for bf16 MXU operands (weights + activations rounded
    # to bf16; f32 accumulation). Softmax math itself is full f32 (approx
    # reciprocal + Newton step is ~f32-accurate).
    assert jnp.allclose(out, expected, atol=2e-2, rtol=2e-2), (
        float(jnp.max(jnp.abs(out - expected))))

    print("KERNEL_OK")
</pallas_src>

<mosaic_0001>
module attributes {stable_mosaic.version = 11 : i64} {
  func.func @_mha_fused_kernel(%arg0: i32, %arg1: memref<2x16x384xf32, #tpu.memory_space<vmem>>, %arg2: memref<384x1152xbf16, #tpu.memory_space<vmem>>, %arg3: memref<384x384xbf16, #tpu.memory_space<vmem>>, %arg4: memref<1x384xf32, #tpu.memory_space<vmem>>, %arg5: memref<2x16x384xf32, #tpu.memory_space<vmem>>) attributes {dimension_semantics = [#tpu.dimension_semantics<parallel>], iteration_bounds = array<i64: 2>, scalar_prefetch = 0 : i64, scratch_operands = 0 : i64, tpu.core_type = #tpu.core_type<tc>, window_params = [{transform_indices = @transform_0, window_bounds = array<i64: 2, 16, 384>}, {pipeline_mode = #tpu.pipeline_mode<synchronous>, transform_indices = @transform_1, window_bounds = array<i64: 384, 1152>}, {pipeline_mode = #tpu.pipeline_mode<synchronous>, transform_indices = @transform_2, window_bounds = array<i64: 384, 384>}, {pipeline_mode = #tpu.pipeline_mode<synchronous>, transform_indices = @transform_3, window_bounds = array<i64: 1, 384>}, {transform_indices = @transform_4, window_bounds = array<i64: 2, 16, 384>}]} {
    %c0 = arith.constant 0 : index
    %c0_0 = arith.constant 0 : index
    %c0_1 = arith.constant 0 : index
    %0 = vector.load %arg1[%c0, %c0_0, %c0_1] : memref<2x16x384xf32, #tpu.memory_space<vmem>>, vector<2x16x384xf32>
    %1 = vector.shape_cast %0 : vector<2x16x384xf32> to vector<32x384xf32>
    %2 = arith.truncf %1 : vector<32x384xf32> to vector<32x384xbf16>
    %c0_2 = arith.constant 0 : index
    %c0_3 = arith.constant 0 : index
    %3 = vector.load %arg2[%c0_2, %c0_3] : memref<384x1152xbf16, #tpu.memory_space<vmem>>, vector<384x1152xbf16>
    %cst = arith.constant dense<0.000000e+00> : vector<32x1152xf32>
    %4 = tpu.matmul %2, %3, %cst {dimension_numbers = #tpu.dot_dimension_numbers<[1], [0], [0], [1], [0, 0, 1, 1], [], []>} : vector<32x384xbf16>, vector<384x1152xbf16>, vector<32x1152xf32> -> vector<32x1152xf32>
    %5 = vector.extract_strided_slice %4 {offsets = [0, 0], sizes = [32, 384], strides = [1, 1]} : vector<32x1152xf32> to vector<32x384xf32>
    %6 = vector.shape_cast %5 : vector<32x384xf32> to vector<2x16x6x64xf32>
    %7 = tpu.transpose %6, [0, 2, 1, 3] : vector<2x16x6x64xf32> -> vector<2x6x16x64xf32>
    %8 = vector.shape_cast %7 : vector<2x6x16x64xf32> to vector<12x16x64xf32>
    %9 = arith.truncf %8 : vector<12x16x64xf32> to vector<12x16x64xbf16>
    %10 = vector.extract_strided_slice %4 {offsets = [0, 384], sizes = [32, 384], strides = [1, 1]} : vector<32x1152xf32> to vector<32x384xf32>
    %11 = vector.shape_cast %10 : vector<32x384xf32> to vector<2x16x6x64xf32>
    %12 = tpu.transpose %11, [0, 2, 1, 3] : vector<2x16x6x64xf32> -> vector<2x6x16x64xf32>
    %13 = vector.shape_cast %12 : vector<2x6x16x64xf32> to vector<12x16x64xf32>
    %14 = arith.truncf %13 : vector<12x16x64xf32> to vector<12x16x64xbf16>
    %15 = vector.extract_strided_slice %4 {offsets = [0, 768], sizes = [32, 384], strides = [1, 1]} : vector<32x1152xf32> to vector<32x384xf32>
    %16 = vector.shape_cast %15 : vector<32x384xf32> to vector<2x16x6x64xf32>
    %17 = tpu.transpose %16, [0, 2, 1, 3] : vector<2x16x6x64xf32> -> vector<2x6x16x64xf32>
    %18 = vector.shape_cast %17 : vector<2x6x16x64xf32> to vector<12x16x64xf32>
    %19 = arith.truncf %18 : vector<12x16x64xf32> to vector<12x16x64xbf16>
    "tpu.trace_start"() <{level = 10 : i32, message = "bqd,bkd->bqk"}> : () -> ()
    %cst_4 = arith.constant dense<0.000000e+00> : vector<12x16x16xf32>
    %20 = tpu.matmul %9, %14, %cst_4 {dimension_numbers = #tpu.dot_dimension_numbers<[2], [2], [1], [1], [0, 0, 0, 1, 1, 1], [0], [0]>} : vector<12x16x64xbf16>, vector<12x16x64xbf16>, vector<12x16x16xf32> -> vector<12x16x16xf32>
    "tpu.trace_stop"() : () -> ()
    %21 = tpu.iota {dimensions = array<i32: 0>} : vector<16x16xi32>
    %22 = tpu.iota {dimensions = array<i32: 1>} : vector<16x16xi32>
    %23 = arith.cmpi sle, %22, %21 : vector<16x16xi32>
    %24 = vector.shape_cast %23 : vector<16x16xi1> to vector<1x16x16xi1>
    %cst_5 = arith.constant -1.000000e+30 : f32
    %25 = vector.shape_cast %24 : vector<1x16x16xi1> to vector<1x16x16xi1>
    %26 = vector.broadcast %25 : vector<1x16x16xi1> to vector<12x16x16xi1>
    %27 = vector.broadcast %cst_5 : f32 to vector<12x16x16xf32>
    %28 = arith.select %26, %20, %27 : vector<12x16x16xi1>, vector<12x16x16xf32>
    %cst_6 = arith.constant dense<0xFF800000> : vector<12x16xf32>
    %29 = vector.multi_reduction <maximumf>, %28, %cst_6 [2] : vector<12x16x16xf32> to vector<12x16xf32>
    %30 = vector.shape_cast %29 : vector<12x16xf32> to vector<12x16x1xf32>
    %31 = vector.broadcast %30 : vector<12x16x1xf32> to vector<12x16x16xf32>
    %32 = arith.subf %28, %31 : vector<12x16x16xf32>
    %33 = math.exp %32 : vector<12x16x16xf32>
    %cst_7 = arith.constant dense<0.000000e+00> : vector<12x16xf32>
    %34 = vector.multi_reduction <add>, %33, %cst_7 [2] : vector<12x16x16xf32> to vector<12x16xf32>
    %35 = vector.shape_cast %34 : vector<12x16xf32> to vector<12x16x1xf32>
    %36 = tpu.reciprocal %35 {approx = true} : vector<12x16x1xf32> -> vector<12x16x1xf32>
    %37 = arith.mulf %35, %36 : vector<12x16x1xf32>
    %cst_8 = arith.constant 2.000000e+00 : f32
    %38 = vector.broadcast %cst_8 : f32 to vector<12x16x1xf32>
    %39 = arith.subf %38, %37 : vector<12x16x1xf32>
    %40 = arith.mulf %36, %39 : vector<12x16x1xf32>
    %41 = vector.broadcast %40 : vector<12x16x1xf32> to vector<12x16x16xf32>
    %42 = arith.mulf %33, %41 : vector<12x16x16xf32>
    %43 = arith.truncf %42 : vector<12x16x16xf32> to vector<12x16x16xbf16>
    "tpu.trace_start"() <{level = 10 : i32, message = "bqk,bkd->bqd"}> : () -> ()
    %cst_9 = arith.constant dense<0.000000e+00> : vector<12x16x64xf32>
    %44 = tpu.matmul %43, %19, %cst_9 {dimension_numbers = #tpu.dot_dimension_numbers<[2], [1], [1], [2], [0, 0, 0, 1, 1, 2], [0], [0]>} : vector<12x16x16xbf16>, vector<12x16x64xbf16>, vector<12x16x64xf32> -> vector<12x16x64xf32>
    "tpu.trace_stop"() : () -> ()
    %45 = vector.shape_cast %44 : vector<12x16x64xf32> to vector<2x6x16x64xf32>
    %46 = tpu.transpose %45, [0, 2, 1, 3] : vector<2x6x16x64xf32> -> vector<2x16x6x64xf32>
    %47 = vector.shape_cast %46 : vector<2x16x6x64xf32> to vector<32x384xf32>
    %48 = arith.truncf %47 : vector<32x384xf32> to vector<32x384xbf16>
    %c0_10 = arith.constant 0 : index
    %c0_11 = arith.constant 0 : index
    %49 = vector.load %arg3[%c0_10, %c0_11] : memref<384x384xbf16, #tpu.memory_space<vmem>>, vector<384x384xbf16>
    %cst_12 = arith.constant dense<0.000000e+00> : vector<32x384xf32>
    %50 = tpu.matmul %48, %49, %cst_12 {dimension_numbers = #tpu.dot_dimension_numbers<[1], [0], [0], [1], [0, 0, 1, 1], [], []>} : vector<32x384xbf16>, vector<384x384xbf16>, vector<32x384xf32> -> vector<32x384xf32>
    %c0_13 = arith.constant 0 : index
    %c0_14 = arith.constant 0 : index
    %51 = vector.load %arg4[%c0_13, %c0_14] : memref<1x384xf32, #tpu.memory_space<vmem>>, vector<1x384xf32>
    %52 = vector.broadcast %51 : vector<1x384xf32> to vector<32x384xf32>
    %53 = arith.addf %50, %52 : vector<32x384xf32>
    %54 = vector.shape_cast %53 : vector<32x384xf32> to vector<2x16x384xf32>
    %c0_15 = arith.constant 0 : index
    %c0_16 = arith.constant 0 : index
    %c0_17 = arith.constant 0 : index
    %55 = vector.load %arg5[%c0_15, %c0_16, %c0_17] : memref<2x16x384xf32, #tpu.memory_space<vmem>>, vector<2x16x384xf32>
    tpu.vector_store %arg5[%c0_15, %c0_16, %c0_17], %54 {strides = array<i32>} : memref<2x16x384xf32, #tpu.memory_space<vmem>>, vector<2x16x384xf32>,
    return
  }
  func.func @transform_0(%arg0: i32) -> (i32, i32, i32) {
    %c0_i32 = arith.constant 0 : i32
    %c0_i32_0 = arith.constant 0 : i32
    %c0_i32_1 = arith.constant 0 : i32
    return %arg0, %c0_i32, %c0_i32_0 : i32, i32, i32
  }
  func.func @transform_1(%arg0: i32) -> (i32, i32) {
    %c0_i32 = arith.constant 0 : i32
    %c0_i32_0 = arith.constant 0 : i32
    %c0_i32_1 = arith.constant 0 : i32
    return %c0_i32, %c0_i32_0 : i32, i32
  }
  func.func @transform_2(%arg0: i32) -> (i32, i32) {
    %c0_i32 = arith.constant 0 : i32
    %c0_i32_0 = arith.constant 0 : i32
    %c0_i32_1 = arith.constant 0 : i32
    return %c0_i32, %c0_i32_0 : i32, i32
  }
  func.func @transform_3(%arg0: i32) -> (i32, i32) {
    %c0_i32 = arith.constant 0 : i32
    %c0_i32_0 = arith.constant 0 : i32
    %c0_i32_1 = arith.constant 0 : i32
    return %c0_i32, %c0_i32_0 : i32, i32
  }
  func.func @transform_4(%arg0: i32) -> (i32, i32, i32) {
    %c0_i32 = arith.constant 0 : i32
    %c0_i32_0 = arith.constant 0 : i32
    %c0_i32_1 = arith.constant 0 : i32
    return %arg0, %c0_i32, %c0_i32_0 : i32, i32, i32
  }
}

</mosaic_0001>

<llo_original>
// kernel: tpu_custom_call.1
$region0: #{tpu_custom_call.1}
  #allocation0 [shape = 'u32[]', space=smem, size = 0x4, offset = 0x4, fixed_abs, tag = 'smem constant byte address 0x4 - core index']
  #allocation1 [shape = 'u32[144,128]{1,0:T(1,128)}', space=vmem, size = 0x12000, scoped, tag = 'internal scratch']
  %s0 = inlined_call_operand.hbm [shape: f32[4,16,384], index: 0, kind: input, shape index: {}]
  %s1 = inlined_call_operand.hbm [shape: bf16[384,1152], index: 1, kind: input, shape index: {}]
  %s2 = inlined_call_operand.hbm [shape: bf16[384,384], index: 2, kind: input, shape index: {}]
  %s3 = inlined_call_operand.vmem [shape: f32[1,384], index: 3, kind: input, shape index: {}]
  %s4 = inlined_call_operand.hbm [shape: f32[4,16,384], index: 4, kind: output, shape index: {}]
  %s5 = sld [smem:[#allocation0]]
  $region61: #{tpu_custom_call.1} parent=0
    _
  %s7 = ssub.s32 1, %s5
  %s8 = scalar_select 0, %s7, %s5
  $region1: #{tpu_custom_call.1} parent=0
    #allocation2 [shape = 'u8[98304]{0}', space=vmem, size = 0x18000, scoped, tag = 'input window, operand 0']
    #allocation3 [shape = 's32[2]{0}', space=sflag, size = 0x8, scoped, tag = 'scoped memory for tpu_custom_call.1']
    #allocation4 [shape = 's32[2]{0}', space=sflag, size = 0x8, scoped, tag = 'scoped memory for tpu_custom_call.1']
    #allocation5 [shape = 'u8[884736]{0}', space=vmem, size = 0xd8000, scoped, tag = 'input window, operand 1, single buffered']
    #allocation6 [shape = 's32[1]{0}', space=sflag, size = 0x4, scoped, tag = 'scoped memory for tpu_custom_call.1']
    #allocation7 [shape = 'u8[294912]{0}', space=vmem, size = 0x48000, scoped, tag = 'input window, operand 2, single buffered']
    #allocation8 [shape = 'u8[98304]{0}', space=vmem, size = 0x18000, scoped, tag = 'output window, operand 0']
    %9 = vsyncpa [#allocation3], 0
    %s10 = scalar_lea.sflag [#allocation3], 1
    %11 = vsyncpa %s10, 0
    %12 = vsyncpa [#allocation6], 0
    %13 = vsyncpa [#allocation4], 0
    %s14 = scalar_lea.sflag [#allocation4], 1
    %15 = vsyncpa %s14, 0
    loop: start=0, step=1, limit=4
    $region2: #{tpu_custom_call.1} parent=1 // loop_pre_header
      _
    $region3: #{tpu_custom_call.1} parent=1 // loop_header
      %s17 = sphi 0, %s21
      %p18 = scmp.ge.s32.totalorder %s17, 4
      %s27 = sphi 0, %s29
      %s30 = sphi 0, %s27
      %s31 = sphi 0, %s30
      %s47 = sphi 0, %s31
      %s51 = sphi 0, %s51
      %s53 = sphi 0, %s51
      %s54 = sphi 0, %s53
      %s68 = sphi 0, %s54
      %s72 = sphi 0, %s72
      %s74 = sphi 0, %s72
      %s75 = sphi 0, %s74
      %s89 = sphi 0, %s75
      %s93 = sphi 0, %s93
      %s95 = sphi 0, %s93
      %s96 = sphi 0, %s95
      %s110 = sphi 0, %s96
      %s116 = sphi 0, %s118
      %s119 = sphi 0, %s116
      %s120 = sphi 0, %s119
      %s136 = sphi 0, %s120
    $region4: #{tpu_custom_call.1} parent=1 // loop_header_branch
      %20 = sbr.rel (%p18) target = $region8
    $region5: #{tpu_custom_call.1} parent=1 // loop_body
      %s22 = ssub.s32 %s17, 1
      %s23 = ssub.s32 %s17, 2
      %s24 = sadd.s32 %s17, 1
      %s25 = ssub.s32 %s17, %s24
      %p26 = scmp.eq.s32.totalorder %s25, 0
      %s28 = sadd.s32 %s27, 1
      %s29 = scalar_select %p26, %s27, %s28
      %p32 = pneg %p26
      %p33 = scmp.eq.s32.totalorder %s17, 1
      %p34 = por %p32, %p33
      %p35 = scmp.ne.s32.totalorder %s27, %s30
      %p36 = scmp.eq.s32.totalorder %s17, 0
      %p37 = por %p35, %p36
      %p38 = scmp.ne.s32.totalorder %s27, %s30
      %p39 = scmp.eq.s32.totalorder %s22, 1
      %p40 = por %p38, %p39
      %p41 = scmp.ne.s32.totalorder %s30, %s31
      %p42 = scmp.eq.s32.totalorder %s22, 0
      %p43 = por %p41, %p42
      %p44 = scmp.ne.s32.totalorder %s30, %s31
      %p45 = scmp.eq.s32.totalorder %s23, 1
      %p46 = por %p44, %p45
      %p48 = scmp.ne.s32.totalorder %s31, %s47
      %p49 = scmp.eq.s32.totalorder %s23, 0
      %p50 = por %p48, %p49
      %s52 = sadd.s32 %s51, 1
      %p55 = scmp.eq.s32.totalorder %s17, 1
      %p56 = scmp.ne.s32.totalorder %s51, %s53
      %p57 = scmp.eq.s32.totalorder %s17, 0
      %p58 = por %p56, %p57
      %p59 = scmp.ne.s32.totalorder %s51, %s53
      %p60 = scmp.eq.s32.totalorder %s22, 1
      %p61 = por %p59, %p60
      %p62 = scmp.ne.s32.totalorder %s53, %s54
      %p63 = scmp.eq.s32.totalorder %s22, 0
      %p64 = por %p62, %p63
      %p65 = scmp.ne.s32.totalorder %s53, %s54
      %p66 = scmp.eq.s32.totalorder %s23, 1
      %p67 = por %p65, %p66
      %p69 = scmp.ne.s32.totalorder %s54, %s68
      %p70 = scmp.eq.s32.totalorder %s23, 0
      %p71 = por %p69, %p70
      %s73 = sadd.s32 %s72, 1
      %p76 = scmp.eq.s32.totalorder %s17, 1
      %p77 = scmp.ne.s32.totalorder %s72, %s74
      %p78 = scmp.eq.s32.totalorder %s17, 0
      %p79 = por %p77, %p78
      %p80 = scmp.ne.s32.totalorder %s72, %s74
      %p81 = scmp.eq.s32.totalorder %s22, 1
      %p82 = por %p80, %p81
      %p83 = scmp.ne.s32.totalorder %s74, %s75
      %p84 = scmp.eq.s32.totalorder %s22, 0
      %p85 = por %p83, %p84
      %p86 = scmp.ne.s32.totalorder %s74, %s75
      %p87 = scmp.eq.s32.totalorder %s23, 1
      %p88 = por %p86, %p87
      %p90 = scmp.ne.s32.totalorder %s75, %s89
      %p91 = scmp.eq.s32.totalorder %s23, 0
      %p92 = por %p90, %p91
      %s94 = sadd.s32 %s93, 1
      %p97 = scmp.eq.s32.totalorder %s17, 1
      %p98 = scmp.ne.s32.totalorder %s93, %s95
      %p99 = scmp.eq.s32.totalorder %s17, 0
      %p100 = por %p98, %p99
      %p101 = scmp.ne.s32.totalorder %s93, %s95
      %p102 = scmp.eq.s32.totalorder %s22, 1
      %p103 = por %p101, %p102
      %p104 = scmp.ne.s32.totalorder %s95, %s96
      %p105 = scmp.eq.s32.totalorder %s22, 0
      %p106 = por %p104, %p105
      %p107 = scmp.ne.s32.totalorder %s95, %s96
      %p108 = scmp.eq.s32.totalorder %s23, 1
      %p109 = por %p107, %p108
      %p111 = scmp.ne.s32.totalorder %s96, %s110
      %p112 = scmp.eq.s32.totalorder %s23, 0
      %p113 = por %p111, %p112
      %s114 = ssub.s32 %s17, %s24
      %p115 = scmp.eq.s32.totalorder %s114, 0
      %s117 = sadd.s32 %s116, 1
      %s118 = scalar_select %p115, %s116, %s117
      %p121 = pneg %p115
      %p122 = scmp.eq.s32.totalorder %s17, 1
      %p123 = por %p121, %p122
      %p124 = scmp.ne.s32.totalorder %s116, %s119
      %p125 = scmp.eq.s32.totalorder %s17, 0
      %p126 = por %p124, %p125
      %p127 = scmp.ne.s32.totalorder %s116, %s119
      %p128 = scmp.eq.s32.totalorder %s22, 1
      %p129 = por %p127, %p128
      %p130 = scmp.ne.s32.totalorder %s119, %s120
      %p131 = scmp.eq.s32.totalorder %s22, 0
      %p132 = por %p130, %p131
      %p133 = scmp.ne.s32.totalorder %s119, %s120
      %p134 = scmp.eq.s32.totalorder %s23, 1
      %p135 = por %p133, %p134
      %p137 = scmp.ne.s32.totalorder %s120, %s136
      %p138 = scmp.eq.s32.totalorder %s23, 0
      %p139 = por %p137, %p138
      %p140 = scmp.le.s32.totalorder 1, %s17
      %p141 = scmp.lt.s32.totalorder %s17, 3
      %p142 = pnand %p140, %p141
      %p143 = pneg %p142
      // Predicated region
      $region9: #{tpu_custom_call.1} parent=5 // pred_check
        _
      $region10: #{tpu_custom_call.1} parent=5 // pred_check_branch
        %145 = sbr.rel (%p142) target = $region12
      $region11: #{tpu_custom_call.1} parent=5 // pred_region
        %s146 = ssub.s32 %s17, 1
        // Predicated region
        $region13: #{tpu_custom_call.1} parent=11 // pred_check
          %p147 = pneg %p64
        $region14: #{tpu_custom_call.1} parent=11 // pred_check_branch
          %149 = sbr.rel (%p147) target = $region16
        $region15: #{tpu_custom_call.1} parent=11 // pred_region
          %s151 = ssub.s32 27648, 27648
          %152 = vsyncadd [#allocation6], %s151
          %s153 = sshll.u32 [#allocation5], 4
          %s154 = int_to_ptr.vmem [resolvable:$true] %s153
          %159 = dma.hbm_to_vmem [thread:$0]  %s1, 27648, %s154, [#allocation6], 576, 576, 36
        $region16: #{tpu_custom_call.1} parent=11 // pred_fallthru
          _
        // Predicated region
        $region17: #{tpu_custom_call.1} parent=11 // pred_check
          %p160 = pneg %p85
        $region18: #{tpu_custom_call.1} parent=11 // pred_check_branch
          %162 = sbr.rel (%p160) target = $region20
        $region19: #{tpu_custom_call.1} parent=11 // pred_region
          %s164 = ssub.s32 9216, 9216
          %165 = vsyncadd [#allocation6], %s164
          %s166 = sshll.u32 [#allocation7], 4
          %s167 = int_to_ptr.vmem [resolvable:$true] %s166
          %172 = dma.hbm_to_vmem [thread:$0]  %s2, 9216, %s167, [#allocation6], 192, 192, 12
        $region20: #{tpu_custom_call.1} parent=11 // pred_fallthru
          _
        // Predicated region
        $region21: #{tpu_custom_call.1} parent=11 // pred_check
          %p173 = pneg %p106
        $region22: #{tpu_custom_call.1} parent=11 // pred_check_branch
          %175 = sbr.rel (%p173) target = $region24
        $region23: #{tpu_custom_call.1} parent=11 // pred_region
          _
        $region24: #{tpu_custom_call.1} parent=11 // pred_fallthru
          _
      $region12: #{tpu_custom_call.1} parent=5 // pred_fallthru
        _
      %p176 = scmp.lt.s32.totalorder %s17, 2
      // Predicated region
      $region25: #{tpu_custom_call.1} parent=5 // pred_check
        %p177 = pneg %p176
      $region26: #{tpu_custom_call.1} parent=5 // pred_check_branch
        %179 = sbr.rel (%p177) target = $region28
      $region27: #{tpu_custom_call.1} parent=5 // pred_region
        // Predicated region
        $region29: #{tpu_custom_call.1} parent=27 // pred_check
          %p180 = pneg %p37
        $region30: #{tpu_custom_call.1} parent=27 // pred_check_branch
          %182 = sbr.rel (%p180) target = $region32
        $region31: #{tpu_custom_call.1} parent=27 // pred_region
          %s183 = sand.u32 %s27, 1
          %s184 = scalar_lea.sflag [#allocation3], %s183
          %s185 = sand.u32 %s27, 1
          %s186 = smul.addr %s185, 96
          %s187 = scalar_lea.vmem [#allocation2], %s186
          %s188 = smul.u32 2, %s17
          %s190 = ssub.s32 1536, 1536
          %191 = vsyncadd %s184, %s190
          %s192 = smul.addr %s188, 6
          %s193 = smul.addr %s192, 128
          %s194 = scalar_lea.hbm %s0, %s193
          %s195 = sshll.u32 %s187, 4
          %s196 = int_to_ptr.vmem [resolvable:$true] %s195
          %201 = dma.hbm_to_vmem [thread:$0]  %s194, 1536, %s196, %s184, 384, 384, 24
        $region32: #{tpu_custom_call.1} parent=27 // pred_fallthru
          _
      $region28: #{tpu_custom_call.1} parent=5 // pred_fallthru
        _
      %p202 = scmp.le.s32.totalorder 1, %s17
      %p203 = scmp.lt.s32.totalorder %s17, 3
      %p204 = pnand %p202, %p203
      %p205 = pneg %p204
      // Predicated region
      $region33: #{tpu_custom_call.1} parent=5 // pred_check
        _
      $region34: #{tpu_custom_call.1} parent=5 // pred_check_branch
        %207 = sbr.rel (%p204) target = $region36
      $region35: #{tpu_custom_call.1} parent=5 // pred_region
        %s208 = ssub.s32 %s17, 1
        %s209 = sand.u32 %s30, 1
        %s210 = scalar_lea.sflag [#allocation3], %s209
        %s211 = sand.u32 %s30, 1
        %s212 = smul.addr %s211, 96
        %s213 = scalar_lea.vmem [#allocation2], %s212
        // Predicated region
        $region37: #{tpu_custom_call.1} parent=35 // pred_check
          %p214 = pneg %p43
        $region38: #{tpu_custom_call.1} parent=35 // pred_check_branch
          %216 = sbr.rel (%p214) target = $region40
        $region39: #{tpu_custom_call.1} parent=35 // pred_region
          %217 = dma.done %s210, 1536
        $region40: #{tpu_custom_call.1} parent=35 // pred_fallthru
          _
        // Predicated region
        $region41: #{tpu_custom_call.1} parent=35 // pred_check
          %p218 = pneg %p64
        $region42: #{tpu_custom_call.1} parent=35 // pred_check_branch
          %220 = sbr.rel (%p218) target = $region44
        $region43: #{tpu_custom_call.1} parent=35 // pred_region
          %221 = dma.done [#allocation6], 27648
        $region44: #{tpu_custom_call.1} parent=35 // pred_fallthru
          _
        // Predicated region
        $region45: #{tpu_custom_call.1} parent=35 // pred_check
          %p222 = pneg %p85
        $region46: #{tpu_custom_call.1} parent=35 // pred_check_branch
          %224 = sbr.rel (%p222) target = $region48
        $region47: #{tpu_custom_call.1} parent=35 // pred_region
          %225 = dma.done [#allocation6], 9216
        $region48: #{tpu_custom_call.1} parent=35 // pred_fallthru
          _
        %s226 = sand.u32 %s30, 1
        %s227 = scalar_lea.sflag [#allocation3], %s226
        %s228 = sand.u32 %s30, 1
        %s229 = smul.addr %s228, 96
        %s230 = scalar_lea.vmem [#allocation2], %s229
        %p231 = pneg %p43
        %p232 = pneg %p40
        %p233 = pneg %p64
        %p234 = pneg %p61
        %p235 = pneg %p85
        %p236 = pneg %p82
        %p237 = pneg %p106
        %p238 = pneg %p103
        %p239 = pneg %p132
        %p240 = pneg %p129
        %s241 = sand.u32 %s119, 1
        %s242 = scalar_lea.sflag [#allocation4], %s241
        %s243 = sand.u32 %s119, 1
        %s244 = smul.addr %s243, 96
        %s245 = scalar_lea.vmem [#allocation8], %s244
        %s246 = smul.u32 2, %s22
        %s247 = smul.u32 2, %s22
        %v249 = vld [vmem:[%s213] sm:$0xff]
        %v250 = vld [vmem:[%s213 + $0x8] sm:$0xff]
        %v251 = vld [vmem:[%s213 + $0x10] sm:$0xff]
        %v252 = vld [vmem:[%s213 + $0x18] sm:$0xff]
        %v253 = vld [vmem:[%s213 + $0x20] sm:$0xff]
        %v254 = vld [vmem:[%s213 + $0x28] sm:$0xff]
        %v255 = vld [vmem:[%s213 + $0x30] sm:$0xff]
        %v256 = vld [vmem:[%s213 + $0x38] sm:$0xff]
        %v257 = vld [vmem:[%s213 + $0x40] sm:$0xff]
        %v258 = vld [vmem:[%s213 + $0x48] sm:$0xff]
        %v259 = vld [vmem:[%s213 + $0x50] sm:$0xff]
        %v260 = vld [vmem:[%s213 + $0x58] sm:$0xff]
        %v261 = vpack.c.bf16 %v252, %v249
        %v262 = vpack.c.bf16 %v253, %v250
        %v263 = vpack.c.bf16 %v254, %v251
        %v264 = vpack.c.bf16 %v258, %v255
        %v265 = vpack.c.bf16 %v259, %v256
        %v266 = vpack.c.bf16 %v260, %v257
        %v267 = vld [vmem:[#allocation5] sm:$0xff]
        %v268 = vld [vmem:[#allocation5 + $0x8] sm:$0xff]
        %v269 = vld [vmem:[#allocation5 + $0x10] sm:$0xff]
        %v270 = vld [vmem:[#allocation5 + $0x18] sm:$0xff]
        %v271 = vld [vmem:[#allocation5 + $0x20] sm:$0xf]
        %v272 = vld [vmem:[#allocation5 + $0x24] sm:$0xff]
        %v273 = vld [vmem:[#allocation5 + $0x2c] sm:$0xff]
        %v274 = vld [vmem:[#allocation5 + $0x34] sm:$0xff]
        %v275 = vld [vmem:[#allocation5 + $0x3c] sm:$0xff]
        %v276 = vld [vmem:[#allocation5 + $0x44] sm:$0xf]
        %v277 = vld [vmem:[#allocation5 + $0x48] sm:$0xff]
        %v278 = vld [vmem:[#allocation5 + $0x50] sm:$0xff]
        %v279 = vld [vmem:[#allocation5 + $0x58] sm:$0xff]
        %v280 = vld [vmem:[#allocation5 + $0x60] sm:$0xff]
        %v281 = vld [vmem:[#allocation5 + $0x68] sm:$0xf]
        %v282 = vld [vmem:[#allocation5 + $0x6c] sm:$0xff]
        %v283 = vld [vmem:[#allocation5 + $0x74] sm:$0xff]
        %v284 = vld [vmem:[#allocation5 + $0x7c] sm:$0xff]
        %v285 = vld [vmem:[#allocation5 + $0x84] sm:$0xff]
        %v286 = vld [vmem:[#allocation5 + $0x8c] sm:$0xf]
        %v287 = vld [vmem:[#allocation5 + $0x90] sm:$0xff]
        %v288 = vld [vmem:[#allocation5 + $0x98] sm:$0xff]
        %v289 = vld [vmem:[#allocation5 + $0xa0] sm:$0xff]
        %v290 = vld [vmem:[#allocation5 + $0xa8] sm:$0xff]
        %v291 = vld [vmem:[#allocation5 + $0xb0] sm:$0xf]
        %v292 = vld [vmem:[#allocation5 + $0xb4] sm:$0xff]
        %v293 = vld [vmem:[#allocation5 + $0xbc] sm:$0xff]
        %v294 = vld [vmem:[#allocation5 + $0xc4] sm:$0xff]
        %v295 = vld [vmem:[#allocation5 + $0xcc] sm:$0xff]
        %v296 = vld [vmem:[#allocation5 + $0xd4] sm:$0xf]
        %v297 = vld [vmem:[#allocation5 + $0xd8] sm:$0xff]
        %v298 = vld [vmem:[#allocation5 + $0xe0] sm:$0xff]
        %v299 = vld [vmem:[#allocation5 + $0xe8] sm:$0xff]
        %v300 = vld [vmem:[#allocation5 + $0xf0] sm:$0xff]
        %v301 = vld [vmem:[#allocation5 + $0xf8] sm:$0xf]
        %v302 = vld [vmem:[#allocation5 + $0xfc] sm:$0xff]
        %v303 = vld [vmem:[#allocation5 + $0x104] sm:$0xff]
        %v304 = vld [vmem:[#allocation5 + $0x10c] sm:$0xff]
        %v305 = vld [vmem:[#allocation5 + $0x114] sm:$0xff]
        %v306 = vld [vmem:[#allocation5 + $0x11c] sm:$0xf]
        %v307 = vld [vmem:[#allocation5 + $0x120] sm:$0xff]
        %v308 = vld [vmem:[#allocation5 + $0x128] sm:$0xff]
        %v309 = vld [vmem:[#allocation5 + $0x130] sm:$0xff]
        %v310 = vld [vmem:[#allocation5 + $0x138] sm:$0xff]
        %v311 = vld [vmem:[#allocation5 + $0x140] sm:$0xf]
        %v312 = vld [vmem:[#allocation5 + $0x144] sm:$0xff]
        %v313 = vld [vmem:[#allocation5 + $0x14c] sm:$0xff]
        %v314 = vld [vmem:[#allocation5 + $0x154] sm:$0xff]
        %v315 = vld [vmem:[#allocation5 + $0x15c] sm:$0xff]
        %v316 = vld [vmem:[#allocation5 + $0x164] sm:$0xf]
        %v317 = vld [vmem:[#allocation5 + $0x168] sm:$0xff]
        %v318 = vld [vmem:[#allocation5 + $0x170] sm:$0xff]
        %v319 = vld [vmem:[#allocation5 + $0x178] sm:$0xff]
        %v320 = vld [vmem:[#allocation5 + $0x180] sm:$0xff]
        %v321 = vld [vmem:[#allocation5 + $0x188] sm:$0xf]
        %v322 = vld [vmem:[#allocation5 + $0x18c] sm:$0xff]
        %v323 = vld [vmem:[#allocation5 + $0x194] sm:$0xff]
        %v324 = vld [vmem:[#allocation5 + $0x19c] sm:$0xff]
        %v325 = vld [vmem:[#allocation5 + $0x1a4] sm:$0xff]
        %v326 = vld [vmem:[#allocation5 + $0x1ac] sm:$0xf]
        %v327 = vld [vmem:[#allocation5 + $0x1b0] sm:$0xff]
        %v328 = vld [vmem:[#allocation5 + $0x1b8] sm:$0xff]
        %v329 = vld [vmem:[#allocation5 + $0x1c0] sm:$0xff]
        %v330 = vld [vmem:[#allocation5 + $0x1c8] sm:$0xff]
        %v331 = vld [vmem:[#allocation5 + $0x1d0] sm:$0xf]
        %v332 = vld [vmem:[#allocation5 + $0x1d4] sm:$0xff]
        %v333 = vld [vmem:[#allocation5 + $0x1dc] sm:$0xff]
        %v334 = vld [vmem:[#allocation5 + $0x1e4] sm:$0xff]
        %v335 = vld [vmem:[#allocation5 + $0x1ec] sm:$0xff]
        %v336 = vld [vmem:[#allocation5 + $0x1f4] sm:$0xf]
        %v337 = vld [vmem:[#allocation5 + $0x1f8] sm:$0xff]
        %v338 = vld [vmem:[#allocation5 + $0x200] sm:$0xff]
        %v339 = vld [vmem:[#allocation5 + $0x208] sm:$0xff]
        %v340 = vld [vmem:[#allocation5 + $0x210] sm:$0xff]
        %v341 = vld [vmem:[#allocation5 + $0x218] sm:$0xf]
        %v342 = vld [vmem:[#allocation5 + $0x21c] sm:$0xff]
        %v343 = vld [vmem:[#allocation5 + $0x224] sm:$0xff]
        %v344 = vld [vmem:[#allocation5 + $0x22c] sm:$0xff]
        %v345 = vld [vmem:[#allocation5 + $0x234] sm:$0xff]
        %v346 = vld [vmem:[#allocation5 + $0x23c] sm:$0xf]
        %v347 = vld [vmem:[#allocation5 + $0x240] sm:$0xff]
        %v348 = vld [vmem:[#allocation5 + $0x248] sm:$0xff]
        %v349 = vld [vmem:[#allocation5 + $0x250] sm:$0xff]
        %v350 = vld [vmem:[#allocation5 + $0x258] sm:$0xff]
        %v351 = vld [vmem:[#allocation5 + $0x260] sm:$0xf]
        %v352 = vld [vmem:[#allocation5 + $0x264] sm:$0xff]
        %v353 = vld [vmem:[#allocation5 + $0x26c] sm:$0xff]
        %v354 = vld [vmem:[#allocation5 + $0x274] sm:$0xff]
        %v355 = vld [vmem:[#allocation5 + $0x27c] sm:$0xff]
        %v356 = vld [vmem:[#allocation5 + $0x284] sm:$0xf]
        %v357 = vld [vmem:[#allocation5 + $0x288] sm:$0xff]
        %v358 = vld [vmem:[#allocation5 + $0x290] sm:$0xff]
        %v359 = vld [vmem:[#allocation5 + $0x298] sm:$0xff]
        %v360 = vld [vmem:[#allocation5 + $0x2a0] sm:$0xff]
        %v361 = vld [vmem:[#allocation5 + $0x2a8] sm:$0xf]
        %v362 = vld [vmem:[#allocation5 + $0x2ac] sm:$0xff]
        %v363 = vld [vmem:[#allocation5 + $0x2b4] sm:$0xff]
        %v364 = vld [vmem:[#allocation5 + $0x2bc] sm:$0xff]
        %v365 = vld [vmem:[#allocation5 + $0x2c4] sm:$0xff]
        %v366 = vld [vmem:[#allocation5 + $0x2cc] sm:$0xf]
        %v367 = vld [vmem:[#allocation5 + $0x2d0] sm:$0xff]
        %v368 = vld [vmem:[#allocation5 + $0x2d8] sm:$0xff]
        %v369 = vld [vmem:[#allocation5 + $0x2e0] sm:$0xff]
        %v370 = vld [vmem:[#allocation5 + $0x2e8] sm:$0xff]
        %v371 = vld [vmem:[#allocation5 + $0x2f0] sm:$0xf]
        %v372 = vld [vmem:[#allocation5 + $0x2f4] sm:$0xff]
        %v373 = vld [vmem:[#allocation5 + $0x2fc] sm:$0xff]
        %v374 = vld [vmem:[#allocation5 + $0x304] sm:$0xff]
        %v375 = vld [vmem:[#allocation5 + $0x30c] sm:$0xff]
        %v376 = vld [vmem:[#allocation5 + $0x314] sm:$0xf]
        %v377 = vld [vmem:[#allocation5 + $0x318] sm:$0xff]
        %v378 = vld [vmem:[#allocation5 + $0x320] sm:$0xff]
        %v379 = vld [vmem:[#allocation5 + $0x328] sm:$0xff]
        %v380 = vld [vmem:[#allocation5 + $0x330] sm:$0xff]
        %v381 = vld [vmem:[#allocation5 + $0x338] sm:$0xf]
        %v382 = vld [vmem:[#allocation5 + $0x33c] sm:$0xff]
        %v383 = vld [vmem:[#allocation5 + $0x344] sm:$0xff]
        %v384 = vld [vmem:[#allocation5 + $0x34c] sm:$0xff]
        %v385 = vld [vmem:[#allocation5 + $0x354] sm:$0xff]
        %v386 = vld [vmem:[#allocation5 + $0x35c] sm:$0xf]
        %v387 = vld [vmem:[#allocation5 + $0x360] sm:$0xff]
        %v388 = vld [vmem:[#allocation5 + $0x368] sm:$0xff]
        %v389 = vld [vmem:[#allocation5 + $0x370] sm:$0xff]
        %v390 = vld [vmem:[#allocation5 + $0x378] sm:$0xff]
        %v391 = vld [vmem:[#allocation5 + $0x380] sm:$0xf]
        %v392 = vld [vmem:[#allocation5 + $0x384] sm:$0xff]
        %v393 = vld [vmem:[#allocation5 + $0x38c] sm:$0xff]
        %v394 = vld [vmem:[#allocation5 + $0x394] sm:$0xff]
        %v395 = vld [vmem:[#allocation5 + $0x39c] sm:$0xff]
        %v396 = vld [vmem:[#allocation5 + $0x3a4] sm:$0xf]
        %v397 = vld [vmem:[#allocation5 + $0x3a8] sm:$0xff]
        %v398 = vld [vmem:[#allocation5 + $0x3b0] sm:$0xff]
        %v399 = vld [vmem:[#allocation5 + $0x3b8] sm:$0xff]
        %v400 = vld [vmem:[#allocation5 + $0x3c0] sm:$0xff]
        %v401 = vld [vmem:[#allocation5 + $0x3c8] sm:$0xf]
        %v402 = vld [vmem:[#allocation5 + $0x3cc] sm:$0xff]
        %v403 = vld [vmem:[#allocation5 + $0x3d4] sm:$0xff]
        %v404 = vld [vmem:[#allocation5 + $0x3dc] sm:$0xff]
        %v405 = vld [vmem:[#allocation5 + $0x3e4] sm:$0xff]
        %v406 = vld [vmem:[#allocation5 + $0x3ec] sm:$0xf]
        %v407 = vld [vmem:[#allocation5 + $0x3f0] sm:$0xff]
        %v408 = vld [vmem:[#allocation5 + $0x3f8] sm:$0xff]
        %v409 = vld [vmem:[#allocation5 + $0x400] sm:$0xff]
        %v410 = vld [vmem:[#allocation5 + $0x408] sm:$0xff]
        %v411 = vld [vmem:[#allocation5 + $0x410] sm:$0xf]
        %v412 = vld [vmem:[#allocation5 + $0x414] sm:$0xff]
        %v413 = vld [vmem:[#allocation5 + $0x41c] sm:$0xff]
        %v414 = vld [vmem:[#allocation5 + $0x424] sm:$0xff]
        %v415 = vld [vmem:[#allocation5 + $0x42c] sm:$0xff]
        %v416 = vld [vmem:[#allocation5 + $0x434] sm:$0xf]
        %v417 = vld [vmem:[#allocation5 + $0x438] sm:$0xff]
        %v418 = vld [vmem:[#allocation5 + $0x440] sm:$0xff]
        %v419 = vld [vmem:[#allocation5 + $0x448] sm:$0xff]
        %v420 = vld [vmem:[#allocation5 + $0x450] sm:$0xff]
        %v421 = vld [vmem:[#allocation5 + $0x458] sm:$0xf]
        %v422 = vld [vmem:[#allocation5 + $0x45c] sm:$0xff]
        %v423 = vld [vmem:[#allocation5 + $0x464] sm:$0xff]
        %v424 = vld [vmem:[#allocation5 + $0x46c] sm:$0xff]
        %v425 = vld [vmem:[#allocation5 + $0x474] sm:$0xff]
        %v426 = vld [vmem:[#allocation5 + $0x47c] sm:$0xf]
        %v427 = vld [vmem:[#allocation5 + $0x480] sm:$0xff]
        %v428 = vld [vmem:[#allocation5 + $0x488] sm:$0xff]
        %v429 = vld [vmem:[#allocation5 + $0x490] sm:$0xff]
        %v430 = vld [vmem:[#allocation5 + $0x498] sm:$0xff]
        %v431 = vld [vmem:[#allocation5 + $0x4a0] sm:$0xf]
        %v432 = vld [vmem:[#allocation5 + $0x4a4] sm:$0xff]
        %v433 = vld [vmem:[#allocation5 + $0x4ac] sm:$0xff]
        %v434 = vld [vmem:[#allocation5 + $0x4b4] sm:$0xff]
        %v435 = vld [vmem:[#allocation5 + $0x4bc] sm:$0xff]
        %v436 = vld [vmem:[#allocation5 + $0x4c4] sm:$0xf]
        %v437 = vld [vmem:[#allocation5 + $0x4c8] sm:$0xff]
        %v438 = vld [vmem:[#allocation5 + $0x4d0] sm:$0xff]
        %v439 = vld [vmem:[#allocation5 + $0x4d8] sm:$0xff]
        %v440 = vld [vmem:[#allocation5 + $0x4e0] sm:$0xff]
        %v441 = vld [vmem:[#allocation5 + $0x4e8] sm:$0xf]
        %v442 = vld [vmem:[#allocation5 + $0x4ec] sm:$0xff]
        %v443 = vld [vmem:[#allocation5 + $0x4f4] sm:$0xff]
        %v444 = vld [vmem:[#allocation5 + $0x4fc] sm:$0xff]
        %v445 = vld [vmem:[#allocation5 + $0x504] sm:$0xff]
        %v446 = vld [vmem:[#allocation5 + $0x50c] sm:$0xf]
        %v447 = vld [vmem:[#allocation5 + $0x510] sm:$0xff]
        %v448 = vld [vmem:[#allocation5 + $0x518] sm:$0xff]
        %v449 = vld [vmem:[#allocation5 + $0x520] sm:$0xff]
        %v450 = vld [vmem:[#allocation5 + $0x528] sm:$0xff]
        %v451 = vld [vmem:[#allocation5 + $0x530] sm:$0xf]
        %v452 = vld [vmem:[#allocation5 + $0x534] sm:$0xff]
        %v453 = vld [vmem:[#allocation5 + $0x53c] sm:$0xff]
        %v454 = vld [vmem:[#allocation5 + $0x544] sm:$0xff]
        %v455 = vld [vmem:[#allocation5 + $0x54c] sm:$0xff]
        %v456 = vld [vmem:[#allocation5 + $0x554] sm:$0xf]
        %v457 = vld [vmem:[#allocation5 + $0x558] sm:$0xff]
        %v458 = vld [vmem:[#allocation5 + $0x560] sm:$0xff]
        %v459 = vld [vmem:[#allocation5 + $0x568] sm:$0xff]
        %v460 = vld [vmem:[#allocation5 + $0x570] sm:$0xff]
        %v461 = vld [vmem:[#allocation5 + $0x578] sm:$0xf]
        %v462 = vld [vmem:[#allocation5 + $0x57c] sm:$0xff]
        %v463 = vld [vmem:[#allocation5 + $0x584] sm:$0xff]
        %v464 = vld [vmem:[#allocation5 + $0x58c] sm:$0xff]
        %v465 = vld [vmem:[#allocation5 + $0x594] sm:$0xff]
        %v466 = vld [vmem:[#allocation5 + $0x59c] sm:$0xf]
        %v467 = vld [vmem:[#allocation5 + $0x5a0] sm:$0xff]
        %v468 = vld [vmem:[#allocation5 + $0x5a8] sm:$0xff]
        %v469 = vld [vmem:[#allocation5 + $0x5b0] sm:$0xff]
        %v470 = vld [vmem:[#allocation5 + $0x5b8] sm:$0xff]
        %v471 = vld [vmem:[#allocation5 + $0x5c0] sm:$0xf]
        %v472 = vld [vmem:[#allocation5 + $0x5c4] sm:$0xff]
        %v473 = vld [vmem:[#allocation5 + $0x5cc] sm:$0xff]
        %v474 = vld [vmem:[#allocation5 + $0x5d4] sm:$0xff]
        %v475 = vld [vmem:[#allocation5 + $0x5dc] sm:$0xff]
        %v476 = vld [vmem:[#allocation5 + $0x5e4] sm:$0xf]
        %v477 = vld [vmem:[#allocation5 + $0x5e8] sm:$0xff]
        %v478 = vld [vmem:[#allocation5 + $0x5f0] sm:$0xff]
        %v479 = vld [vmem:[#allocation5 + $0x5f8] sm:$0xff]
        %v480 = vld [vmem:[#allocation5 + $0x600] sm:$0xff]
        %v481 = vld [vmem:[#allocation5 + $0x608] sm:$0xf]
        %v482 = vld [vmem:[#allocation5 + $0x60c] sm:$0xff]
        %v483 = vld [vmem:[#allocation5 + $0x614] sm:$0xff]
        %v484 = vld [vmem:[#allocation5 + $0x61c] sm:$0xff]
        %v485 = vld [vmem:[#allocation5 + $0x624] sm:$0xff]
        %v486 = vld [vmem:[#allocation5 + $0x62c] sm:$0xf]
        %v487 = vld [vmem:[#allocation5 + $0x630] sm:$0xff]
        %v488 = vld [vmem:[#allocation5 + $0x638] sm:$0xff]
        %v489 = vld [vmem:[#allocation5 + $0x640] sm:$0xff]
        %v490 = vld [vmem:[#allocation5 + $0x648] sm:$0xff]
        %v491 = vld [vmem:[#allocation5 + $0x650] sm:$0xf]
        %v492 = vld [vmem:[#allocation5 + $0x654] sm:$0xff]
        %v493 = vld [vmem:[#allocation5 + $0x65c] sm:$0xff]
        %v494 = vld [vmem:[#allocation5 + $0x664] sm:$0xff]
        %v495 = vld [vmem:[#allocation5 + $0x66c] sm:$0xff]
        %v496 = vld [vmem:[#allocation5 + $0x674] sm:$0xf]
        %v497 = vld [vmem:[#allocation5 + $0x678] sm:$0xff]
        %v498 = vld [vmem:[#allocation5 + $0x680] sm:$0xff]
        %v499 = vld [vmem:[#allocation5 + $0x688] sm:$0xff]
        %v500 = vld [vmem:[#allocation5 + $0x690] sm:$0xff]
        %v501 = vld [vmem:[#allocation5 + $0x698] sm:$0xf]
        %v502 = vld [vmem:[#allocation5 + $0x69c] sm:$0xff]
        %v503 = vld [vmem:[#allocation5 + $0x6a4] sm:$0xff]
        %v504 = vld [vmem:[#allocation5 + $0x6ac] sm:$0xff]
        %v505 = vld [vmem:[#allocation5 + $0x6b4] sm:$0xff]
        %v506 = vld [vmem:[#allocation5 + $0x6bc] sm:$0xf]
        %v747 = vunpack.c.l.b16 %v267
        %v748 = vunpack.c.h.b16 %v267
        %v749 = vunpack.c.l.b16 %v268
        %v750 = vunpack.c.h.b16 %v268
        %v751 = vunpack.c.l.b16 %v269
        %v752 = vunpack.c.h.b16 %v269
        %v753 = vunpack.c.l.b16 %v270
        %v754 = vunpack.c.h.b16 %v270
        %v755 = vunpack.c.l.b16 %v271
        %v756 = vunpack.c.l.b16 %v272
        %v757 = vunpack.c.h.b16 %v272
        %v758 = vunpack.c.l.b16 %v273
        %v759 = vunpack.c.h.b16 %v273
        %v760 = vunpack.c.l.b16 %v274
        %v761 = vunpack.c.h.b16 %v274
        %v762 = vunpack.c.l.b16 %v275
        %v763 = vunpack.c.h.b16 %v275
        %v764 = vunpack.c.l.b16 %v276
        %v765 = vunpack.c.l.b16 %v277
        %v766 = vunpack.c.h.b16 %v277
        %v767 = vunpack.c.l.b16 %v278
        %v768 = vunpack.c.h.b16 %v278
        %v769 = vunpack.c.l.b16 %v279
        %v770 = vunpack.c.h.b16 %v279
        %v771 = vunpack.c.l.b16 %v280
        %v772 = vunpack.c.h.b16 %v280
        %v773 = vunpack.c.l.b16 %v281
        %v774 = vunpack.c.l.b16 %v282
        %v775 = vunpack.c.h.b16 %v282
        %v776 = vunpack.c.l.b16 %v283
        %v777 = vunpack.c.h.b16 %v283
        %v778 = vunpack.c.l.b16 %v284
        %v779 = vunpack.c.h.b16 %v284
        %v780 = vunpack.c.l.b16 %v285
        %v781 = vunpack.c.h.b16 %v285
        %v782 = vunpack.c.l.b16 %v286
        %v783 = vunpack.c.l.b16 %v287
        %v784 = vunpack.c.h.b16 %v287
        %v785 = vunpack.c.l.b16 %v288
        %v786 = vunpack.c.h.b16 %v288
        %v787 = vunpack.c.l.b16 %v289
        %v788 = vunpack.c.h.b16 %v289
        %v789 = vunpack.c.l.b16 %v290
        %v790 = vunpack.c.h.b16 %v290
        %v791 = vunpack.c.l.b16 %v291
        %v792 = vunpack.c.l.b16 %v292
        %v793 = vunpack.c.h.b16 %v292
        %v794 = vunpack.c.l.b16 %v293
        %v795 = vunpack.c.h.b16 %v293
        %v796 = vunpack.c.l.b16 %v294
        %v797 = vunpack.c.h.b16 %v294
        %v798 = vunpack.c.l.b16 %v295
        %v799 = vunpack.c.h.b16 %v295
        %v800 = vunpack.c.l.b16 %v296
        %v801 = vunpack.c.l.b16 %v297
        %v802 = vunpack.c.h.b16 %v297
        %v803 = vunpack.c.l.b16 %v298
        %v804 = vunpack.c.h.b16 %v298
        %v805 = vunpack.c.l.b16 %v299
        %v806 = vunpack.c.h.b16 %v299
        %v807 = vunpack.c.l.b16 %v300
        %v808 = vunpack.c.h.b16 %v300
        %v809 = vunpack.c.l.b16 %v301
        %v810 = vunpack.c.l.b16 %v302
        %v811 = vunpack.c.h.b16 %v302
        %v812 = vunpack.c.l.b16 %v303
        %v813 = vunpack.c.h.b16 %v303
        %v814 = vunpack.c.l.b16 %v304
        %v815 = vunpack.c.h.b16 %v304
        %v816 = vunpack.c.l.b16 %v305
        %v817 = vunpack.c.h.b16 %v305
        %v818 = vunpack.c.l.b16 %v306
        %v819 = vunpack.c.l.b16 %v307
        %v820 = vunpack.c.h.b16 %v307
        %v821 = vunpack.c.l.b16 %v308
        %v822 = vunpack.c.h.b16 %v308
        %v823 = vunpack.c.l.b16 %v309
        %v824 = vunpack.c.h.b16 %v309
        %v825 = vunpack.c.l.b16 %v310
        %v826 = vunpack.c.h.b16 %v310
        %v827 = vunpack.c.l.b16 %v311
        %v828 = vunpack.c.l.b16 %v312
        %v829 = vunpack.c.h.b16 %v312
        %v830 = vunpack.c.l.b16 %v313
        %v831 = vunpack.c.h.b16 %v313
        %v832 = vunpack.c.l.b16 %v314
        %v833 = vunpack.c.h.b16 %v314
        %v834 = vunpack.c.l.b16 %v315
        %v835 = vunpack.c.h.b16 %v315
        %v836 = vunpack.c.l.b16 %v316
        %v837 = vunpack.c.l.b16 %v317
        %v838 = vunpack.c.h.b16 %v317
        %v839 = vunpack.c.l.b16 %v318
        %v840 = vunpack.c.h.b16 %v318
        %v841 = vunpack.c.l.b16 %v319
        %v842 = vunpack.c.h.b16 %v319
        %v843 = vunpack.c.l.b16 %v320
        %v844 = vunpack.c.h.b16 %v320
        %v845 = vunpack.c.l.b16 %v321
        %v846 = vunpack.c.l.b16 %v322
        %v847 = vunpack.c.h.b16 %v322
        %v848 = vunpack.c.l.b16 %v323
        %v849 = vunpack.c.h.b16 %v323
        %v850 = vunpack.c.l.b16 %v324
        %v851 = vunpack.c.h.b16 %v324
        %v852 = vunpack.c.l.b16 %v325
        %v853 = vunpack.c.h.b16 %v325
        %v854 = vunpack.c.l.b16 %v326
        %v855 = vunpack.c.l.b16 %v327
        %v856 = vunpack.c.h.b16 %v327
        %v857 = vunpack.c.l.b16 %v328
        %v858 = vunpack.c.h.b16 %v328
        %v859 = vunpack.c.l.b16 %v329
        %v860 = vunpack.c.h.b16 %v329
        %v861 = vunpack.c.l.b16 %v330
        %v862 = vunpack.c.h.b16 %v330
        %v863 = vunpack.c.l.b16 %v331
        %v864 = vunpack.c.l.b16 %v332
        %v865 = vunpack.c.h.b16 %v332
        %v866 = vunpack.c.l.b16 %v333
        %v867 = vunpack.c.h.b16 %v333
        %v868 = vunpack.c.l.b16 %v334
        %v869 = vunpack.c.h.b16 %v334
        %v870 = vunpack.c.l.b16 %v335
        %v871 = vunpack.c.h.b16 %v335
        %v872 = vunpack.c.l.b16 %v336
        %v873 = vunpack.c.l.b16 %v337
        %v874 = vunpack.c.h.b16 %v337
        %v875 = vunpack.c.l.b16 %v338
        %v876 = vunpack.c.h.b16 %v338
        %v877 = vunpack.c.l.b16 %v339
        %v878 = vunpack.c.h.b16 %v339
        %v879 = vunpack.c.l.b16 %v340
        %v880 = vunpack.c.h.b16 %v340
        %v881 = vunpack.c.l.b16 %v341
        %v882 = vunpack.c.l.b16 %v342
        %v883 = vunpack.c.h.b16 %v342
        %v884 = vunpack.c.l.b16 %v343
        %v885 = vunpack.c.h.b16 %v343
        %v886 = vunpack.c.l.b16 %v344
        %v887 = vunpack.c.h.b16 %v344
        %v888 = vunpack.c.l.b16 %v345
        %v889 = vunpack.c.h.b16 %v345
        %v890 = vunpack.c.l.b16 %v346
        %v891 = vunpack.c.l.b16 %v347
        %v892 = vunpack.c.h.b16 %v347
        %v893 = vunpack.c.l.b16 %v348
        %v894 = vunpack.c.h.b16 %v348
        %v895 = vunpack.c.l.b16 %v349
        %v896 = vunpack.c.h.b16 %v349
        %v897 = vunpack.c.l.b16 %v350
        %v898 = vunpack.c.h.b16 %v350
        %v899 = vunpack.c.l.b16 %v351
        %v900 = vunpack.c.l.b16 %v352
        %v901 = vunpack.c.h.b16 %v352
        %v902 = vunpack.c.l.b16 %v353
        %v903 = vunpack.c.h.b16 %v353
        %v904 = vunpack.c.l.b16 %v354
        %v905 = vunpack.c.h.b16 %v354
        %v906 = vunpack.c.l.b16 %v355
        %v907 = vunpack.c.h.b16 %v355
        %v908 = vunpack.c.l.b16 %v356
        %v909 = vunpack.c.l.b16 %v357
        %v910 = vunpack.c.h.b16 %v357
        %v911 = vunpack.c.l.b16 %v358
        %v912 = vunpack.c.h.b16 %v358
        %v913 = vunpack.c.l.b16 %v359
        %v914 = vunpack.c.h.b16 %v359
        %v915 = vunpack.c.l.b16 %v360
        %v916 = vunpack.c.h.b16 %v360
        %v917 = vunpack.c.l.b16 %v361
        %v918 = vunpack.c.l.b16 %v362
        %v919 = vunpack.c.h.b16 %v362
        %v920 = vunpack.c.l.b16 %v363
        %v921 = vunpack.c.h.b16 %v363
        %v922 = vunpack.c.l.b16 %v364
        %v923 = vunpack.c.h.b16 %v364
        %v924 = vunpack.c.l.b16 %v365
        %v925 = vunpack.c.h.b16 %v365
        %v926 = vunpack.c.l.b16 %v366
        %v927 = vunpack.c.l.b16 %v367
        %v928 = vunpack.c.h.b16 %v367
        %v929 = vunpack.c.l.b16 %v368
        %v930 = vunpack.c.h.b16 %v368
        %v931 = vunpack.c.l.b16 %v369
        %v932 = vunpack.c.h.b16 %v369
        %v933 = vunpack.c.l.b16 %v370
        %v934 = vunpack.c.h.b16 %v370
        %v935 = vunpack.c.l.b16 %v371
        %v936 = vunpack.c.l.b16 %v372
        %v937 = vunpack.c.h.b16 %v372
        %v938 = vunpack.c.l.b16 %v373
        %v939 = vunpack.c.h.b16 %v373
        %v940 = vunpack.c.l.b16 %v374
        %v941 = vunpack.c.h.b16 %v374
        %v942 = vunpack.c.l.b16 %v375
        %v943 = vunpack.c.h.b16 %v375
        %v944 = vunpack.c.l.b16 %v376
        %v945 = vunpack.c.l.b16 %v377
        %v946 = vunpack.c.h.b16 %v377
        %v947 = vunpack.c.l.b16 %v378
        %v948 = vunpack.c.h.b16 %v378
        %v949 = vunpack.c.l.b16 %v379
        %v950 = vunpack.c.h.b16 %v379
        %v951 = vunpack.c.l.b16 %v380
        %v952 = vunpack.c.h.b16 %v380
        %v953 = vunpack.c.l.b16 %v381
        %v954 = vunpack.c.l.b16 %v382
        %v955 = vunpack.c.h.b16 %v382
        %v956 = vunpack.c.l.b16 %v383
        %v957 = vunpack.c.h.b16 %v383
        %v958 = vunpack.c.l.b16 %v384
        %v959 = vunpack.c.h.b16 %v384
        %v960 = vunpack.c.l.b16 %v385
        %v961 = vunpack.c.h.b16 %v385
        %v962 = vunpack.c.l.b16 %v386
        %v963 = vunpack.c.l.b16 %v387
        %v964 = vunpack.c.h.b16 %v387
        %v965 = vunpack.c.l.b16 %v388
        %v966 = vunpack.c.h.b16 %v388
        %v967 = vunpack.c.l.b16 %v389
        %v968 = vunpack.c.h.b16 %v389
        %v969 = vunpack.c.l.b16 %v390
        %v970 = vunpack.c.h.b16 %v390
        %v971 = vunpack.c.l.b16 %v391
        %v972 = vunpack.c.l.b16 %v392
        %v973 = vunpack.c.h.b16 %v392
        %v974 = vunpack.c.l.b16 %v393
        %v975 = vunpack.c.h.b16 %v393
        %v976 = vunpack.c.l.b16 %v394
        %v977 = vunpack.c.h.b16 %v394
        %v978 = vunpack.c.l.b16 %v395
        %v979 = vunpack.c.h.b16 %v395
        %v980 = vunpack.c.l.b16 %v396
        %v981 = vunpack.c.l.b16 %v397
        %v982 = vunpack.c.h.b16 %v397
        %v983 = vunpack.c.l.b16 %v398
        %v984 = vunpack.c.h.b16 %v398
        %v985 = vunpack.c.l.b16 %v399
        %v986 = vunpack.c.h.b16 %v399
        %v987 = vunpack.c.l.b16 %v400
        %v988 = vunpack.c.h.b16 %v400
        %v989 = vunpack.c.l.b16 %v401
        %v990 = vunpack.c.l.b16 %v402
        %v991 = vunpack.c.h.b16 %v402
        %v992 = vunpack.c.l.b16 %v403
        %v993 = vunpack.c.h.b16 %v403
        %v994 = vunpack.c.l.b16 %v404
        %v995 = vunpack.c.h.b16 %v404
        %v996 = vunpack.c.l.b16 %v405
        %v997 = vunpack.c.h.b16 %v405
        %v998 = vunpack.c.l.b16 %v406
        %v999 = vunpack.c.l.b16 %v407
        %v1000 = vunpack.c.h.b16 %v407
        %v1001 = vunpack.c.l.b16 %v408
        %v1002 = vunpack.c.h.b16 %v408
        %v1003 = vunpack.c.l.b16 %v409
        %v1004 = vunpack.c.h.b16 %v409
        %v1005 = vunpack.c.l.b16 %v410
        %v1006 = vunpack.c.h.b16 %v410
        %v1007 = vunpack.c.l.b16 %v411
        %v1008 = vunpack.c.l.b16 %v412
        %v1009 = vunpack.c.h.b16 %v412
        %v1010 = vunpack.c.l.b16 %v413
        %v1011 = vunpack.c.h.b16 %v413
        %v1012 = vunpack.c.l.b16 %v414
        %v1013 = vunpack.c.h.b16 %v414
        %v1014 = vunpack.c.l.b16 %v415
        %v1015 = vunpack.c.h.b16 %v415
        %v1016 = vunpack.c.l.b16 %v416
        %v1017 = vunpack.c.l.b16 %v417
        %v1018 = vunpack.c.h.b16 %v417
        %v1019 = vunpack.c.l.b16 %v418
        %v1020 = vunpack.c.h.b16 %v418
        %v1021 = vunpack.c.l.b16 %v419
        %v1022 = vunpack.c.h.b16 %v419
        %v1023 = vunpack.c.l.b16 %v420
        %v1024 = vunpack.c.h.b16 %v420
        %v1025 = vunpack.c.l.b16 %v421
        %v1026 = vunpack.c.l.b16 %v422
        %v1027 = vunpack.c.h.b16 %v422
        %v1028 = vunpack.c.l.b16 %v423
        %v1029 = vunpack.c.h.b16 %v423
        %v1030 = vunpack.c.l.b16 %v424
        %v1031 = vunpack.c.h.b16 %v424
        %v1032 = vunpack.c.l.b16 %v425
        %v1033 = vunpack.c.h.b16 %v425
        %v1034 = vunpack.c.l.b16 %v426
        %v1035 = vunpack.c.l.b16 %v427
        %v1036 = vunpack.c.h.b16 %v427
        %v1037 = vunpack.c.l.b16 %v428
        %v1038 = vunpack.c.h.b16 %v428
        %v1039 = vunpack.c.l.b16 %v429
        %v1040 = vunpack.c.h.b16 %v429
        %v1041 = vunpack.c.l.b16 %v430
        %v1042 = vunpack.c.h.b16 %v430
        %v1043 = vunpack.c.l.b16 %v431
        %v1044 = vunpack.c.l.b16 %v432
        %v1045 = vunpack.c.h.b16 %v432
        %v1046 = vunpack.c.l.b16 %v433
        %v1047 = vunpack.c.h.b16 %v433
        %v1048 = vunpack.c.l.b16 %v434
        %v1049 = vunpack.c.h.b16 %v434
        %v1050 = vunpack.c.l.b16 %v435
        %v1051 = vunpack.c.h.b16 %v435
        %v1052 = vunpack.c.l.b16 %v436
        %v1053 = vunpack.c.l.b16 %v437
        %v1054 = vunpack.c.h.b16 %v437
        %v1055 = vunpack.c.l.b16 %v438
        %v1056 = vunpack.c.h.b16 %v438
        %v1057 = vunpack.c.l.b16 %v439
        %v1058 = vunpack.c.h.b16 %v439
        %v1059 = vunpack.c.l.b16 %v440
        %v1060 = vunpack.c.h.b16 %v440
        %v1061 = vunpack.c.l.b16 %v441
        %v1062 = vunpack.c.l.b16 %v442
        %v1063 = vunpack.c.h.b16 %v442
        %v1064 = vunpack.c.l.b16 %v443
        %v1065 = vunpack.c.h.b16 %v443
        %v1066 = vunpack.c.l.b16 %v444
        %v1067 = vunpack.c.h.b16 %v444
        %v1068 = vunpack.c.l.b16 %v445
        %v1069 = vunpack.c.h.b16 %v445
        %v1070 = vunpack.c.l.b16 %v446
        %v1071 = vunpack.c.l.b16 %v447
        %v1072 = vunpack.c.h.b16 %v447
        %v1073 = vunpack.c.l.b16 %v448
        %v1074 = vunpack.c.h.b16 %v448
        %v1075 = vunpack.c.l.b16 %v449
        %v1076 = vunpack.c.h.b16 %v449
        %v1077 = vunpack.c.l.b16 %v450
        %v1078 = vunpack.c.h.b16 %v450
        %v1079 = vunpack.c.l.b16 %v451
        %v1080 = vunpack.c.l.b16 %v452
        %v1081 = vunpack.c.h.b16 %v452
        %v1082 = vunpack.c.l.b16 %v453
        %v1083 = vunpack.c.h.b16 %v453
        %v1084 = vunpack.c.l.b16 %v454
        %v1085 = vunpack.c.h.b16 %v454
        %v1086 = vunpack.c.l.b16 %v455
        %v1087 = vunpack.c.h.b16 %v455
        %v1088 = vunpack.c.l.b16 %v456
        %v1089 = vunpack.c.l.b16 %v457
        %v1090 = vunpack.c.h.b16 %v457
        %v1091 = vunpack.c.l.b16 %v458
        %v1092 = vunpack.c.h.b16 %v458
        %v1093 = vunpack.c.l.b16 %v459
        %v1094 = vunpack.c.h.b16 %v459
        %v1095 = vunpack.c.l.b16 %v460
        %v1096 = vunpack.c.h.b16 %v460
        %v1097 = vunpack.c.l.b16 %v461
        %v1098 = vunpack.c.l.b16 %v462
        %v1099 = vunpack.c.h.b16 %v462
        %v1100 = vunpack.c.l.b16 %v463
        %v1101 = vunpack.c.h.b16 %v463
        %v1102 = vunpack.c.l.b16 %v464
        %v1103 = vunpack.c.h.b16 %v464
        %v1104 = vunpack.c.l.b16 %v465
        %v1105 = vunpack.c.h.b16 %v465
        %v1106 = vunpack.c.l.b16 %v466
        %v1107 = vunpack.c.l.b16 %v467
        %v1108 = vunpack.c.h.b16 %v467
        %v1109 = vunpack.c.l.b16 %v468
        %v1110 = vunpack.c.h.b16 %v468
        %v1111 = vunpack.c.l.b16 %v469
        %v1112 = vunpack.c.h.b16 %v469
        %v1113 = vunpack.c.l.b16 %v470
        %v1114 = vunpack.c.h.b16 %v470
        %v1115 = vunpack.c.l.b16 %v471
        %v1116 = vunpack.c.l.b16 %v472
        %v1117 = vunpack.c.h.b16 %v472
        %v1118 = vunpack.c.l.b16 %v473
        %v1119 = vunpack.c.h.b16 %v473
        %v1120 = vunpack.c.l.b16 %v474
        %v1121 = vunpack.c.h.b16 %v474
        %v1122 = vunpack.c.l.b16 %v475
        %v1123 = vunpack.c.h.b16 %v475
        %v1124 = vunpack.c.l.b16 %v476
        %v1125 = vunpack.c.l.b16 %v477
        %v1126 = vunpack.c.h.b16 %v477
        %v1127 = vunpack.c.l.b16 %v478
        %v1128 = vunpack.c.h.b16 %v478
        %v1129 = vunpack.c.l.b16 %v479
        %v1130 = vunpack.c.h.b16 %v479
        %v1131 = vunpack.c.l.b16 %v480
        %v1132 = vunpack.c.h.b16 %v480
        %v1133 = vunpack.c.l.b16 %v481
        %v1134 = vunpack.c.l.b16 %v482
        %v1135 = vunpack.c.h.b16 %v482
        %v1136 = vunpack.c.l.b16 %v483
        %v1137 = vunpack.c.h.b16 %v483
        %v1138 = vunpack.c.l.b16 %v484
        %v1139 = vunpack.c.h.b16 %v484
        %v1140 = vunpack.c.l.b16 %v485
        %v1141 = vunpack.c.h.b16 %v485
        %v1142 = vunpack.c.l.b16 %v486
        %v1143 = vunpack.c.l.b16 %v487
        %v1144 = vunpack.c.h.b16 %v487
        %v1145 = vunpack.c.l.b16 %v488
        %v1146 = vunpack.c.h.b16 %v488
        %v1147 = vunpack.c.l.b16 %v489
        %v1148 = vunpack.c.h.b16 %v489
        %v1149 = vunpack.c.l.b16 %v490
        %v1150 = vunpack.c.h.b16 %v490
        %v1151 = vunpack.c.l.b16 %v491
        %v1152 = vunpack.c.l.b16 %v492
        %v1153 = vunpack.c.h.b16 %v492
        %v1154 = vunpack.c.l.b16 %v493
        %v1155 = vunpack.c.h.b16 %v493
        %v1156 = vunpack.c.l.b16 %v494
        %v1157 = vunpack.c.h.b16 %v494
        %v1158 = vunpack.c.l.b16 %v495
        %v1159 = vunpack.c.h.b16 %v495
        %v1160 = vunpack.c.l.b16 %v496
        %v1161 = vunpack.c.l.b16 %v497
        %v1162 = vunpack.c.h.b16 %v497
        %v1163 = vunpack.c.l.b16 %v498
        %v1164 = vunpack.c.h.b16 %v498
        %v1165 = vunpack.c.l.b16 %v499
        %v1166 = vunpack.c.h.b16 %v499
        %v1167 = vunpack.c.l.b16 %v500
        %v1168 = vunpack.c.h.b16 %v500
        %v1169 = vunpack.c.l.b16 %v501
        %v1170 = vunpack.c.l.b16 %v502
        %v1171 = vunpack.c.h.b16 %v502
        %v1172 = vunpack.c.l.b16 %v503
        %v1173 = vunpack.c.h.b16 %v503
        %v1174 = vunpack.c.l.b16 %v504
        %v1175 = vunpack.c.h.b16 %v504
        %v1176 = vunpack.c.l.b16 %v505
        %v1177 = vunpack.c.h.b16 %v505
        %v1178 = vunpack.c.l.b16 %v506
        %v1179 = vpack.c.b16 %v756, %v747
        %v1180 = vpack.c.b16 %v757, %v748
        %v1181 = vpack.c.b16 %v758, %v749
        %v1182 = vpack.c.b16 %v759, %v750
        %v1183 = vpack.c.b16 %v760, %v751
        %v1184 = vpack.c.b16 %v761, %v752
        %v1185 = vpack.c.b16 %v762, %v753
        %v1186 = vpack.c.b16 %v763, %v754
        %v1187 = vpack.c.b16 %v764, %v755
        %v1188 = vpack.c.b16 %v774, %v765
        %v1189 = vpack.c.b16 %v775, %v766
        %v1190 = vpack.c.b16 %v776, %v767
        %v1191 = vpack.c.b16 %v777, %v768
        %v1192 = vpack.c.b16 %v778, %v769
        %v1193 = vpack.c.b16 %v779, %v770
        %v1194 = vpack.c.b16 %v780, %v771
        %v1195 = vpack.c.b16 %v781, %v772
        %v1196 = vpack.c.b16 %v782, %v773
        %v1197 = vpack.c.b16 %v792, %v783
        %v1198 = vpack.c.b16 %v793, %v784
        %v1199 = vpack.c.b16 %v794, %v785
        %v1200 = vpack.c.b16 %v795, %v786
        %v1201 = vpack.c.b16 %v796, %v787
        %v1202 = vpack.c.b16 %v797, %v788
        %v1203 = vpack.c.b16 %v798, %v789
        %v1204 = vpack.c.b16 %v799, %v790
        %v1205 = vpack.c.b16 %v800, %v791
        %v1206 = vpack.c.b16 %v810, %v801
        %v1207 = vpack.c.b16 %v811, %v802
        %v1208 = vpack.c.b16 %v812, %v803
        %v1209 = vpack.c.b16 %v813, %v804
        %v1210 = vpack.c.b16 %v814, %v805
        %v1211 = vpack.c.b16 %v815, %v806
        %v1212 = vpack.c.b16 %v816, %v807
        %v1213 = vpack.c.b16 %v817, %v808
        %v1214 = vpack.c.b16 %v818, %v809
        %v1215 = vpack.c.b16 %v828, %v819
        %v1216 = vpack.c.b16 %v829, %v820
        %v1217 = vpack.c.b16 %v830, %v821
        %v1218 = vpack.c.b16 %v831, %v822
        %v1219 = vpack.c.b16 %v832, %v823
        %v1220 = vpack.c.b16 %v833, %v824
        %v1221 = vpack.c.b16 %v834, %v825
        %v1222 = vpack.c.b16 %v835, %v826
        %v1223 = vpack.c.b16 %v836, %v827
        %v1224 = vpack.c.b16 %v846, %v837
        %v1225 = vpack.c.b16 %v847, %v838
        %v1226 = vpack.c.b16 %v848, %v839
        %v1227 = vpack.c.b16 %v849, %v840
        %v1228 = vpack.c.b16 %v850, %v841
        %v1229 = vpack.c.b16 %v851, %v842
        %v1230 = vpack.c.b16 %v852, %v843
        %v1231 = vpack.c.b16 %v853, %v844
        %v1232 = vpack.c.b16 %v854, %v845
        %v1233 = vpack.c.b16 %v864, %v855
        %v1234 = vpack.c.b16 %v865, %v856
        %v1235 = vpack.c.b16 %v866, %v857
        %v1236 = vpack.c.b16 %v867, %v858
        %v1237 = vpack.c.b16 %v868, %v859
        %v1238 = vpack.c.b16 %v869, %v860
        %v1239 = vpack.c.b16 %v870, %v861
        %v1240 = vpack.c.b16 %v871, %v862
        %v1241 = vpack.c.b16 %v872, %v863
        %v1242 = vpack.c.b16 %v882, %v873
        %v1243 = vpack.c.b16 %v883, %v874
        %v1244 = vpack.c.b16 %v884, %v875
        %v1245 = vpack.c.b16 %v885, %v876
        %v1246 = vpack.c.b16 %v886, %v877
        %v1247 = vpack.c.b16 %v887, %v878
        %v1248 = vpack.c.b16 %v888, %v879
        %v1249 = vpack.c.b16 %v889, %v880
        %v1250 = vpack.c.b16 %v890, %v881
        %v1251 = vpack.c.b16 %v900, %v891
        %v1252 = vpack.c.b16 %v901, %v892
        %v1253 = vpack.c.b16 %v902, %v893
        %v1254 = vpack.c.b16 %v903, %v894
        %v1255 = vpack.c.b16 %v904, %v895
        %v1256 = vpack.c.b16 %v905, %v896
        %v1257 = vpack.c.b16 %v906, %v897
        %v1258 = vpack.c.b16 %v907, %v898
        %v1259 = vpack.c.b16 %v908, %v899
        %v1260 = vpack.c.b16 %v918, %v909
        %v1261 = vpack.c.b16 %v919, %v910
        %v1262 = vpack.c.b16 %v920, %v911
        %v1263 = vpack.c.b16 %v921, %v912
        %v1264 = vpack.c.b16 %v922, %v913
        %v1265 = vpack.c.b16 %v923, %v914
        %v1266 = vpack.c.b16 %v924, %v915
        %v1267 = vpack.c.b16 %v925, %v916
        %v1268 = vpack.c.b16 %v926, %v917
        %v1269 = vpack.c.b16 %v936, %v927
        %v1270 = vpack.c.b16 %v937, %v928
        %v1271 = vpack.c.b16 %v938, %v929
        %v1272 = vpack.c.b16 %v939, %v930
        %v1273 = vpack.c.b16 %v940, %v931
        %v1274 = vpack.c.b16 %v941, %v932
        %v1275 = vpack.c.b16 %v942, %v933
        %v1276 = vpack.c.b16 %v943, %v934
        %v1277 = vpack.c.b16 %v944, %v935
        %v1278 = vpack.c.b16 %v954, %v945
        %v1279 = vpack.c.b16 %v955, %v946
        %v1280 = vpack.c.b16 %v956, %v947
        %v1281 = vpack.c.b16 %v957, %v948
        %v1282 = vpack.c.b16 %v958, %v949
        %v1283 = vpack.c.b16 %v959, %v950
        %v1284 = vpack.c.b16 %v960, %v951
        %v1285 = vpack.c.b16 %v961, %v952
        %v1286 = vpack.c.b16 %v962, %v953
        %v1287 = vpack.c.b16 %v972, %v963
        %v1288 = vpack.c.b16 %v973, %v964
        %v1289 = vpack.c.b16 %v974, %v965
        %v1290 = vpack.c.b16 %v975, %v966
        %v1291 = vpack.c.b16 %v976, %v967
        %v1292 = vpack.c.b16 %v977, %v968
        %v1293 = vpack.c.b16 %v978, %v969
        %v1294 = vpack.c.b16 %v979, %v970
        %v1295 = vpack.c.b16 %v980, %v971
        %v1296 = vpack.c.b16 %v990, %v981
        %v1297 = vpack.c.b16 %v991, %v982
        %v1298 = vpack.c.b16 %v992, %v983
        %v1299 = vpack.c.b16 %v993, %v984
        %v1300 = vpack.c.b16 %v994, %v985
        %v1301 = vpack.c.b16 %v995, %v986
        %v1302 = vpack.c.b16 %v996, %v987
        %v1303 = vpack.c.b16 %v997, %v988
        %v1304 = vpack.c.b16 %v998, %v989
        %v1305 = vpack.c.b16 %v1008, %v999
        %v1306 = vpack.c.b16 %v1009, %v1000
        %v1307 = vpack.c.b16 %v1010, %v1001
        %v1308 = vpack.c.b16 %v1011, %v1002
        %v1309 = vpack.c.b16 %v1012, %v1003
        %v1310 = vpack.c.b16 %v1013, %v1004
        %v1311 = vpack.c.b16 %v1014, %v1005
        %v1312 = vpack.c.b16 %v1015, %v1006
        %v1313 = vpack.c.b16 %v1016, %v1007
        %v1314 = vpack.c.b16 %v1026, %v1017
        %v1315 = vpack.c.b16 %v1027, %v1018
        %v1316 = vpack.c.b16 %v1028, %v1019
        %v1317 = vpack.c.b16 %v1029, %v1020
        %v1318 = vpack.c.b16 %v1030, %v1021
        %v1319 = vpack.c.b16 %v1031, %v1022
        %v1320 = vpack.c.b16 %v1032, %v1023
        %v1321 = vpack.c.b16 %v1033, %v1024
        %v1322 = vpack.c.b16 %v1034, %v1025
        %v1323 = vpack.c.b16 %v1044, %v1035
        %v1324 = vpack.c.b16 %v1045, %v1036
        %v1325 = vpack.c.b16 %v1046, %v1037
        %v1326 = vpack.c.b16 %v1047, %v1038
        %v1327 = vpack.c.b16 %v1048, %v1039
        %v1328 = vpack.c.b16 %v1049, %v1040
        %v1329 = vpack.c.b16 %v1050, %v1041
        %v1330 = vpack.c.b16 %v1051, %v1042
        %v1331 = vpack.c.b16 %v1052, %v1043
        %v1332 = vpack.c.b16 %v1062, %v1053
        %v1333 = vpack.c.b16 %v1063, %v1054
        %v1334 = vpack.c.b16 %v1064, %v1055
        %v1335 = vpack.c.b16 %v1065, %v1056
        %v1336 = vpack.c.b16 %v1066, %v1057
        %v1337 = vpack.c.b16 %v1067, %v1058
        %v1338 = vpack.c.b16 %v1068, %v1059
        %v1339 = vpack.c.b16 %v1069, %v1060
        %v1340 = vpack.c.b16 %v1070, %v1061
        %v1341 = vpack.c.b16 %v1080, %v1071
        %v1342 = vpack.c.b16 %v1081, %v1072
        %v1343 = vpack.c.b16 %v1082, %v1073
        %v1344 = vpack.c.b16 %v1083, %v1074
        %v1345 = vpack.c.b16 %v1084, %v1075
        %v1346 = vpack.c.b16 %v1085, %v1076
        %v1347 = vpack.c.b16 %v1086, %v1077
        %v1348 = vpack.c.b16 %v1087, %v1078
        %v1349 = vpack.c.b16 %v1088, %v1079
        %v1350 = vpack.c.b16 %v1098, %v1089
        %v1351 = vpack.c.b16 %v1099, %v1090
        %v1352 = vpack.c.b16 %v1100, %v1091
        %v1353 = vpack.c.b16 %v1101, %v1092
        %v1354 = vpack.c.b16 %v1102, %v1093
        %v1355 = vpack.c.b16 %v1103, %v1094
        %v1356 = vpack.c.b16 %v1104, %v1095
        %v1357 = vpack.c.b16 %v1105, %v1096
        %v1358 = vpack.c.b16 %v1106, %v1097
        %v1359 = vpack.c.b16 %v1116, %v1107
        %v1360 = vpack.c.b16 %v1117, %v1108
        %v1361 = vpack.c.b16 %v1118, %v1109
        %v1362 = vpack.c.b16 %v1119, %v1110
        %v1363 = vpack.c.b16 %v1120, %v1111
        %v1364 = vpack.c.b16 %v1121, %v1112
        %v1365 = vpack.c.b16 %v1122, %v1113
        %v1366 = vpack.c.b16 %v1123, %v1114
        %v1367 = vpack.c.b16 %v1124, %v1115
        %v1368 = vpack.c.b16 %v1134, %v1125
        %v1369 = vpack.c.b16 %v1135, %v1126
        %v1370 = vpack.c.b16 %v1136, %v1127
        %v1371 = vpack.c.b16 %v1137, %v1128
        %v1372 = vpack.c.b16 %v1138, %v1129
        %v1373 = vpack.c.b16 %v1139, %v1130
        %v1374 = vpack.c.b16 %v1140, %v1131
        %v1375 = vpack.c.b16 %v1141, %v1132
        %v1376 = vpack.c.b16 %v1142, %v1133
        %v1377 = vpack.c.b16 %v1152, %v1143
        %v1378 = vpack.c.b16 %v1153, %v1144
        %v1379 = vpack.c.b16 %v1154, %v1145
        %v1380 = vpack.c.b16 %v1155, %v1146
        %v1381 = vpack.c.b16 %v1156, %v1147
        %v1382 = vpack.c.b16 %v1157, %v1148
        %v1383 = vpack.c.b16 %v1158, %v1149
        %v1384 = vpack.c.b16 %v1159, %v1150
        %v1385 = vpack.c.b16 %v1160, %v1151
        %v1386 = vpack.c.b16 %v1170, %v1161
        %v1387 = vpack.c.b16 %v1171, %v1162
        %v1388 = vpack.c.b16 %v1172, %v1163
        %v1389 = vpack.c.b16 %v1173, %v1164
        %v1390 = vpack.c.b16 %v1174, %v1165
        %v1391 = vpack.c.b16 %v1175, %v1166
        %v1392 = vpack.c.b16 %v1176, %v1167
        %v1393 = vpack.c.b16 %v1177, %v1168
        %v1394 = vpack.c.b16 %v1178, %v1169
        %1611 = vmatprep.subr.bf16.mxu0 %v1180
        %1612 = vmatpush1.bf16.msra.mxu0 %v1179
        %1613 = vmatprep.subr.bf16.mxu0 %v1189
        %1614 = vmatpush1.bf16.msra.mxu0 %v1188
        %1615 = vmatprep.subr.bf16.mxu0 %v1198
        %1616 = vmatpush1.bf16.msra.mxu0 %v1197
        %1617 = vmatprep.subr.bf16.mxu0 %v1207
        %1618 = vmatpush1.bf16.msra.mxu0 %v1206
        %1619 = vmatprep.subr.bf16.mxu0 %v1216
        %1620 = vmatpush1.bf16.msra.mxu0 %v1215
        %1621 = vmatprep.subr.bf16.mxu0 %v1225
        %1622 = vmatpush1.bf16.msra.mxu0 %v1224
        %1623 = vmatprep.subr.bf16.mxu0 %v1234
        %1624 = vmatpush1.bf16.msra.mxu0 %v1233
        %1625 = vmatprep.subr.bf16.mxu0 %v1243
        %1626 = vmatpush1.bf16.msra.mxu0 %v1242
        %1627 = vmatprep.subr.bf16.mxu0 %v1252
        %1628 = vmatpush1.bf16.msra.mxu0 %v1251
        %1629 = vmatprep.subr.bf16.mxu0 %v1261
        %1630 = vmatpush1.bf16.msra.mxu0 %v1260
        %1631 = vmatprep.subr.bf16.mxu0 %v1270
        %1632 = vmatpush1.bf16.msra.mxu0 %v1269
        %1633 = vmatprep.subr.bf16.mxu0 %v1279
        %1634 = vmatpush1.bf16.msra.mxu0 %v1278
        %1635 = vmatprep.subr.bf16.mxu0 %v1288
        %1636 = vmatpush1.bf16.msra.mxu0 %v1287
        %1637 = vmatprep.subr.bf16.mxu0 %v1297
        %1638 = vmatpush1.bf16.msra.mxu0 %v1296
        %1639 = vmatprep.subr.bf16.mxu0 %v1306
        %1640 = vmatpush1.bf16.msra.mxu0 %v1305
        %1641 = vmatprep.subr.bf16.mxu0 %v1315
        %1642 = vmatpush1.bf16.msra.mxu0 %v1314
        %1643 = vmatprep.mubr.bf16.mxu0 %v262
        %1644 = vmatmul.mubr.bf16.gmra.mrb[0].mxu0 %v261
        %v1645 = vpop.f32.mrb[0].mxu0
        %v1646 = vadd.f32 0.0, %v1645
        %v1647 = vpop.f32.mrb[0].mxu0
        %v1648 = vadd.f32 0.0, %v1647
        %v1649 = vpop.f32.mrb[0].mxu0
        %v1650 = vadd.f32 0.0, %v1649
        %v1651 = vpop.f32.mrb[0].mxu0
        %v1652 = vadd.f32 0.0, %v1651
        %1653 = vmatprep.mubr.bf16.mxu0 %v265
        %1654 = vmatmul.mubr.bf16.gmra.mrb[0].mxu0 %v264
        %v1655 = vpop.f32.mrb[0].mxu0
        %v1656 = vadd.f32 0.0, %v1655
        %v1657 = vpop.f32.mrb[0].mxu0
        %v1658 = vadd.f32 0.0, %v1657
        %v1659 = vpop.f32.mrb[0].mxu0
        %v1660 = vadd.f32 0.0, %v1659
        %v1661 = vpop.f32.mrb[0].mxu0
        %v1662 = vadd.f32 0.0, %v1661
        %1663 = vdwg.mxu0
        %1664 = vmatprep.subr.bf16.mxu0 %v1324
        %1665 = vmatpush1.bf16.msra.mxu0 %v1323
        %1666 = vmatprep.subr.bf16.mxu0 %v1333
        %1667 = vmatpush1.bf16.msra.mxu0 %v1332
        %1668 = vmatprep.subr.bf16.mxu0 %v1342
        %1669 = vmatpush1.bf16.msra.mxu0 %v1341
        %1670 = vmatprep.subr.bf16.mxu0 %v1351
        %1671 = vmatpush1.bf16.msra.mxu0 %v1350
        %1672 = vmatprep.subr.bf16.mxu0 %v1360
        %1673 = vmatpush1.bf16.msra.mxu0 %v1359
        %1674 = vmatprep.subr.bf16.mxu0 %v1369
        %1675 = vmatpush1.bf16.msra.mxu0 %v1368
        %1676 = vmatprep.subr.bf16.mxu0 %v1378
        %1677 = vmatpush1.bf16.msra.mxu0 %v1377
        %1678 = vmatprep.subr.bf16.mxu0 %v1387
        %1679 = vmatpush1.bf16.msra.mxu0 %v1386
        %1680 = vmatprep.subr.bf16.mxu0 0
        %1681 = vmatpush1.bf16.msra.mxu0 0
        %1682 = vmatprep.subr.bf16.mxu0 0
        %1683 = vmatpush1.bf16.msra.mxu0 0
        %1684 = vmatprep.subr.bf16.mxu0 0
        %1685 = vmatpush1.bf16.msra.mxu0 0
        %1686 = vmatprep.subr.bf16.mxu0 0
        %1687 = vmatpush1.bf16.msra.mxu0 0
        %1688 = vmatprep.subr.bf16.mxu0 0
        %1689 = vmatpush1.bf16.msra.mxu0 0
        %1690 = vmatprep.subr.bf16.mxu0 0
        %1691 = vmatpush1.bf16.msra.mxu0 0
        %1692 = vmatprep.subr.bf16.mxu0 0
        %1693 = vmatpush1.bf16.msra.mxu0 0
        %1694 = vmatprep.subr.bf16.mxu0 0
        %1695 = vmatpush1.bf16.msra.mxu0 0
        %1696 = vmatprep.mubr.bf16.mxu0 0
        %1697 = vmatmul.mubr.bf16.gmra.mrb[0].mxu0 %v263
        %v1698 = vpop.f32.mrb[0].mxu0
        %v1699 = vadd.f32 %v1646, %v1698
        %v1700 = vpop.f32.mrb[0].mxu0
        %v1701 = vadd.f32 %v1648, %v1700
        %v1702 = vpop.f32.mrb[0].mxu0
        %v1703 = vadd.f32 %v1650, %v1702
        %v1704 = vpop.f32.mrb[0].mxu0
        %v1705 = vadd.f32 %v1652, %v1704
        %1706 = vmatprep.mubr.bf16.mxu0 0
        %1707 = vmatmul.mubr.bf16.gmra.mrb[0].mxu0 %v266
        %v1708 = vpop.f32.mrb[0].mxu0
        %v1709 = vadd.f32 %v1656, %v1708
        %v1710 = vpop.f32.mrb[0].mxu0
        %v1711 = vadd.f32 %v1658, %v1710
        %v1712 = vpop.f32.mrb[0].mxu0
        %v1713 = vadd.f32 %v1660, %v1712
        %v1714 = vpop.f32.mrb[0].mxu0
        %v1715 = vadd.f32 %v1662, %v1714
        %1716 = vdwg.mxu0
        %1717 = vmatprep.subr.bf16.mxu0 %v1182
        %1718 = vmatpush1.bf16.msra.mxu0 %v1181
        %1719 = vmatprep.subr.bf16.mxu0 %v1191
        %1720 = vmatpush1.bf16.msra.mxu0 %v1190
        %1721 = vmatprep.subr.bf16.mxu0 %v1200
        %1722 = vmatpush1.bf16.msra.mxu0 %v1199
        %1723 = vmatprep.subr.bf16.mxu0 %v1209
        %1724 = vmatpush1.bf16.msra.mxu0 %v1208
        %1725 = vmatprep.subr.bf16.mxu0 %v1218
        %1726 = vmatpush1.bf16.msra.mxu0 %v1217
        %1727 = vmatprep.subr.bf16.mxu0 %v1227
        %1728 = vmatpush1.bf16.msra.mxu0 %v1226
        %1729 = vmatprep.subr.bf16.mxu0 %v1236
        %1730 = vmatpush1.bf16.msra.mxu0 %v1235
        %1731 = vmatprep.subr.bf16.mxu0 %v1245
        %1732 = vmatpush1.bf16.msra.mxu0 %v1244
        %1733 = vmatprep.subr.bf16.mxu0 %v1254
        %1734 = vmatpush1.bf16.msra.mxu0 %v1253
        %1735 = vmatprep.subr.bf16.mxu0 %v1263
        %1736 = vmatpush1.bf16.msra.mxu0 %v1262
        %1737 = vmatprep.subr.bf16.mxu0 %v1272
        %1738 = vmatpush1.bf16.msra.mxu0 %v1271
        %1739 = vmatprep.subr.bf16.mxu0 %v1281
        %1740 = vmatpush1.bf16.msra.mxu0 %v1280
        %1741 = vmatprep.subr.bf16.mxu0 %v1290
        %1742 = vmatpush1.bf16.msra.mxu0 %v1289
        %1743 = vmatprep.subr.bf16.mxu0 %v1299
        %1744 = vmatpush1.bf16.msra.mxu0 %v1298
        %1745 = vmatprep.subr.bf16.mxu0 %v1308
        %1746 = vmatpush1.bf16.msra.mxu0 %v1307
        %1747 = vmatprep.subr.bf16.mxu0 %v1317
        %1748 = vmatpush1.bf16.msra.mxu0 %v1316
        %1749 = vmatprep.mubr.bf16.mxu0 %v262
        %1750 = vmatmul.mubr.bf16.gmra.mrb[0].mxu0 %v261
        %v1751 = vpop.f32.mrb[0].mxu0
        %v1752 = vadd.f32 0.0, %v1751
        %v1753 = vpop.f32.mrb[0].mxu0
        %v1754 = vadd.f32 0.0, %v1753
        %v1755 = vpop.f32.mrb[0].mxu0
        %v1756 = vadd.f32 0.0, %v1755
        %v1757 = vpop.f32.mrb[0].mxu0
        %v1758 = vadd.f32 0.0, %v1757
        %1759 = vmatprep.mubr.bf16.mxu0 %v265
        %1760 = vmatmul.mubr.bf16.gmra.mrb[0].mxu0 %v264
        %v1761 = vpop.f32.mrb[0].mxu0
        %v1762 = vadd.f32 0.0, %v1761
        %v1763 = vpop.f32.mrb[0].mxu0
        %v1764 = vadd.f32 0.0, %v1763
        %v1765 = vpop.f32.mrb[0].mxu0
        %v1766 = vadd.f32 0.0, %v1765
        %v1767 = vpop.f32.mrb[0].mxu0
        %v1768 = vadd.f32 0.0, %v1767
        %1769 = vdwg.mxu0
        %1770 = vmatprep.subr.bf16.mxu0 %v1326
        %1771 = vmatpush1.bf16.msra.mxu0 %v1325
        %1772 = vmatprep.subr.bf16.mxu0 %v1335
        %1773 = vmatpush1.bf16.msra.mxu0 %v1334
        %1774 = vmatprep.subr.bf16.mxu0 %v1344
        %1775 = vmatpush1.bf16.msra.mxu0 %v1343
        %1776 = vmatprep.subr.bf16.mxu0 %v1353
        %1777 = vmatpush1.bf16.msra.mxu0 %v1352
        %1778 = vmatprep.subr.bf16.mxu0 %v1362
        %1779 = vmatpush1.bf16.msra.mxu0 %v1361
        %1780 = vmatprep.subr.bf16.mxu0 %v1371
        %1781 = vmatpush1.bf16.msra.mxu0 %v1370
        %1782 = vmatprep.subr.bf16.mxu0 %v1380
        %1783 = vmatpush1.bf16.msra.mxu0 %v1379
        %1784 = vmatprep.subr.bf16.mxu0 %v1389
        %1785 = vmatpush1.bf16.msra.mxu0 %v1388
        %1786 = vmatprep.subr.bf16.mxu0 0
        %1787 = vmatpush1.bf16.msra.mxu0 0
        %1788 = vmatprep.subr.bf16.mxu0 0
        %1789 = vmatpush1.bf16.msra.mxu0 0
        %1790 = vmatprep.subr.bf16.mxu0 0
        %1791 = vmatpush1.bf16.msra.mxu0 0
        %1792 = vmatprep.subr.bf16.mxu0 0
        %1793 = vmatpush1.bf16.msra.mxu0 0
        %1794 = vmatprep.subr.bf16.mxu0 0
        %1795 = vmatpush1.bf16.msra.mxu0 0
        %1796 = vmatprep.subr.bf16.mxu0 0
        %1797 = vmatpush1.bf16.msra.mxu0 0
        %1798 = vmatprep.subr.bf16.mxu0 0
        %1799 = vmatpush1.bf16.msra.mxu0 0
        %1800 = vmatprep.subr.bf16.mxu0 0
        %1801 = vmatpush1.bf16.msra.mxu0 0
        %1802 = vmatprep.mubr.bf16.mxu0 0
        %1803 = vmatmul.mubr.bf16.gmra.mrb[0].mxu0 %v263
        %v1804 = vpop.f32.mrb[0].mxu0
        %v1805 = vadd.f32 %v1752, %v1804
        %v1806 = vpop.f32.mrb[0].mxu0
        %v1807 = vadd.f32 %v1754, %v1806
        %v1808 = vpop.f32.mrb[0].mxu0
        %v1809 = vadd.f32 %v1756, %v1808
        %v1810 = vpop.f32.mrb[0].mxu0
        %v1811 = vadd.f32 %v1758, %v1810
        %1812 = vmatprep.mubr.bf16.mxu0 0
        %1813 = vmatmul.mubr.bf16.gmra.mrb[0].mxu0 %v266
        %v1814 = vpop.f32.mrb[0].mxu0
        %v1815 = vadd.f32 %v1762, %v1814
        %v1816 = vpop.f32.mrb[0].mxu0
        %v1817 = vadd.f32 %v1764, %v1816
        %v1818 = vpop.f32.mrb[0].mxu0
        %v1819 = vadd.f32 %v1766, %v1818
        %v1820 = vpop.f32.mrb[0].mxu0
        %v1821 = vadd.f32 %v1768, %v1820
        %1822 = vdwg.mxu0
        %1823 = vmatprep.subr.bf16.mxu0 %v1184
        %1824 = vmatpush1.bf16.msra.mxu0 %v1183
        %1825 = vmatprep.subr.bf16.mxu0 %v1193
        %1826 = vmatpush1.bf16.msra.mxu0 %v1192
        %1827 = vmatprep.subr.bf16.mxu0 %v1202
        %1828 = vmatpush1.bf16.msra.mxu0 %v1201
        %1829 = vmatprep.subr.bf16.mxu0 %v1211
        %1830 = vmatpush1.bf16.msra.mxu0 %v1210
        %1831 = vmatprep.subr.bf16.mxu0 %v1220
        %1832 = vmatpush1.bf16.msra.mxu0 %v1219
        %1833 = vmatprep.subr.bf16.mxu0 %v1229
        %1834 = vmatpush1.bf16.msra.mxu0 %v1228
        %1835 = vmatprep.subr.bf16.mxu0 %v1238
        %1836 = vmatpush1.bf16.msra.mxu0 %v1237
        %1837 = vmatprep.subr.bf16.mxu0 %v1247
        %1838 = vmatpush1.bf16.msra.mxu0 %v1246
        %1839 = vmatprep.subr.bf16.mxu0 %v1256
        %1840 = vmatpush1.bf16.msra.mxu0 %v1255
        %1841 = vmatprep.subr.bf16.mxu0 %v1265
        %1842 = vmatpush1.bf16.msra.mxu0 %v1264
        %1843 = vmatprep.subr.bf16.mxu0 %v1274
        %1844 = vmatpush1.bf16.msra.mxu0 %v1273
        %1845 = vmatprep.subr.bf16.mxu0 %v1283
        %1846 = vmatpush1.bf16.msra.mxu0 %v1282
        %1847 = vmatprep.subr.bf16.mxu0 %v1292
        %1848 = vmatpush1.bf16.msra.mxu0 %v1291
        %1849 = vmatprep.subr.bf16.mxu0 %v1301
        %1850 = vmatpush1.bf16.msra.mxu0 %v1300
        %1851 = vmatprep.subr.bf16.mxu0 %v1310
        %1852 = vmatpush1.bf16.msra.mxu0 %v1309
        %1853 = vmatprep.subr.bf16.mxu0 %v1319
        %1854 = vmatpush1.bf16.msra.mxu0 %v1318
        %1855 = vmatprep.mubr.bf16.mxu0 %v262
        %1856 = vmatmul.mubr.bf16.gmra.mrb[0].mxu0 %v261
        %v1857 = vpop.f32.mrb[0].mxu0
        %v1858 = vadd.f32 0.0, %v1857
        %v1859 = vpop.f32.mrb[0].mxu0
        %v1860 = vadd.f32 0.0, %v1859
        %v1861 = vpop.f32.mrb[0].mxu0
        %v1862 = vadd.f32 0.0, %v1861
        %v1863 = vpop.f32.mrb[0].mxu0
        %v1864 = vadd.f32 0.0, %v1863
        %1865 = vmatprep.mubr.bf16.mxu0 %v265
        %1866 = vmatmul.mubr.bf16.gmra.mrb[0].mxu0 %v264
        %v1867 = vpop.f32.mrb[0].mxu0
        %v1868 = vadd.f32 0.0, %v1867
        %v1869 = vpop.f32.mrb[0].mxu0
        %v1870 = vadd.f32 0.0, %v1869
        %v1871 = vpop.f32.mrb[0].mxu0
        %v1872 = vadd.f32 0.0, %v1871
        %v1873 = vpop.f32.mrb[0].mxu0
        %v1874 = vadd.f32 0.0, %v1873
        %1875 = vdwg.mxu0
        %1876 = vmatprep.subr.bf16.mxu0 %v1328
        %1877 = vmatpush1.bf16.msra.mxu0 %v1327
        %1878 = vmatprep.subr.bf16.mxu0 %v1337
        %1879 = vmatpush1.bf16.msra.mxu0 %v1336
        %1880 = vmatprep.subr.bf16.mxu0 %v1346
        %1881 = vmatpush1.bf16.msra.mxu0 %v1345
        %1882 = vmatprep.subr.bf16.mxu0 %v1355
        %1883 = vmatpush1.bf16.msra.mxu0 %v1354
        %1884 = vmatprep.subr.bf16.mxu0 %v1364
        %1885 = vmatpush1.bf16.msra.mxu0 %v1363
        %1886 = vmatprep.subr.bf16.mxu0 %v1373
        %1887 = vmatpush1.bf16.msra.mxu0 %v1372
        %1888 = vmatprep.subr.bf16.mxu0 %v1382
        %1889 = vmatpush1.bf16.msra.mxu0 %v1381
        %1890 = vmatprep.subr.bf16.mxu0 %v1391
        %1891 = vmatpush1.bf16.msra.mxu0 %v1390
        %1892 = vmatprep.subr.bf16.mxu0 0
        %1893 = vmatpush1.bf16.msra.mxu0 0
        %1894 = vmatprep.subr.bf16.mxu0 0
        %1895 = vmatpush1.bf16.msra.mxu0 0
        %1896 = vmatprep.subr.bf16.mxu0 0
        %1897 = vmatpush1.bf16.msra.mxu0 0
        %1898 = vmatprep.subr.bf16.mxu0 0
        %1899 = vmatpush1.bf16.msra.mxu0 0
        %1900 = vmatprep.subr.bf16.mxu0 0
        %1901 = vmatpush1.bf16.msra.mxu0 0
        %1902 = vmatprep.subr.bf16.mxu0 0
        %1903 = vmatpush1.bf16.msra.mxu0 0
        %1904 = vmatprep.subr.bf16.mxu0 0
        %1905 = vmatpush1.bf16.msra.mxu0 0
        %1906 = vmatprep.subr.bf16.mxu0 0
        %1907 = vmatpush1.bf16.msra.mxu0 0
        %1908 = vmatprep.mubr.bf16.mxu0 0
        %1909 = vmatmul.mubr.bf16.gmra.mrb[0].mxu0 %v263
        %v1910 = vpop.f32.mrb[0].mxu0
        %v1911 = vadd.f32 %v1858, %v1910
        %v1912 = vpop.f32.mrb[0].mxu0
        %v1913 = vadd.f32 %v1860, %v1912
        %v1914 = vpop.f32.mrb[0].mxu0
        %v1915 = vadd.f32 %v1862, %v1914
        %v1916 = vpop.f32.mrb[0].mxu0
        %v1917 = vadd.f32 %v1864, %v1916
        %1918 = vmatprep.mubr.bf16.mxu0 0
        %1919 = vmatmul.mubr.bf16.gmra.mrb[0].mxu0 %v266
        %v1920 = vpop.f32.mrb[0].mxu0
        %v1921 = vadd.f32 %v1868, %v1920
        %v1922 = vpop.f32.mrb[0].mxu0
        %v1923 = vadd.f32 %v1870, %v1922
        %v1924 = vpop.f32.mrb[0].mxu0
        %v1925 = vadd.f32 %v1872, %v1924
        %v1926 = vpop.f32.mrb[0].mxu0
        %v1927 = vadd.f32 %v1874, %v1926
        %1928 = vdwg.mxu0
        %1929 = vmatprep.subr.bf16.mxu0 %v1186
        %1930 = vmatpush1.bf16.msra.mxu0 %v1185
        %1931 = vmatprep.subr.bf16.mxu0 %v1195
        %1932 = vmatpush1.bf16.msra.mxu0 %v1194
        %1933 = vmatprep.subr.bf16.mxu0 %v1204
        %1934 = vmatpush1.bf16.msra.mxu0 %v1203
        %1935 = vmatprep.subr.bf16.mxu0 %v1213
        %1936 = vmatpush1.bf16.msra.mxu0 %v1212
        %1937 = vmatprep.subr.bf16.mxu0 %v1222
        %1938 = vmatpush1.bf16.msra.mxu0 %v1221
        %1939 = vmatprep.subr.bf16.mxu0 %v1231
        %1940 = vmatpush1.bf16.msra.mxu0 %v1230
        %1941 = vmatprep.subr.bf16.mxu0 %v1240
        %1942 = vmatpush1.bf16.msra.mxu0 %v1239
        %1943 = vmatprep.subr.bf16.mxu0 %v1249
        %1944 = vmatpush1.bf16.msra.mxu0 %v1248
        %1945 = vmatprep.subr.bf16.mxu0 %v1258
        %1946 = vmatpush1.bf16.msra.mxu0 %v1257
        %1947 = vmatprep.subr.bf16.mxu0 %v1267
        %1948 = vmatpush1.bf16.msra.mxu0 %v1266
        %1949 = vmatprep.subr.bf16.mxu0 %v1276
        %1950 = vmatpush1.bf16.msra.mxu0 %v1275
        %1951 = vmatprep.subr.bf16.mxu0 %v1285
        %1952 = vmatpush1.bf16.msra.mxu0 %v1284
        %1953 = vmatprep.subr.bf16.mxu0 %v1294
        %1954 = vmatpush1.bf16.msra.mxu0 %v1293
        %1955 = vmatprep.subr.bf16.mxu0 %v1303
        %1956 = vmatpush1.bf16.msra.mxu0 %v1302
        %1957 = vmatprep.subr.bf16.mxu0 %v1312
        %1958 = vmatpush1.bf16.msra.mxu0 %v1311
        %1959 = vmatprep.subr.bf16.mxu0 %v1321
        %1960 = vmatpush1.bf16.msra.mxu0 %v1320
        %1961 = vmatprep.mubr.bf16.mxu0 %v262
        %1962 = vmatmul.mubr.bf16.gmra.mrb[0].mxu0 %v261
        %v1963 = vpop.f32.mrb[0].mxu0
        %v1964 = vadd.f32 0.0, %v1963
        %v1965 = vpop.f32.mrb[0].mxu0
        %v1966 = vadd.f32 0.0, %v1965
        %v1967 = vpop.f32.mrb[0].mxu0
        %v1968 = vadd.f32 0.0, %v1967
        %v1969 = vpop.f32.mrb[0].mxu0
        %v1970 = vadd.f32 0.0, %v1969
        %1971 = vmatprep.mubr.bf16.mxu0 %v265
        %1972 = vmatmul.mubr.bf16.gmra.mrb[0].mxu0 %v264
        %v1973 = vpop.f32.mrb[0].mxu0
        %v1974 = vadd.f32 0.0, %v1973
        %v1975 = vpop.f32.mrb[0].mxu0
        %v1976 = vadd.f32 0.0, %v1975
        %v1977 = vpop.f32.mrb[0].mxu0
        %v1978 = vadd.f32 0.0, %v1977
        %v1979 = vpop.f32.mrb[0].mxu0
        %v1980 = vadd.f32 0.0, %v1979
        %1981 = vdwg.mxu0
        %1982 = vmatprep.subr.bf16.mxu0 %v1330
        %1983 = vmatpush1.bf16.msra.mxu0 %v1329
        %1984 = vmatprep.subr.bf16.mxu0 %v1339
        %1985 = vmatpush1.bf16.msra.mxu0 %v1338
        %1986 = vmatprep.subr.bf16.mxu0 %v1348
        %1987 = vmatpush1.bf16.msra.mxu0 %v1347
        %1988 = vmatprep.subr.bf16.mxu0 %v1357
        %1989 = vmatpush1.bf16.msra.mxu0 %v1356
        %1990 = vmatprep.subr.bf16.mxu0 %v1366
        %1991 = vmatpush1.bf16.msra.mxu0 %v1365
        %1992 = vmatprep.subr.bf16.mxu0 %v1375
        %1993 = vmatpush1.bf16.msra.mxu0 %v1374
        %1994 = vmatprep.subr.bf16.mxu0 %v1384
        %1995 = vmatpush1.bf16.msra.mxu0 %v1383
        %1996 = vmatprep.subr.bf16.mxu0 %v1393
        %1997 = vmatpush1.bf16.msra.mxu0 %v1392
        %1998 = vmatprep.subr.bf16.mxu0 0
        %1999 = vmatpush1.bf16.msra.mxu0 0
        %2000 = vmatprep.subr.bf16.mxu0 0
        %2001 = vmatpush1.bf16.msra.mxu0 0
        %2002 = vmatprep.subr.bf16.mxu0 0
        %2003 = vmatpush1.bf16.msra.mxu0 0
        %2004 = vmatprep.subr.bf16.mxu0 0
        %2005 = vmatpush1.bf16.msra.mxu0 0
        %2006 = vmatprep.subr.bf16.mxu0 0
        %2007 = vmatpush1.bf16.msra.mxu0 0
        %2008 = vmatprep.subr.bf16.mxu0 0
        %2009 = vmatpush1.bf16.msra.mxu0 0
        %2010 = vmatprep.subr.bf16.mxu0 0
        %2011 = vmatpush1.bf16.msra.mxu0 0
        %2012 = vmatprep.subr.bf16.mxu0 0
        %2013 = vmatpush1.bf16.msra.mxu0 0
        %2014 = vmatprep.mubr.bf16.mxu0 0
        %2015 = vmatmul.mubr.bf16.gmra.mrb[0].mxu0 %v263
        %v2016 = vpop.f32.mrb[0].mxu0
        %v2017 = vadd.f32 %v1964, %v2016
        %v2018 = vpop.f32.mrb[0].mxu0
        %v2019 = vadd.f32 %v1966, %v2018
        %v2020 = vpop.f32.mrb[0].mxu0
        %v2021 = vadd.f32 %v1968, %v2020
        %v2022 = vpop.f32.mrb[0].mxu0
        %v2023 = vadd.f32 %v1970, %v2022
        %2024 = vmatprep.mubr.bf16.mxu0 0
        %2025 = vmatmul.mubr.bf16.gmra.mrb[0].mxu0 %v266
        %v2026 = vpop.f32.mrb[0].mxu0
        %v2027 = vadd.f32 %v1974, %v2026
        %v2028 = vpop.f32.mrb[0].mxu0
        %v2029 = vadd.f32 %v1976, %v2028
        %v2030 = vpop.f32.mrb[0].mxu0
        %v2031 = vadd.f32 %v1978, %v2030
        %v2032 = vpop.f32.mrb[0].mxu0
        %v2033 = vadd.f32 %v1980, %v2032
        %2034 = vdwg.mxu0
        %2035 = vmatprep.subr.bf16.mxu0 0
        %2036 = vmatpush1.bf16.msra.mxu0 %v1187
        %2037 = vmatprep.subr.bf16.mxu0 0
        %2038 = vmatpush1.bf16.msra.mxu0 %v1196
        %2039 = vmatprep.subr.bf16.mxu0 0
        %2040 = vmatpush1.bf16.msra.mxu0 %v1205
        %2041 = vmatprep.subr.bf16.mxu0 0
        %2042 = vmatpush1.bf16.msra.mxu0 %v1214
        %2043 = vmatprep.subr.bf16.mxu0 0
        %2044 = vmatpush1.bf16.msra.mxu0 %v1223
        %2045 = vmatprep.subr.bf16.mxu0 0
        %2046 = vmatpush1.bf16.msra.mxu0 %v1232
        %2047 = vmatprep.subr.bf16.mxu0 0
        %2048 = vmatpush1.bf16.msra.mxu0 %v1241
        %2049 = vmatprep.subr.bf16.mxu0 0
        %2050 = vmatpush1.bf16.msra.mxu0 %v1250
        %2051 = vmatprep.subr.bf16.mxu0 0
        %2052 = vmatpush1.bf16.msra.mxu0 %v1259
        %2053 = vmatprep.subr.bf16.mxu0 0
        %2054 = vmatpush1.bf16.msra.mxu0 %v1268
        %2055 = vmatprep.subr.bf16.mxu0 0
        %2056 = vmatpush1.bf16.msra.mxu0 %v1277
        %2057 = vmatprep.subr.bf16.mxu0 0
        %2058 = vmatpush1.bf16.msra.mxu0 %v1286
        %2059 = vmatprep.subr.bf16.mxu0 0
        %2060 = vmatpush1.bf16.msra.mxu0 %v1295
        %2061 = vmatprep.subr.bf16.mxu0 0
        %2062 = vmatpush1.bf16.msra.mxu0 %v1304
        %2063 = vmatprep.subr.bf16.mxu0 0
        %2064 = vmatpush1.bf16.msra.mxu0 %v1313
        %2065 = vmatprep.subr.bf16.mxu0 0
        %2066 = vmatpush1.bf16.msra.mxu0 %v1322
        %2067 = vmatprep.mubr.bf16.mxu0 %v262
        %2068 = vmatmul.mubr.bf16.gmra.mrb[0].mxu0 %v261
        %v2069 = vpop.f32.mrb[0].mxu0
        %v2070 = vadd.f32 0.0, %v2069
        %v2071 = vpop.f32.mrb[0].mxu0
        %v2072 = vpop.f32.mrb[0].mxu0
        %v2073 = vadd.f32 0.0, %v2072
        %v2074 = vpop.f32.mrb[0].mxu0
        %2075 = vmatprep.mubr.bf16.mxu0 %v265
        %2076 = vmatmul.mubr.bf16.gmra.mrb[0].mxu0 %v264
        %v2077 = vpop.f32.mrb[0].mxu0
        %v2078 = vadd.f32 0.0, %v2077
        %v2079 = vpop.f32.mrb[0].mxu0
        %v2080 = vpop.f32.mrb[0].mxu0
        %v2081 = vadd.f32 0.0, %v2080
        %v2082 = vpop.f32.mrb[0].mxu0
        %2083 = vdwg.mxu0
        %2084 = vmatprep.subr.bf16.mxu0 0
        %2085 = vmatpush1.bf16.msra.mxu0 %v1331
        %2086 = vmatprep.subr.bf16.mxu0 0
        %2087 = vmatpush1.bf16.msra.mxu0 %v1340
        %2088 = vmatprep.subr.bf16.mxu0 0
        %2089 = vmatpush1.bf16.msra.mxu0 %v1349
        %2090 = vmatprep.subr.bf16.mxu0 0
        %2091 = vmatpush1.bf16.msra.mxu0 %v1358
        %2092 = vmatprep.subr.bf16.mxu0 0
        %2093 = vmatpush1.bf16.msra.mxu0 %v1367
        %2094 = vmatprep.subr.bf16.mxu0 0
        %2095 = vmatpush1.bf16.msra.mxu0 %v1376
        %2096 = vmatprep.subr.bf16.mxu0 0
        %2097 = vmatpush1.bf16.msra.mxu0 %v1385
        %2098 = vmatprep.subr.bf16.mxu0 0
        %2099 = vmatpush1.bf16.msra.mxu0 %v1394
        %2100 = vmatprep.subr.bf16.mxu0 0
        %2101 = vmatpush1.bf16.msra.mxu0 0
        %2102 = vmatprep.subr.bf16.mxu0 0
        %2103 = vmatpush1.bf16.msra.mxu0 0
        %2104 = vmatprep.subr.bf16.mxu0 0
        %2105 = vmatpush1.bf16.msra.mxu0 0
        %2106 = vmatprep.subr.bf16.mxu0 0
        %2107 = vmatpush1.bf16.msra.mxu0 0
        %2108 = vmatprep.subr.bf16.mxu0 0
        %2109 = vmatpush1.bf16.msra.mxu0 0
        %2110 = vmatprep.subr.bf16.mxu0 0
        %2111 = vmatpush1.bf16.msra.mxu0 0
        %2112 = vmatprep.subr.bf16.mxu0 0
        %2113 = vmatpush1.bf16.msra.mxu0 0
        %2114 = vmatprep.subr.bf16.mxu0 0
        %2115 = vmatpush1.bf16.msra.mxu0 0
        %2116 = vmatprep.mubr.bf16.mxu0 0
        %2117 = vmatmul.mubr.bf16.gmra.mrb[0].mxu0 %v263
        %v2118 = vpop.f32.mrb[0].mxu0
        %v2119 = vadd.f32 %v2070, %v2118
        %v2120 = vpop.f32.mrb[0].mxu0
        %v2121 = vpop.f32.mrb[0].mxu0
        %v2122 = vadd.f32 %v2073, %v2121
        %v2123 = vpop.f32.mrb[0].mxu0
        %2124 = vmatprep.mubr.bf16.mxu0 0
        %2125 = vmatmul.mubr.bf16.gmra.mrb[0].mxu0 %v266
        %v2126 = vpop.f32.mrb[0].mxu0
        %v2127 = vadd.f32 %v2078, %v2126
        %v2128 = vpop.f32.mrb[0].mxu0
        %v2129 = vpop.f32.mrb[0].mxu0
        %v2130 = vadd.f32 %v2081, %v2129
        %v2131 = vpop.f32.mrb[0].mxu0
        %2132 = vdwg.mxu0
        %2137 = vrot.lane.b32.xlu0 %v1699, 64
        %v2138 = vpop.permute.xlu0 %2137
        %2139 = vrot.lane.b32.xlu0 %v1703, 64
        %v2140 = vpop.permute.xlu0 %2139
        %2141 = vrot.lane.b32.xlu0 %v1709, 64
        %v2142 = vpop.permute.xlu0 %2141
        %2143 = vrot.lane.b32.xlu0 %v1713, 64
        %v2144 = vpop.permute.xlu0 %2143
        %2153 = vrot.lane.b32.xlu0 %v1701, 64
        %v2154 = vpop.permute.xlu0 %2153
        %2155 = vrot.lane.b32.xlu0 %v1705, 64
        %v2156 = vpop.permute.xlu0 %2155
        %2157 = vrot.lane.b32.xlu0 %v1711, 64
        %v2158 = vpop.permute.xlu0 %2157
        %2159 = vrot.lane.b32.xlu0 %v1715, 64
        %v2160 = vpop.permute.xlu0 %2159
        %2169 = vrot.lane.b32.xlu0 %v1805, 64
        %v2170 = vpop.permute.xlu0 %2169
        %2171 = vrot.lane.b32.xlu0 %v1809, 64
        %v2172 = vpop.permute.xlu0 %2171
        %2173 = vrot.lane.b32.xlu0 %v1815, 64
        %v2174 = vpop.permute.xlu0 %2173
        %2175 = vrot.lane.b32.xlu0 %v1819, 64
        %v2176 = vpop.permute.xlu0 %2175
        %v2181 = vcombine.low %v1699, %v1701
        %v2182 = vcombine.high %v1699, %v1701
        %v2184 = vunpack.c.l.s4 1983009808
        %v2185 = vunpack.c.0.s8 %v2184
        %v2186 = vlaneseq
        %v2187 = vshrl.u32 %v2186, 7
        %v2188 = vsub.s32 %v2185, %v2187
        %v2189 = vrot.slane %v2181, %v2188
        %v2191 = vunpack.c.l.s4 1983009808
        %v2192 = vunpack.c.0.s8 %v2191
        %v2193 = vlaneseq
        %v2194 = vshrl.u32 %v2193, 7
        %v2195 = vsub.s32 %v2192, %v2194
        %v2196 = vrot.slane %v2182, %v2195
        %v2197 = vcombine.low %v2138, %v2154
        %v2198 = vcombine.high %v2138, %v2154
        %v2200 = vunpack.c.l.s4 1983009808
        %v2201 = vunpack.c.0.s8 %v2200
        %v2202 = vlaneseq
        %v2203 = vshrl.u32 %v2202, 7
        %v2204 = vsub.s32 %v2201, %v2203
        %v2205 = vrot.slane %v2197, %v2204
        %v2207 = vunpack.c.l.s4 1983009808
        %v2208 = vunpack.c.0.s8 %v2207
        %v2209 = vlaneseq
        %v2210 = vshrl.u32 %v2209, 7
        %v2211 = vsub.s32 %v2208, %v2210
        %v2212 = vrot.slane %v2198, %v2211
        %v2213 = vcombine.high %v1805, 0.0
        %v2215 = vunpack.c.l.s4 1983009808
        %v2216 = vunpack.c.0.s8 %v2215
        %v2217 = vlaneseq
        %v2218 = vshrl.u32 %v2217, 7
        %v2219 = vsub.s32 %v2216, %v2218
        %v2220 = vrot.slane %v1805, %v2219
        %v2222 = vunpack.c.l.s4 1983009808
        %v2223 = vunpack.c.0.s8 %v2222
        %v2224 = vlaneseq
        %v2225 = vshrl.u32 %v2224, 7
        %v2226 = vsub.s32 %v2223, %v2225
        %v2227 = vrot.slane %v2213, %v2226
        %v2228 = vcombine.high %v2170, 0.0
        %v2230 = vunpack.c.l.s4 1983009808
        %v2231 = vunpack.c.0.s8 %v2230
        %v2232 = vlaneseq
        %v2233 = vshrl.u32 %v2232, 7
        %v2234 = vsub.s32 %v2231, %v2233
        %v2235 = vrot.slane %v2170, %v2234
        %v2237 = vunpack.c.l.s4 1983009808
        %v2238 = vunpack.c.0.s8 %v2237
        %v2239 = vlaneseq
        %v2240 = vshrl.u32 %v2239, 7
        %v2241 = vsub.s32 %v2238, %v2240
        %v2242 = vrot.slane %v2228, %v2241
        %v2243 = vcombine.low %v2189, %v2205
        %v2244 = vcombine.high %v2189, %v2205
        %v2246 = vunpack.c.l.s4 1934713408
        %v2247 = vunpack.c.0.s8 %v2246
        %v2248 = vlaneseq
        %v2249 = vshrl.u32 %v2248, 7
        %v2250 = vsub.s32 %v2247, %v2249
        %v2251 = vrot.slane %v2243, %v2250
        %v2253 = vunpack.c.l.s4 1934713408
        %v2254 = vunpack.c.0.s8 %v2253
        %v2255 = vlaneseq
        %v2256 = vshrl.u32 %v2255, 7
        %v2257 = vsub.s32 %v2254, %v2256
        %v2258 = vrot.slane %v2244, %v2257
        %v2259 = vcombine.low %v2196, %v2212
        %v2260 = vcombine.high %v2196, %v2212
        %v2262 = vunpack.c.l.s4 1934713408
        %v2263 = vunpack.c.0.s8 %v2262
        %v2264 = vlaneseq
        %v2265 = vshrl.u32 %v2264, 7
        %v2266 = vsub.s32 %v2263, %v2265
        %v2267 = vrot.slane %v2259, %v2266
        %v2269 = vunpack.c.l.s4 1934713408
        %v2270 = vunpack.c.0.s8 %v2269
        %v2271 = vlaneseq
        %v2272 = vshrl.u32 %v2271, 7
        %v2273 = vsub.s32 %v2270, %v2272
        %v2274 = vrot.slane %v2260, %v2273
        %v2275 = vcombine.low %v2220, %v2235
        %v2276 = vcombine.high %v2220, %v2235
        %v2278 = vunpack.c.l.s4 1934713408
        %v2279 = vunpack.c.0.s8 %v2278
        %v2280 = vlaneseq
        %v2281 = vshrl.u32 %v2280, 7
        %v2282 = vsub.s32 %v2279, %v2281
        %v2283 = vrot.slane %v2275, %v2282
        %v2285 = vunpack.c.l.s4 1934713408
        %v2286 = vunpack.c.0.s8 %v2285
        %v2287 = vlaneseq
        %v2288 = vshrl.u32 %v2287, 7
        %v2289 = vsub.s32 %v2286, %v2288
        %v2290 = vrot.slane %v2276, %v2289
        %v2291 = vcombine.low %v2227, %v2242
        %v2292 = vcombine.high %v2227, %v2242
        %v2294 = vunpack.c.l.s4 1934713408
        %v2295 = vunpack.c.0.s8 %v2294
        %v2296 = vlaneseq
        %v2297 = vshrl.u32 %v2296, 7
        %v2298 = vsub.s32 %v2295, %v2297
        %v2299 = vrot.slane %v2291, %v2298
        %v2301 = vunpack.c.l.s4 1934713408
        %v2302 = vunpack.c.0.s8 %v2301
        %v2303 = vlaneseq
        %v2304 = vshrl.u32 %v2303, 7
        %v2305 = vsub.s32 %v2302, %v2304
        %v2306 = vrot.slane %v2292, %v2305
        %v2307 = vcombine.low %v2251, %v2283
        %v2308 = vcombine.high %v2251, %v2283
        %v2309 = vcombine.low %v2258, %v2290
        %v2310 = vcombine.high %v2258, %v2290
        %v2311 = vcombine.low %v2267, %v2299
        %v2312 = vcombine.high %v2267, %v2299
        %v2313 = vcombine.low %v2274, %v2306
        %v2314 = vcombine.high %v2274, %v2306
        %v2315 = vcombine.low %v1703, %v1705
        %v2316 = vcombine.high %v1703, %v1705
        %v2318 = vunpack.c.l.s4 1983009808
        %v2319 = vunpack.c.0.s8 %v2318
        %v2320 = vlaneseq
        %v2321 = vshrl.u32 %v2320, 7
        %v2322 = vsub.s32 %v2319, %v2321
        %v2323 = vrot.slane %v2315, %v2322
        %v2325 = vunpack.c.l.s4 1983009808
        %v2326 = vunpack.c.0.s8 %v2325
        %v2327 = vlaneseq
        %v2328 = vshrl.u32 %v2327, 7
        %v2329 = vsub.s32 %v2326, %v2328
        %v2330 = vrot.slane %v2316, %v2329
        %v2331 = vcombine.low %v2140, %v2156
        %v2332 = vcombine.high %v2140, %v2156
        %v2334 = vunpack.c.l.s4 1983009808
        %v2335 = vunpack.c.0.s8 %v2334
        %v2336 = vlaneseq
        %v2337 = vshrl.u32 %v2336, 7
        %v2338 = vsub.s32 %v2335, %v2337
        %v2339 = vrot.slane %v2331, %v2338
        %v2341 = vunpack.c.l.s4 1983009808
        %v2342 = vunpack.c.0.s8 %v2341
        %v2343 = vlaneseq
        %v2344 = vshrl.u32 %v2343, 7
        %v2345 = vsub.s32 %v2342, %v2344
        %v2346 = vrot.slane %v2332, %v2345
        %v2347 = vcombine.high %v1809, 0.0
        %v2349 = vunpack.c.l.s4 1983009808
        %v2350 = vunpack.c.0.s8 %v2349
        %v2351 = vlaneseq
        %v2352 = vshrl.u32 %v2351, 7
        %v2353 = vsub.s32 %v2350, %v2352
        %v2354 = vrot.slane %v1809, %v2353
        %v2356 = vunpack.c.l.s4 1983009808
        %v2357 = vunpack.c.0.s8 %v2356
        %v2358 = vlaneseq
        %v2359 = vshrl.u32 %v2358, 7
        %v2360 = vsub.s32 %v2357, %v2359
        %v2361 = vrot.slane %v2347, %v2360
        %v2362 = vcombine.high %v2172, 0.0
        %v2364 = vunpack.c.l.s4 1983009808
        %v2365 = vunpack.c.0.s8 %v2364
        %v2366 = vlaneseq
        %v2367 = vshrl.u32 %v2366, 7
        %v2368 = vsub.s32 %v2365, %v2367
        %v2369 = vrot.slane %v2172, %v2368
        %v2371 = vunpack.c.l.s4 1983009808
        %v2372 = vunpack.c.0.s8 %v2371
        %v2373 = vlaneseq
        %v2374 = vshrl.u32 %v2373, 7
        %v2375 = vsub.s32 %v2372, %v2374
        %v2376 = vrot.slane %v2362, %v2375
        %v2377 = vcombine.low %v2323, %v2339
        %v2378 = vcombine.high %v2323, %v2339
        %v2380 = vunpack.c.l.s4 1934713408
        %v2381 = vunpack.c.0.s8 %v2380
        %v2382 = vlaneseq
        %v2383 = vshrl.u32 %v2382, 7
        %v2384 = vsub.s32 %v2381, %v2383
        %v2385 = vrot.slane %v2377, %v2384
        %v2387 = vunpack.c.l.s4 1934713408
        %v2388 = vunpack.c.0.s8 %v2387
        %v2389 = vlaneseq
        %v2390 = vshrl.u32 %v2389, 7
        %v2391 = vsub.s32 %v2388, %v2390
        %v2392 = vrot.slane %v2378, %v2391
        %v2393 = vcombine.low %v2330, %v2346
        %v2394 = vcombine.high %v2330, %v2346
        %v2396 = vunpack.c.l.s4 1934713408
        %v2397 = vunpack.c.0.s8 %v2396
        %v2398 = vlaneseq
        %v2399 = vshrl.u32 %v2398, 7
        %v2400 = vsub.s32 %v2397, %v2399
        %v2401 = vrot.slane %v2393, %v2400
        %v2403 = vunpack.c.l.s4 1934713408
        %v2404 = vunpack.c.0.s8 %v2403
        %v2405 = vlaneseq
        %v2406 = vshrl.u32 %v2405, 7
        %v2407 = vsub.s32 %v2404, %v2406
        %v2408 = vrot.slane %v2394, %v2407
        %v2409 = vcombine.low %v2354, %v2369
        %v2410 = vcombine.high %v2354, %v2369
        %v2412 = vunpack.c.l.s4 1934713408
        %v2413 = vunpack.c.0.s8 %v2412
        %v2414 = vlaneseq
        %v2415 = vshrl.u32 %v2414, 7
        %v2416 = vsub.s32 %v2413, %v2415
        %v2417 = vrot.slane %v2409, %v2416
        %v2419 = vunpack.c.l.s4 1934713408
        %v2420 = vunpack.c.0.s8 %v2419
        %v2421 = vlaneseq
        %v2422 = vshrl.u32 %v2421, 7
        %v2423 = vsub.s32 %v2420, %v2422
        %v2424 = vrot.slane %v2410, %v2423
        %v2425 = vcombine.low %v2361, %v2376
        %v2426 = vcombine.high %v2361, %v2376
        %v2428 = vunpack.c.l.s4 1934713408
        %v2429 = vunpack.c.0.s8 %v2428
        %v2430 = vlaneseq
        %v2431 = vshrl.u32 %v2430, 7
        %v2432 = vsub.s32 %v2429, %v2431
        %v2433 = vrot.slane %v2425, %v2432
        %v2435 = vunpack.c.l.s4 1934713408
        %v2436 = vunpack.c.0.s8 %v2435
        %v2437 = vlaneseq
        %v2438 = vshrl.u32 %v2437, 7
        %v2439 = vsub.s32 %v2436, %v2438
        %v2440 = vrot.slane %v2426, %v2439
        %v2441 = vcombine.low %v2385, %v2417
        %v2442 = vcombine.high %v2385, %v2417
        %v2443 = vcombine.low %v2392, %v2424
        %v2444 = vcombine.high %v2392, %v2424
        %v2445 = vcombine.low %v2401, %v2433
        %v2446 = vcombine.high %v2401, %v2433
        %v2447 = vcombine.low %v2408, %v2440
        %v2448 = vcombine.high %v2408, %v2440
        %v2449 = vcombine.low %v1709, %v1711
        %v2450 = vcombine.high %v1709, %v1711
        %v2452 = vunpack.c.l.s4 1983009808
        %v2453 = vunpack.c.0.s8 %v2452
        %v2454 = vlaneseq
        %v2455 = vshrl.u32 %v2454, 7
        %v2456 = vsub.s32 %v2453, %v2455
        %v2457 = vrot.slane %v2449, %v2456
        %v2459 = vunpack.c.l.s4 1983009808
        %v2460 = vunpack.c.0.s8 %v2459
        %v2461 = vlaneseq
        %v2462 = vshrl.u32 %v2461, 7
        %v2463 = vsub.s32 %v2460, %v2462
        %v2464 = vrot.slane %v2450, %v2463
        %v2465 = vcombine.low %v2142, %v2158
        %v2466 = vcombine.high %v2142, %v2158
        %v2468 = vunpack.c.l.s4 1983009808
        %v2469 = vunpack.c.0.s8 %v2468
        %v2470 = vlaneseq
        %v2471 = vshrl.u32 %v2470, 7
        %v2472 = vsub.s32 %v2469, %v2471
        %v2473 = vrot.slane %v2465, %v2472
        %v2475 = vunpack.c.l.s4 1983009808
        %v2476 = vunpack.c.0.s8 %v2475
        %v2477 = vlaneseq
        %v2478 = vshrl.u32 %v2477, 7
        %v2479 = vsub.s32 %v2476, %v2478
        %v2480 = vrot.slane %v2466, %v2479
        %v2481 = vcombine.high %v1815, 0.0
        %v2483 = vunpack.c.l.s4 1983009808
        %v2484 = vunpack.c.0.s8 %v2483
        %v2485 = vlaneseq
        %v2486 = vshrl.u32 %v2485, 7
        %v2487 = vsub.s32 %v2484, %v2486
        %v2488 = vrot.slane %v1815, %v2487
        %v2490 = vunpack.c.l.s4 1983009808
        %v2491 = vunpack.c.0.s8 %v2490
        %v2492 = vlaneseq
        %v2493 = vshrl.u32 %v2492, 7
        %v2494 = vsub.s32 %v2491, %v2493
        %v2495 = vrot.slane %v2481, %v2494
        %v2496 = vcombine.high %v2174, 0.0
        %v2498 = vunpack.c.l.s4 1983009808
        %v2499 = vunpack.c.0.s8 %v2498
        %v2500 = vlaneseq
        %v2501 = vshrl.u32 %v2500, 7
        %v2502 = vsub.s32 %v2499, %v2501
        %v2503 = vrot.slane %v2174, %v2502
        %v2505 = vunpack.c.l.s4 1983009808
        %v2506 = vunpack.c.0.s8 %v2505
        %v2507 = vlaneseq
        %v2508 = vshrl.u32 %v2507, 7
        %v2509 = vsub.s32 %v2506, %v2508
        %v2510 = vrot.slane %v2496, %v2509
        %v2511 = vcombine.low %v2457, %v2473
        %v2512 = vcombine.high %v2457, %v2473
        %v2514 = vunpack.c.l.s4 1934713408
        %v2515 = vunpack.c.0.s8 %v2514
        %v2516 = vlaneseq
        %v2517 = vshrl.u32 %v2516, 7
        %v2518 = vsub.s32 %v2515, %v2517
        %v2519 = vrot.slane %v2511, %v2518
        %v2521 = vunpack.c.l.s4 1934713408
        %v2522 = vunpack.c.0.s8 %v2521
        %v2523 = vlaneseq
        %v2524 = vshrl.u32 %v2523, 7
        %v2525 = vsub.s32 %v2522, %v2524
        %v2526 = vrot.slane %v2512, %v2525
        %v2527 = vcombine.low %v2464, %v2480
        %v2528 = vcombine.high %v2464, %v2480
        %v2530 = vunpack.c.l.s4 1934713408
        %v2531 = vunpack.c.0.s8 %v2530
        %v2532 = vlaneseq
        %v2533 = vshrl.u32 %v2532, 7
        %v2534 = vsub.s32 %v2531, %v2533
        %v2535 = vrot.slane %v2527, %v2534
        %v2537 = vunpack.c.l.s4 1934713408
        %v2538 = vunpack.c.0.s8 %v2537
        %v2539 = vlaneseq
        %v2540 = vshrl.u32 %v2539, 7
        %v2541 = vsub.s32 %v2538, %v2540
        %v2542 = vrot.slane %v2528, %v2541
        %v2543 = vcombine.low %v2488, %v2503
        %v2544 = vcombine.high %v2488, %v2503
        %v2546 = vunpack.c.l.s4 1934713408
        %v2547 = vunpack.c.0.s8 %v2546
        %v2548 = vlaneseq
        %v2549 = vshrl.u32 %v2548, 7
        %v2550 = vsub.s32 %v2547, %v2549
        %v2551 = vrot.slane %v2543, %v2550
        %v2553 = vunpack.c.l.s4 1934713408
        %v2554 = vunpack.c.0.s8 %v2553
        %v2555 = vlaneseq
        %v2556 = vshrl.u32 %v2555, 7
        %v2557 = vsub.s32 %v2554, %v2556
        %v2558 = vrot.slane %v2544, %v2557
        %v2559 = vcombine.low %v2495, %v2510
        %v2560 = vcombine.high %v2495, %v2510
        %v2562 = vunpack.c.l.s4 1934713408
        %v2563 = vunpack.c.0.s8 %v2562
        %v2564 = vlaneseq
        %v2565 = vshrl.u32 %v2564, 7
        %v2566 = vsub.s32 %v2563, %v2565
        %v2567 = vrot.slane %v2559, %v2566
        %v2569 = vunpack.c.l.s4 1934713408
        %v2570 = vunpack.c.0.s8 %v2569
        %v2571 = vlaneseq
        %v2572 = vshrl.u32 %v2571, 7
        %v2573 = vsub.s32 %v2570, %v2572
        %v2574 = vrot.slane %v2560, %v2573
        %v2575 = vcombine.low %v2519, %v2551
        %v2576 = vcombine.high %v2519, %v2551
        %v2577 = vcombine.low %v2526, %v2558
        %v2578 = vcombine.high %v2526, %v2558
        %v2579 = vcombine.low %v2535, %v2567
        %v2580 = vcombine.high %v2535, %v2567
        %v2581 = vcombine.low %v2542, %v2574
        %v2582 = vcombine.high %v2542, %v2574
        %v2583 = vcombine.low %v1713, %v1715
        %v2584 = vcombine.high %v1713, %v1715
        %v2586 = vunpack.c.l.s4 1983009808
        %v2587 = vunpack.c.0.s8 %v2586
        %v2588 = vlaneseq
        %v2589 = vshrl.u32 %v2588, 7
        %v2590 = vsub.s32 %v2587, %v2589
        %v2591 = vrot.slane %v2583, %v2590
        %v2593 = vunpack.c.l.s4 1983009808
        %v2594 = vunpack.c.0.s8 %v2593
        %v2595 = vlaneseq
        %v2596 = vshrl.u32 %v2595, 7
        %v2597 = vsub.s32 %v2594, %v2596
        %v2598 = vrot.slane %v2584, %v2597
        %v2599 = vcombine.low %v2144, %v2160
        %v2600 = vcombine.high %v2144, %v2160
        %v2602 = vunpack.c.l.s4 1983009808
        %v2603 = vunpack.c.0.s8 %v2602
        %v2604 = vlaneseq
        %v2605 = vshrl.u32 %v2604, 7
        %v2606 = vsub.s32 %v2603, %v2605
        %v2607 = vrot.slane %v2599, %v2606
        %v2609 = vunpack.c.l.s4 1983009808
        %v2610 = vunpack.c.0.s8 %v2609
        %v2611 = vlaneseq
        %v2612 = vshrl.u32 %v2611, 7
        %v2613 = vsub.s32 %v2610, %v2612
        %v2614 = vrot.slane %v2600, %v2613
        %v2615 = vcombine.high %v1819, 0.0
        %v2617 = vunpack.c.l.s4 1983009808
        %v2618 = vunpack.c.0.s8 %v2617
        %v2619 = vlaneseq
        %v2620 = vshrl.u32 %v2619, 7
        %v2621 = vsub.s32 %v2618, %v2620
        %v2622 = vrot.slane %v1819, %v2621
        %v2624 = vunpack.c.l.s4 1983009808
        %v2625 = vunpack.c.0.s8 %v2624
        %v2626 = vlaneseq
        %v2627 = vshrl.u32 %v2626, 7
        %v2628 = vsub.s32 %v2625, %v2627
        %v2629 = vrot.slane %v2615, %v2628
        %v2630 = vcombine.high %v2176, 0.0
        %v2632 = vunpack.c.l.s4 1983009808
        %v2633 = vunpack.c.0.s8 %v2632
        %v2634 = vlaneseq
        %v2635 = vshrl.u32 %v2634, 7
        %v2636 = vsub.s32 %v2633, %v2635
        %v2637 = vrot.slane %v2176, %v2636
        %v2639 = vunpack.c.l.s4 1983009808
        %v2640 = vunpack.c.0.s8 %v2639
        %v2641 = vlaneseq
        %v2642 = vshrl.u32 %v2641, 7
        %v2643 = vsub.s32 %v2640, %v2642
        %v2644 = vrot.slane %v2630, %v2643
        %v2645 = vcombine.low %v2591, %v2607
        %v2646 = vcombine.high %v2591, %v2607
        %v2648 = vunpack.c.l.s4 1934713408
        %v2649 = vunpack.c.0.s8 %v2648
        %v2650 = vlaneseq
        %v2651 = vshrl.u32 %v2650, 7
        %v2652 = vsub.s32 %v2649, %v2651
        %v2653 = vrot.slane %v2645, %v2652
        %v2655 = vunpack.c.l.s4 1934713408
        %v2656 = vunpack.c.0.s8 %v2655
        %v2657 = vlaneseq
        %v2658 = vshrl.u32 %v2657, 7
        %v2659 = vsub.s32 %v2656, %v2658
        %v2660 = vrot.slane %v2646, %v2659
        %v2661 = vcombine.low %v2598, %v2614
        %v2662 = vcombine.high %v2598, %v2614
        %v2664 = vunpack.c.l.s4 1934713408
        %v2665 = vunpack.c.0.s8 %v2664
        %v2666 = vlaneseq
        %v2667 = vshrl.u32 %v2666, 7
        %v2668 = vsub.s32 %v2665, %v2667
        %v2669 = vrot.slane %v2661, %v2668
        %v2671 = vunpack.c.l.s4 1934713408
        %v2672 = vunpack.c.0.s8 %v2671
        %v2673 = vlaneseq
        %v2674 = vshrl.u32 %v2673, 7
        %v2675 = vsub.s32 %v2672, %v2674
        %v2676 = vrot.slane %v2662, %v2675
        %v2677 = vcombine.low %v2622, %v2637
        %v2678 = vcombine.high %v2622, %v2637
        %v2680 = vunpack.c.l.s4 1934713408
        %v2681 = vunpack.c.0.s8 %v2680
        %v2682 = vlaneseq
        %v2683 = vshrl.u32 %v2682, 7
        %v2684 = vsub.s32 %v2681, %v2683
        %v2685 = vrot.slane %v2677, %v2684
        %v2687 = vunpack.c.l.s4 1934713408
        %v2688 = vunpack.c.0.s8 %v2687
        %v2689 = vlaneseq
        %v2690 = vshrl.u32 %v2689, 7
        %v2691 = vsub.s32 %v2688, %v2690
        %v2692 = vrot.slane %v2678, %v2691
        %v2693 = vcombine.low %v2629, %v2644
        %v2694 = vcombine.high %v2629, %v2644
        %v2696 = vunpack.c.l.s4 1934713408
        %v2697 = vunpack.c.0.s8 %v2696
        %v2698 = vlaneseq
        %v2699 = vshrl.u32 %v2698, 7
        %v2700 = vsub.s32 %v2697, %v2699
        %v2701 = vrot.slane %v2693, %v2700
        %v2703 = vunpack.c.l.s4 1934713408
        %v2704 = vunpack.c.0.s8 %v2703
        %v2705 = vlaneseq
        %v2706 = vshrl.u32 %v2705, 7
        %v2707 = vsub.s32 %v2704, %v2706
        %v2708 = vrot.slane %v2694, %v2707
        %v2709 = vcombine.low %v2653, %v2685
        %v2710 = vcombine.high %v2653, %v2685
        %v2711 = vcombine.low %v2660, %v2692
        %v2712 = vcombine.high %v2660, %v2692
        %v2713 = vcombine.low %v2669, %v2701
        %v2714 = vcombine.high %v2669, %v2701
        %v2715 = vcombine.low %v2676, %v2708
        %v2716 = vcombine.high %v2676, %v2708
        %v2717 = vcombine.low %v2307, %v2309
        %v2718 = vcombine.high %v2307, %v2309
        %v2720 = vunpack.c.l.s4 1983009808
        %v2721 = vunpack.c.0.s8 %v2720
        %v2722 = vlaneseq
        %v2723 = vshrl.u32 %v2722, 7
        %v2724 = vsub.s32 %v2721, %v2723
        %v2725 = vrot.slane %v2717, %v2724
        %v2727 = vunpack.c.l.s4 1983009808
        %v2728 = vunpack.c.0.s8 %v2727
        %v2729 = vlaneseq
        %v2730 = vshrl.u32 %v2729, 7
        %v2731 = vsub.s32 %v2728, %v2730
        %v2732 = vrot.slane %v2718, %v2731
        %v2733 = vcombine.low %v2308, %v2310
        %v2734 = vcombine.high %v2308, %v2310
        %v2736 = vunpack.c.l.s4 1983009808
        %v2737 = vunpack.c.0.s8 %v2736
        %v2738 = vlaneseq
        %v2739 = vshrl.u32 %v2738, 7
        %v2740 = vsub.s32 %v2737, %v2739
        %v2741 = vrot.slane %v2733, %v2740
        %v2743 = vunpack.c.l.s4 1983009808
        %v2744 = vunpack.c.0.s8 %v2743
        %v2745 = vlaneseq
        %v2746 = vshrl.u32 %v2745, 7
        %v2747 = vsub.s32 %v2744, %v2746
        %v2748 = vrot.slane %v2734, %v2747
        %v2749 = vcombine.low %v2311, %v2313
        %v2750 = vcombine.high %v2311, %v2313
        %v2752 = vunpack.c.l.s4 1983009808
        %v2753 = vunpack.c.0.s8 %v2752
        %v2754 = vlaneseq
        %v2755 = vshrl.u32 %v2754, 7
        %v2756 = vsub.s32 %v2753, %v2755
        %v2757 = vrot.slane %v2749, %v2756
        %v2759 = vunpack.c.l.s4 1983009808
        %v2760 = vunpack.c.0.s8 %v2759
        %v2761 = vlaneseq
        %v2762 = vshrl.u32 %v2761, 7
        %v2763 = vsub.s32 %v2760, %v2762
        %v2764 = vrot.slane %v2750, %v2763
        %v2765 = vcombine.low %v2312, %v2314
        %v2766 = vcombine.high %v2312, %v2314
        %v2768 = vunpack.c.l.s4 1983009808
        %v2769 = vunpack.c.0.s8 %v2768
        %v2770 = vlaneseq
        %v2771 = vshrl.u32 %v2770, 7
        %v2772 = vsub.s32 %v2769, %v2771
        %v2773 = vrot.slane %v2765, %v2772
        %v2775 = vunpack.c.l.s4 1983009808
        %v2776 = vunpack.c.0.s8 %v2775
        %v2777 = vlaneseq
        %v2778 = vshrl.u32 %v2777, 7
        %v2779 = vsub.s32 %v2776, %v2778
        %v2780 = vrot.slane %v2766, %v2779
        %v2781 = vcombine.low %v2725, %v2741
        %v2782 = vcombine.high %v2725, %v2741
        %v2784 = vunpack.c.l.s4 1934713408
        %v2785 = vunpack.c.0.s8 %v2784
        %v2786 = vlaneseq
        %v2787 = vshrl.u32 %v2786, 7
        %v2788 = vsub.s32 %v2785, %v2787
        %v2789 = vrot.slane %v2781, %v2788
        %v2791 = vunpack.c.l.s4 1934713408
        %v2792 = vunpack.c.0.s8 %v2791
        %v2793 = vlaneseq
        %v2794 = vshrl.u32 %v2793, 7
        %v2795 = vsub.s32 %v2792, %v2794
        %v2796 = vrot.slane %v2782, %v2795
        %v2797 = vcombine.low %v2732, %v2748
        %v2799 = vunpack.c.l.s4 1934713408
        %v2800 = vunpack.c.0.s8 %v2799
        %v2801 = vlaneseq
        %v2802 = vshrl.u32 %v2801, 7
        %v2803 = vsub.s32 %v2800, %v2802
        %v2804 = vrot.slane %v2797, %v2803
        %v2805 = vcombine.low %v2757, %v2773
        %v2806 = vcombine.high %v2757, %v2773
        %v2808 = vunpack.c.l.s4 1934713408
        %v2809 = vunpack.c.0.s8 %v2808
        %v2810 = vlaneseq
        %v2811 = vshrl.u32 %v2810, 7
        %v2812 = vsub.s32 %v2809, %v2811
        %v2813 = vrot.slane %v2805, %v2812
        %v2815 = vunpack.c.l.s4 1934713408
        %v2816 = vunpack.c.0.s8 %v2815
        %v2817 = vlaneseq
        %v2818 = vshrl.u32 %v2817, 7
        %v2819 = vsub.s32 %v2816, %v2818
        %v2820 = vrot.slane %v2806, %v2819
        %v2821 = vcombine.low %v2764, %v2780
        %v2823 = vunpack.c.l.s4 1934713408
        %v2824 = vunpack.c.0.s8 %v2823
        %v2825 = vlaneseq
        %v2826 = vshrl.u32 %v2825, 7
        %v2827 = vsub.s32 %v2824, %v2826
        %v2828 = vrot.slane %v2821, %v2827
        %v2829 = vcombine.low %v2789, %v2813
        %v2830 = vcombine.high %v2789, %v2813
        %v2831 = vcombine.low %v2796, %v2820
        %v2832 = vcombine.high %v2796, %v2820
        %v2833 = vcombine.low %v2804, %v2828
        %v2834 = vcombine.high %v2804, %v2828
        %v2835 = vcombine.low %v2441, %v2443
        %v2836 = vcombine.high %v2441, %v2443
        %v2838 = vunpack.c.l.s4 1983009808
        %v2839 = vunpack.c.0.s8 %v2838
        %v2840 = vlaneseq
        %v2841 = vshrl.u32 %v2840, 7
        %v2842 = vsub.s32 %v2839, %v2841
        %v2843 = vrot.slane %v2835, %v2842
        %v2845 = vunpack.c.l.s4 1983009808
        %v2846 = vunpack.c.0.s8 %v2845
        %v2847 = vlaneseq
        %v2848 = vshrl.u32 %v2847, 7
        %v2849 = vsub.s32 %v2846, %v2848
        %v2850 = vrot.slane %v2836, %v2849
        %v2851 = vcombine.low %v2442, %v2444
        %v2852 = vcombine.high %v2442, %v2444
        %v2854 = vunpack.c.l.s4 1983009808
        %v2855 = vunpack.c.0.s8 %v2854
        %v2856 = vlaneseq
        %v2857 = vshrl.u32 %v2856, 7
        %v2858 = vsub.s32 %v2855, %v2857
        %v2859 = vrot.slane %v2851, %v2858
        %v2861 = vunpack.c.l.s4 1983009808
        %v2862 = vunpack.c.0.s8 %v2861
        %v2863 = vlaneseq
        %v2864 = vshrl.u32 %v2863, 7
        %v2865 = vsub.s32 %v2862, %v2864
        %v2866 = vrot.slane %v2852, %v2865
        %v2867 = vcombine.low %v2445, %v2447
        %v2868 = vcombine.high %v2445, %v2447
        %v2870 = vunpack.c.l.s4 1983009808
        %v2871 = vunpack.c.0.s8 %v2870
        %v2872 = vlaneseq
        %v2873 = vshrl.u32 %v2872, 7
        %v2874 = vsub.s32 %v2871, %v2873
        %v2875 = vrot.slane %v2867, %v2874
        %v2877 = vunpack.c.l.s4 1983009808
        %v2878 = vunpack.c.0.s8 %v2877
        %v2879 = vlaneseq
        %v2880 = vshrl.u32 %v2879, 7
        %v2881 = vsub.s32 %v2878, %v2880
        %v2882 = vrot.slane %v2868, %v2881
        %v2883 = vcombine.low %v2446, %v2448
        %v2884 = vcombine.high %v2446, %v2448
        %v2886 = vunpack.c.l.s4 1983009808
        %v2887 = vunpack.c.0.s8 %v2886
        %v2888 = vlaneseq
        %v2889 = vshrl.u32 %v2888, 7
        %v2890 = vsub.s32 %v2887, %v2889
        %v2891 = vrot.slane %v2883, %v2890
        %v2893 = vunpack.c.l.s4 1983009808
        %v2894 = vunpack.c.0.s8 %v2893
        %v2895 = vlaneseq
        %v2896 = vshrl.u32 %v2895, 7
        %v2897 = vsub.s32 %v2894, %v2896
        %v2898 = vrot.slane %v2884, %v2897
        %v2899 = vcombine.low %v2843, %v2859
        %v2900 = vcombine.high %v2843, %v2859
        %v2902 = vunpack.c.l.s4 1934713408
        %v2903 = vunpack.c.0.s8 %v2902
        %v2904 = vlaneseq
        %v2905 = vshrl.u32 %v2904, 7
        %v2906 = vsub.s32 %v2903, %v2905
        %v2907 = vrot.slane %v2899, %v2906
        %v2909 = vunpack.c.l.s4 1934713408
        %v2910 = vunpack.c.0.s8 %v2909
        %v2911 = vlaneseq
        %v2912 = vshrl.u32 %v2911, 7
        %v2913 = vsub.s32 %v2910, %v2912
        %v2914 = vrot.slane %v2900, %v2913
        %v2915 = vcombine.low %v2850, %v2866
        %v2917 = vunpack.c.l.s4 1934713408
        %v2918 = vunpack.c.0.s8 %v2917
        %v2919 = vlaneseq
        %v2920 = vshrl.u32 %v2919, 7
        %v2921 = vsub.s32 %v2918, %v2920
        %v2922 = vrot.slane %v2915, %v2921
        %v2923 = vcombine.low %v2875, %v2891
        %v2924 = vcombine.high %v2875, %v2891
        %v2926 = vunpack.c.l.s4 1934713408
        %v2927 = vunpack.c.0.s8 %v2926
        %v2928 = vlaneseq
        %v2929 = vshrl.u32 %v2928, 7
        %v2930 = vsub.s32 %v2927, %v2929
        %v2931 = vrot.slane %v2923, %v2930
        %v2933 = vunpack.c.l.s4 1934713408
        %v2934 = vunpack.c.0.s8 %v2933
        %v2935 = vlaneseq
        %v2936 = vshrl.u32 %v2935, 7
        %v2937 = vsub.s32 %v2934, %v2936
        %v2938 = vrot.slane %v2924, %v2937
        %v2939 = vcombine.low %v2882, %v2898
        %v2941 = vunpack.c.l.s4 1934713408
        %v2942 = vunpack.c.0.s8 %v2941
        %v2943 = vlaneseq
        %v2944 = vshrl.u32 %v2943, 7
        %v2945 = vsub.s32 %v2942, %v2944
        %v2946 = vrot.slane %v2939, %v2945
        %v2947 = vcombine.low %v2907, %v2931
        %v2948 = vcombine.high %v2907, %v2931
        %v2949 = vcombine.low %v2914, %v2938
        %v2950 = vcombine.high %v2914, %v2938
        %v2951 = vcombine.low %v2922, %v2946
        %v2952 = vcombine.high %v2922, %v2946
        %v2953 = vcombine.low %v2575, %v2577
        %v2954 = vcombine.high %v2575, %v2577
        %v2956 = vunpack.c.l.s4 1983009808
        %v2957 = vunpack.c.0.s8 %v2956
        %v2958 = vlaneseq
        %v2959 = vshrl.u32 %v2958, 7
        %v2960 = vsub.s32 %v2957, %v2959
        %v2961 = vrot.slane %v2953, %v2960
        %v2963 = vunpack.c.l.s4 1983009808
        %v2964 = vunpack.c.0.s8 %v2963
        %v2965 = vlaneseq
        %v2966 = vshrl.u32 %v2965, 7
        %v2967 = vsub.s32 %v2964, %v2966
        %v2968 = vrot.slane %v2954, %v2967
        %v2969 = vcombine.low %v2576, %v2578
        %v2970 = vcombine.high %v2576, %v2578
        %v2972 = vunpack.c.l.s4 1983009808
        %v2973 = vunpack.c.0.s8 %v2972
        %v2974 = vlaneseq
        %v2975 = vshrl.u32 %v2974, 7
        %v2976 = vsub.s32 %v2973, %v2975
        %v2977 = vrot.slane %v2969, %v2976
        %v2979 = vunpack.c.l.s4 1983009808
        %v2980 = vunpack.c.0.s8 %v2979
        %v2981 = vlaneseq
        %v2982 = vshrl.u32 %v2981, 7
        %v2983 = vsub.s32 %v2980, %v2982
        %v2984 = vrot.slane %v2970, %v2983
        %v2985 = vcombine.low %v2579, %v2581
        %v2986 = vcombine.high %v2579, %v2581
        %v2988 = vunpack.c.l.s4 1983009808
        %v2989 = vunpack.c.0.s8 %v2988
        %v2990 = vlaneseq
        %v2991 = vshrl.u32 %v2990, 7
        %v2992 = vsub.s32 %v2989, %v2991
        %v2993 = vrot.slane %v2985, %v2992
        %v2995 = vunpack.c.l.s4 1983009808
        %v2996 = vunpack.c.0.s8 %v2995
        %v2997 = vlaneseq
        %v2998 = vshrl.u32 %v2997, 7
        %v2999 = vsub.s32 %v2996, %v2998
        %v3000 = vrot.slane %v2986, %v2999
        %v3001 = vcombine.low %v2580, %v2582
        %v3002 = vcombine.high %v2580, %v2582
        %v3004 = vunpack.c.l.s4 1983009808
        %v3005 = vunpack.c.0.s8 %v3004
        %v3006 = vlaneseq
        %v3007 = vshrl.u32 %v3006, 7
        %v3008 = vsub.s32 %v3005, %v3007
        %v3009 = vrot.slane %v3001, %v3008
        %v3011 = vunpack.c.l.s4 1983009808
        %v3012 = vunpack.c.0.s8 %v3011
        %v3013 = vlaneseq
        %v3014 = vshrl.u32 %v3013, 7
        %v3015 = vsub.s32 %v3012, %v3014
        %v3016 = vrot.slane %v3002, %v3015
        %v3017 = vcombine.low %v2961, %v2977
        %v3018 = vcombine.high %v2961, %v2977
        %v3020 = vunpack.c.l.s4 1934713408
        %v3021 = vunpack.c.0.s8 %v3020
        %v3022 = vlaneseq
        %v3023 = vshrl.u32 %v3022, 7
        %v3024 = vsub.s32 %v3021, %v3023
        %v3025 = vrot.slane %v3017, %v3024
        %v3027 = vunpack.c.l.s4 1934713408
        %v3028 = vunpack.c.0.s8 %v3027
        %v3029 = vlaneseq
        %v3030 = vshrl.u32 %v3029, 7
        %v3031 = vsub.s32 %v3028, %v3030
        %v3032 = vrot.slane %v3018, %v3031
        %v3033 = vcombine.low %v2968, %v2984
        %v3035 = vunpack.c.l.s4 1934713408
        %v3036 = vunpack.c.0.s8 %v3035
        %v3037 = vlaneseq
        %v3038 = vshrl.u32 %v3037, 7
        %v3039 = vsub.s32 %v3036, %v3038
        %v3040 = vrot.slane %v3033, %v3039
        %v3041 = vcombine.low %v2993, %v3009
        %v3042 = vcombine.high %v2993, %v3009
        %v3044 = vunpack.c.l.s4 1934713408
        %v3045 = vunpack.c.0.s8 %v3044
        %v3046 = vlaneseq
        %v3047 = vshrl.u32 %v3046, 7
        %v3048 = vsub.s32 %v3045, %v3047
        %v3049 = vrot.slane %v3041, %v3048
        %v3051 = vunpack.c.l.s4 1934713408
        %v3052 = vunpack.c.0.s8 %v3051
        %v3053 = vlaneseq
        %v3054 = vshrl.u32 %v3053, 7
        %v3055 = vsub.s32 %v3052, %v3054
        %v3056 = vrot.slane %v3042, %v3055
        %v3057 = vcombine.low %v3000, %v3016
        %v3059 = vunpack.c.l.s4 1934713408
        %v3060 = vunpack.c.0.s8 %v3059
        %v3061 = vlaneseq
        %v3062 = vshrl.u32 %v3061, 7
        %v3063 = vsub.s32 %v3060, %v3062
        %v3064 = vrot.slane %v3057, %v3063
        %v3065 = vcombine.low %v3025, %v3049
        %v3066 = vcombine.high %v3025, %v3049
        %v3067 = vcombine.low %v3032, %v3056
        %v3068 = vcombine.high %v3032, %v3056
        %v3069 = vcombine.low %v3040, %v3064
        %v3070 = vcombine.high %v3040, %v3064
        %v3071 = vcombine.low %v2709, %v2711
        %v3072 = vcombine.high %v2709, %v2711
        %v3074 = vunpack.c.l.s4 1983009808
        %v3075 = vunpack.c.0.s8 %v3074
        %v3076 = vlaneseq
        %v3077 = vshrl.u32 %v3076, 7
        %v3078 = vsub.s32 %v3075, %v3077
        %v3079 = vrot.slane %v3071, %v3078
        %v3081 = vunpack.c.l.s4 1983009808
        %v3082 = vunpack.c.0.s8 %v3081
        %v3083 = vlaneseq
        %v3084 = vshrl.u32 %v3083, 7
        %v3085 = vsub.s32 %v3082, %v3084
        %v3086 = vrot.slane %v3072, %v3085
        %v3087 = vcombine.low %v2710, %v2712
        %v3088 = vcombine.high %v2710, %v2712
        %v3090 = vunpack.c.l.s4 1983009808
        %v3091 = vunpack.c.0.s8 %v3090
        %v3092 = vlaneseq
        %v3093 = vshrl.u32 %v3092, 7
        %v3094 = vsub.s32 %v3091, %v3093
        %v3095 = vrot.slane %v3087, %v3094
        %v3097 = vunpack.c.l.s4 1983009808
        %v3098 = vunpack.c.0.s8 %v3097
        %v3099 = vlaneseq
        %v3100 = vshrl.u32 %v3099, 7
        %v3101 = vsub.s32 %v3098, %v3100
        %v3102 = vrot.slane %v3088, %v3101
        %v3103 = vcombine.low %v2713, %v2715
        %v3104 = vcombine.high %v2713, %v2715
        %v3106 = vunpack.c.l.s4 1983009808
        %v3107 = vunpack.c.0.s8 %v3106
        %v3108 = vlaneseq
        %v3109 = vshrl.u32 %v3108, 7
        %v3110 = vsub.s32 %v3107, %v3109
        %v3111 = vrot.slane %v3103, %v3110
        %v3113 = vunpack.c.l.s4 1983009808
        %v3114 = vunpack.c.0.s8 %v3113
        %v3115 = vlaneseq
        %v3116 = vshrl.u32 %v3115, 7
        %v3117 = vsub.s32 %v3114, %v3116
        %v3118 = vrot.slane %v3104, %v3117
        %v3119 = vcombine.low %v2714, %v2716
        %v3120 = vcombine.high %v2714, %v2716
        %v3122 = vunpack.c.l.s4 1983009808
        %v3123 = vunpack.c.0.s8 %v3122
        %v3124 = vlaneseq
        %v3125 = vshrl.u32 %v3124, 7
        %v3126 = vsub.s32 %v3123, %v3125
        %v3127 = vrot.slane %v3119, %v3126
        %v3129 = vunpack.c.l.s4 1983009808
        %v3130 = vunpack.c.0.s8 %v3129
        %v3131 = vlaneseq
        %v3132 = vshrl.u32 %v3131, 7
        %v3133 = vsub.s32 %v3130, %v3132
        %v3134 = vrot.slane %v3120, %v3133
        %v3135 = vcombine.low %v3079, %v3095
        %v3136 = vcombine.high %v3079, %v3095
        %v3138 = vunpack.c.l.s4 1934713408
        %v3139 = vunpack.c.0.s8 %v3138
        %v3140 = vlaneseq
        %v3141 = vshrl.u32 %v3140, 7
        %v3142 = vsub.s32 %v3139, %v3141
        %v3143 = vrot.slane %v3135, %v3142
        %v3145 = vunpack.c.l.s4 1934713408
        %v3146 = vunpack.c.0.s8 %v3145
        %v3147 = vlaneseq
        %v3148 = vshrl.u32 %v3147, 7
        %v3149 = vsub.s32 %v3146, %v3148
        %v3150 = vrot.slane %v3136, %v3149
        %v3151 = vcombine.low %v3086, %v3102
        %v3153 = vunpack.c.l.s4 1934713408
        %v3154 = vunpack.c.0.s8 %v3153
        %v3155 = vlaneseq
        %v3156 = vshrl.u32 %v3155, 7
        %v3157 = vsub.s32 %v3154, %v3156
        %v3158 = vrot.slane %v3151, %v3157
        %v3159 = vcombine.low %v3111, %v3127
        %v3160 = vcombine.high %v3111, %v3127
        %v3162 = vunpack.c.l.s4 1934713408
        %v3163 = vunpack.c.0.s8 %v3162
        %v3164 = vlaneseq
        %v3165 = vshrl.u32 %v3164, 7
        %v3166 = vsub.s32 %v3163, %v3165
        %v3167 = vrot.slane %v3159, %v3166
        %v3169 = vunpack.c.l.s4 1934713408
        %v3170 = vunpack.c.0.s8 %v3169
        %v3171 = vlaneseq
        %v3172 = vshrl.u32 %v3171, 7
        %v3173 = vsub.s32 %v3170, %v3172
        %v3174 = vrot.slane %v3160, %v3173
        %v3175 = vcombine.low %v3118, %v3134
        %v3177 = vunpack.c.l.s4 1934713408
        %v3178 = vunpack.c.0.s8 %v3177
        %v3179 = vlaneseq
        %v3180 = vshrl.u32 %v3179, 7
        %v3181 = vsub.s32 %v3178, %v3180
        %v3182 = vrot.slane %v3175, %v3181
        %v3183 = vcombine.low %v3143, %v3167
        %v3184 = vcombine.high %v3143, %v3167
        %v3185 = vcombine.low %v3150, %v3174
        %v3186 = vcombine.high %v3150, %v3174
        %v3187 = vcombine.low %v3158, %v3182
        %v3188 = vcombine.high %v3158, %v3182
        %v3189 = vpack.c.bf16 %v2947, %v2829
        %v3190 = vpack.c.bf16 %v2948, %v2830
        %v3191 = vpack.c.bf16 %v2949, %v2831
        %v3192 = vpack.c.bf16 %v2950, %v2832
        %v3193 = vpack.c.bf16 %v2951, %v2833
        %v3194 = vpack.c.bf16 %v2952, %v2834
        %v3195 = vpack.c.bf16 %v3183, %v3065
        %v3196 = vpack.c.bf16 %v3184, %v3066
        %v3197 = vpack.c.bf16 %v3185, %v3067
        %v3198 = vpack.c.bf16 %v3186, %v3068
        %v3199 = vpack.c.bf16 %v3187, %v3069
        %v3200 = vpack.c.bf16 %v3188, %v3070
        %3205 = vrot.lane.b32.xlu0 %v1807, 64
        %v3206 = vpop.permute.xlu0 %3205
        %3207 = vrot.lane.b32.xlu0 %v1811, 64
        %v3208 = vpop.permute.xlu0 %3207
        %3209 = vrot.lane.b32.xlu0 %v1817, 64
        %v3210 = vpop.permute.xlu0 %3209
        %3211 = vrot.lane.b32.xlu0 %v1821, 64
        %v3212 = vpop.permute.xlu0 %3211
        %3221 = vrot.lane.b32.xlu0 %v1911, 64
        %v3222 = vpop.permute.xlu0 %3221
        %3223 = vrot.lane.b32.xlu0 %v1915, 64
        %v3224 = vpop.permute.xlu0 %3223
        %3225 = vrot.lane.b32.xlu0 %v1921, 64
        %v3226 = vpop.permute.xlu0 %3225
        %3227 = vrot.lane.b32.xlu0 %v1925, 64
        %v3228 = vpop.permute.xlu0 %3227
        %3237 = vrot.lane.b32.xlu0 %v1913, 64
        %v3238 = vpop.permute.xlu0 %3237
        %3239 = vrot.lane.b32.xlu0 %v1917, 64
        %v3240 = vpop.permute.xlu0 %3239
        %3241 = vrot.lane.b32.xlu0 %v1923, 64
        %v3242 = vpop.permute.xlu0 %3241
        %3243 = vrot.lane.b32.xlu0 %v1927, 64
        %v3244 = vpop.permute.xlu0 %3243
        %v3249 = vcombine.low %v1807, %v1911
        %v3250 = vcombine.high %v1807, %v1911
        %v3252 = vunpack.c.l.s4 1983009808
        %v3253 = vunpack.c.0.s8 %v3252
        %v3254 = vlaneseq
        %v3255 = vshrl.u32 %v3254, 7
        %v3256 = vsub.s32 %v3253, %v3255
        %v3257 = vrot.slane %v3249, %v3256
        %v3259 = vunpack.c.l.s4 1983009808
        %v3260 = vunpack.c.0.s8 %v3259
        %v3261 = vlaneseq
        %v3262 = vshrl.u32 %v3261, 7
        %v3263 = vsub.s32 %v3260, %v3262
        %v3264 = vrot.slane %v3250, %v3263
        %v3265 = vcombine.low %v3206, %v3222
        %v3266 = vcombine.high %v3206, %v3222
        %v3268 = vunpack.c.l.s4 1983009808
        %v3269 = vunpack.c.0.s8 %v3268
        %v3270 = vlaneseq
        %v3271 = vshrl.u32 %v3270, 7
        %v3272 = vsub.s32 %v3269, %v3271
        %v3273 = vrot.slane %v3265, %v3272
        %v3275 = vunpack.c.l.s4 1983009808
        %v3276 = vunpack.c.0.s8 %v3275
        %v3277 = vlaneseq
        %v3278 = vshrl.u32 %v3277, 7
        %v3279 = vsub.s32 %v3276, %v3278
        %v3280 = vrot.slane %v3266, %v3279
        %v3281 = vcombine.high %v1913, 0.0
        %v3283 = vunpack.c.l.s4 1983009808
        %v3284 = vunpack.c.0.s8 %v3283
        %v3285 = vlaneseq
        %v3286 = vshrl.u32 %v3285, 7
        %v3287 = vsub.s32 %v3284, %v3286
        %v3288 = vrot.slane %v1913, %v3287
        %v3290 = vunpack.c.l.s4 1983009808
        %v3291 = vunpack.c.0.s8 %v3290
        %v3292 = vlaneseq
        %v3293 = vshrl.u32 %v3292, 7
        %v3294 = vsub.s32 %v3291, %v3293
        %v3295 = vrot.slane %v3281, %v3294
        %v3296 = vcombine.high %v3238, 0.0
        %v3298 = vunpack.c.l.s4 1983009808
        %v3299 = vunpack.c.0.s8 %v3298
        %v3300 = vlaneseq
        %v3301 = vshrl.u32 %v3300, 7
        %v3302 = vsub.s32 %v3299, %v3301
        %v3303 = vrot.slane %v3238, %v3302
        %v3305 = vunpack.c.l.s4 1983009808
        %v3306 = vunpack.c.0.s8 %v3305
        %v3307 = vlaneseq
        %v3308 = vshrl.u32 %v3307, 7
        %v3309 = vsub.s32 %v3306, %v3308
        %v3310 = vrot.slane %v3296, %v3309
        %v3311 = vcombine.low %v3257, %v3273
        %v3312 = vcombine.high %v3257, %v3273
        %v3314 = vunpack.c.l.s4 1934713408
        %v3315 = vunpack.c.0.s8 %v3314
        %v3316 = vlaneseq
        %v3317 = vshrl.u32 %v3316, 7
        %v3318 = vsub.s32 %v3315, %v3317
        %v3319 = vrot.slane %v3311, %v3318
        %v3321 = vunpack.c.l.s4 1934713408
        %v3322 = vunpack.c.0.s8 %v3321
        %v3323 = vlaneseq
        %v3324 = vshrl.u32 %v3323, 7
        %v3325 = vsub.s32 %v3322, %v3324
        %v3326 = vrot.slane %v3312, %v3325
        %v3327 = vcombine.low %v3264, %v3280
        %v3328 = vcombine.high %v3264, %v3280
        %v3330 = vunpack.c.l.s4 1934713408
        %v3331 = vunpack.c.0.s8 %v3330
        %v3332 = vlaneseq
        %v3333 = vshrl.u32 %v3332, 7
        %v3334 = vsub.s32 %v3331, %v3333
        %v3335 = vrot.slane %v3327, %v3334
        %v3337 = vunpack.c.l.s4 1934713408
        %v3338 = vunpack.c.0.s8 %v3337
        %v3339 = vlaneseq
        %v3340 = vshrl.u32 %v3339, 7
        %v3341 = vsub.s32 %v3338, %v3340
        %v3342 = vrot.slane %v3328, %v3341
        %v3343 = vcombine.low %v3288, %v3303
        %v3344 = vcombine.high %v3288, %v3303
        %v3346 = vunpack.c.l.s4 1934713408
        %v3347 = vunpack.c.0.s8 %v3346
        %v3348 = vlaneseq
        %v3349 = vshrl.u32 %v3348, 7
        %v3350 = vsub.s32 %v3347, %v3349
        %v3351 = vrot.slane %v3343, %v3350
        %v3353 = vunpack.c.l.s4 1934713408
        %v3354 = vunpack.c.0.s8 %v3353
        %v3355 = vlaneseq
        %v3356 = vshrl.u32 %v3355, 7
        %v3357 = vsub.s32 %v3354, %v3356
        %v3358 = vrot.slane %v3344, %v3357
        %v3359 = vcombine.low %v3295, %v3310
        %v3360 = vcombine.high %v3295, %v3310
        %v3362 = vunpack.c.l.s4 1934713408
        %v3363 = vunpack.c.0.s8 %v3362
        %v3364 = vlaneseq
        %v3365 = vshrl.u32 %v3364, 7
        %v3366 = vsub.s32 %v3363, %v3365
        %v3367 = vrot.slane %v3359, %v3366
        %v3369 = vunpack.c.l.s4 1934713408
        %v3370 = vunpack.c.0.s8 %v3369
        %v3371 = vlaneseq
        %v3372 = vshrl.u32 %v3371, 7
        %v3373 = vsub.s32 %v3370, %v3372
        %v3374 = vrot.slane %v3360, %v3373
        %v3375 = vcombine.low %v3319, %v3351
        %v3376 = vcombine.high %v3319, %v3351
        %v3377 = vcombine.low %v3326, %v3358
        %v3378 = vcombine.high %v3326, %v3358
        %v3379 = vcombine.low %v3335, %v3367
        %v3380 = vcombine.high %v3335, %v3367
        %v3381 = vcombine.low %v3342, %v3374
        %v3382 = vcombine.high %v3342, %v3374
        %v3383 = vcombine.low %v1811, %v1915
        %v3384 = vcombine.high %v1811, %v1915
        %v3386 = vunpack.c.l.s4 1983009808
        %v3387 = vunpack.c.0.s8 %v3386
        %v3388 = vlaneseq
        %v3389 = vshrl.u32 %v3388, 7
        %v3390 = vsub.s32 %v3387, %v3389
        %v3391 = vrot.slane %v3383, %v3390
        %v3393 = vunpack.c.l.s4 1983009808
        %v3394 = vunpack.c.0.s8 %v3393
        %v3395 = vlaneseq
        %v3396 = vshrl.u32 %v3395, 7
        %v3397 = vsub.s32 %v3394, %v3396
        %v3398 = vrot.slane %v3384, %v3397
        %v3399 = vcombine.low %v3208, %v3224
        %v3400 = vcombine.high %v3208, %v3224
        %v3402 = vunpack.c.l.s4 1983009808
        %v3403 = vunpack.c.0.s8 %v3402
        %v3404 = vlaneseq
        %v3405 = vshrl.u32 %v3404, 7
        %v3406 = vsub.s32 %v3403, %v3405
        %v3407 = vrot.slane %v3399, %v3406
        %v3409 = vunpack.c.l.s4 1983009808
        %v3410 = vunpack.c.0.s8 %v3409
        %v3411 = vlaneseq
        %v3412 = vshrl.u32 %v3411, 7
        %v3413 = vsub.s32 %v3410, %v3412
        %v3414 = vrot.slane %v3400, %v3413
        %v3415 = vcombine.high %v1917, 0.0
        %v3417 = vunpack.c.l.s4 1983009808
        %v3418 = vunpack.c.0.s8 %v3417
        %v3419 = vlaneseq
        %v3420 = vshrl.u32 %v3419, 7
        %v3421 = vsub.s32 %v3418, %v3420
        %v3422 = vrot.slane %v1917, %v3421
        %v3424 = vunpack.c.l.s4 1983009808
        %v3425 = vunpack.c.0.s8 %v3424
        %v3426 = vlaneseq
        %v3427 = vshrl.u32 %v3426, 7
        %v3428 = vsub.s32 %v3425, %v3427
        %v3429 = vrot.slane %v3415, %v3428
        %v3430 = vcombine.high %v3240, 0.0
        %v3432 = vunpack.c.l.s4 1983009808
        %v3433 = vunpack.c.0.s8 %v3432
        %v3434 = vlaneseq
        %v3435 = vshrl.u32 %v3434, 7
        %v3436 = vsub.s32 %v3433, %v3435
        %v3437 = vrot.slane %v3240, %v3436
        %v3439 = vunpack.c.l.s4 1983009808
        %v3440 = vunpack.c.0.s8 %v3439
        %v3441 = vlaneseq
        %v3442 = vshrl.u32 %v3441, 7
        %v3443 = vsub.s32 %v3440, %v3442
        %v3444 = vrot.slane %v3430, %v3443
        %v3445 = vcombine.low %v3391, %v3407
        %v3446 = vcombine.high %v3391, %v3407
        %v3448 = vunpack.c.l.s4 1934713408
        %v3449 = vunpack.c.0.s8 %v3448
        %v3450 = vlaneseq
        %v3451 = vshrl.u32 %v3450, 7
        %v3452 = vsub.s32 %v3449, %v3451
        %v3453 = vrot.slane %v3445, %v3452
        %v3455 = vunpack.c.l.s4 1934713408
        %v3456 = vunpack.c.0.s8 %v3455
        %v3457 = vlaneseq
        %v3458 = vshrl.u32 %v3457, 7
        %v3459 = vsub.s32 %v3456, %v3458
        %v3460 = vrot.slane %v3446, %v3459
        %v3461 = vcombine.low %v3398, %v3414
        %v3462 = vcombine.high %v3398, %v3414
        %v3464 = vunpack.c.l.s4 1934713408
        %v3465 = vunpack.c.0.s8 %v3464
        %v3466 = vlaneseq
        %v3467 = vshrl.u32 %v3466, 7
        %v3468 = vsub.s32 %v3465, %v3467
        %v3469 = vrot.slane %v3461, %v3468
        %v3471 = vunpack.c.l.s4 1934713408
        %v3472 = vunpack.c.0.s8 %v3471
        %v3473 = vlaneseq
        %v3474 = vshrl.u32 %v3473, 7
        %v3475 = vsub.s32 %v3472, %v3474
        %v3476 = vrot.slane %v3462, %v3475
        %v3477 = vcombine.low %v3422, %v3437
        %v3478 = vcombine.high %v3422, %v3437
        %v3480 = vunpack.c.l.s4 1934713408
        %v3481 = vunpack.c.0.s8 %v3480
        %v3482 = vlaneseq
        %v3483 = vshrl.u32 %v3482, 7
        %v3484 = vsub.s32 %v3481, %v3483
        %v3485 = vrot.slane %v3477, %v3484
        %v3487 = vunpack.c.l.s4 1934713408
        %v3488 = vunpack.c.0.s8 %v3487
        %v3489 = vlaneseq
        %v3490 = vshrl.u32 %v3489, 7
        %v3491 = vsub.s32 %v3488, %v3490
        %v3492 = vrot.slane %v3478, %v3491
        %v3493 = vcombine.low %v3429, %v3444
        %v3494 = vcombine.high %v3429, %v3444
        %v3496 = vunpack.c.l.s4 1934713408
        %v3497 = vunpack.c.0.s8 %v3496
        %v3498 = vlaneseq
        %v3499 = vshrl.u32 %v3498, 7
        %v3500 = vsub.s32 %v3497, %v3499
        %v3501 = vrot.slane %v3493, %v3500
        %v3503 = vunpack.c.l.s4 1934713408
        %v3504 = vunpack.c.0.s8 %v3503
        %v3505 = vlaneseq
        %v3506 = vshrl.u32 %v3505, 7
        %v3507 = vsub.s32 %v3504, %v3506
        %v3508 = vrot.slane %v3494, %v3507
        %v3509 = vcombine.low %v3453, %v3485
        %v3510 = vcombine.high %v3453, %v3485
        %v3511 = vcombine.low %v3460, %v3492
        %v3512 = vcombine.high %v3460, %v3492
        %v3513 = vcombine.low %v3469, %v3501
        %v3514 = vcombine.high %v3469, %v3501
        %v3515 = vcombine.low %v3476, %v3508
        %v3516 = vcombine.high %v3476, %v3508
        %v3517 = vcombine.low %v1817, %v1921
        %v3518 = vcombine.high %v1817, %v1921
        %v3520 = vunpack.c.l.s4 1983009808
        %v3521 = vunpack.c.0.s8 %v3520
        %v3522 = vlaneseq
        %v3523 = vshrl.u32 %v3522, 7
        %v3524 = vsub.s32 %v3521, %v3523
        %v3525 = vrot.slane %v3517, %v3524
        %v3527 = vunpack.c.l.s4 1983009808
        %v3528 = vunpack.c.0.s8 %v3527
        %v3529 = vlaneseq
        %v3530 = vshrl.u32 %v3529, 7
        %v3531 = vsub.s32 %v3528, %v3530
        %v3532 = vrot.slane %v3518, %v3531
        %v3533 = vcombine.low %v3210, %v3226
        %v3534 = vcombine.high %v3210, %v3226
        %v3536 = vunpack.c.l.s4 1983009808
        %v3537 = vunpack.c.0.s8 %v3536
        %v3538 = vlaneseq
        %v3539 = vshrl.u32 %v3538, 7
        %v3540 = vsub.s32 %v3537, %v3539
        %v3541 = vrot.slane %v3533, %v3540
        %v3543 = vunpack.c.l.s4 1983009808
        %v3544 = vunpack.c.0.s8 %v3543
        %v3545 = vlaneseq
        %v3546 = vshrl.u32 %v3545, 7
        %v3547 = vsub.s32 %v3544, %v3546
        %v3548 = vrot.slane %v3534, %v3547
        %v3549 = vcombine.high %v1923, 0.0
        %v3551 = vunpack.c.l.s4 1983009808
        %v3552 = vunpack.c.0.s8 %v3551
        %v3553 = vlaneseq
        %v3554 = vshrl.u32 %v3553, 7
        %v3555 = vsub.s32 %v3552, %v3554
        %v3556 = vrot.slane %v1923, %v3555
        %v3558 = vunpack.c.l.s4 1983009808
        %v3559 = vunpack.c.0.s8 %v3558
        %v3560 = vlaneseq
        %v3561 = vshrl.u32 %v3560, 7
        %v3562 = vsub.s32 %v3559, %v3561
        %v3563 = vrot.slane %v3549, %v3562
        %v3564 = vcombine.high %v3242, 0.0
        %v3566 = vunpack.c.l.s4 1983009808
        %v3567 = vunpack.c.0.s8 %v3566
        %v3568 = vlaneseq
        %v3569 = vshrl.u32 %v3568, 7
        %v3570 = vsub.s32 %v3567, %v3569
        %v3571 = vrot.slane %v3242, %v3570
        %v3573 = vunpack.c.l.s4 1983009808
        %v3574 = vunpack.c.0.s8 %v3573
        %v3575 = vlaneseq
        %v3576 = vshrl.u32 %v3575, 7
        %v3577 = vsub.s32 %v3574, %v3576
        %v3578 = vrot.slane %v3564, %v3577
        %v3579 = vcombine.low %v3525, %v3541
        %v3580 = vcombine.high %v3525, %v3541
        %v3582 = vunpack.c.l.s4 1934713408
        %v3583 = vunpack.c.0.s8 %v3582
        %v3584 = vlaneseq
        %v3585 = vshrl.u32 %v3584, 7
        %v3586 = vsub.s32 %v3583, %v3585
        %v3587 = vrot.slane %v3579, %v3586
        %v3589 = vunpack.c.l.s4 1934713408
        %v3590 = vunpack.c.0.s8 %v3589
        %v3591 = vlaneseq
        %v3592 = vshrl.u32 %v3591, 7
        %v3593 = vsub.s32 %v3590, %v3592
        %v3594 = vrot.slane %v3580, %v3593
        %v3595 = vcombine.low %v3532, %v3548
        %v3596 = vcombine.high %v3532, %v3548
        %v3598 = vunpack.c.l.s4 1934713408
        %v3599 = vunpack.c.0.s8 %v3598
        %v3600 = vlaneseq
        %v3601 = vshrl.u32 %v3600, 7
        %v3602 = vsub.s32 %v3599, %v3601
        %v3603 = vrot.slane %v3595, %v3602
        %v3605 = vunpack.c.l.s4 1934713408
        %v3606 = vunpack.c.0.s8 %v3605
        %v3607 = vlaneseq
        %v3608 = vshrl.u32 %v3607, 7
        %v3609 = vsub.s32 %v3606, %v3608
        %v3610 = vrot.slane %v3596, %v3609
        %v3611 = vcombine.low %v3556, %v3571
        %v3612 = vcombine.high %v3556, %v3571
        %v3614 = vunpack.c.l.s4 1934713408
        %v3615 = vunpack.c.0.s8 %v3614
        %v3616 = vlaneseq
        %v3617 = vshrl.u32 %v3616, 7
        %v3618 = vsub.s32 %v3615, %v3617
        %v3619 = vrot.slane %v3611, %v3618
        %v3621 = vunpack.c.l.s4 1934713408
        %v3622 = vunpack.c.0.s8 %v3621
        %v3623 = vlaneseq
        %v3624 = vshrl.u32 %v3623, 7
        %v3625 = vsub.s32 %v3622, %v3624
        %v3626 = vrot.slane %v3612, %v3625
        %v3627 = vcombine.low %v3563, %v3578
        %v3628 = vcombine.high %v3563, %v3578
        %v3630 = vunpack.c.l.s4 1934713408
        %v3631 = vunpack.c.0.s8 %v3630
        %v3632 = vlaneseq
        %v3633 = vshrl.u32 %v3632, 7
        %v3634 = vsub.s32 %v3631, %v3633
        %v3635 = vrot.slane %v3627, %v3634
        %v3637 = vunpack.c.l.s4 1934713408
        %v3638 = vunpack.c.0.s8 %v3637
        %v3639 = vlaneseq
        %v3640 = vshrl.u32 %v3639, 7
        %v3641 = vsub.s32 %v3638, %v3640
        %v3642 = vrot.slane %v3628, %v3641
        %v3643 = vcombine.low %v3587, %v3619
        %v3644 = vcombine.high %v3587, %v3619
        %v3645 = vcombine.low %v3594, %v3626
        %v3646 = vcombine.high %v3594, %v3626
        %v3647 = vcombine.low %v3603, %v3635
        %v3648 = vcombine.high %v3603, %v3635
        %v3649 = vcombine.low %v3610, %v3642
        %v3650 = vcombine.high %v3610, %v3642
        %v3651 = vcombine.low %v1821, %v1925
        %v3652 = vcombine.high %v1821, %v1925
        %v3654 = vunpack.c.l.s4 1983009808
        %v3655 = vunpack.c.0.s8 %v3654
        %v3656 = vlaneseq
        %v3657 = vshrl.u32 %v3656, 7
        %v3658 = vsub.s32 %v3655, %v3657
        %v3659 = vrot.slane %v3651, %v3658
        %v3661 = vunpack.c.l.s4 1983009808
        %v3662 = vunpack.c.0.s8 %v3661
        %v3663 = vlaneseq
        %v3664 = vshrl.u32 %v3663, 7
        %v3665 = vsub.s32 %v3662, %v3664
        %v3666 = vrot.slane %v3652, %v3665
        %v3667 = vcombine.low %v3212, %v3228
        %v3668 = vcombine.high %v3212, %v3228
        %v3670 = vunpack.c.l.s4 1983009808
        %v3671 = vunpack.c.0.s8 %v3670
        %v3672 = vlaneseq
        %v3673 = vshrl.u32 %v3672, 7
        %v3674 = vsub.s32 %v3671, %v3673
        %v3675 = vrot.slane %v3667, %v3674
        %v3677 = vunpack.c.l.s4 1983009808
        %v3678 = vunpack.c.0.s8 %v3677
        %v3679 = vlaneseq
        %v3680 = vshrl.u32 %v3679, 7
        %v3681 = vsub.s32 %v3678, %v3680
        %v3682 = vrot.slane %v3668, %v3681
        %v3683 = vcombine.high %v1927, 0.0
        %v3685 = vunpack.c.l.s4 1983009808
        %v3686 = vunpack.c.0.s8 %v3685
        %v3687 = vlaneseq
        %v3688 = vshrl.u32 %v3687, 7
        %v3689 = vsub.s32 %v3686, %v3688
        %v3690 = vrot.slane %v1927, %v3689
        %v3692 = vunpack.c.l.s4 1983009808
        %v3693 = vunpack.c.0.s8 %v3692
        %v3694 = vlaneseq
        %v3695 = vshrl.u32 %v3694, 7
        %v3696 = vsub.s32 %v3693, %v3695
        %v3697 = vrot.slane %v3683, %v3696
        %v3698 = vcombine.high %v3244, 0.0
        %v3700 = vunpack.c.l.s4 1983009808
        %v3701 = vunpack.c.0.s8 %v3700
        %v3702 = vlaneseq
        %v3703 = vshrl.u32 %v3702, 7
        %v3704 = vsub.s32 %v3701, %v3703
        %v3705 = vrot.slane %v3244, %v3704
        %v3707 = vunpack.c.l.s4 1983009808
        %v3708 = vunpack.c.0.s8 %v3707
        %v3709 = vlaneseq
        %v3710 = vshrl.u32 %v3709, 7
        %v3711 = vsub.s32 %v3708, %v3710
        %v3712 = vrot.slane %v3698, %v3711
        %v3713 = vcombine.low %v3659, %v3675
        %v3714 = vcombine.high %v3659, %v3675
        %v3716 = vunpack.c.l.s4 1934713408
        %v3717 = vunpack.c.0.s8 %v3716
        %v3718 = vlaneseq
        %v3719 = vshrl.u32 %v3718, 7
        %v3720 = vsub.s32 %v3717, %v3719
        %v3721 = vrot.slane %v3713, %v3720
        %v3723 = vunpack.c.l.s4 1934713408
        %v3724 = vunpack.c.0.s8 %v3723
        %v3725 = vlaneseq
        %v3726 = vshrl.u32 %v3725, 7
        %v3727 = vsub.s32 %v3724, %v3726
        %v3728 = vrot.slane %v3714, %v3727
        %v3729 = vcombine.low %v3666, %v3682
        %v3730 = vcombine.high %v3666, %v3682
        %v3732 = vunpack.c.l.s4 1934713408
        %v3733 = vunpack.c.0.s8 %v3732
        %v3734 = vlaneseq
        %v3735 = vshrl.u32 %v3734, 7
        %v3736 = vsub.s32 %v3733, %v3735
        %v3737 = vrot.slane %v3729, %v3736
        %v3739 = vunpack.c.l.s4 1934713408
        %v3740 = vunpack.c.0.s8 %v3739
        %v3741 = vlaneseq
        %v3742 = vshrl.u32 %v3741, 7
        %v3743 = vsub.s32 %v3740, %v3742
        %v3744 = vrot.slane %v3730, %v3743
        %v3745 = vcombine.low %v3690, %v3705
        %v3746 = vcombine.high %v3690, %v3705
        %v3748 = vunpack.c.l.s4 1934713408
        %v3749 = vunpack.c.0.s8 %v3748
        %v3750 = vlaneseq
        %v3751 = vshrl.u32 %v3750, 7
        %v3752 = vsub.s32 %v3749, %v3751
        %v3753 = vrot.slane %v3745, %v3752
        %v3755 = vunpack.c.l.s4 1934713408
        %v3756 = vunpack.c.0.s8 %v3755
        %v3757 = vlaneseq
        %v3758 = vshrl.u32 %v3757, 7
        %v3759 = vsub.s32 %v3756, %v3758
        %v3760 = vrot.slane %v3746, %v3759
        %v3761 = vcombine.low %v3697, %v3712
        %v3762 = vcombine.high %v3697, %v3712
        %v3764 = vunpack.c.l.s4 1934713408
        %v3765 = vunpack.c.0.s8 %v3764
        %v3766 = vlaneseq
        %v3767 = vshrl.u32 %v3766, 7
        %v3768 = vsub.s32 %v3765, %v3767
        %v3769 = vrot.slane %v3761, %v3768
        %v3771 = vunpack.c.l.s4 1934713408
        %v3772 = vunpack.c.0.s8 %v3771
        %v3773 = vlaneseq
        %v3774 = vshrl.u32 %v3773, 7
        %v3775 = vsub.s32 %v3772, %v3774
        %v3776 = vrot.slane %v3762, %v3775
        %v3777 = vcombine.low %v3721, %v3753
        %v3778 = vcombine.high %v3721, %v3753
        %v3779 = vcombine.low %v3728, %v3760
        %v3780 = vcombine.high %v3728, %v3760
        %v3781 = vcombine.low %v3737, %v3769
        %v3782 = vcombine.high %v3737, %v3769
        %v3783 = vcombine.low %v3744, %v3776
        %v3784 = vcombine.high %v3744, %v3776
        %v3785 = vcombine.low %v3375, %v3377
        %v3786 = vcombine.high %v3375, %v3377
        %v3788 = vunpack.c.l.s4 1983009808
        %v3789 = vunpack.c.0.s8 %v3788
        %v3790 = vlaneseq
        %v3791 = vshrl.u32 %v3790, 7
        %v3792 = vsub.s32 %v3789, %v3791
        %v3793 = vrot.slane %v3785, %v3792
        %v3795 = vunpack.c.l.s4 1983009808
        %v3796 = vunpack.c.0.s8 %v3795
        %v3797 = vlaneseq
        %v3798 = vshrl.u32 %v3797, 7
        %v3799 = vsub.s32 %v3796, %v3798
        %v3800 = vrot.slane %v3786, %v3799
        %v3801 = vcombine.low %v3376, %v3378
        %v3802 = vcombine.high %v3376, %v3378
        %v3804 = vunpack.c.l.s4 1983009808
        %v3805 = vunpack.c.0.s8 %v3804
        %v3806 = vlaneseq
        %v3807 = vshrl.u32 %v3806, 7
        %v3808 = vsub.s32 %v3805, %v3807
        %v3809 = vrot.slane %v3801, %v3808
        %v3811 = vunpack.c.l.s4 1983009808
        %v3812 = vunpack.c.0.s8 %v3811
        %v3813 = vlaneseq
        %v3814 = vshrl.u32 %v3813, 7
        %v3815 = vsub.s32 %v3812, %v3814
        %v3816 = vrot.slane %v3802, %v3815
        %v3817 = vcombine.low %v3379, %v3381
        %v3818 = vcombine.high %v3379, %v3381
        %v3820 = vunpack.c.l.s4 1983009808
        %v3821 = vunpack.c.0.s8 %v3820
        %v3822 = vlaneseq
        %v3823 = vshrl.u32 %v3822, 7
        %v3824 = vsub.s32 %v3821, %v3823
        %v3825 = vrot.slane %v3817, %v3824
        %v3827 = vunpack.c.l.s4 1983009808
        %v3828 = vunpack.c.0.s8 %v3827
        %v3829 = vlaneseq
        %v3830 = vshrl.u32 %v3829, 7
        %v3831 = vsub.s32 %v3828, %v3830
        %v3832 = vrot.slane %v3818, %v3831
        %v3833 = vcombine.low %v3380, %v3382
        %v3834 = vcombine.high %v3380, %v3382
        %v3836 = vunpack.c.l.s4 1983009808
        %v3837 = vunpack.c.0.s8 %v3836
        %v3838 = vlaneseq
        %v3839 = vshrl.u32 %v3838, 7
        %v3840 = vsub.s32 %v3837, %v3839
        %v3841 = vrot.slane %v3833, %v3840
        %v3843 = vunpack.c.l.s4 1983009808
        %v3844 = vunpack.c.0.s8 %v3843
        %v3845 = vlaneseq
        %v3846 = vshrl.u32 %v3845, 7
        %v3847 = vsub.s32 %v3844, %v3846
        %v3848 = vrot.slane %v3834, %v3847
        %v3849 = vcombine.low %v3793, %v3809
        %v3850 = vcombine.high %v3793, %v3809
        %v3852 = vunpack.c.l.s4 1934713408
        %v3853 = vunpack.c.0.s8 %v3852
        %v3854 = vlaneseq
        %v3855 = vshrl.u32 %v3854, 7
        %v3856 = vsub.s32 %v3853, %v3855
        %v3857 = vrot.slane %v3849, %v3856
        %v3859 = vunpack.c.l.s4 1934713408
        %v3860 = vunpack.c.0.s8 %v3859
        %v3861 = vlaneseq
        %v3862 = vshrl.u32 %v3861, 7
        %v3863 = vsub.s32 %v3860, %v3862
        %v3864 = vrot.slane %v3850, %v3863
        %v3865 = vcombine.low %v3800, %v3816
        %v3867 = vunpack.c.l.s4 1934713408
        %v3868 = vunpack.c.0.s8 %v3867
        %v3869 = vlaneseq
        %v3870 = vshrl.u32 %v3869, 7
        %v3871 = vsub.s32 %v3868, %v3870
        %v3872 = vrot.slane %v3865, %v3871
        %v3873 = vcombine.low %v3825, %v3841
        %v3874 = vcombine.high %v3825, %v3841
        %v3876 = vunpack.c.l.s4 1934713408
        %v3877 = vunpack.c.0.s8 %v3876
        %v3878 = vlaneseq
        %v3879 = vshrl.u32 %v3878, 7
        %v3880 = vsub.s32 %v3877, %v3879
        %v3881 = vrot.slane %v3873, %v3880
        %v3883 = vunpack.c.l.s4 1934713408
        %v3884 = vunpack.c.0.s8 %v3883
        %v3885 = vlaneseq
        %v3886 = vshrl.u32 %v3885, 7
        %v3887 = vsub.s32 %v3884, %v3886
        %v3888 = vrot.slane %v3874, %v3887
        %v3889 = vcombine.low %v3832, %v3848
        %v3891 = vunpack.c.l.s4 1934713408
        %v3892 = vunpack.c.0.s8 %v3891
        %v3893 = vlaneseq
        %v3894 = vshrl.u32 %v3893, 7
        %v3895 = vsub.s32 %v3892, %v3894
        %v3896 = vrot.slane %v3889, %v3895
        %v3897 = vcombine.low %v3857, %v3881
        %v3898 = vcombine.high %v3857, %v3881
        %v3899 = vcombine.low %v3864, %v3888
        %v3900 = vcombine.high %v3864, %v3888
        %v3901 = vcombine.low %v3872, %v3896
        %v3902 = vcombine.high %v3872, %v3896
        %v3903 = vcombine.low %v3509, %v3511
        %v3904 = vcombine.high %v3509, %v3511
        %v3906 = vunpack.c.l.s4 1983009808
        %v3907 = vunpack.c.0.s8 %v3906
        %v3908 = vlaneseq
        %v3909 = vshrl.u32 %v3908, 7
        %v3910 = vsub.s32 %v3907, %v3909
        %v3911 = vrot.slane %v3903, %v3910
        %v3913 = vunpack.c.l.s4 1983009808
        %v3914 = vunpack.c.0.s8 %v3913
        %v3915 = vlaneseq
        %v3916 = vshrl.u32 %v3915, 7
        %v3917 = vsub.s32 %v3914, %v3916
        %v3918 = vrot.slane %v3904, %v3917
        %v3919 = vcombine.low %v3510, %v3512
        %v3920 = vcombine.high %v3510, %v3512
        %v3922 = vunpack.c.l.s4 1983009808
        %v3923 = vunpack.c.0.s8 %v3922
        %v3924 = vlaneseq
        %v3925 = vshrl.u32 %v3924, 7
        %v3926 = vsub.s32 %v3923, %v3925
        %v3927 = vrot.slane %v3919, %v3926
        %v3929 = vunpack.c.l.s4 1983009808
        %v3930 = vunpack.c.0.s8 %v3929
        %v3931 = vlaneseq
        %v3932 = vshrl.u32 %v3931, 7
        %v3933 = vsub.s32 %v3930, %v3932
        %v3934 = vrot.slane %v3920, %v3933
        %v3935 = vcombine.low %v3513, %v3515
        %v3936 = vcombine.high %v3513, %v3515
        %v3938 = vunpack.c.l.s4 1983009808
        %v3939 = vunpack.c.0.s8 %v3938
        %v3940 = vlaneseq
        %v3941 = vshrl.u32 %v3940, 7
        %v3942 = vsub.s32 %v3939, %v3941
        %v3943 = vrot.slane %v3935, %v3942
        %v3945 = vunpack.c.l.s4 1983009808
        %v3946 = vunpack.c.0.s8 %v3945
        %v3947 = vlaneseq
        %v3948 = vshrl.u32 %v3947, 7
        %v3949 = vsub.s32 %v3946, %v3948
        %v3950 = vrot.slane %v3936, %v3949
        %v3951 = vcombine.low %v3514, %v3516
        %v3952 = vcombine.high %v3514, %v3516
        %v3954 = vunpack.c.l.s4 1983009808
        %v3955 = vunpack.c.0.s8 %v3954
        %v3956 = vlaneseq
        %v3957 = vshrl.u32 %v3956, 7
        %v3958 = vsub.s32 %v3955, %v3957
        %v3959 = vrot.slane %v3951, %v3958
        %v3961 = vunpack.c.l.s4 1983009808
        %v3962 = vunpack.c.0.s8 %v3961
        %v3963 = vlaneseq
        %v3964 = vshrl.u32 %v3963, 7
        %v3965 = vsub.s32 %v3962, %v3964
        %v3966 = vrot.slane %v3952, %v3965
        %v3967 = vcombine.low %v3911, %v3927
        %v3968 = vcombine.high %v3911, %v3927
        %v3970 = vunpack.c.l.s4 1934713408
        %v3971 = vunpack.c.0.s8 %v3970
        %v3972 = vlaneseq
        %v3973 = vshrl.u32 %v3972, 7
        %v3974 = vsub.s32 %v3971, %v3973
        %v3975 = vrot.slane %v3967, %v3974
        %v3977 = vunpack.c.l.s4 1934713408
        %v3978 = vunpack.c.0.s8 %v3977
        %v3979 = vlaneseq
        %v3980 = vshrl.u32 %v3979, 7
        %v3981 = vsub.s32 %v3978, %v3980
        %v3982 = vrot.slane %v3968, %v3981
        %v3983 = vcombine.low %v3918, %v3934
        %v3985 = vunpack.c.l.s4 1934713408
        %v3986 = vunpack.c.0.s8 %v3985
        %v3987 = vlaneseq
        %v3988 = vshrl.u32 %v3987, 7
        %v3989 = vsub.s32 %v3986, %v3988
        %v3990 = vrot.slane %v3983, %v3989
        %v3991 = vcombine.low %v3943, %v3959
        %v3992 = vcombine.high %v3943, %v3959
        %v3994 = vunpack.c.l.s4 1934713408
        %v3995 = vunpack.c.0.s8 %v3994
        %v3996 = vlaneseq
        %v3997 = vshrl.u32 %v3996, 7
        %v3998 = vsub.s32 %v3995, %v3997
        %v3999 = vrot.slane %v3991, %v3998
        %v4001 = vunpack.c.l.s4 1934713408
        %v4002 = vunpack.c.0.s8 %v4001
        %v4003 = vlaneseq
        %v4004 = vshrl.u32 %v4003, 7
        %v4005 = vsub.s32 %v4002, %v4004
        %v4006 = vrot.slane %v3992, %v4005
        %v4007 = vcombine.low %v3950, %v3966
        %v4009 = vunpack.c.l.s4 1934713408
        %v4010 = vunpack.c.0.s8 %v4009
        %v4011 = vlaneseq
        %v4012 = vshrl.u32 %v4011, 7
        %v4013 = vsub.s32 %v4010, %v4012
        %v4014 = vrot.slane %v4007, %v4013
        %v4015 = vcombine.low %v3975, %v3999
        %v4016 = vcombine.high %v3975, %v3999
        %v4017 = vcombine.low %v3982, %v4006
        %v4018 = vcombine.high %v3982, %v4006
        %v4019 = vcombine.low %v3990, %v4014
        %v4020 = vcombine.high %v3990, %v4014
        %v4021 = vcombine.low %v3643, %v3645
        %v4022 = vcombine.high %v3643, %v3645
        %v4024 = vunpack.c.l.s4 1983009808
        %v4025 = vunpack.c.0.s8 %v4024
        %v4026 = vlaneseq
        %v4027 = vshrl.u32 %v4026, 7
        %v4028 = vsub.s32 %v4025, %v4027
        %v4029 = vrot.slane %v4021, %v4028
        %v4031 = vunpack.c.l.s4 1983009808
        %v4032 = vunpack.c.0.s8 %v4031
        %v4033 = vlaneseq
        %v4034 = vshrl.u32 %v4033, 7
        %v4035 = vsub.s32 %v4032, %v4034
        %v4036 = vrot.slane %v4022, %v4035
        %v4037 = vcombine.low %v3644, %v3646
        %v4038 = vcombine.high %v3644, %v3646
        %v4040 = vunpack.c.l.s4 1983009808
        %v4041 = vunpack.c.0.s8 %v4040
        %v4042 = vlaneseq
        %v4043 = vshrl.u32 %v4042, 7
        %v4044 = vsub.s32 %v4041, %v4043
        %v4045 = vrot.slane %v4037, %v4044
        %v4047 = vunpack.c.l.s4 1983009808
        %v4048 = vunpack.c.0.s8 %v4047
        %v4049 = vlaneseq
        %v4050 = vshrl.u32 %v4049, 7
        %v4051 = vsub.s32 %v4048, %v4050
        %v4052 = vrot.slane %v4038, %v4051
        %v4053 = vcombine.low %v3647, %v3649
        %v4054 = vcombine.high %v3647, %v3649
        %v4056 = vunpack.c.l.s4 1983009808
        %v4057 = vunpack.c.0.s8 %v4056
        %v4058 = vlaneseq
        %v4059 = vshrl.u32 %v4058, 7
        %v4060 = vsub.s32 %v4057, %v4059
        %v4061 = vrot.slane %v4053, %v4060
        %v4063 = vunpack.c.l.s4 1983009808
        %v4064 = vunpack.c.0.s8 %v4063
        %v4065 = vlaneseq
        %v4066 = vshrl.u32 %v4065, 7
        %v4067 = vsub.s32 %v4064, %v4066
        %v4068 = vrot.slane %v4054, %v4067
        %v4069 = vcombine.low %v3648, %v3650
        %v4070 = vcombine.high %v3648, %v3650
        %v4072 = vunpack.c.l.s4 1983009808
        %v4073 = vunpack.c.0.s8 %v4072
        %v4074 = vlaneseq
        %v4075 = vshrl.u32 %v4074, 7
        %v4076 = vsub.s32 %v4073, %v4075
        %v4077 = vrot.slane %v4069, %v4076
        %v4079 = vunpack.c.l.s4 1983009808
        %v4080 = vunpack.c.0.s8 %v4079
        %v4081 = vlaneseq
        %v4082 = vshrl.u32 %v4081, 7
        %v4083 = vsub.s32 %v4080, %v4082
        %v4084 = vrot.slane %v4070, %v4083
        %v4085 = vcombine.low %v4029, %v4045
        %v4086 = vcombine.high %v4029, %v4045
        %v4088 = vunpack.c.l.s4 1934713408
        %v4089 = vunpack.c.0.s8 %v4088
        %v4090 = vlaneseq
        %v4091 = vshrl.u32 %v4090, 7
        %v4092 = vsub.s32 %v4089, %v4091
        %v4093 = vrot.slane %v4085, %v4092
        %v4095 = vunpack.c.l.s4 1934713408
        %v4096 = vunpack.c.0.s8 %v4095
        %v4097 = vlaneseq
        %v4098 = vshrl.u32 %v4097, 7
        %v4099 = vsub.s32 %v4096, %v4098
        %v4100 = vrot.slane %v4086, %v4099
        %v4101 = vcombine.low %v4036, %v4052
        %v4103 = vunpack.c.l.s4 1934713408
        %v4104 = vunpack.c.0.s8 %v4103
        %v4105 = vlaneseq
        %v4106 = vshrl.u32 %v4105, 7
        %v4107 = vsub.s32 %v4104, %v4106
        %v4108 = vrot.slane %v4101, %v4107
        %v4109 = vcombine.low %v4061, %v4077
        %v4110 = vcombine.high %v4061, %v4077
        %v4112 = vunpack.c.l.s4 1934713408
        %v4113 = vunpack.c.0.s8 %v4112
        %v4114 = vlaneseq
        %v4115 = vshrl.u32 %v4114, 7
        %v4116 = vsub.s32 %v4113, %v4115
        %v4117 = vrot.slane %v4109, %v4116
        %v4119 = vunpack.c.l.s4 1934713408
        %v4120 = vunpack.c.0.s8 %v4119
        %v4121 = vlaneseq
        %v4122 = vshrl.u32 %v4121, 7
        %v4123 = vsub.s32 %v4120, %v4122
        %v4124 = vrot.slane %v4110, %v4123
        %v4125 = vcombine.low %v4068, %v4084
        %v4127 = vunpack.c.l.s4 1934713408
        %v4128 = vunpack.c.0.s8 %v4127
        %v4129 = vlaneseq
        %v4130 = vshrl.u32 %v4129, 7
        %v4131 = vsub.s32 %v4128, %v4130
        %v4132 = vrot.slane %v4125, %v4131
        %v4133 = vcombine.low %v4093, %v4117
        %v4134 = vcombine.high %v4093, %v4117
        %v4135 = vcombine.low %v4100, %v4124
        %v4136 = vcombine.high %v4100, %v4124
        %v4137 = vcombine.low %v4108, %v4132
        %v4138 = vcombine.high %v4108, %v4132
        %v4139 = vcombine.low %v3777, %v3779
        %v4140 = vcombine.high %v3777, %v3779
        %v4142 = vunpack.c.l.s4 1983009808
        %v4143 = vunpack.c.0.s8 %v4142
        %v4144 = vlaneseq
        %v4145 = vshrl.u32 %v4144, 7
        %v4146 = vsub.s32 %v4143, %v4145
        %v4147 = vrot.slane %v4139, %v4146
        %v4149 = vunpack.c.l.s4 1983009808
        %v4150 = vunpack.c.0.s8 %v4149
        %v4151 = vlaneseq
        %v4152 = vshrl.u32 %v4151, 7
        %v4153 = vsub.s32 %v4150, %v4152
        %v4154 = vrot.slane %v4140, %v4153
        %v4155 = vcombine.low %v3778, %v3780
        %v4156 = vcombine.high %v3778, %v3780
        %v4158 = vunpack.c.l.s4 1983009808
        %v4159 = vunpack.c.0.s8 %v4158
        %v4160 = vlaneseq
        %v4161 = vshrl.u32 %v4160, 7
        %v4162 = vsub.s32 %v4159, %v4161
        %v4163 = vrot.slane %v4155, %v4162
        %v4165 = vunpack.c.l.s4 1983009808
        %v4166 = vunpack.c.0.s8 %v4165
        %v4167 = vlaneseq
        %v4168 = vshrl.u32 %v4167, 7
        %v4169 = vsub.s32 %v4166, %v4168
        %v4170 = vrot.slane %v4156, %v4169
        %v4171 = vcombine.low %v3781, %v3783
        %v4172 = vcombine.high %v3781, %v3783
        %v4174 = vunpack.c.l.s4 1983009808
        %v4175 = vunpack.c.0.s8 %v4174
        %v4176 = vlaneseq
        %v4177 = vshrl.u32 %v4176, 7
        %v4178 = vsub.s32 %v4175, %v4177
        %v4179 = vrot.slane %v4171, %v4178
        %v4181 = vunpack.c.l.s4 1983009808
        %v4182 = vunpack.c.0.s8 %v4181
        %v4183 = vlaneseq
        %v4184 = vshrl.u32 %v4183, 7
        %v4185 = vsub.s32 %v4182, %v4184
        %v4186 = vrot.slane %v4172, %v4185
        %v4187 = vcombine.low %v3782, %v3784
        %v4188 = vcombine.high %v3782, %v3784
        %v4190 = vunpack.c.l.s4 1983009808
        %v4191 = vunpack.c.0.s8 %v4190
        %v4192 = vlaneseq
        %v4193 = vshrl.u32 %v4192, 7
        %v4194 = vsub.s32 %v4191, %v4193
        %v4195 = vrot.slane %v4187, %v4194
        %v4197 = vunpack.c.l.s4 1983009808
        %v4198 = vunpack.c.0.s8 %v4197
        %v4199 = vlaneseq
        %v4200 = vshrl.u32 %v4199, 7
        %v4201 = vsub.s32 %v4198, %v4200
        %v4202 = vrot.slane %v4188, %v4201
        %v4203 = vcombine.low %v4147, %v4163
        %v4204 = vcombine.high %v4147, %v4163
        %v4206 = vunpack.c.l.s4 1934713408
        %v4207 = vunpack.c.0.s8 %v4206
        %v4208 = vlaneseq
        %v4209 = vshrl.u32 %v4208, 7
        %v4210 = vsub.s32 %v4207, %v4209
        %v4211 = vrot.slane %v4203, %v4210
        %v4213 = vunpack.c.l.s4 1934713408
        %v4214 = vunpack.c.0.s8 %v4213
        %v4215 = vlaneseq
        %v4216 = vshrl.u32 %v4215, 7
        %v4217 = vsub.s32 %v4214, %v4216
        %v4218 = vrot.slane %v4204, %v4217
        %v4219 = vcombine.low %v4154, %v4170
        %v4221 = vunpack.c.l.s4 1934713408
        %v4222 = vunpack.c.0.s8 %v4221
        %v4223 = vlaneseq
        %v4224 = vshrl.u32 %v4223, 7
        %v4225 = vsub.s32 %v4222, %v4224
        %v4226 = vrot.slane %v4219, %v4225
        %v4227 = vcombine.low %v4179, %v4195
        %v4228 = vcombine.high %v4179, %v4195
        %v4230 = vunpack.c.l.s4 1934713408
        %v4231 = vunpack.c.0.s8 %v4230
        %v4232 = vlaneseq
        %v4233 = vshrl.u32 %v4232, 7
        %v4234 = vsub.s32 %v4231, %v4233
        %v4235 = vrot.slane %v4227, %v4234
        %v4237 = vunpack.c.l.s4 1934713408
        %v4238 = vunpack.c.0.s8 %v4237
        %v4239 = vlaneseq
        %v4240 = vshrl.u32 %v4239, 7
        %v4241 = vsub.s32 %v4238, %v4240
        %v4242 = vrot.slane %v4228, %v4241
        %v4243 = vcombine.low %v4186, %v4202
        %v4245 = vunpack.c.l.s4 1934713408
        %v4246 = vunpack.c.0.s8 %v4245
        %v4247 = vlaneseq
        %v4248 = vshrl.u32 %v4247, 7
        %v4249 = vsub.s32 %v4246, %v4248
        %v4250 = vrot.slane %v4243, %v4249
        %v4251 = vcombine.low %v4211, %v4235
        %v4252 = vcombine.high %v4211, %v4235
        %v4253 = vcombine.low %v4218, %v4242
        %v4254 = vcombine.high %v4218, %v4242
        %v4255 = vcombine.low %v4226, %v4250
        %v4256 = vcombine.high %v4226, %v4250
        %v4257 = vpack.c.bf16 %v4015, %v3897
        %v4258 = vpack.c.bf16 %v4016, %v3898
        %v4259 = vpack.c.bf16 %v4017, %v3899
        %v4260 = vpack.c.bf16 %v4018, %v3900
        %v4261 = vpack.c.bf16 %v4019, %v3901
        %v4262 = vpack.c.bf16 %v4020, %v3902
        %v4263 = vpack.c.bf16 %v4251, %v4133
        %v4264 = vpack.c.bf16 %v4252, %v4134
        %v4265 = vpack.c.bf16 %v4253, %v4135
        %v4266 = vpack.c.bf16 %v4254, %v4136
        %v4267 = vpack.c.bf16 %v4255, %v4137
        %v4268 = vpack.c.bf16 %v4256, %v4138
        %4273 = vrot.lane.b32.xlu0 %v2017, 64
        %v4274 = vpop.permute.xlu0 %4273
        %4275 = vrot.lane.b32.xlu0 %v2021, 64
        %v4276 = vpop.permute.xlu0 %4275
        %4277 = vrot.lane.b32.xlu0 %v2027, 64
        %v4278 = vpop.permute.xlu0 %4277
        %4279 = vrot.lane.b32.xlu0 %v2031, 64
        %v4280 = vpop.permute.xlu0 %4279
        %4289 = vrot.lane.b32.xlu0 %v2019, 64
        %v4290 = vpop.permute.xlu0 %4289
        %4291 = vrot.lane.b32.xlu0 %v2023, 64
        %v4292 = vpop.permute.xlu0 %4291
        %4293 = vrot.lane.b32.xlu0 %v2029, 64
        %v4294 = vpop.permute.xlu0 %4293
        %4295 = vrot.lane.b32.xlu0 %v2033, 64
        %v4296 = vpop.permute.xlu0 %4295
        %4305 = vrot.lane.b32.xlu0 %v2119, 64
        %v4306 = vpop.permute.xlu0 %4305
        %4307 = vrot.lane.b32.xlu0 %v2122, 64
        %v4308 = vpop.permute.xlu0 %4307
        %4309 = vrot.lane.b32.xlu0 %v2127, 64
        %v4310 = vpop.permute.xlu0 %4309
        %4311 = vrot.lane.b32.xlu0 %v2130, 64
        %v4312 = vpop.permute.xlu0 %4311
        %v4317 = vcombine.low %v2017, %v2019
        %v4318 = vcombine.high %v2017, %v2019
        %v4320 = vunpack.c.l.s4 1983009808
        %v4321 = vunpack.c.0.s8 %v4320
        %v4322 = vlaneseq
        %v4323 = vshrl.u32 %v4322, 7
        %v4324 = vsub.s32 %v4321, %v4323
        %v4325 = vrot.slane %v4317, %v4324
        %v4327 = vunpack.c.l.s4 1983009808
        %v4328 = vunpack.c.0.s8 %v4327
        %v4329 = vlaneseq
        %v4330 = vshrl.u32 %v4329, 7
        %v4331 = vsub.s32 %v4328, %v4330
        %v4332 = vrot.slane %v4318, %v4331
        %v4333 = vcombine.low %v4274, %v4290
        %v4334 = vcombine.high %v4274, %v4290
        %v4336 = vunpack.c.l.s4 1983009808
        %v4337 = vunpack.c.0.s8 %v4336
        %v4338 = vlaneseq
        %v4339 = vshrl.u32 %v4338, 7
        %v4340 = vsub.s32 %v4337, %v4339
        %v4341 = vrot.slane %v4333, %v4340
        %v4343 = vunpack.c.l.s4 1983009808
        %v4344 = vunpack.c.0.s8 %v4343
        %v4345 = vlaneseq
        %v4346 = vshrl.u32 %v4345, 7
        %v4347 = vsub.s32 %v4344, %v4346
        %v4348 = vrot.slane %v4334, %v4347
        %v4349 = vcombine.high %v2119, 0.0
        %v4351 = vunpack.c.l.s4 1983009808
        %v4352 = vunpack.c.0.s8 %v4351
        %v4353 = vlaneseq
        %v4354 = vshrl.u32 %v4353, 7
        %v4355 = vsub.s32 %v4352, %v4354
        %v4356 = vrot.slane %v2119, %v4355
        %v4358 = vunpack.c.l.s4 1983009808
        %v4359 = vunpack.c.0.s8 %v4358
        %v4360 = vlaneseq
        %v4361 = vshrl.u32 %v4360, 7
        %v4362 = vsub.s32 %v4359, %v4361
        %v4363 = vrot.slane %v4349, %v4362
        %v4364 = vcombine.high %v4306, 0.0
        %v4366 = vunpack.c.l.s4 1983009808
        %v4367 = vunpack.c.0.s8 %v4366
        %v4368 = vlaneseq
        %v4369 = vshrl.u32 %v4368, 7
        %v4370 = vsub.s32 %v4367, %v4369
        %v4371 = vrot.slane %v4306, %v4370
        %v4373 = vunpack.c.l.s4 1983009808
        %v4374 = vunpack.c.0.s8 %v4373
        %v4375 = vlaneseq
        %v4376 = vshrl.u32 %v4375, 7
        %v4377 = vsub.s32 %v4374, %v4376
        %v4378 = vrot.slane %v4364, %v4377
        %v4379 = vcombine.low %v4325, %v4341
        %v4380 = vcombine.high %v4325, %v4341
        %v4382 = vunpack.c.l.s4 1934713408
        %v4383 = vunpack.c.0.s8 %v4382
        %v4384 = vlaneseq
        %v4385 = vshrl.u32 %v4384, 7
        %v4386 = vsub.s32 %v4383, %v4385
        %v4387 = vrot.slane %v4379, %v4386
        %v4389 = vunpack.c.l.s4 1934713408
        %v4390 = vunpack.c.0.s8 %v4389
        %v4391 = vlaneseq
        %v4392 = vshrl.u32 %v4391, 7
        %v4393 = vsub.s32 %v4390, %v4392
        %v4394 = vrot.slane %v4380, %v4393
        %v4395 = vcombine.low %v4332, %v4348
        %v4396 = vcombine.high %v4332, %v4348
        %v4398 = vunpack.c.l.s4 1934713408
        %v4399 = vunpack.c.0.s8 %v4398
        %v4400 = vlaneseq
        %v4401 = vshrl.u32 %v4400, 7
        %v4402 = vsub.s32 %v4399, %v4401
        %v4403 = vrot.slane %v4395, %v4402
        %v4405 = vunpack.c.l.s4 1934713408
        %v4406 = vunpack.c.0.s8 %v4405
        %v4407 = vlaneseq
        %v4408 = vshrl.u32 %v4407, 7
        %v4409 = vsub.s32 %v4406, %v4408
        %v4410 = vrot.slane %v4396, %v4409
        %v4411 = vcombine.low %v4356, %v4371
        %v4412 = vcombine.high %v4356, %v4371
        %v4414 = vunpack.c.l.s4 1934713408
        %v4415 = vunpack.c.0.s8 %v4414
        %v4416 = vlaneseq
        %v4417 = vshrl.u32 %v4416, 7
        %v4418 = vsub.s32 %v4415, %v4417
        %v4419 = vrot.slane %v4411, %v4418
        %v4421 = vunpack.c.l.s4 1934713408
        %v4422 = vunpack.c.0.s8 %v4421
        %v4423 = vlaneseq
        %v4424 = vshrl.u32 %v4423, 7
        %v4425 = vsub.s32 %v4422, %v4424
        %v4426 = vrot.slane %v4412, %v4425
        %v4427 = vcombine.low %v4363, %v4378
        %v4428 = vcombine.high %v4363, %v4378
        %v4430 = vunpack.c.l.s4 1934713408
        %v4431 = vunpack.c.0.s8 %v4430
        %v4432 = vlaneseq
        %v4433 = vshrl.u32 %v4432, 7
        %v4434 = vsub.s32 %v4431, %v4433
        %v4435 = vrot.slane %v4427, %v4434
        %v4437 = vunpack.c.l.s4 1934713408
        %v4438 = vunpack.c.0.s8 %v4437
        %v4439 = vlaneseq
        %v4440 = vshrl.u32 %v4439, 7
        %v4441 = vsub.s32 %v4438, %v4440
        %v4442 = vrot.slane %v4428, %v4441
        %v4443 = vcombine.low %v4387, %v4419
        %v4444 = vcombine.high %v4387, %v4419
        %v4445 = vcombine.low %v4394, %v4426
        %v4446 = vcombine.high %v4394, %v4426
        %v4447 = vcombine.low %v4403, %v4435
        %v4448 = vcombine.high %v4403, %v4435
        %v4449 = vcombine.low %v4410, %v4442
        %v4450 = vcombine.high %v4410, %v4442
        %v4451 = vcombine.low %v2021, %v2023
        %v4452 = vcombine.high %v2021, %v2023
        %v4454 = vunpack.c.l.s4 1983009808
        %v4455 = vunpack.c.0.s8 %v4454
        %v4456 = vlaneseq
        %v4457 = vshrl.u32 %v4456, 7
        %v4458 = vsub.s32 %v4455, %v4457
        %v4459 = vrot.slane %v4451, %v4458
        %v4461 = vunpack.c.l.s4 1983009808
        %v4462 = vunpack.c.0.s8 %v4461
        %v4463 = vlaneseq
        %v4464 = vshrl.u32 %v4463, 7
        %v4465 = vsub.s32 %v4462, %v4464
        %v4466 = vrot.slane %v4452, %v4465
        %v4467 = vcombine.low %v4276, %v4292
        %v4468 = vcombine.high %v4276, %v4292
        %v4470 = vunpack.c.l.s4 1983009808
        %v4471 = vunpack.c.0.s8 %v4470
        %v4472 = vlaneseq
        %v4473 = vshrl.u32 %v4472, 7
        %v4474 = vsub.s32 %v4471, %v4473
        %v4475 = vrot.slane %v4467, %v4474
        %v4477 = vunpack.c.l.s4 1983009808
        %v4478 = vunpack.c.0.s8 %v4477
        %v4479 = vlaneseq
        %v4480 = vshrl.u32 %v4479, 7
        %v4481 = vsub.s32 %v4478, %v4480
        %v4482 = vrot.slane %v4468, %v4481
        %v4483 = vcombine.high %v2122, 0.0
        %v4485 = vunpack.c.l.s4 1983009808
        %v4486 = vunpack.c.0.s8 %v4485
        %v4487 = vlaneseq
        %v4488 = vshrl.u32 %v4487, 7
        %v4489 = vsub.s32 %v4486, %v4488
        %v4490 = vrot.slane %v2122, %v4489
        %v4492 = vunpack.c.l.s4 1983009808
        %v4493 = vunpack.c.0.s8 %v4492
        %v4494 = vlaneseq
        %v4495 = vshrl.u32 %v4494, 7
        %v4496 = vsub.s32 %v4493, %v4495
        %v4497 = vrot.slane %v4483, %v4496
        %v4498 = vcombine.high %v4308, 0.0
        %v4500 = vunpack.c.l.s4 1983009808
        %v4501 = vunpack.c.0.s8 %v4500
        %v4502 = vlaneseq
        %v4503 = vshrl.u32 %v4502, 7
        %v4504 = vsub.s32 %v4501, %v4503
        %v4505 = vrot.slane %v4308, %v4504
        %v4507 = vunpack.c.l.s4 1983009808
        %v4508 = vunpack.c.0.s8 %v4507
        %v4509 = vlaneseq
        %v4510 = vshrl.u32 %v4509, 7
        %v4511 = vsub.s32 %v4508, %v4510
        %v4512 = vrot.slane %v4498, %v4511
        %v4513 = vcombine.low %v4459, %v4475
        %v4514 = vcombine.high %v4459, %v4475
        %v4516 = vunpack.c.l.s4 1934713408
        %v4517 = vunpack.c.0.s8 %v4516
        %v4518 = vlaneseq
        %v4519 = vshrl.u32 %v4518, 7
        %v4520 = vsub.s32 %v4517, %v4519
        %v4521 = vrot.slane %v4513, %v4520
        %v4523 = vunpack.c.l.s4 1934713408
        %v4524 = vunpack.c.0.s8 %v4523
        %v4525 = vlaneseq
        %v4526 = vshrl.u32 %v4525, 7
        %v4527 = vsub.s32 %v4524, %v4526
        %v4528 = vrot.slane %v4514, %v4527
        %v4529 = vcombine.low %v4466, %v4482
        %v4530 = vcombine.high %v4466, %v4482
        %v4532 = vunpack.c.l.s4 1934713408
        %v4533 = vunpack.c.0.s8 %v4532
        %v4534 = vlaneseq
        %v4535 = vshrl.u32 %v4534, 7
        %v4536 = vsub.s32 %v4533, %v4535
        %v4537 = vrot.slane %v4529, %v4536
        %v4539 = vunpack.c.l.s4 1934713408
        %v4540 = vunpack.c.0.s8 %v4539
        %v4541 = vlaneseq
        %v4542 = vshrl.u32 %v4541, 7
        %v4543 = vsub.s32 %v4540, %v4542
        %v4544 = vrot.slane %v4530, %v4543
        %v4545 = vcombine.low %v4490, %v4505
        %v4546 = vcombine.high %v4490, %v4505
        %v4548 = vunpack.c.l.s4 1934713408
        %v4549 = vunpack.c.0.s8 %v4548
        %v4550 = vlaneseq
        %v4551 = vshrl.u32 %v4550, 7
        %v4552 = vsub.s32 %v4549, %v4551
        %v4553 = vrot.slane %v4545, %v4552
        %v4555 = vunpack.c.l.s4 1934713408
        %v4556 = vunpack.c.0.s8 %v4555
        %v4557 = vlaneseq
        %v4558 = vshrl.u32 %v4557, 7
        %v4559 = vsub.s32 %v4556, %v4558
        %v4560 = vrot.slane %v4546, %v4559
        %v4561 = vcombine.low %v4497, %v4512
        %v4562 = vcombine.high %v4497, %v4512
        %v4564 = vunpack.c.l.s4 1934713408
        %v4565 = vunpack.c.0.s8 %v4564
        %v4566 = vlaneseq
        %v4567 = vshrl.u32 %v4566, 7
        %v4568 = vsub.s32 %v4565, %v4567
        %v4569 = vrot.slane %v4561, %v4568
        %v4571 = vunpack.c.l.s4 1934713408
        %v4572 = vunpack.c.0.s8 %v4571
        %v4573 = vlaneseq
        %v4574 = vshrl.u32 %v4573, 7
        %v4575 = vsub.s32 %v4572, %v4574
        %v4576 = vrot.slane %v4562, %v4575
        %v4577 = vcombine.low %v4521, %v4553
        %v4578 = vcombine.high %v4521, %v4553
        %v4579 = vcombine.low %v4528, %v4560
        %v4580 = vcombine.high %v4528, %v4560
        %v4581 = vcombine.low %v4537, %v4569
        %v4582 = vcombine.high %v4537, %v4569
        %v4583 = vcombine.low %v4544, %v4576
        %v4584 = vcombine.high %v4544, %v4576
        %v4585 = vcombine.low %v2027, %v2029
        %v4586 = vcombine.high %v2027, %v2029
        %v4588 = vunpack.c.l.s4 1983009808
        %v4589 = vunpack.c.0.s8 %v4588
        %v4590 = vlaneseq
        %v4591 = vshrl.u32 %v4590, 7
        %v4592 = vsub.s32 %v4589, %v4591
        %v4593 = vrot.slane %v4585, %v4592
        %v4595 = vunpack.c.l.s4 1983009808
        %v4596 = vunpack.c.0.s8 %v4595
        %v4597 = vlaneseq
        %v4598 = vshrl.u32 %v4597, 7
        %v4599 = vsub.s32 %v4596, %v4598
        %v4600 = vrot.slane %v4586, %v4599
        %v4601 = vcombine.low %v4278, %v4294
        %v4602 = vcombine.high %v4278, %v4294
        %v4604 = vunpack.c.l.s4 1983009808
        %v4605 = vunpack.c.0.s8 %v4604
        %v4606 = vlaneseq
        %v4607 = vshrl.u32 %v4606, 7
        %v4608 = vsub.s32 %v4605, %v4607
        %v4609 = vrot.slane %v4601, %v4608
        %v4611 = vunpack.c.l.s4 1983009808
        %v4612 = vunpack.c.0.s8 %v4611
        %v4613 = vlaneseq
        %v4614 = vshrl.u32 %v4613, 7
        %v4615 = vsub.s32 %v4612, %v4614
        %v4616 = vrot.slane %v4602, %v4615
        %v4617 = vcombine.high %v2127, 0.0
        %v4619 = vunpack.c.l.s4 1983009808
        %v4620 = vunpack.c.0.s8 %v4619
        %v4621 = vlaneseq
        %v4622 = vshrl.u32 %v4621, 7
        %v4623 = vsub.s32 %v4620, %v4622
        %v4624 = vrot.slane %v2127, %v4623
        %v4626 = vunpack.c.l.s4 1983009808
        %v4627 = vunpack.c.0.s8 %v4626
        %v4628 = vlaneseq
        %v4629 = vshrl.u32 %v4628, 7
        %v4630 = vsub.s32 %v4627, %v4629
        %v4631 = vrot.slane %v4617, %v4630
        %v4632 = vcombine.high %v4310, 0.0
        %v4634 = vunpack.c.l.s4 1983009808
        %v4635 = vunpack.c.0.s8 %v4634
        %v4636 = vlaneseq
        %v4637 = vshrl.u32 %v4636, 7
        %v4638 = vsub.s32 %v4635, %v4637
        %v4639 = vrot.slane %v4310, %v4638
        %v4641 = vunpack.c.l.s4 1983009808
        %v4642 = vunpack.c.0.s8 %v4641
        %v4643 = vlaneseq
        %v4644 = vshrl.u32 %v4643, 7
        %v4645 = vsub.s32 %v4642, %v4644
        %v4646 = vrot.slane %v4632, %v4645
        %v4647 = vcombine.low %v4593, %v4609
        %v4648 = vcombine.high %v4593, %v4609
        %v4650 = vunpack.c.l.s4 1934713408
        %v4651 = vunpack.c.0.s8 %v4650
        %v4652 = vlaneseq
        %v4653 = vshrl.u32 %v4652, 7
        %v4654 = vsub.s32 %v4651, %v4653
        %v4655 = vrot.slane %v4647, %v4654
        %v4657 = vunpack.c.l.s4 1934713408
        %v4658 = vunpack.c.0.s8 %v4657
        %v4659 = vlaneseq
        %v4660 = vshrl.u32 %v4659, 7
        %v4661 = vsub.s32 %v4658, %v4660
        %v4662 = vrot.slane %v4648, %v4661
        %v4663 = vcombine.low %v4600, %v4616
        %v4664 = vcombine.high %v4600, %v4616
        %v4666 = vunpack.c.l.s4 1934713408
        %v4667 = vunpack.c.0.s8 %v4666
        %v4668 = vlaneseq
        %v4669 = vshrl.u32 %v4668, 7
        %v4670 = vsub.s32 %v4667, %v4669
        %v4671 = vrot.slane %v4663, %v4670
        %v4673 = vunpack.c.l.s4 1934713408
        %v4674 = vunpack.c.0.s8 %v4673
        %v4675 = vlaneseq
        %v4676 = vshrl.u32 %v4675, 7
        %v4677 = vsub.s32 %v4674, %v4676
        %v4678 = vrot.slane %v4664, %v4677
        %v4679 = vcombine.low %v4624, %v4639
        %v4680 = vcombine.high %v4624, %v4639
        %v4682 = vunpack.c.l.s4 1934713408
        %v4683 = vunpack.c.0.s8 %v4682
        %v4684 = vlaneseq
        %v4685 = vshrl.u32 %v4684, 7
        %v4686 = vsub.s32 %v4683, %v4685
        %v4687 = vrot.slane %v4679, %v4686
        %v4689 = vunpack.c.l.s4 1934713408
        %v4690 = vunpack.c.0.s8 %v4689
        %v4691 = vlaneseq
        %v4692 = vshrl.u32 %v4691, 7
        %v4693 = vsub.s32 %v4690, %v4692
        %v4694 = vrot.slane %v4680, %v4693
        %v4695 = vcombine.low %v4631, %v4646
        %v4696 = vcombine.high %v4631, %v4646
        %v4698 = vunpack.c.l.s4 1934713408
        %v4699 = vunpack.c.0.s8 %v4698
        %v4700 = vlaneseq
        %v4701 = vshrl.u32 %v4700, 7
        %v4702 = vsub.s32 %v4699, %v4701
        %v4703 = vrot.slane %v4695, %v4702
        %v4705 = vunpack.c.l.s4 1934713408
        %v4706 = vunpack.c.0.s8 %v4705
        %v4707 = vlaneseq
        %v4708 = vshrl.u32 %v4707, 7
        %v4709 = vsub.s32 %v4706, %v4708
        %v4710 = vrot.slane %v4696, %v4709
        %v4711 = vcombine.low %v4655, %v4687
        %v4712 = vcombine.high %v4655, %v4687
        %v4713 = vcombine.low %v4662, %v4694
        %v4714 = vcombine.high %v4662, %v4694
        %v4715 = vcombine.low %v4671, %v4703
        %v4716 = vcombine.high %v4671, %v4703
        %v4717 = vcombine.low %v4678, %v4710
        %v4718 = vcombine.high %v4678, %v4710
        %v4719 = vcombine.low %v2031, %v2033
        %v4720 = vcombine.high %v2031, %v2033
        %v4722 = vunpack.c.l.s4 1983009808
        %v4723 = vunpack.c.0.s8 %v4722
        %v4724 = vlaneseq
        %v4725 = vshrl.u32 %v4724, 7
        %v4726 = vsub.s32 %v4723, %v4725
        %v4727 = vrot.slane %v4719, %v4726
        %v4729 = vunpack.c.l.s4 1983009808
        %v4730 = vunpack.c.0.s8 %v4729
        %v4731 = vlaneseq
        %v4732 = vshrl.u32 %v4731, 7
        %v4733 = vsub.s32 %v4730, %v4732
        %v4734 = vrot.slane %v4720, %v4733
        %v4735 = vcombine.low %v4280, %v4296
        %v4736 = vcombine.high %v4280, %v4296
        %v4738 = vunpack.c.l.s4 1983009808
        %v4739 = vunpack.c.0.s8 %v4738
        %v4740 = vlaneseq
        %v4741 = vshrl.u32 %v4740, 7
        %v4742 = vsub.s32 %v4739, %v4741
        %v4743 = vrot.slane %v4735, %v4742
        %v4745 = vunpack.c.l.s4 1983009808
        %v4746 = vunpack.c.0.s8 %v4745
        %v4747 = vlaneseq
        %v4748 = vshrl.u32 %v4747, 7
        %v4749 = vsub.s32 %v4746, %v4748
        %v4750 = vrot.slane %v4736, %v4749
        %v4751 = vcombine.high %v2130, 0.0
        %v4753 = vunpack.c.l.s4 1983009808
        %v4754 = vunpack.c.0.s8 %v4753
        %v4755 = vlaneseq
        %v4756 = vshrl.u32 %v4755, 7
        %v4757 = vsub.s32 %v4754, %v4756
        %v4758 = vrot.slane %v2130, %v4757
        %v4760 = vunpack.c.l.s4 1983009808
        %v4761 = vunpack.c.0.s8 %v4760
        %v4762 = vlaneseq
        %v4763 = vshrl.u32 %v4762, 7
        %v4764 = vsub.s32 %v4761, %v4763
        %v4765 = vrot.slane %v4751, %v4764
        %v4766 = vcombine.high %v4312, 0.0
        %v4768 = vunpack.c.l.s4 1983009808
        %v4769 = vunpack.c.0.s8 %v4768
        %v4770 = vlaneseq
        %v4771 = vshrl.u32 %v4770, 7
        %v4772 = vsub.s32 %v4769, %v4771
        %v4773 = vrot.slane %v4312, %v4772
        %v4775 = vunpack.c.l.s4 1983009808
        %v4776 = vunpack.c.0.s8 %v4775
        %v4777 = vlaneseq
        %v4778 = vshrl.u32 %v4777, 7
        %v4779 = vsub.s32 %v4776, %v4778
        %v4780 = vrot.slane %v4766, %v4779
        %v4781 = vcombine.low %v4727, %v4743
        %v4782 = vcombine.high %v4727, %v4743
        %v4784 = vunpack.c.l.s4 1934713408
        %v4785 = vunpack.c.0.s8 %v4784
        %v4786 = vlaneseq
        %v4787 = vshrl.u32 %v4786, 7
        %v4788 = vsub.s32 %v4785, %v4787
        %v4789 = vrot.slane %v4781, %v4788
        %v4791 = vunpack.c.l.s4 1934713408
        %v4792 = vunpack.c.0.s8 %v4791
        %v4793 = vlaneseq
        %v4794 = vshrl.u32 %v4793, 7
        %v4795 = vsub.s32 %v4792, %v4794
        %v4796 = vrot.slane %v4782, %v4795
        %v4797 = vcombine.low %v4734, %v4750
        %v4798 = vcombine.high %v4734, %v4750
        %v4800 = vunpack.c.l.s4 1934713408
        %v4801 = vunpack.c.0.s8 %v4800
        %v4802 = vlaneseq
        %v4803 = vshrl.u32 %v4802, 7
        %v4804 = vsub.s32 %v4801, %v4803
        %v4805 = vrot.slane %v4797, %v4804
        %v4807 = vunpack.c.l.s4 1934713408
        %v4808 = vunpack.c.0.s8 %v4807
        %v4809 = vlaneseq
        %v4810 = vshrl.u32 %v4809, 7
        %v4811 = vsub.s32 %v4808, %v4810
        %v4812 = vrot.slane %v4798, %v4811
        %v4813 = vcombine.low %v4758, %v4773
        %v4814 = vcombine.high %v4758, %v4773
        %v4816 = vunpack.c.l.s4 1934713408
        %v4817 = vunpack.c.0.s8 %v4816
        %v4818 = vlaneseq
        %v4819 = vshrl.u32 %v4818, 7
        %v4820 = vsub.s32 %v4817, %v4819
        %v4821 = vrot.slane %v4813, %v4820
        %v4823 = vunpack.c.l.s4 1934713408
        %v4824 = vunpack.c.0.s8 %v4823
        %v4825 = vlaneseq
        %v4826 = vshrl.u32 %v4825, 7
        %v4827 = vsub.s32 %v4824, %v4826
        %v4828 = vrot.slane %v4814, %v4827
        %v4829 = vcombine.low %v4765, %v4780
        %v4830 = vcombine.high %v4765, %v4780
        %v4832 = vunpack.c.l.s4 1934713408
        %v4833 = vunpack.c.0.s8 %v4832
        %v4834 = vlaneseq
        %v4835 = vshrl.u32 %v4834, 7
        %v4836 = vsub.s32 %v4833, %v4835
        %v4837 = vrot.slane %v4829, %v4836
        %v4839 = vunpack.c.l.s4 1934713408
        %v4840 = vunpack.c.0.s8 %v4839
        %v4841 = vlaneseq
        %v4842 = vshrl.u32 %v4841, 7
        %v4843 = vsub.s32 %v4840, %v4842
        %v4844 = vrot.slane %v4830, %v4843
        %v4845 = vcombine.low %v4789, %v4821
        %v4846 = vcombine.high %v4789, %v4821
        %v4847 = vcombine.low %v4796, %v4828
        %v4848 = vcombine.high %v4796, %v4828
        %v4849 = vcombine.low %v4805, %v4837
        %v4850 = vcombine.high %v4805, %v4837
        %v4851 = vcombine.low %v4812, %v4844
        %v4852 = vcombine.high %v4812, %v4844
        %v4853 = vcombine.low %v4443, %v4445
        %v4854 = vcombine.high %v4443, %v4445
        %v4856 = vunpack.c.l.s4 1983009808
        %v4857 = vunpack.c.0.s8 %v4856
        %v4858 = vlaneseq
        %v4859 = vshrl.u32 %v4858, 7
        %v4860 = vsub.s32 %v4857, %v4859
        %v4861 = vrot.slane %v4853, %v4860
        %v4863 = vunpack.c.l.s4 1983009808
        %v4864 = vunpack.c.0.s8 %v4863
        %v4865 = vlaneseq
        %v4866 = vshrl.u32 %v4865, 7
        %v4867 = vsub.s32 %v4864, %v4866
        %v4868 = vrot.slane %v4854, %v4867
        %v4869 = vcombine.low %v4444, %v4446
        %v4870 = vcombine.high %v4444, %v4446
        %v4872 = vunpack.c.l.s4 1983009808
        %v4873 = vunpack.c.0.s8 %v4872
        %v4874 = vlaneseq
        %v4875 = vshrl.u32 %v4874, 7
        %v4876 = vsub.s32 %v4873, %v4875
        %v4877 = vrot.slane %v4869, %v4876
        %v4879 = vunpack.c.l.s4 1983009808
        %v4880 = vunpack.c.0.s8 %v4879
        %v4881 = vlaneseq
        %v4882 = vshrl.u32 %v4881, 7
        %v4883 = vsub.s32 %v4880, %v4882
        %v4884 = vrot.slane %v4870, %v4883
        %v4885 = vcombine.low %v4447, %v4449
        %v4886 = vcombine.high %v4447, %v4449
        %v4888 = vunpack.c.l.s4 1983009808
        %v4889 = vunpack.c.0.s8 %v4888
        %v4890 = vlaneseq
        %v4891 = vshrl.u32 %v4890, 7
        %v4892 = vsub.s32 %v4889, %v4891
        %v4893 = vrot.slane %v4885, %v4892
        %v4895 = vunpack.c.l.s4 1983009808
        %v4896 = vunpack.c.0.s8 %v4895
        %v4897 = vlaneseq
        %v4898 = vshrl.u32 %v4897, 7
        %v4899 = vsub.s32 %v4896, %v4898
        %v4900 = vrot.slane %v4886, %v4899
        %v4901 = vcombine.low %v4448, %v4450
        %v4902 = vcombine.high %v4448, %v4450
        %v4904 = vunpack.c.l.s4 1983009808
        %v4905 = vunpack.c.0.s8 %v4904
        %v4906 = vlaneseq
        %v4907 = vshrl.u32 %v4906, 7
        %v4908 = vsub.s32 %v4905, %v4907
        %v4909 = vrot.slane %v4901, %v4908
        %v4911 = vunpack.c.l.s4 1983009808
        %v4912 = vunpack.c.0.s8 %v4911
        %v4913 = vlaneseq
        %v4914 = vshrl.u32 %v4913, 7
        %v4915 = vsub.s32 %v4912, %v4914
        %v4916 = vrot.slane %v4902, %v4915
        %v4917 = vcombine.low %v4861, %v4877
        %v4918 = vcombine.high %v4861, %v4877
        %v4920 = vunpack.c.l.s4 1934713408
        %v4921 = vunpack.c.0.s8 %v4920
        %v4922 = vlaneseq
        %v4923 = vshrl.u32 %v4922, 7
        %v4924 = vsub.s32 %v4921, %v4923
        %v4925 = vrot.slane %v4917, %v4924
        %v4927 = vunpack.c.l.s4 1934713408
        %v4928 = vunpack.c.0.s8 %v4927
        %v4929 = vlaneseq
        %v4930 = vshrl.u32 %v4929, 7
        %v4931 = vsub.s32 %v4928, %v4930
        %v4932 = vrot.slane %v4918, %v4931
        %v4933 = vcombine.low %v4868, %v4884
        %v4935 = vunpack.c.l.s4 1934713408
        %v4936 = vunpack.c.0.s8 %v4935
        %v4937 = vlaneseq
        %v4938 = vshrl.u32 %v4937, 7
        %v4939 = vsub.s32 %v4936, %v4938
        %v4940 = vrot.slane %v4933, %v4939
        %v4941 = vcombine.low %v4893, %v4909
        %v4942 = vcombine.high %v4893, %v4909
        %v4944 = vunpack.c.l.s4 1934713408
        %v4945 = vunpack.c.0.s8 %v4944
        %v4946 = vlaneseq
        %v4947 = vshrl.u32 %v4946, 7
        %v4948 = vsub.s32 %v4945, %v4947
        %v4949 = vrot.slane %v4941, %v4948
        %v4951 = vunpack.c.l.s4 1934713408
        %v4952 = vunpack.c.0.s8 %v4951
        %v4953 = vlaneseq
        %v4954 = vshrl.u32 %v4953, 7
        %v4955 = vsub.s32 %v4952, %v4954
        %v4956 = vrot.slane %v4942, %v4955
        %v4957 = vcombine.low %v4900, %v4916
        %v4959 = vunpack.c.l.s4 1934713408
        %v4960 = vunpack.c.0.s8 %v4959
        %v4961 = vlaneseq
        %v4962 = vshrl.u32 %v4961, 7
        %v4963 = vsub.s32 %v4960, %v4962
        %v4964 = vrot.slane %v4957, %v4963
        %v4965 = vcombine.low %v4925, %v4949
        %v4966 = vcombine.high %v4925, %v4949
        %v4967 = vcombine.low %v4932, %v4956
        %v4968 = vcombine.high %v4932, %v4956
        %v4969 = vcombine.low %v4940, %v4964
        %v4970 = vcombine.high %v4940, %v4964
        %v4971 = vcombine.low %v4577, %v4579
        %v4972 = vcombine.high %v4577, %v4579
        %v4974 = vunpack.c.l.s4 1983009808
        %v4975 = vunpack.c.0.s8 %v4974
        %v4976 = vlaneseq
        %v4977 = vshrl.u32 %v4976, 7
        %v4978 = vsub.s32 %v4975, %v4977
        %v4979 = vrot.slane %v4971, %v4978
        %v4981 = vunpack.c.l.s4 1983009808
        %v4982 = vunpack.c.0.s8 %v4981
        %v4983 = vlaneseq
        %v4984 = vshrl.u32 %v4983, 7
        %v4985 = vsub.s32 %v4982, %v4984
        %v4986 = vrot.slane %v4972, %v4985
        %v4987 = vcombine.low %v4578, %v4580
        %v4988 = vcombine.high %v4578, %v4580
        %v4990 = vunpack.c.l.s4 1983009808
        %v4991 = vunpack.c.0.s8 %v4990
        %v4992 = vlaneseq
        %v4993 = vshrl.u32 %v4992, 7
        %v4994 = vsub.s32 %v4991, %v4993
        %v4995 = vrot.slane %v4987, %v4994
        %v4997 = vunpack.c.l.s4 1983009808
        %v4998 = vunpack.c.0.s8 %v4997
        %v4999 = vlaneseq
        %v5000 = vshrl.u32 %v4999, 7
        %v5001 = vsub.s32 %v4998, %v5000
        %v5002 = vrot.slane %v4988, %v5001
        %v5003 = vcombine.low %v4581, %v4583
        %v5004 = vcombine.high %v4581, %v4583
        %v5006 = vunpack.c.l.s4 1983009808
        %v5007 = vunpack.c.0.s8 %v5006
        %v5008 = vlaneseq
        %v5009 = vshrl.u32 %v5008, 7
        %v5010 = vsub.s32 %v5007, %v5009
        %v5011 = vrot.slane %v5003, %v5010
        %v5013 = vunpack.c.l.s4 1983009808
        %v5014 = vunpack.c.0.s8 %v5013
        %v5015 = vlaneseq
        %v5016 = vshrl.u32 %v5015, 7
        %v5017 = vsub.s32 %v5014, %v5016
        %v5018 = vrot.slane %v5004, %v5017
        %v5019 = vcombine.low %v4582, %v4584
        %v5020 = vcombine.high %v4582, %v4584
        %v5022 = vunpack.c.l.s4 1983009808
        %v5023 = vunpack.c.0.s8 %v5022
        %v5024 = vlaneseq
        %v5025 = vshrl.u32 %v5024, 7
        %v5026 = vsub.s32 %v5023, %v5025
        %v5027 = vrot.slane %v5019, %v5026
        %v5029 = vunpack.c.l.s4 1983009808
        %v5030 = vunpack.c.0.s8 %v5029
        %v5031 = vlaneseq
        %v5032 = vshrl.u32 %v5031, 7
        %v5033 = vsub.s32 %v5030, %v5032
        %v5034 = vrot.slane %v5020, %v5033
        %v5035 = vcombine.low %v4979, %v4995
        %v5036 = vcombine.high %v4979, %v4995
        %v5038 = vunpack.c.l.s4 1934713408
        %v5039 = vunpack.c.0.s8 %v5038
        %v5040 = vlaneseq
        %v5041 = vshrl.u32 %v5040, 7
        %v5042 = vsub.s32 %v5039, %v5041
        %v5043 = vrot.slane %v5035, %v5042
        %v5045 = vunpack.c.l.s4 1934713408
        %v5046 = vunpack.c.0.s8 %v5045
        %v5047 = vlaneseq
        %v5048 = vshrl.u32 %v5047, 7
        %v5049 = vsub.s32 %v5046, %v5048
        %v5050 = vrot.slane %v5036, %v5049
        %v5051 = vcombine.low %v4986, %v5002
        %v5053 = vunpack.c.l.s4 1934713408
        %v5054 = vunpack.c.0.s8 %v5053
        %v5055 = vlaneseq
        %v5056 = vshrl.u32 %v5055, 7
        %v5057 = vsub.s32 %v5054, %v5056
        %v5058 = vrot.slane %v5051, %v5057
        %v5059 = vcombine.low %v5011, %v5027
        %v5060 = vcombine.high %v5011, %v5027
        %v5062 = vunpack.c.l.s4 1934713408
        %v5063 = vunpack.c.0.s8 %v5062
        %v5064 = vlaneseq
        %v5065 = vshrl.u32 %v5064, 7
        %v5066 = vsub.s32 %v5063, %v5065
        %v5067 = vrot.slane %v5059, %v5066
        %v5069 = vunpack.c.l.s4 1934713408
        %v5070 = vunpack.c.0.s8 %v5069
        %v5071 = vlaneseq
        %v5072 = vshrl.u32 %v5071, 7
        %v5073 = vsub.s32 %v5070, %v5072
        %v5074 = vrot.slane %v5060, %v5073
        %v5075 = vcombine.low %v5018, %v5034
        %v5077 = vunpack.c.l.s4 1934713408
        %v5078 = vunpack.c.0.s8 %v5077
        %v5079 = vlaneseq
        %v5080 = vshrl.u32 %v5079, 7
        %v5081 = vsub.s32 %v5078, %v5080
        %v5082 = vrot.slane %v5075, %v5081
        %v5083 = vcombine.low %v5043, %v5067
        %v5084 = vcombine.high %v5043, %v5067
        %v5085 = vcombine.low %v5050, %v5074
        %v5086 = vcombine.high %v5050, %v5074
        %v5087 = vcombine.low %v5058, %v5082
        %v5088 = vcombine.high %v5058, %v5082
        %v5089 = vcombine.low %v4711, %v4713
        %v5090 = vcombine.high %v4711, %v4713
        %v5092 = vunpack.c.l.s4 1983009808
        %v5093 = vunpack.c.0.s8 %v5092
        %v5094 = vlaneseq
        %v5095 = vshrl.u32 %v5094, 7
        %v5096 = vsub.s32 %v5093, %v5095
        %v5097 = vrot.slane %v5089, %v5096
        %v5099 = vunpack.c.l.s4 1983009808
        %v5100 = vunpack.c.0.s8 %v5099
        %v5101 = vlaneseq
        %v5102 = vshrl.u32 %v5101, 7
        %v5103 = vsub.s32 %v5100, %v5102
        %v5104 = vrot.slane %v5090, %v5103
        %v5105 = vcombine.low %v4712, %v4714
        %v5106 = vcombine.high %v4712, %v4714
        %v5108 = vunpack.c.l.s4 1983009808
        %v5109 = vunpack.c.0.s8 %v5108
        %v5110 = vlaneseq
        %v5111 = vshrl.u32 %v5110, 7
        %v5112 = vsub.s32 %v5109, %v5111
        %v5113 = vrot.slane %v5105, %v5112
        %v5115 = vunpack.c.l.s4 1983009808
        %v5116 = vunpack.c.0.s8 %v5115
        %v5117 = vlaneseq
        %v5118 = vshrl.u32 %v5117, 7
        %v5119 = vsub.s32 %v5116, %v5118
        %v5120 = vrot.slane %v5106, %v5119
        %v5121 = vcombine.low %v4715, %v4717
        %v5122 = vcombine.high %v4715, %v4717
        %v5124 = vunpack.c.l.s4 1983009808
        %v5125 = vunpack.c.0.s8 %v5124
        %v5126 = vlaneseq
        %v5127 = vshrl.u32 %v5126, 7
        %v5128 = vsub.s32 %v5125, %v5127
        %v5129 = vrot.slane %v5121, %v5128
        %v5131 = vunpack.c.l.s4 1983009808
        %v5132 = vunpack.c.0.s8 %v5131
        %v5133 = vlaneseq
        %v5134 = vshrl.u32 %v5133, 7
        %v5135 = vsub.s32 %v5132, %v5134
        %v5136 = vrot.slane %v5122, %v5135
        %v5137 = vcombine.low %v4716, %v4718
        %v5138 = vcombine.high %v4716, %v4718
        %v5140 = vunpack.c.l.s4 1983009808
        %v5141 = vunpack.c.0.s8 %v5140
        %v5142 = vlaneseq
        %v5143 = vshrl.u32 %v5142, 7
        %v5144 = vsub.s32 %v5141, %v5143
        %v5145 = vrot.slane %v5137, %v5144
        %v5147 = vunpack.c.l.s4 1983009808
        %v5148 = vunpack.c.0.s8 %v5147
        %v5149 = vlaneseq
        %v5150 = vshrl.u32 %v5149, 7
        %v5151 = vsub.s32 %v5148, %v5150
        %v5152 = vrot.slane %v5138, %v5151
        %v5153 = vcombine.low %v5097, %v5113
        %v5154 = vcombine.high %v5097, %v5113
        %v5156 = vunpack.c.l.s4 1934713408
        %v5157 = vunpack.c.0.s8 %v5156
        %v5158 = vlaneseq
        %v5159 = vshrl.u32 %v5158, 7
        %v5160 = vsub.s32 %v5157, %v5159
        %v5161 = vrot.slane %v5153, %v5160
        %v5163 = vunpack.c.l.s4 1934713408
        %v5164 = vunpack.c.0.s8 %v5163
        %v5165 = vlaneseq
        %v5166 = vshrl.u32 %v5165, 7
        %v5167 = vsub.s32 %v5164, %v5166
        %v5168 = vrot.slane %v5154, %v5167
        %v5169 = vcombine.low %v5104, %v5120
        %v5171 = vunpack.c.l.s4 1934713408
        %v5172 = vunpack.c.0.s8 %v5171
        %v5173 = vlaneseq
        %v5174 = vshrl.u32 %v5173, 7
        %v5175 = vsub.s32 %v5172, %v5174
        %v5176 = vrot.slane %v5169, %v5175
        %v5177 = vcombine.low %v5129, %v5145
        %v5178 = vcombine.high %v5129, %v5145
        %v5180 = vunpack.c.l.s4 1934713408
        %v5181 = vunpack.c.0.s8 %v5180
        %v5182 = vlaneseq
        %v5183 = vshrl.u32 %v5182, 7
        %v5184 = vsub.s32 %v5181, %v5183
        %v5185 = vrot.slane %v5177, %v5184
        %v5187 = vunpack.c.l.s4 1934713408
        %v5188 = vunpack.c.0.s8 %v5187
        %v5189 = vlaneseq
        %v5190 = vshrl.u32 %v5189, 7
        %v5191 = vsub.s32 %v5188, %v5190
        %v5192 = vrot.slane %v5178, %v5191
        %v5193 = vcombine.low %v5136, %v5152
        %v5195 = vunpack.c.l.s4 1934713408
        %v5196 = vunpack.c.0.s8 %v5195
        %v5197 = vlaneseq
        %v5198 = vshrl.u32 %v5197, 7
        %v5199 = vsub.s32 %v5196, %v5198
        %v5200 = vrot.slane %v5193, %v5199
        %v5201 = vcombine.low %v5161, %v5185
        %v5202 = vcombine.high %v5161, %v5185
        %v5203 = vcombine.low %v5168, %v5192
        %v5204 = vcombine.high %v5168, %v5192
        %v5205 = vcombine.low %v5176, %v5200
        %v5206 = vcombine.high %v5176, %v5200
        %v5207 = vcombine.low %v4845, %v4847
        %v5208 = vcombine.high %v4845, %v4847
        %v5210 = vunpack.c.l.s4 1983009808
        %v5211 = vunpack.c.0.s8 %v5210
        %v5212 = vlaneseq
        %v5213 = vshrl.u32 %v5212, 7
        %v5214 = vsub.s32 %v5211, %v5213
        %v5215 = vrot.slane %v5207, %v5214
        %v5217 = vunpack.c.l.s4 1983009808
        %v5218 = vunpack.c.0.s8 %v5217
        %v5219 = vlaneseq
        %v5220 = vshrl.u32 %v5219, 7
        %v5221 = vsub.s32 %v5218, %v5220
        %v5222 = vrot.slane %v5208, %v5221
        %v5223 = vcombine.low %v4846, %v4848
        %v5224 = vcombine.high %v4846, %v4848
        %v5226 = vunpack.c.l.s4 1983009808
        %v5227 = vunpack.c.0.s8 %v5226
        %v5228 = vlaneseq
        %v5229 = vshrl.u32 %v5228, 7
        %v5230 = vsub.s32 %v5227, %v5229
        %v5231 = vrot.slane %v5223, %v5230
        %v5233 = vunpack.c.l.s4 1983009808
        %v5234 = vunpack.c.0.s8 %v5233
        %v5235 = vlaneseq
        %v5236 = vshrl.u32 %v5235, 7
        %v5237 = vsub.s32 %v5234, %v5236
        %v5238 = vrot.slane %v5224, %v5237
        %v5239 = vcombine.low %v4849, %v4851
        %v5240 = vcombine.high %v4849, %v4851
        %v5242 = vunpack.c.l.s4 1983009808
        %v5243 = vunpack.c.0.s8 %v5242
        %v5244 = vlaneseq
        %v5245 = vshrl.u32 %v5244, 7
        %v5246 = vsub.s32 %v5243, %v5245
        %v5247 = vrot.slane %v5239, %v5246
        %v5249 = vunpack.c.l.s4 1983009808
        %v5250 = vunpack.c.0.s8 %v5249
        %v5251 = vlaneseq
        %v5252 = vshrl.u32 %v5251, 7
        %v5253 = vsub.s32 %v5250, %v5252
        %v5254 = vrot.slane %v5240, %v5253
        %v5255 = vcombine.low %v4850, %v4852
        %v5256 = vcombine.high %v4850, %v4852
        %v5258 = vunpack.c.l.s4 1983009808
        %v5259 = vunpack.c.0.s8 %v5258
        %v5260 = vlaneseq
        %v5261 = vshrl.u32 %v5260, 7
        %v5262 = vsub.s32 %v5259, %v5261
        %v5263 = vrot.slane %v5255, %v5262
        %v5265 = vunpack.c.l.s4 1983009808
        %v5266 = vunpack.c.0.s8 %v5265
        %v5267 = vlaneseq
        %v5268 = vshrl.u32 %v5267, 7
        %v5269 = vsub.s32 %v5266, %v5268
        %v5270 = vrot.slane %v5256, %v5269
        %v5271 = vcombine.low %v5215, %v5231
        %v5272 = vcombine.high %v5215, %v5231
        %v5274 = vunpack.c.l.s4 1934713408
        %v5275 = vunpack.c.0.s8 %v5274
        %v5276 = vlaneseq
        %v5277 = vshrl.u32 %v5276, 7
        %v5278 = vsub.s32 %v5275, %v5277
        %v5279 = vrot.slane %v5271, %v5278
        %v5281 = vunpack.c.l.s4 1934713408
        %v5282 = vunpack.c.0.s8 %v5281
        %v5283 = vlaneseq
        %v5284 = vshrl.u32 %v5283, 7
        %v5285 = vsub.s32 %v5282, %v5284
        %v5286 = vrot.slane %v5272, %v5285
        %v5287 = vcombine.low %v5222, %v5238
        %v5289 = vunpack.c.l.s4 1934713408
        %v5290 = vunpack.c.0.s8 %v5289
        %v5291 = vlaneseq
        %v5292 = vshrl.u32 %v5291, 7
        %v5293 = vsub.s32 %v5290, %v5292
        %v5294 = vrot.slane %v5287, %v5293
        %v5295 = vcombine.low %v5247, %v5263
        %v5296 = vcombine.high %v5247, %v5263
        %v5298 = vunpack.c.l.s4 1934713408
        %v5299 = vunpack.c.0.s8 %v5298
        %v5300 = vlaneseq
        %v5301 = vshrl.u32 %v5300, 7
        %v5302 = vsub.s32 %v5299, %v5301
        %v5303 = vrot.slane %v5295, %v5302
        %v5305 = vunpack.c.l.s4 1934713408
        %v5306 = vunpack.c.0.s8 %v5305
        %v5307 = vlaneseq
        %v5308 = vshrl.u32 %v5307, 7
        %v5309 = vsub.s32 %v5306, %v5308
        %v5310 = vrot.slane %v5296, %v5309
        %v5311 = vcombine.low %v5254, %v5270
        %v5313 = vunpack.c.l.s4 1934713408
        %v5314 = vunpack.c.0.s8 %v5313
        %v5315 = vlaneseq
        %v5316 = vshrl.u32 %v5315, 7
        %v5317 = vsub.s32 %v5314, %v5316
        %v5318 = vrot.slane %v5311, %v5317
        %v5319 = vcombine.low %v5279, %v5303
        %v5320 = vcombine.high %v5279, %v5303
        %v5321 = vcombine.low %v5286, %v5310
        %v5322 = vcombine.high %v5286, %v5310
        %v5323 = vcombine.low %v5294, %v5318
        %v5324 = vcombine.high %v5294, %v5318
        %v5325 = vpack.c.bf16 %v5083, %v4965
        %v5326 = vpack.c.bf16 %v5084, %v4966
        %v5327 = vpack.c.bf16 %v5085, %v4967
        %v5328 = vpack.c.bf16 %v5086, %v4968
        %v5329 = vpack.c.bf16 %v5087, %v4969
        %v5330 = vpack.c.bf16 %v5088, %v4970
        %v5331 = vpack.c.bf16 %v5319, %v5201
        %v5332 = vpack.c.bf16 %v5320, %v5202
        %v5333 = vpack.c.bf16 %v5321, %v5203
        %v5334 = vpack.c.bf16 %v5322, %v5204
        %v5335 = vpack.c.bf16 %v5323, %v5205
        %v5336 = vpack.c.bf16 %v5324, %v5206
        %vm5337 = vcmask 523264
        %v5339 = vsel %vm5337, %v3189, 0
        %v5342 = vsel %vm5337, %v4257, 0
        %5344 = vmatprep.subr.bf16.mxu0 0
        %5345 = vmatpush1.bf16.xpose.msra.mxu0 %v5342
        %5346 = vmatprep.subr.bf16.mxu0 0
        %5347 = vmatpush1.bf16.xpose.msra.mxu0 0
        %5348 = vmatprep.subr.bf16.mxu0 0
        %5349 = vmatpush1.bf16.xpose.msra.mxu0 0
        %5350 = vmatprep.subr.bf16.mxu0 0
        %5351 = vmatpush1.bf16.xpose.msra.mxu0 0
        %5352 = vmatprep.subr.bf16.mxu0 0
        %5353 = vmatpush1.bf16.xpose.msra.mxu0 0
        %5354 = vmatprep.subr.bf16.mxu0 0
        %5355 = vmatpush1.bf16.xpose.msra.mxu0 0
        %5356 = vmatprep.subr.bf16.mxu0 0
        %5357 = vmatpush1.bf16.xpose.msra.mxu0 0
        %5358 = vmatprep.subr.bf16.mxu0 0
        %5359 = vmatpush1.bf16.xpose.msra.mxu0 0
        %5360 = vmatprep.subr.bf16.mxu0 0
        %5361 = vmatpush1.bf16.xpose.msra.mxu0 0
        %5362 = vmatprep.subr.bf16.mxu0 0
        %5363 = vmatpush1.bf16.xpose.msra.mxu0 0
        %5364 = vmatprep.subr.bf16.mxu0 0
        %5365 = vmatpush1.bf16.xpose.msra.mxu0 0
        %5366 = vmatprep.subr.bf16.mxu0 0
        %5367 = vmatpush1.bf16.xpose.msra.mxu0 0
        %5368 = vmatprep.subr.bf16.mxu0 0
        %5369 = vmatpush1.bf16.xpose.msra.mxu0 0
        %5370 = vmatprep.subr.bf16.mxu0 0
        %5371 = vmatpush1.bf16.xpose.msra.mxu0 0
        %5372 = vmatprep.subr.bf16.mxu0 0
        %5373 = vmatpush1.bf16.xpose.msra.mxu0 0
        %5374 = vmatprep.subr.bf16.mxu0 0
        %5375 = vmatpush1.bf16.xpose.msra.mxu0 0
        %5376 = vmatprep.mubr.bf16.mxu0 0
        %5377 = vmatmul.mubr.bf16.gmra.mrb[0].mxu0 %v5339
        %v5378 = vpop.f32.mrb[0].mxu0
        %v5379 = vadd.f32 0.0, %v5378
        %v5380 = vpop.f32.mrb[0].mxu0
        %v5381 = vpop.f32.mrb[0].mxu0
        %v5382 = vadd.f32 0.0, %v5381
        %v5383 = vpop.f32.mrb[0].mxu0
        %5384 = vdwg.mxu0
        %v5386 = vsel %vm5337, %v3190, 0
        %v5389 = vsel %vm5337, %v4258, 0
        %5391 = vmatprep.subr.bf16.mxu0 0
        %5392 = vmatpush1.bf16.xpose.msra.mxu0 %v5389
        %5393 = vmatprep.subr.bf16.mxu0 0
        %5394 = vmatpush1.bf16.xpose.msra.mxu0 0
        %5395 = vmatprep.subr.bf16.mxu0 0
        %5396 = vmatpush1.bf16.xpose.msra.mxu0 0
        %5397 = vmatprep.subr.bf16.mxu0 0
        %5398 = vmatpush1.bf16.xpose.msra.mxu0 0
        %5399 = vmatprep.subr.bf16.mxu0 0
        %5400 = vmatpush1.bf16.xpose.msra.mxu0 0
        %5401 = vmatprep.subr.bf16.mxu0 0
        %5402 = vmatpush1.bf16.xpose.msra.mxu0 0
        %5403 = vmatprep.subr.bf16.mxu0 0
        %5404 = vmatpush1.bf16.xpose.msra.mxu0 0
        %5405 = vmatprep.subr.bf16.mxu0 0
        %5406 = vmatpush1.bf16.xpose.msra.mxu0 0
        %5407 = vmatprep.subr.bf16.mxu0 0
        %5408 = vmatpush1.bf16.xpose.msra.mxu0 0
        %5409 = vmatprep.subr.bf16.mxu0 0
        %5410 = vmatpush1.bf16.xpose.msra.mxu0 0
        %5411 = vmatprep.subr.bf16.mxu0 0
        %5412 = vmatpush1.bf16.xpose.msra.mxu0 0
        %5413 = vmatprep.subr.bf16.mxu0 0
        %5414 = vmatpush1.bf16.xpose.msra.mxu0 0
        %5415 = vmatprep.subr.bf16.mxu0 0
        %5416 = vmatpush1.bf16.xpose.msra.mxu0 0
        %5417 = vmatprep.subr.bf16.mxu0 0
        %5418 = vmatpush1.bf16.xpose.msra.mxu0 0
        %5419 = vmatprep.subr.bf16.mxu0 0
        %5420 = vmatpush1.bf16.xpose.msra.mxu0 0
        %5421 = vmatprep.subr.bf16.mxu0 0
        %5422 = vmatpush1.bf16.xpose.msra.mxu0 0
        %5423 = vmatprep.mubr.bf16.mxu0 0
        %5424 = vmatmul.mubr.bf16.gmra.mrb[0].mxu0 %v5386
        %v5425 = vpop.f32.mrb[0].mxu0
        %v5426 = vadd.f32 0.0, %v5425
        %v5427 = vpop.f32.mrb[0].mxu0
        %v5428 = vpop.f32.mrb[0].mxu0
        %v5429 = vadd.f32 0.0, %v5428
        %v5430 = vpop.f32.mrb[0].mxu0
        %5431 = vdwg.mxu0
        %v5433 = vsel %vm5337, %v3191, 0
        %v5436 = vsel %vm5337, %v4259, 0
        %5438 = vmatprep.subr.bf16.mxu0 0
        %5439 = vmatpush1.bf16.xpose.msra.mxu0 %v5436
        %5440 = vmatprep.subr.bf16.mxu0 0
        %5441 = vmatpush1.bf16.xpose.msra.mxu0 0
        %5442 = vmatprep.subr.bf16.mxu0 0
        %5443 = vmatpush1.bf16.xpose.msra.mxu0 0
        %5444 = vmatprep.subr.bf16.mxu0 0
        %5445 = vmatpush1.bf16.xpose.msra.mxu0 0
        %5446 = vmatprep.subr.bf16.mxu0 0
        %5447 = vmatpush1.bf16.xpose.msra.mxu0 0
        %5448 = vmatprep.subr.bf16.mxu0 0
        %5449 = vmatpush1.bf16.xpose.msra.mxu0 0
        %5450 = vmatprep.subr.bf16.mxu0 0
        %5451 = vmatpush1.bf16.xpose.msra.mxu0 0
        %5452 = vmatprep.subr.bf16.mxu0 0
        %5453 = vmatpush1.bf16.xpose.msra.mxu0 0
        %5454 = vmatprep.subr.bf16.mxu0 0
        %5455 = vmatpush1.bf16.xpose.msra.mxu0 0
        %5456 = vmatprep.subr.bf16.mxu0 0
        %5457 = vmatpush1.bf16.xpose.msra.mxu0 0
        %5458 = vmatprep.subr.bf16.mxu0 0
        %5459 = vmatpush1.bf16.xpose.msra.mxu0 0
        %5460 = vmatprep.subr.bf16.mxu0 0
        %5461 = vmatpush1.bf16.xpose.msra.mxu0 0
        %5462 = vmatprep.subr.bf16.mxu0 0
        %5463 = vmatpush1.bf16.xpose.msra.mxu0 0
        %5464 = vmatprep.subr.bf16.mxu0 0
        %5465 = vmatpush1.bf16.xpose.msra.mxu0 0
        %5466 = vmatprep.subr.bf16.mxu0 0
        %5467 = vmatpush1.bf16.xpose.msra.mxu0 0
        %5468 = vmatprep.subr.bf16.mxu0 0
        %5469 = vmatpush1.bf16.xpose.msra.mxu0 0
        %5470 = vmatprep.mubr.bf16.mxu0 0
        %5471 = vmatmul.mubr.bf16.gmra.mrb[0].mxu0 %v5433
        %v5472 = vpop.f32.mrb[0].mxu0
        %v5473 = vadd.f32 0.0, %v5472
        %v5474 = vpop.f32.mrb[0].mxu0
        %v5475 = vpop.f32.mrb[0].mxu0
        %v5476 = vadd.f32 0.0, %v5475
        %v5477 = vpop.f32.mrb[0].mxu0
        %5478 = vdwg.mxu0
        %v5480 = vsel %vm5337, %v3192, 0
        %v5483 = vsel %vm5337, %v4260, 0
        %5485 = vmatprep.subr.bf16.mxu0 0
        %5486 = vmatpush1.bf16.xpose.msra.mxu0 %v5483
        %5487 = vmatprep.subr.bf16.mxu0 0
        %5488 = vmatpush1.bf16.xpose.msra.mxu0 0
        %5489 = vmatprep.subr.bf16.mxu0 0
        %5490 = vmatpush1.bf16.xpose.msra.mxu0 0
        %5491 = vmatprep.subr.bf16.mxu0 0
        %5492 = vmatpush1.bf16.xpose.msra.mxu0 0
        %5493 = vmatprep.subr.bf16.mxu0 0
        %5494 = vmatpush1.bf16.xpose.msra.mxu0 0
        %5495 = vmatprep.subr.bf16.mxu0 0
        %5496 = vmatpush1.bf16.xpose.msra.mxu0 0
        %5497 = vmatprep.subr.bf16.mxu0 0
        %5498 = vmatpush1.bf16.xpose.msra.mxu0 0
        %5499 = vmatprep.subr.bf16.mxu0 0
        %5500 = vmatpush1.bf16.xpose.msra.mxu0 0
        %5501 = vmatprep.subr.bf16.mxu0 0
        %5502 = vmatpush1.bf16.xpose.msra.mxu0 0
        %5503 = vmatprep.subr.bf16.mxu0 0
        %5504 = vmatpush1.bf16.xpose.msra.mxu0 0
        %5505 = vmatprep.subr.bf16.mxu0 0
        %5506 = vmatpush1.bf16.xpose.msra.mxu0 0
        %5507 = vmatprep.subr.bf16.mxu0 0
        %5508 = vmatpush1.bf16.xpose.msra.mxu0 0
        %5509 = vmatprep.subr.bf16.mxu0 0
        %5510 = vmatpush1.bf16.xpose.msra.mxu0 0
        %5511 = vmatprep.subr.bf16.mxu0 0
        %5512 = vmatpush1.bf16.xpose.msra.mxu0 0
        %5513 = vmatprep.subr.bf16.mxu0 0
        %5514 = vmatpush1.bf16.xpose.msra.mxu0 0
        %5515 = vmatprep.subr.bf16.mxu0 0
        %5516 = vmatpush1.bf16.xpose.msra.mxu0 0
        %5517 = vmatprep.mubr.bf16.mxu0 0
        %5518 = vmatmul.mubr.bf16.gmra.mrb[0].mxu0 %v5480
        %v5519 = vpop.f32.mrb[0].mxu0
        %v5520 = vadd.f32 0.0, %v5519
        %v5521 = vpop.f32.mrb[0].mxu0
        %v5522 = vpop.f32.mrb[0].mxu0
        %v5523 = vadd.f32 0.0, %v5522
        %v5524 = vpop.f32.mrb[0].mxu0
        %5525 = vdwg.mxu0
        %v5527 = vsel %vm5337, %v3193, 0
        %v5530 = vsel %vm5337, %v4261, 0
        %5532 = vmatprep.subr.bf16.mxu0 0
        %5533 = vmatpush1.bf16.xpose.msra.mxu0 %v5530
        %5534 = vmatprep.subr.bf16.mxu0 0
        %5535 = vmatpush1.bf16.xpose.msra.mxu0 0
        %5536 = vmatprep.subr.bf16.mxu0 0
        %5537 = vmatpush1.bf16.xpose.msra.mxu0 0
        %5538 = vmatprep.subr.bf16.mxu0 0
        %5539 = vmatpush1.bf16.xpose.msra.mxu0 0
        %5540 = vmatprep.subr.bf16.mxu0 0
        %5541 = vmatpush1.bf16.xpose.msra.mxu0 0
        %5542 = vmatprep.subr.bf16.mxu0 0
        %5543 = vmatpush1.bf16.xpose.msra.mxu0 0
        %5544 = vmatprep.subr.bf16.mxu0 0
        %5545 = vmatpush1.bf16.xpose.msra.mxu0 0
        %5546 = vmatprep.subr.bf16.mxu0 0
        %5547 = vmatpush1.bf16.xpose.msra.mxu0 0
        %5548 = vmatprep.subr.bf16.mxu0 0
        %5549 = vmatpush1.bf16.xpose.msra.mxu0 0
        %5550 = vmatprep.subr.bf16.mxu0 0
        %5551 = vmatpush1.bf16.xpose.msra.mxu0 0
        %5552 = vmatprep.subr.bf16.mxu0 0
        %5553 = vmatpush1.bf16.xpose.msra.mxu0 0
        %5554 = vmatprep.subr.bf16.mxu0 0
        %5555 = vmatpush1.bf16.xpose.msra.mxu0 0
        %5556 = vmatprep.subr.bf16.mxu0 0
        %5557 = vmatpush1.bf16.xpose.msra.mxu0 0
        %5558 = vmatprep.subr.bf16.mxu0 0
        %5559 = vmatpush1.bf16.xpose.msra.mxu0 0
        %5560 = vmatprep.subr.bf16.mxu0 0
        %5561 = vmatpush1.bf16.xpose.msra.mxu0 0
        %5562 = vmatprep.subr.bf16.mxu0 0
        %5563 = vmatpush1.bf16.xpose.msra.mxu0 0
        %5564 = vmatprep.mubr.bf16.mxu0 0
        %5565 = vmatmul.mubr.bf16.gmra.mrb[0].mxu0 %v5527
        %v5566 = vpop.f32.mrb[0].mxu0
        %v5567 = vadd.f32 0.0, %v5566
        %v5568 = vpop.f32.mrb[0].mxu0
        %v5569 = vpop.f32.mrb[0].mxu0
        %v5570 = vadd.f32 0.0, %v5569
        %v5571 = vpop.f32.mrb[0].mxu0
        %5572 = vdwg.mxu0
        %v5574 = vsel %vm5337, %v3194, 0
        %v5577 = vsel %vm5337, %v4262, 0
        %5579 = vmatprep.subr.bf16.mxu0 0
        %5580 = vmatpush1.bf16.xpose.msra.mxu0 %v5577
        %5581 = vmatprep.subr.bf16.mxu0 0
        %5582 = vmatpush1.bf16.xpose.msra.mxu0 0
        %5583 = vmatprep.subr.bf16.mxu0 0
        %5584 = vmatpush1.bf16.xpose.msra.mxu0 0
        %5585 = vmatprep.subr.bf16.mxu0 0
        %5586 = vmatpush1.bf16.xpose.msra.mxu0 0
        %5587 = vmatprep.subr.bf16.mxu0 0
        %5588 = vmatpush1.bf16.xpose.msra.mxu0 0
        %5589 = vmatprep.subr.bf16.mxu0 0
        %5590 = vmatpush1.bf16.xpose.msra.mxu0 0
        %5591 = vmatprep.subr.bf16.mxu0 0
        %5592 = vmatpush1.bf16.xpose.msra.mxu0 0
        %5593 = vmatprep.subr.bf16.mxu0 0
        %5594 = vmatpush1.bf16.xpose.msra.mxu0 0
        %5595 = vmatprep.subr.bf16.mxu0 0
        %5596 = vmatpush1.bf16.xpose.msra.mxu0 0
        %5597 = vmatprep.subr.bf16.mxu0 0
        %5598 = vmatpush1.bf16.xpose.msra.mxu0 0
        %5599 = vmatprep.subr.bf16.mxu0 0
        %5600 = vmatpush1.bf16.xpose.msra.mxu0 0
        %5601 = vmatprep.subr.bf16.mxu0 0
        %5602 = vmatpush1.bf16.xpose.msra.mxu0 0
        %5603 = vmatprep.subr.bf16.mxu0 0
        %5604 = vmatpush1.bf16.xpose.msra.mxu0 0
        %5605 = vmatprep.subr.bf16.mxu0 0
        %5606 = vmatpush1.bf16.xpose.msra.mxu0 0
        %5607 = vmatprep.subr.bf16.mxu0 0
        %5608 = vmatpush1.bf16.xpose.msra.mxu0 0
        %5609 = vmatprep.subr.bf16.mxu0 0
        %5610 = vmatpush1.bf16.xpose.msra.mxu0 0
        %5611 = vmatprep.mubr.bf16.mxu0 0
        %5612 = vmatmul.mubr.bf16.gmra.mrb[0].mxu0 %v5574
        %v5613 = vpop.f32.mrb[0].mxu0
        %v5614 = vadd.f32 0.0, %v5613
        %v5615 = vpop.f32.mrb[0].mxu0
        %v5616 = vpop.f32.mrb[0].mxu0
        %v5617 = vadd.f32 0.0, %v5616
        %v5618 = vpop.f32.mrb[0].mxu0
        %5619 = vdwg.mxu0
        %v5621 = vsel %vm5337, %v3195, 0
        %v5624 = vsel %vm5337, %v4263, 0
        %5626 = vmatprep.subr.bf16.mxu0 0
        %5627 = vmatpush1.bf16.xpose.msra.mxu0 %v5624
        %5628 = vmatprep.subr.bf16.mxu0 0
        %5629 = vmatpush1.bf16.xpose.msra.mxu0 0
        %5630 = vmatprep.subr.bf16.mxu0 0
        %5631 = vmatpush1.bf16.xpose.msra.mxu0 0
        %5632 = vmatprep.subr.bf16.mxu0 0
        %5633 = vmatpush1.bf16.xpose.msra.mxu0 0
        %5634 = vmatprep.subr.bf16.mxu0 0
        %5635 = vmatpush1.bf16.xpose.msra.mxu0 0
        %5636 = vmatprep.subr.bf16.mxu0 0
        %5637 = vmatpush1.bf16.xpose.msra.mxu0 0
        %5638 = vmatprep.subr.bf16.mxu0 0
        %5639 = vmatpush1.bf16.xpose.msra.mxu0 0
        %5640 = vmatprep.subr.bf16.mxu0 0
        %5641 = vmatpush1.bf16.xpose.msra.mxu0 0
        %5642 = vmatprep.subr.bf16.mxu0 0
        %5643 = vmatpush1.bf16.xpose.msra.mxu0 0
        %5644 = vmatprep.subr.bf16.mxu0 0
        %5645 = vmatpush1.bf16.xpose.msra.mxu0 0
        %5646 = vmatprep.subr.bf16.mxu0 0
        %5647 = vmatpush1.bf16.xpose.msra.mxu0 0
        %5648 = vmatprep.subr.bf16.mxu0 0
        %5649 = vmatpush1.bf16.xpose.msra.mxu0 0
        %5650 = vmatprep.subr.bf16.mxu0 0
        %5651 = vmatpush1.bf16.xpose.msra.mxu0 0
        %5652 = vmatprep.subr.bf16.mxu0 0
        %5653 = vmatpush1.bf16.xpose.msra.mxu0 0
        %5654 = vmatprep.subr.bf16.mxu0 0
        %5655 = vmatpush1.bf16.xpose.msra.mxu0 0
        %5656 = vmatprep.subr.bf16.mxu0 0
        %5657 = vmatpush1.bf16.xpose.msra.mxu0 0
        %5658 = vmatprep.mubr.bf16.mxu0 0
        %5659 = vmatmul.mubr.bf16.gmra.mrb[0].mxu0 %v5621
        %v5660 = vpop.f32.mrb[0].mxu0
        %v5661 = vadd.f32 0.0, %v5660
        %v5662 = vpop.f32.mrb[0].mxu0
        %v5663 = vpop.f32.mrb[0].mxu0
        %v5664 = vadd.f32 0.0, %v5663
        %v5665 = vpop.f32.mrb[0].mxu0
        %5666 = vdwg.mxu0
        %v5668 = vsel %vm5337, %v3196, 0
        %v5671 = vsel %vm5337, %v4264, 0
        %5673 = vmatprep.subr.bf16.mxu0 0
        %5674 = vmatpush1.bf16.xpose.msra.mxu0 %v5671
        %5675 = vmatprep.subr.bf16.mxu0 0
        %5676 = vmatpush1.bf16.xpose.msra.mxu0 0
        %5677 = vmatprep.subr.bf16.mxu0 0
        %5678 = vmatpush1.bf16.xpose.msra.mxu0 0
        %5679 = vmatprep.subr.bf16.mxu0 0
        %5680 = vmatpush1.bf16.xpose.msra.mxu0 0
        %5681 = vmatprep.subr.bf16.mxu0 0
        %5682 = vmatpush1.bf16.xpose.msra.mxu0 0
        %5683 = vmatprep.subr.bf16.mxu0 0
        %5684 = vmatpush1.bf16.xpose.msra.mxu0 0
        %5685 = vmatprep.subr.bf16.mxu0 0
        %5686 = vmatpush1.bf16.xpose.msra.mxu0 0
        %5687 = vmatprep.subr.bf16.mxu0 0
        %5688 = vmatpush1.bf16.xpose.msra.mxu0 0
        %5689 = vmatprep.subr.bf16.mxu0 0
        %5690 = vmatpush1.bf16.xpose.msra.mxu0 0
        %5691 = vmatprep.subr.bf16.mxu0 0
        %5692 = vmatpush1.bf16.xpose.msra.mxu0 0
        %5693 = vmatprep.subr.bf16.mxu0 0
        %5694 = vmatpush1.bf16.xpose.msra.mxu0 0
        %5695 = vmatprep.subr.bf16.mxu0 0
        %5696 = vmatpush1.bf16.xpose.msra.mxu0 0
        %5697 = vmatprep.subr.bf16.mxu0 0
        %5698 = vmatpush1.bf16.xpose.msra.mxu0 0
        %5699 = vmatprep.subr.bf16.mxu0 0
        %5700 = vmatpush1.bf16.xpose.msra.mxu0 0
        %5701 = vmatprep.subr.bf16.mxu0 0
        %5702 = vmatpush1.bf16.xpose.msra.mxu0 0
        %5703 = vmatprep.subr.bf16.mxu0 0
        %5704 = vmatpush1.bf16.xpose.msra.mxu0 0
        %5705 = vmatprep.mubr.bf16.mxu0 0
        %5706 = vmatmul.mubr.bf16.gmra.mrb[0].mxu0 %v5668
        %v5707 = vpop.f32.mrb[0].mxu0
        %v5708 = vadd.f32 0.0, %v5707
        %v5709 = vpop.f32.mrb[0].mxu0
        %v5710 = vpop.f32.mrb[0].mxu0
        %v5711 = vadd.f32 0.0, %v5710
        %v5712 = vpop.f32.mrb[0].mxu0
        %5713 = vdwg.mxu0
        %v5715 = vsel %vm5337, %v3197, 0
        %v5718 = vsel %vm5337, %v4265, 0
        %5720 = vmatprep.subr.bf16.mxu0 0
        %5721 = vmatpush1.bf16.xpose.msra.mxu0 %v5718
        %5722 = vmatprep.subr.bf16.mxu0 0
        %5723 = vmatpush1.bf16.xpose.msra.mxu0 0
        %5724 = vmatprep.subr.bf16.mxu0 0
        %5725 = vmatpush1.bf16.xpose.msra.mxu0 0
        %5726 = vmatprep.subr.bf16.mxu0 0
        %5727 = vmatpush1.bf16.xpose.msra.mxu0 0
        %5728 = vmatprep.subr.bf16.mxu0 0
        %5729 = vmatpush1.bf16.xpose.msra.mxu0 0
        %5730 = vmatprep.subr.bf16.mxu0 0
        %5731 = vmatpush1.bf16.xpose.msra.mxu0 0
        %5732 = vmatprep.subr.bf16.mxu0 0
        %5733 = vmatpush1.bf16.xpose.msra.mxu0 0
        %5734 = vmatprep.subr.bf16.mxu0 0
        %5735 = vmatpush1.bf16.xpose.msra.mxu0 0
        %5736 = vmatprep.subr.bf16.mxu0 0
        %5737 = vmatpush1.bf16.xpose.msra.mxu0 0
        %5738 = vmatprep.subr.bf16.mxu0 0
        %5739 = vmatpush1.bf16.xpose.msra.mxu0 0
        %5740 = vmatprep.subr.bf16.mxu0 0
        %5741 = vmatpush1.bf16.xpose.msra.mxu0 0
        %5742 = vmatprep.subr.bf16.mxu0 0
        %5743 = vmatpush1.bf16.xpose.msra.mxu0 0
        %5744 = vmatprep.subr.bf16.mxu0 0
        %5745 = vmatpush1.bf16.xpose.msra.mxu0 0
        %5746 = vmatprep.subr.bf16.mxu0 0
        %5747 = vmatpush1.bf16.xpose.msra.mxu0 0
        %5748 = vmatprep.subr.bf16.mxu0 0
        %5749 = vmatpush1.bf16.xpose.msra.mxu0 0
        %5750 = vmatprep.subr.bf16.mxu0 0
        %5751 = vmatpush1.bf16.xpose.msra.mxu0 0
        %5752 = vmatprep.mubr.bf16.mxu0 0
        %5753 = vmatmul.mubr.bf16.gmra.mrb[0].mxu0 %v5715
        %v5754 = vpop.f32.mrb[0].mxu0
        %v5755 = vadd.f32 0.0, %v5754
        %v5756 = vpop.f32.mrb[0].mxu0
        %v5757 = vpop.f32.mrb[0].mxu0
        %v5758 = vadd.f32 0.0, %v5757
        %v5759 = vpop.f32.mrb[0].mxu0
        %5760 = vdwg.mxu0
        %v5762 = vsel %vm5337, %v3198, 0
        %v5765 = vsel %vm5337, %v4266, 0
        %5767 = vmatprep.subr.bf16.mxu0 0
        %5768 = vmatpush1.bf16.xpose.msra.mxu0 %v5765
        %5769 = vmatprep.subr.bf16.mxu0 0
        %5770 = vmatpush1.bf16.xpose.msra.mxu0 0
        %5771 = vmatprep.subr.bf16.mxu0 0
        %5772 = vmatpush1.bf16.xpose.msra.mxu0 0
        %5773 = vmatprep.subr.bf16.mxu0 0
        %5774 = vmatpush1.bf16.xpose.msra.mxu0 0
        %5775 = vmatprep.subr.bf16.mxu0 0
        %5776 = vmatpush1.bf16.xpose.msra.mxu0 0
        %5777 = vmatprep.subr.bf16.mxu0 0
        %5778 = vmatpush1.bf16.xpose.msra.mxu0 0
        %5779 = vmatprep.subr.bf16.mxu0 0
        %5780 = vmatpush1.bf16.xpose.msra.mxu0 0
        %5781 = vmatprep.subr.bf16.mxu0 0
        %5782 = vmatpush1.bf16.xpose.msra.mxu0 0
        %5783 = vmatprep.subr.bf16.mxu0 0
        %5784 = vmatpush1.bf16.xpose.msra.mxu0 0
        %5785 = vmatprep.subr.bf16.mxu0 0
        %5786 = vmatpush1.bf16.xpose.msra.mxu0 0
        %5787 = vmatprep.subr.bf16.mxu0 0
        %5788 = vmatpush1.bf16.xpose.msra.mxu0 0
        %5789 = vmatprep.subr.bf16.mxu0 0
        %5790 = vmatpush1.bf16.xpose.msra.mxu0 0
        %5791 = vmatprep.subr.bf16.mxu0 0
        %5792 = vmatpush1.bf16.xpose.msra.mxu0 0
        %5793 = vmatprep.subr.bf16.mxu0 0
        %5794 = vmatpush1.bf16.xpose.msra.mxu0 0
        %5795 = vmatprep.subr.bf16.mxu0 0
        %5796 = vmatpush1.bf16.xpose.msra.mxu0 0
        %5797 = vmatprep.subr.bf16.mxu0 0
        %5798 = vmatpush1.bf16.xpose.msra.mxu0 0
        %5799 = vmatprep.mubr.bf16.mxu0 0
        %5800 = vmatmul.mubr.bf16.gmra.mrb[0].mxu0 %v5762
        %v5801 = vpop.f32.mrb[0].mxu0
        %v5802 = vadd.f32 0.0, %v5801
        %v5803 = vpop.f32.mrb[0].mxu0
        %v5804 = vpop.f32.mrb[0].mxu0
        %v5805 = vadd.f32 0.0, %v5804
        %v5806 = vpop.f32.mrb[0].mxu0
        %5807 = vdwg.mxu0
        %v5809 = vsel %vm5337, %v3199, 0
        %v5812 = vsel %vm5337, %v4267, 0
        %5814 = vmatprep.subr.bf16.mxu0 0
        %5815 = vmatpush1.bf16.xpose.msra.mxu0 %v5812
        %5816 = vmatprep.subr.bf16.mxu0 0
        %5817 = vmatpush1.bf16.xpose.msra.mxu0 0
        %5818 = vmatprep.subr.bf16.mxu0 0
        %5819 = vmatpush1.bf16.xpose.msra.mxu0 0
        %5820 = vmatprep.subr.bf16.mxu0 0
        %5821 = vmatpush1.bf16.xpose.msra.mxu0 0
        %5822 = vmatprep.subr.bf16.mxu0 0
        %5823 = vmatpush1.bf16.xpose.msra.mxu0 0
        %5824 = vmatprep.subr.bf16.mxu0 0
        %5825 = vmatpush1.bf16.xpose.msra.mxu0 0
        %5826 = vmatprep.subr.bf16.mxu0 0
        %5827 = vmatpush1.bf16.xpose.msra.mxu0 0
        %5828 = vmatprep.subr.bf16.mxu0 0
        %5829 = vmatpush1.bf16.xpose.msra.mxu0 0
        %5830 = vmatprep.subr.bf16.mxu0 0
        %5831 = vmatpush1.bf16.xpose.msra.mxu0 0
        %5832 = vmatprep.subr.bf16.mxu0 0
        %5833 = vmatpush1.bf16.xpose.msra.mxu0 0
        %5834 = vmatprep.subr.bf16.mxu0 0
        %5835 = vmatpush1.bf16.xpose.msra.mxu0 0
        %5836 = vmatprep.subr.bf16.mxu0 0
        %5837 = vmatpush1.bf16.xpose.msra.mxu0 0
        %5838 = vmatprep.subr.bf16.mxu0 0
        %5839 = vmatpush1.bf16.xpose.msra.mxu0 0
        %5840 = vmatprep.subr.bf16.mxu0 0
        %5841 = vmatpush1.bf16.xpose.msra.mxu0 0
        %5842 = vmatprep.subr.bf16.mxu0 0
        %5843 = vmatpush1.bf16.xpose.msra.mxu0 0
        %5844 = vmatprep.subr.bf16.mxu0 0
        %5845 = vmatpush1.bf16.xpose.msra.mxu0 0
        %5846 = vmatprep.mubr.bf16.mxu0 0
        %5847 = vmatmul.mubr.bf16.gmra.mrb[0].mxu0 %v5809
        %v5848 = vpop.f32.mrb[0].mxu0
        %v5849 = vadd.f32 0.0, %v5848
        %v5850 = vpop.f32.mrb[0].mxu0
        %v5851 = vpop.f32.mrb[0].mxu0
        %v5852 = vadd.f32 0.0, %v5851
        %v5853 = vpop.f32.mrb[0].mxu0
        %5854 = vdwg.mxu0
        %v5856 = vsel %vm5337, %v3200, 0
        %v5859 = vsel %vm5337, %v4268, 0
        %5861 = vmatprep.subr.bf16.mxu0 0
        %5862 = vmatpush1.bf16.xpose.msra.mxu0 %v5859
        %5863 = vmatprep.subr.bf16.mxu0 0
        %5864 = vmatpush1.bf16.xpose.msra.mxu0 0
        %5865 = vmatprep.subr.bf16.mxu0 0
        %5866 = vmatpush1.bf16.xpose.msra.mxu0 0
        %5867 = vmatprep.subr.bf16.mxu0 0
        %5868 = vmatpush1.bf16.xpose.msra.mxu0 0
        %5869 = vmatprep.subr.bf16.mxu0 0
        %5870 = vmatpush1.bf16.xpose.msra.mxu0 0
        %5871 = vmatprep.subr.bf16.mxu0 0
        %5872 = vmatpush1.bf16.xpose.msra.mxu0 0
        %5873 = vmatprep.subr.bf16.mxu0 0
        %5874 = vmatpush1.bf16.xpose.msra.mxu0 0
        %5875 = vmatprep.subr.bf16.mxu0 0
        %5876 = vmatpush1.bf16.xpose.msra.mxu0 0
        %5877 = vmatprep.subr.bf16.mxu0 0
        %5878 = vmatpush1.bf16.xpose.msra.mxu0 0
        %5879 = vmatprep.subr.bf16.mxu0 0
        %5880 = vmatpush1.bf16.xpose.msra.mxu0 0
        %5881 = vmatprep.subr.bf16.mxu0 0
        %5882 = vmatpush1.bf16.xpose.msra.mxu0 0
        %5883 = vmatprep.subr.bf16.mxu0 0
        %5884 = vmatpush1.bf16.xpose.msra.mxu0 0
        %5885 = vmatprep.subr.bf16.mxu0 0
        %5886 = vmatpush1.bf16.xpose.msra.mxu0 0
        %5887 = vmatprep.subr.bf16.mxu0 0
        %5888 = vmatpush1.bf16.xpose.msra.mxu0 0
        %5889 = vmatprep.subr.bf16.mxu0 0
        %5890 = vmatpush1.bf16.xpose.msra.mxu0 0
        %5891 = vmatprep.subr.bf16.mxu0 0
        %5892 = vmatpush1.bf16.xpose.msra.mxu0 0
        %5893 = vmatprep.mubr.bf16.mxu0 0
        %5894 = vmatmul.mubr.bf16.gmra.mrb[0].mxu0 %v5856
        %v5895 = vpop.f32.mrb[0].mxu0
        %v5896 = vadd.f32 0.0, %v5895
        %v5897 = vpop.f32.mrb[0].mxu0
        %v5898 = vpop.f32.mrb[0].mxu0
        %v5899 = vadd.f32 0.0, %v5898
        %v5900 = vpop.f32.mrb[0].mxu0
        %5901 = vdwg.mxu0
        %v5902 = vlaneseq
        %v5903 = vshrl.u32 %v5902, 7
        %v5904 = vadd.s32 %v5903, 8
        %v5905 = vlaneseq
        %v5906 = vand.u32 %v5905, 127
        %vm5907 = vcmp.le.s32.totalorder %v5906, %v5903
        %vm5908 = vcmp.le.s32.totalorder %v5906, %v5904
        %v5909 = vsel %vm5907, 1, 0
        %v5910 = vsel %vm5908, 1, 0
        %vm5911 = vcmp.eq.s32.totalorder %v5909, 1
        %vm5912 = vcmp.eq.s32.totalorder %v5910, 1
        %v5913 = vsel %vm5911, %v5379, -1e+30
        %v5914 = vsel %vm5912, %v5382, -1e+30
        %v5915 = vsel %vm5911, %v5426, -1e+30
        %v5916 = vsel %vm5912, %v5429, -1e+30
        %v5917 = vsel %vm5911, %v5473, -1e+30
        %v5918 = vsel %vm5912, %v5476, -1e+30
        %v5919 = vsel %vm5911, %v5520, -1e+30
        %v5920 = vsel %vm5912, %v5523, -1e+30
        %v5921 = vsel %vm5911, %v5567, -1e+30
        %v5922 = vsel %vm5912, %v5570, -1e+30
        %v5923 = vsel %vm5911, %v5614, -1e+30
        %v5924 = vsel %vm5912, %v5617, -1e+30
        %v5925 = vsel %vm5911, %v5661, -1e+30
        %v5926 = vsel %vm5912, %v5664, -1e+30
        %v5927 = vsel %vm5911, %v5708, -1e+30
        %v5928 = vsel %vm5912, %v5711, -1e+30
        %v5929 = vsel %vm5911, %v5755, -1e+30
        %v5930 = vsel %vm5912, %v5758, -1e+30
        %v5931 = vsel %vm5911, %v5802, -1e+30
        %v5932 = vsel %vm5912, %v5805, -1e+30
        %v5933 = vsel %vm5911, %v5849, -1e+30
        %v5934 = vsel %vm5912, %v5852, -1e+30
        %v5935 = vsel %vm5911, %v5896, -1e+30
        %v5936 = vsel %vm5912, %v5899, -1e+30
        %vm5937 = vcmask 130048
        %v5938 = vsel %vm5937, %v5913, -inf
        %5939 = vmax.xlane.f32.xlu0 %v5938
        %v5940 = vpop.xlane.xlu0 %5939
        %v5941 = vsel %vm5937, %v5914, -inf
        %5942 = vmax.xlane.f32.xlu0 %v5941
        %v5943 = vpop.xlane.xlu0 %5942
        %v5944 = vsel %vm5937, %v5915, -inf
        %5945 = vmax.xlane.f32.xlu0 %v5944
        %v5946 = vpop.xlane.xlu0 %5945
        %v5947 = vsel %vm5937, %v5916, -inf
        %5948 = vmax.xlane.f32.xlu0 %v5947
        %v5949 = vpop.xlane.xlu0 %5948
        %v5950 = vsel %vm5937, %v5917, -inf
        %5951 = vmax.xlane.f32.xlu0 %v5950
        %v5952 = vpop.xlane.xlu0 %5951
        %v5953 = vsel %vm5937, %v5918, -inf
        %5954 = vmax.xlane.f32.xlu0 %v5953
        %v5955 = vpop.xlane.xlu0 %5954
        %v5956 = vsel %vm5937, %v5919, -inf
        %5957 = vmax.xlane.f32.xlu0 %v5956
        %v5958 = vpop.xlane.xlu0 %5957
        %v5959 = vsel %vm5937, %v5920, -inf
        %5960 = vmax.xlane.f32.xlu0 %v5959
        %v5961 = vpop.xlane.xlu0 %5960
        %v5962 = vsel %vm5937, %v5921, -inf
        %5963 = vmax.xlane.f32.xlu0 %v5962
        %v5964 = vpop.xlane.xlu0 %5963
        %v5965 = vsel %vm5937, %v5922, -inf
        %5966 = vmax.xlane.f32.xlu0 %v5965
        %v5967 = vpop.xlane.xlu0 %5966
        %v5968 = vsel %vm5937, %v5923, -inf
        %5969 = vmax.xlane.f32.xlu0 %v5968
        %v5970 = vpop.xlane.xlu0 %5969
        %v5971 = vsel %vm5937, %v5924, -inf
        %5972 = vmax.xlane.f32.xlu0 %v5971
        %v5973 = vpop.xlane.xlu0 %5972
        %v5974 = vsel %vm5937, %v5925, -inf
        %5975 = vmax.xlane.f32.xlu0 %v5974
        %v5976 = vpop.xlane.xlu0 %5975
        %v5977 = vsel %vm5937, %v5926, -inf
        %5978 = vmax.xlane.f32.xlu0 %v5977
        %v5979 = vpop.xlane.xlu0 %5978
        %v5980 = vsel %vm5937, %v5927, -inf
        %5981 = vmax.xlane.f32.xlu0 %v5980
        %v5982 = vpop.xlane.xlu0 %5981
        %v5983 = vsel %vm5937, %v5928, -inf
        %5984 = vmax.xlane.f32.xlu0 %v5983
        %v5985 = vpop.xlane.xlu0 %5984
        %v5986 = vsel %vm5937, %v5929, -inf
        %5987 = vmax.xlane.f32.xlu0 %v5986
        %v5988 = vpop.xlane.xlu0 %5987
        %v5989 = vsel %vm5937, %v5930, -inf
        %5990 = vmax.xlane.f32.xlu0 %v5989
        %v5991 = vpop.xlane.xlu0 %5990
        %v5992 = vsel %vm5937, %v5931, -inf
        %5993 = vmax.xlane.f32.xlu0 %v5992
        %v5994 = vpop.xlane.xlu0 %5993
        %v5995 = vsel %vm5937, %v5932, -inf
        %5996 = vmax.xlane.f32.xlu0 %v5995
        %v5997 = vpop.xlane.xlu0 %5996
        %v5998 = vsel %vm5937, %v5933, -inf
        %5999 = vmax.xlane.f32.xlu0 %v5998
        %v6000 = vpop.xlane.xlu0 %5999
        %v6001 = vsel %vm5937, %v5934, -inf
        %6002 = vmax.xlane.f32.xlu0 %v6001
        %v6003 = vpop.xlane.xlu0 %6002
        %v6004 = vsel %vm5937, %v5935, -inf
        %6005 = vmax.xlane.f32.xlu0 %v6004
        %v6006 = vpop.xlane.xlu0 %6005
        %v6007 = vsel %vm5937, %v5936, -inf
        %6008 = vmax.xlane.f32.xlu0 %v6007
        %v6009 = vpop.xlane.xlu0 %6008
        %v6010 = vsub.f32 %v5913, %v5940
        %v6011 = vsub.f32 %v5914, %v5943
        %v6012 = vsub.f32 %v5915, %v5946
        %v6013 = vsub.f32 %v5916, %v5949
        %v6014 = vsub.f32 %v5917, %v5952
        %v6015 = vsub.f32 %v5918, %v5955
        %v6016 = vsub.f32 %v5919, %v5958
        %v6017 = vsub.f32 %v5920, %v5961
        %v6018 = vsub.f32 %v5921, %v5964
        %v6019 = vsub.f32 %v5922, %v5967
        %v6020 = vsub.f32 %v5923, %v5970
        %v6021 = vsub.f32 %v5924, %v5973
        %v6022 = vsub.f32 %v5925, %v5976
        %v6023 = vsub.f32 %v5926, %v5979
        %v6024 = vsub.f32 %v5927, %v5982
        %v6025 = vsub.f32 %v5928, %v5985
        %v6026 = vsub.f32 %v5929, %v5988
        %v6027 = vsub.f32 %v5930, %v5991
        %v6028 = vsub.f32 %v5931, %v5994
        %v6029 = vsub.f32 %v5932, %v5997
        %v6030 = vsub.f32 %v5933, %v6000
        %v6031 = vsub.f32 %v5934, %v6003
        %v6032 = vsub.f32 %v5935, %v6006
        %v6033 = vsub.f32 %v5936, %v6009
        %v6034 = vmul.f32 %v6010, 1.442695
        %v6035 = vpow.pop %v6034
        %v6036 = vmul.f32 %v6011, 1.442695
        %v6037 = vpow.pop %v6036
        %v6038 = vmul.f32 %v6012, 1.442695
        %v6039 = vpow.pop %v6038
        %v6040 = vmul.f32 %v6013, 1.442695
        %v6041 = vpow.pop %v6040
        %v6042 = vmul.f32 %v6014, 1.442695
        %v6043 = vpow.pop %v6042
        %v6044 = vmul.f32 %v6015, 1.442695
        %v6045 = vpow.pop %v6044
        %v6046 = vmul.f32 %v6016, 1.442695
        %v6047 = vpow.pop %v6046
        %v6048 = vmul.f32 %v6017, 1.442695
        %v6049 = vpow.pop %v6048
        %v6050 = vmul.f32 %v6018, 1.442695
        %v6051 = vpow.pop %v6050
        %v6052 = vmul.f32 %v6019, 1.442695
        %v6053 = vpow.pop %v6052
        %v6054 = vmul.f32 %v6020, 1.442695
        %v6055 = vpow.pop %v6054
        %v6056 = vmul.f32 %v6021, 1.442695
        %v6057 = vpow.pop %v6056
        %v6058 = vmul.f32 %v6022, 1.442695
        %v6059 = vpow.pop %v6058
        %v6060 = vmul.f32 %v6023, 1.442695
        %v6061 = vpow.pop %v6060
        %v6062 = vmul.f32 %v6024, 1.442695
        %v6063 = vpow.pop %v6062
        %v6064 = vmul.f32 %v6025, 1.442695
        %v6065 = vpow.pop %v6064
        %v6066 = vmul.f32 %v6026, 1.442695
        %v6067 = vpow.pop %v6066
        %v6068 = vmul.f32 %v6027, 1.442695
        %v6069 = vpow.pop %v6068
        %v6070 = vmul.f32 %v6028, 1.442695
        %v6071 = vpow.pop %v6070
        %v6072 = vmul.f32 %v6029, 1.442695
        %v6073 = vpow.pop %v6072
        %v6074 = vmul.f32 %v6030, 1.442695
        %v6075 = vpow.pop %v6074
        %v6076 = vmul.f32 %v6031, 1.442695
        %v6077 = vpow.pop %v6076
        %v6078 = vmul.f32 %v6032, 1.442695
        %v6079 = vpow.pop %v6078
        %v6080 = vmul.f32 %v6033, 1.442695
        %v6081 = vpow.pop %v6080
        %v6082 = vsel %vm5937, %v6035, 0.0
        %6083 = vadd.xlane.f32.xlu0 %v6082
        %v6084 = vpop.xlane.xlu0 %6083
        %v6085 = vsel %vm5937, %v6037, 0.0
        %6086 = vadd.xlane.f32.xlu0 %v6085
        %v6087 = vpop.xlane.xlu0 %6086
        %v6088 = vsel %vm5937, %v6039, 0.0
        %6089 = vadd.xlane.f32.xlu0 %v6088
        %v6090 = vpop.xlane.xlu0 %6089
        %v6091 = vsel %vm5937, %v6041, 0.0
        %6092 = vadd.xlane.f32.xlu0 %v6091
        %v6093 = vpop.xlane.xlu0 %6092
        %v6094 = vsel %vm5937, %v6043, 0.0
        %6095 = vadd.xlane.f32.xlu0 %v6094
        %v6096 = vpop.xlane.xlu0 %6095
        %v6097 = vsel %vm5937, %v6045, 0.0
        %6098 = vadd.xlane.f32.xlu0 %v6097
        %v6099 = vpop.xlane.xlu0 %6098
        %v6100 = vsel %vm5937, %v6047, 0.0
        %6101 = vadd.xlane.f32.xlu0 %v6100
        %v6102 = vpop.xlane.xlu0 %6101
        %v6103 = vsel %vm5937, %v6049, 0.0
        %6104 = vadd.xlane.f32.xlu0 %v6103
        %v6105 = vpop.xlane.xlu0 %6104
        %v6106 = vsel %vm5937, %v6051, 0.0
        %6107 = vadd.xlane.f32.xlu0 %v6106
        %v6108 = vpop.xlane.xlu0 %6107
        %v6109 = vsel %vm5937, %v6053, 0.0
        %6110 = vadd.xlane.f32.xlu0 %v6109
        %v6111 = vpop.xlane.xlu0 %6110
        %v6112 = vsel %vm5937, %v6055, 0.0
        %6113 = vadd.xlane.f32.xlu0 %v6112
        %v6114 = vpop.xlane.xlu0 %6113
        %v6115 = vsel %vm5937, %v6057, 0.0
        %6116 = vadd.xlane.f32.xlu0 %v6115
        %v6117 = vpop.xlane.xlu0 %6116
        %v6118 = vsel %vm5937, %v6059, 0.0
        %6119 = vadd.xlane.f32.xlu0 %v6118
        %v6120 = vpop.xlane.xlu0 %6119
        %v6121 = vsel %vm5937, %v6061, 0.0
        %6122 = vadd.xlane.f32.xlu0 %v6121
        %v6123 = vpop.xlane.xlu0 %6122
        %v6124 = vsel %vm5937, %v6063, 0.0
        %6125 = vadd.xlane.f32.xlu0 %v6124
        %v6126 = vpop.xlane.xlu0 %6125
        %v6127 = vsel %vm5937, %v6065, 0.0
        %6128 = vadd.xlane.f32.xlu0 %v6127
        %v6129 = vpop.xlane.xlu0 %6128
        %v6130 = vsel %vm5937, %v6067, 0.0
        %6131 = vadd.xlane.f32.xlu0 %v6130
        %v6132 = vpop.xlane.xlu0 %6131
        %v6133 = vsel %vm5937, %v6069, 0.0
        %6134 = vadd.xlane.f32.xlu0 %v6133
        %v6135 = vpop.xlane.xlu0 %6134
        %v6136 = vsel %vm5937, %v6071, 0.0
        %6137 = vadd.xlane.f32.xlu0 %v6136
        %v6138 = vpop.xlane.xlu0 %6137
        %v6139 = vsel %vm5937, %v6073, 0.0
        %6140 = vadd.xlane.f32.xlu0 %v6139
        %v6141 = vpop.xlane.xlu0 %6140
        %v6142 = vsel %vm5937, %v6075, 0.0
        %6143 = vadd.xlane.f32.xlu0 %v6142
        %v6144 = vpop.xlane.xlu0 %6143
        %v6145 = vsel %vm5937, %v6077, 0.0
        %6146 = vadd.xlane.f32.xlu0 %v6145
        %v6147 = vpop.xlane.xlu0 %6146
        %v6148 = vsel %vm5937, %v6079, 0.0
        %6149 = vadd.xlane.f32.xlu0 %v6148
        %v6150 = vpop.xlane.xlu0 %6149
        %v6151 = vsel %vm5937, %v6081, 0.0
        %6152 = vadd.xlane.f32.xlu0 %v6151
        %v6153 = vpop.xlane.xlu0 %6152
        %v6154 = vrcp.pop %v6084
        %v6155 = vrcp.pop %v6087
        %v6156 = vrcp.pop %v6090
        %v6157 = vrcp.pop %v6093
        %v6158 = vrcp.pop %v6096
        %v6159 = vrcp.pop %v6099
        %v6160 = vrcp.pop %v6102
        %v6161 = vrcp.pop %v6105
        %v6162 = vrcp.pop %v6108
        %v6163 = vrcp.pop %v6111
        %v6164 = vrcp.pop %v6114
        %v6165 = vrcp.pop %v6117
        %v6166 = vrcp.pop %v6120
        %v6167 = vrcp.pop %v6123
        %v6168 = vrcp.pop %v6126
        %v6169 = vrcp.pop %v6129
        %v6170 = vrcp.pop %v6132
        %v6171 = vrcp.pop %v6135
        %v6172 = vrcp.pop %v6138
        %v6173 = vrcp.pop %v6141
        %v6174 = vrcp.pop %v6144
        %v6175 = vrcp.pop %v6147
        %v6176 = vrcp.pop %v6150
        %v6177 = vrcp.pop %v6153
        %v6178 = vmul.f32 %v6084, %v6154
        %v6179 = vmul.f32 %v6087, %v6155
        %v6180 = vmul.f32 %v6090, %v6156
        %v6181 = vmul.f32 %v6093, %v6157
        %v6182 = vmul.f32 %v6096, %v6158
        %v6183 = vmul.f32 %v6099, %v6159
        %v6184 = vmul.f32 %v6102, %v6160
        %v6185 = vmul.f32 %v6105, %v6161
        %v6186 = vmul.f32 %v6108, %v6162
        %v6187 = vmul.f32 %v6111, %v6163
        %v6188 = vmul.f32 %v6114, %v6164
        %v6189 = vmul.f32 %v6117, %v6165
        %v6190 = vmul.f32 %v6120, %v6166
        %v6191 = vmul.f32 %v6123, %v6167
        %v6192 = vmul.f32 %v6126, %v6168
        %v6193 = vmul.f32 %v6129, %v6169
        %v6194 = vmul.f32 %v6132, %v6170
        %v6195 = vmul.f32 %v6135, %v6171
        %v6196 = vmul.f32 %v6138, %v6172
        %v6197 = vmul.f32 %v6141, %v6173
        %v6198 = vmul.f32 %v6144, %v6174
        %v6199 = vmul.f32 %v6147, %v6175
        %v6200 = vmul.f32 %v6150, %v6176
        %v6201 = vmul.f32 %v6153, %v6177
        %v6202 = vsub.f32 2.0, %v6178
        %v6203 = vsub.f32 2.0, %v6179
        %v6204 = vsub.f32 2.0, %v6180
        %v6205 = vsub.f32 2.0, %v6181
        %v6206 = vsub.f32 2.0, %v6182
        %v6207 = vsub.f32 2.0, %v6183
        %v6208 = vsub.f32 2.0, %v6184
        %v6209 = vsub.f32 2.0, %v6185
        %v6210 = vsub.f32 2.0, %v6186
        %v6211 = vsub.f32 2.0, %v6187
        %v6212 = vsub.f32 2.0, %v6188
        %v6213 = vsub.f32 2.0, %v6189
        %v6214 = vsub.f32 2.0, %v6190
        %v6215 = vsub.f32 2.0, %v6191
        %v6216 = vsub.f32 2.0, %v6192
        %v6217 = vsub.f32 2.0, %v6193
        %v6218 = vsub.f32 2.0, %v6194
        %v6219 = vsub.f32 2.0, %v6195
        %v6220 = vsub.f32 2.0, %v6196
        %v6221 = vsub.f32 2.0, %v6197
        %v6222 = vsub.f32 2.0, %v6198
        %v6223 = vsub.f32 2.0, %v6199
        %v6224 = vsub.f32 2.0, %v6200
        %v6225 = vsub.f32 2.0, %v6201
        %v6226 = vmul.f32 %v6154, %v6202
        %v6227 = vmul.f32 %v6155, %v6203
        %v6228 = vmul.f32 %v6156, %v6204
        %v6229 = vmul.f32 %v6157, %v6205
        %v6230 = vmul.f32 %v6158, %v6206
        %v6231 = vmul.f32 %v6159, %v6207
        %v6232 = vmul.f32 %v6160, %v6208
        %v6233 = vmul.f32 %v6161, %v6209
        %v6234 = vmul.f32 %v6162, %v6210
        %v6235 = vmul.f32 %v6163, %v6211
        %v6236 = vmul.f32 %v6164, %v6212
        %v6237 = vmul.f32 %v6165, %v6213
        %v6238 = vmul.f32 %v6166, %v6214
        %v6239 = vmul.f32 %v6167, %v6215
        %v6240 = vmul.f32 %v6168, %v6216
        %v6241 = vmul.f32 %v6169, %v6217
        %v6242 = vmul.f32 %v6170, %v6218
        %v6243 = vmul.f32 %v6171, %v6219
        %v6244 = vmul.f32 %v6172, %v6220
        %v6245 = vmul.f32 %v6173, %v6221
        %v6246 = vmul.f32 %v6174, %v6222
        %v6247 = vmul.f32 %v6175, %v6223
        %v6248 = vmul.f32 %v6176, %v6224
        %v6249 = vmul.f32 %v6177, %v6225
        %v6250 = vmul.f32 %v6035, %v6226
        %v6251 = vmul.f32 %v6037, %v6227
        %v6252 = vmul.f32 %v6039, %v6228
        %v6253 = vmul.f32 %v6041, %v6229
        %v6254 = vmul.f32 %v6043, %v6230
        %v6255 = vmul.f32 %v6045, %v6231
        %v6256 = vmul.f32 %v6047, %v6232
        %v6257 = vmul.f32 %v6049, %v6233
        %v6258 = vmul.f32 %v6051, %v6234
        %v6259 = vmul.f32 %v6053, %v6235
        %v6260 = vmul.f32 %v6055, %v6236
        %v6261 = vmul.f32 %v6057, %v6237
        %v6262 = vmul.f32 %v6059, %v6238
        %v6263 = vmul.f32 %v6061, %v6239
        %v6264 = vmul.f32 %v6063, %v6240
        %v6265 = vmul.f32 %v6065, %v6241
        %v6266 = vmul.f32 %v6067, %v6242
        %v6267 = vmul.f32 %v6069, %v6243
        %v6268 = vmul.f32 %v6071, %v6244
        %v6269 = vmul.f32 %v6073, %v6245
        %v6270 = vmul.f32 %v6075, %v6246
        %v6271 = vmul.f32 %v6077, %v6247
        %v6272 = vmul.f32 %v6079, %v6248
        %v6273 = vmul.f32 %v6081, %v6249
        %v6274 = vpack.c.bf16 %v6251, %v6250
        %v6275 = vpack.c.bf16 %v6253, %v6252
        %v6276 = vpack.c.bf16 %v6255, %v6254
        %v6277 = vpack.c.bf16 %v6257, %v6256
        %v6278 = vpack.c.bf16 %v6259, %v6258
        %v6279 = vpack.c.bf16 %v6261, %v6260
        %v6280 = vpack.c.bf16 %v6263, %v6262
        %v6281 = vpack.c.bf16 %v6265, %v6264
        %v6282 = vpack.c.bf16 %v6267, %v6266
        %v6283 = vpack.c.bf16 %v6269, %v6268
        %v6284 = vpack.c.bf16 %v6271, %v6270
        %v6285 = vpack.c.bf16 %v6273, %v6272
        %v6287 = vsel %vm5937, %v6274, 0
        %6289 = vmatprep.subr.bf16.mxu0 0
        %6290 = vmatpush1.bf16.msra.mxu0 %v5325
        %6291 = vmatprep.subr.bf16.mxu0 0
        %6292 = vmatpush1.bf16.msra.mxu0 0
        %6293 = vmatprep.subr.bf16.mxu0 0
        %6294 = vmatpush1.bf16.msra.mxu0 0
        %6295 = vmatprep.subr.bf16.mxu0 0
        %6296 = vmatpush1.bf16.msra.mxu0 0
        %6297 = vmatprep.subr.bf16.mxu0 0
        %6298 = vmatpush1.bf16.msra.mxu0 0
        %6299 = vmatprep.subr.bf16.mxu0 0
        %6300 = vmatpush1.bf16.msra.mxu0 0
        %6301 = vmatprep.subr.bf16.mxu0 0
        %6302 = vmatpush1.bf16.msra.mxu0 0
        %6303 = vmatprep.subr.bf16.mxu0 0
        %6304 = vmatpush1.bf16.msra.mxu0 0
        %6305 = vmatprep.subr.bf16.mxu0 0
        %6306 = vmatpush1.bf16.msra.mxu0 0
        %6307 = vmatprep.subr.bf16.mxu0 0
        %6308 = vmatpush1.bf16.msra.mxu0 0
        %6309 = vmatprep.subr.bf16.mxu0 0
        %6310 = vmatpush1.bf16.msra.mxu0 0
        %6311 = vmatprep.subr.bf16.mxu0 0
        %6312 = vmatpush1.bf16.msra.mxu0 0
        %6313 = vmatprep.subr.bf16.mxu0 0
        %6314 = vmatpush1.bf16.msra.mxu0 0
        %6315 = vmatprep.subr.bf16.mxu0 0
        %6316 = vmatpush1.bf16.msra.mxu0 0
        %6317 = vmatprep.subr.bf16.mxu0 0
        %6318 = vmatpush1.bf16.msra.mxu0 0
        %6319 = vmatprep.subr.bf16.mxu0 0
        %6320 = vmatpush1.bf16.msra.mxu0 0
        %6321 = vmatprep.mubr.bf16.mxu0 0
        %6322 = vmatmul.mubr.bf16.gmra.mrb[0].mxu0 %v6287
        %v6323 = vpop.f32.mrb[0].mxu0
        %v6324 = vadd.f32 0.0, %v6323
        %v6325 = vpop.f32.mrb[0].mxu0
        %v6326 = vpop.f32.mrb[0].mxu0
        %v6327 = vadd.f32 0.0, %v6326
        %v6328 = vpop.f32.mrb[0].mxu0
        %6329 = vdwg.mxu0
        %v6331 = vsel %vm5937, %v6275, 0
        %6333 = vmatprep.subr.bf16.mxu0 0
        %6334 = vmatpush1.bf16.msra.mxu0 %v5326
        %6335 = vmatprep.subr.bf16.mxu0 0
        %6336 = vmatpush1.bf16.msra.mxu0 0
        %6337 = vmatprep.subr.bf16.mxu0 0
        %6338 = vmatpush1.bf16.msra.mxu0 0
        %6339 = vmatprep.subr.bf16.mxu0 0
        %6340 = vmatpush1.bf16.msra.mxu0 0
        %6341 = vmatprep.subr.bf16.mxu0 0
        %6342 = vmatpush1.bf16.msra.mxu0 0
        %6343 = vmatprep.subr.bf16.mxu0 0
        %6344 = vmatpush1.bf16.msra.mxu0 0
        %6345 = vmatprep.subr.bf16.mxu0 0
        %6346 = vmatpush1.bf16.msra.mxu0 0
        %6347 = vmatprep.subr.bf16.mxu0 0
        %6348 = vmatpush1.bf16.msra.mxu0 0
        %6349 = vmatprep.subr.bf16.mxu0 0
        %6350 = vmatpush1.bf16.msra.mxu0 0
        %6351 = vmatprep.subr.bf16.mxu0 0
        %6352 = vmatpush1.bf16.msra.mxu0 0
        %6353 = vmatprep.subr.bf16.mxu0 0
        %6354 = vmatpush1.bf16.msra.mxu0 0
        %6355 = vmatprep.subr.bf16.mxu0 0
        %6356 = vmatpush1.bf16.msra.mxu0 0
        %6357 = vmatprep.subr.bf16.mxu0 0
        %6358 = vmatpush1.bf16.msra.mxu0 0
        %6359 = vmatprep.subr.bf16.mxu0 0
        %6360 = vmatpush1.bf16.msra.mxu0 0
        %6361 = vmatprep.subr.bf16.mxu0 0
        %6362 = vmatpush1.bf16.msra.mxu0 0
        %6363 = vmatprep.subr.bf16.mxu0 0
        %6364 = vmatpush1.bf16.msra.mxu0 0
        %6365 = vmatprep.mubr.bf16.mxu0 0
        %6366 = vmatmul.mubr.bf16.gmra.mrb[0].mxu0 %v6331
        %v6367 = vpop.f32.mrb[0].mxu0
        %v6368 = vadd.f32 0.0, %v6367
        %v6369 = vpop.f32.mrb[0].mxu0
        %v6370 = vpop.f32.mrb[0].mxu0
        %v6371 = vadd.f32 0.0, %v6370
        %v6372 = vpop.f32.mrb[0].mxu0
        %6373 = vdwg.mxu0
        %v6375 = vsel %vm5937, %v6276, 0
        %6377 = vmatprep.subr.bf16.mxu0 0
        %6378 = vmatpush1.bf16.msra.mxu0 %v5327
        %6379 = vmatprep.subr.bf16.mxu0 0
        %6380 = vmatpush1.bf16.msra.mxu0 0
        %6381 = vmatprep.subr.bf16.mxu0 0
        %6382 = vmatpush1.bf16.msra.mxu0 0
        %6383 = vmatprep.subr.bf16.mxu0 0
        %6384 = vmatpush1.bf16.msra.mxu0 0
        %6385 = vmatprep.subr.bf16.mxu0 0
        %6386 = vmatpush1.bf16.msra.mxu0 0
        %6387 = vmatprep.subr.bf16.mxu0 0
        %6388 = vmatpush1.bf16.msra.mxu0 0
        %6389 = vmatprep.subr.bf16.mxu0 0
        %6390 = vmatpush1.bf16.msra.mxu0 0
        %6391 = vmatprep.subr.bf16.mxu0 0
        %6392 = vmatpush1.bf16.msra.mxu0 0
        %6393 = vmatprep.subr.bf16.mxu0 0
        %6394 = vmatpush1.bf16.msra.mxu0 0
        %6395 = vmatprep.subr.bf16.mxu0 0
        %6396 = vmatpush1.bf16.msra.mxu0 0
        %6397 = vmatprep.subr.bf16.mxu0 0
        %6398 = vmatpush1.bf16.msra.mxu0 0
        %6399 = vmatprep.subr.bf16.mxu0 0
        %6400 = vmatpush1.bf16.msra.mxu0 0
        %6401 = vmatprep.subr.bf16.mxu0 0
        %6402 = vmatpush1.bf16.msra.mxu0 0
        %6403 = vmatprep.subr.bf16.mxu0 0
        %6404 = vmatpush1.bf16.msra.mxu0 0
        %6405 = vmatprep.subr.bf16.mxu0 0
        %6406 = vmatpush1.bf16.msra.mxu0 0
        %6407 = vmatprep.subr.bf16.mxu0 0
        %6408 = vmatpush1.bf16.msra.mxu0 0
        %6409 = vmatprep.mubr.bf16.mxu0 0
        %6410 = vmatmul.mubr.bf16.gmra.mrb[0].mxu0 %v6375
        %v6411 = vpop.f32.mrb[0].mxu0
        %v6412 = vadd.f32 0.0, %v6411
        %v6413 = vpop.f32.mrb[0].mxu0
        %v6414 = vpop.f32.mrb[0].mxu0
        %v6415 = vadd.f32 0.0, %v6414
        %v6416 = vpop.f32.mrb[0].mxu0
        %6417 = vdwg.mxu0
        %v6419 = vsel %vm5937, %v6277, 0
        %6421 = vmatprep.subr.bf16.mxu0 0
        %6422 = vmatpush1.bf16.msra.mxu0 %v5328
        %6423 = vmatprep.subr.bf16.mxu0 0
        %6424 = vmatpush1.bf16.msra.mxu0 0
        %6425 = vmatprep.subr.bf16.mxu0 0
        %6426 = vmatpush1.bf16.msra.mxu0 0
        %6427 = vmatprep.subr.bf16.mxu0 0
        %6428 = vmatpush1.bf16.msra.mxu0 0
        %6429 = vmatprep.subr.bf16.mxu0 0
        %6430 = vmatpush1.bf16.msra.mxu0 0
        %6431 = vmatprep.subr.bf16.mxu0 0
        %6432 = vmatpush1.bf16.msra.mxu0 0
        %6433 = vmatprep.subr.bf16.mxu0 0
        %6434 = vmatpush1.bf16.msra.mxu0 0
        %6435 = vmatprep.subr.bf16.mxu0 0
        %6436 = vmatpush1.bf16.msra.mxu0 0
        %6437 = vmatprep.subr.bf16.mxu0 0
        %6438 = vmatpush1.bf16.msra.mxu0 0
        %6439 = vmatprep.subr.bf16.mxu0 0
        %6440 = vmatpush1.bf16.msra.mxu0 0
        %6441 = vmatprep.subr.bf16.mxu0 0
        %6442 = vmatpush1.bf16.msra.mxu0 0
        %6443 = vmatprep.subr.bf16.mxu0 0
        %6444 = vmatpush1.bf16.msra.mxu0 0
        %6445 = vmatprep.subr.bf16.mxu0 0
        %6446 = vmatpush1.bf16.msra.mxu0 0
        %6447 = vmatprep.subr.bf16.mxu0 0
        %6448 = vmatpush1.bf16.msra.mxu0 0
        %6449 = vmatprep.subr.bf16.mxu0 0
        %6450 = vmatpush1.bf16.msra.mxu0 0
        %6451 = vmatprep.subr.bf16.mxu0 0
        %6452 = vmatpush1.bf16.msra.mxu0 0
        %6453 = vmatprep.mubr.bf16.mxu0 0
        %6454 = vmatmul.mubr.bf16.gmra.mrb[0].mxu0 %v6419
        %v6455 = vpop.f32.mrb[0].mxu0
        %v6456 = vadd.f32 0.0, %v6455
        %v6457 = vpop.f32.mrb[0].mxu0
        %v6458 = vpop.f32.mrb[0].mxu0
        %v6459 = vadd.f32 0.0, %v6458
        %v6460 = vpop.f32.mrb[0].mxu0
        %6461 = vdwg.mxu0
        %v6463 = vsel %vm5937, %v6278, 0
        %6465 = vmatprep.subr.bf16.mxu0 0
        %6466 = vmatpush1.bf16.msra.mxu0 %v5329
        %6467 = vmatprep.subr.bf16.mxu0 0
        %6468 = vmatpush1.bf16.msra.mxu0 0
        %6469 = vmatprep.subr.bf16.mxu0 0
        %6470 = vmatpush1.bf16.msra.mxu0 0
        %6471 = vmatprep.subr.bf16.mxu0 0
        %6472 = vmatpush1.bf16.msra.mxu0 0
        %6473 = vmatprep.subr.bf16.mxu0 0
        %6474 = vmatpush1.bf16.msra.mxu0 0
        %6475 = vmatprep.subr.bf16.mxu0 0
        %6476 = vmatpush1.bf16.msra.mxu0 0
        %6477 = vmatprep.subr.bf16.mxu0 0
        %6478 = vmatpush1.bf16.msra.mxu0 0
        %6479 = vmatprep.subr.bf16.mxu0 0
        %6480 = vmatpush1.bf16.msra.mxu0 0
        %6481 = vmatprep.subr.bf16.mxu0 0
        %6482 = vmatpush1.bf16.msra.mxu0 0
        %6483 = vmatprep.subr.bf16.mxu0 0
        %6484 = vmatpush1.bf16.msra.mxu0 0
        %6485 = vmatprep.subr.bf16.mxu0 0
        %6486 = vmatpush1.bf16.msra.mxu0 0
        %6487 = vmatprep.subr.bf16.mxu0 0
        %6488 = vmatpush1.bf16.msra.mxu0 0
        %6489 = vmatprep.subr.bf16.mxu0 0
        %6490 = vmatpush1.bf16.msra.mxu0 0
        %6491 = vmatprep.subr.bf16.mxu0 0
        %6492 = vmatpush1.bf16.msra.mxu0 0
        %6493 = vmatprep.subr.bf16.mxu0 0
        %6494 = vmatpush1.bf16.msra.mxu0 0
        %6495 = vmatprep.subr.bf16.mxu0 0
        %6496 = vmatpush1.bf16.msra.mxu0 0
        %6497 = vmatprep.mubr.bf16.mxu0 0
        %6498 = vmatmul.mubr.bf16.gmra.mrb[0].mxu0 %v6463
        %v6499 = vpop.f32.mrb[0].mxu0
        %v6500 = vadd.f32 0.0, %v6499
        %v6501 = vpop.f32.mrb[0].mxu0
        %v6502 = vpop.f32.mrb[0].mxu0
        %v6503 = vadd.f32 0.0, %v6502
        %v6504 = vpop.f32.mrb[0].mxu0
        %6505 = vdwg.mxu0
        %v6507 = vsel %vm5937, %v6279, 0
        %6509 = vmatprep.subr.bf16.mxu0 0
        %6510 = vmatpush1.bf16.msra.mxu0 %v5330
        %6511 = vmatprep.subr.bf16.mxu0 0
        %6512 = vmatpush1.bf16.msra.mxu0 0
        %6513 = vmatprep.subr.bf16.mxu0 0
        %6514 = vmatpush1.bf16.msra.mxu0 0
        %6515 = vmatprep.subr.bf16.mxu0 0
        %6516 = vmatpush1.bf16.msra.mxu0 0
        %6517 = vmatprep.subr.bf16.mxu0 0
        %6518 = vmatpush1.bf16.msra.mxu0 0
        %6519 = vmatprep.subr.bf16.mxu0 0
        %6520 = vmatpush1.bf16.msra.mxu0 0
        %6521 = vmatprep.subr.bf16.mxu0 0
        %6522 = vmatpush1.bf16.msra.mxu0 0
        %6523 = vmatprep.subr.bf16.mxu0 0
        %6524 = vmatpush1.bf16.msra.mxu0 0
        %6525 = vmatprep.subr.bf16.mxu0 0
        %6526 = vmatpush1.bf16.msra.mxu0 0
        %6527 = vmatprep.subr.bf16.mxu0 0
        %6528 = vmatpush1.bf16.msra.mxu0 0
        %6529 = vmatprep.subr.bf16.mxu0 0
        %6530 = vmatpush1.bf16.msra.mxu0 0
        %6531 = vmatprep.subr.bf16.mxu0 0
        %6532 = vmatpush1.bf16.msra.mxu0 0
        %6533 = vmatprep.subr.bf16.mxu0 0
        %6534 = vmatpush1.bf16.msra.mxu0 0
        %6535 = vmatprep.subr.bf16.mxu0 0
        %6536 = vmatpush1.bf16.msra.mxu0 0
        %6537 = vmatprep.subr.bf16.mxu0 0
        %6538 = vmatpush1.bf16.msra.mxu0 0
        %6539 = vmatprep.subr.bf16.mxu0 0
        %6540 = vmatpush1.bf16.msra.mxu0 0
        %6541 = vmatprep.mubr.bf16.mxu0 0
        %6542 = vmatmul.mubr.bf16.gmra.mrb[0].mxu0 %v6507
        %v6543 = vpop.f32.mrb[0].mxu0
        %v6544 = vadd.f32 0.0, %v6543
        %v6545 = vpop.f32.mrb[0].mxu0
        %v6546 = vpop.f32.mrb[0].mxu0
        %v6547 = vadd.f32 0.0, %v6546
        %v6548 = vpop.f32.mrb[0].mxu0
        %6549 = vdwg.mxu0
        %v6551 = vsel %vm5937, %v6280, 0
        %6553 = vmatprep.subr.bf16.mxu0 0
        %6554 = vmatpush1.bf16.msra.mxu0 %v5331
        %6555 = vmatprep.subr.bf16.mxu0 0
        %6556 = vmatpush1.bf16.msra.mxu0 0
        %6557 = vmatprep.subr.bf16.mxu0 0
        %6558 = vmatpush1.bf16.msra.mxu0 0
        %6559 = vmatprep.subr.bf16.mxu0 0
        %6560 = vmatpush1.bf16.msra.mxu0 0
        %6561 = vmatprep.subr.bf16.mxu0 0
        %6562 = vmatpush1.bf16.msra.mxu0 0
        %6563 = vmatprep.subr.bf16.mxu0 0
        %6564 = vmatpush1.bf16.msra.mxu0 0
        %6565 = vmatprep.subr.bf16.mxu0 0
        %6566 = vmatpush1.bf16.msra.mxu0 0
        %6567 = vmatprep.subr.bf16.mxu0 0
        %6568 = vmatpush1.bf16.msra.mxu0 0
        %6569 = vmatprep.subr.bf16.mxu0 0
        %6570 = vmatpush1.bf16.msra.mxu0 0
        %6571 = vmatprep.subr.bf16.mxu0 0
        %6572 = vmatpush1.bf16.msra.mxu0 0
        %6573 = vmatprep.subr.bf16.mxu0 0
        %6574 = vmatpush1.bf16.msra.mxu0 0
        %6575 = vmatprep.subr.bf16.mxu0 0
        %6576 = vmatpush1.bf16.msra.mxu0 0
        %6577 = vmatprep.subr.bf16.mxu0 0
        %6578 = vmatpush1.bf16.msra.mxu0 0
        %6579 = vmatprep.subr.bf16.mxu0 0
        %6580 = vmatpush1.bf16.msra.mxu0 0
        %6581 = vmatprep.subr.bf16.mxu0 0
        %6582 = vmatpush1.bf16.msra.mxu0 0
        %6583 = vmatprep.subr.bf16.mxu0 0
        %6584 = vmatpush1.bf16.msra.mxu0 0
        %6585 = vmatprep.mubr.bf16.mxu0 0
        %6586 = vmatmul.mubr.bf16.gmra.mrb[0].mxu0 %v6551
        %v6587 = vpop.f32.mrb[0].mxu0
        %v6588 = vadd.f32 0.0, %v6587
        %v6589 = vpop.f32.mrb[0].mxu0
        %v6590 = vpop.f32.mrb[0].mxu0
        %v6591 = vadd.f32 0.0, %v6590
        %v6592 = vpop.f32.mrb[0].mxu0
        %6593 = vdwg.mxu0
        %v6595 = vsel %vm5937, %v6281, 0
        %6597 = vmatprep.subr.bf16.mxu0 0
        %6598 = vmatpush1.bf16.msra.mxu0 %v5332
        %6599 = vmatprep.subr.bf16.mxu0 0
        %6600 = vmatpush1.bf16.msra.mxu0 0
        %6601 = vmatprep.subr.bf16.mxu0 0
        %6602 = vmatpush1.bf16.msra.mxu0 0
        %6603 = vmatprep.subr.bf16.mxu0 0
        %6604 = vmatpush1.bf16.msra.mxu0 0
        %6605 = vmatprep.subr.bf16.mxu0 0
        %6606 = vmatpush1.bf16.msra.mxu0 0
        %6607 = vmatprep.subr.bf16.mxu0 0
        %6608 = vmatpush1.bf16.msra.mxu0 0
        %6609 = vmatprep.subr.bf16.mxu0 0
        %6610 = vmatpush1.bf16.msra.mxu0 0
        %6611 = vmatprep.subr.bf16.mxu0 0
        %6612 = vmatpush1.bf16.msra.mxu0 0
        %6613 = vmatprep.subr.bf16.mxu0 0
        %6614 = vmatpush1.bf16.msra.mxu0 0
        %6615 = vmatprep.subr.bf16.mxu0 0
        %6616 = vmatpush1.bf16.msra.mxu0 0
        %6617 = vmatprep.subr.bf16.mxu0 0
        %6618 = vmatpush1.bf16.msra.mxu0 0
        %6619 = vmatprep.subr.bf16.mxu0 0
        %6620 = vmatpush1.bf16.msra.mxu0 0
        %6621 = vmatprep.subr.bf16.mxu0 0
        %6622 = vmatpush1.bf16.msra.mxu0 0
        %6623 = vmatprep.subr.bf16.mxu0 0
        %6624 = vmatpush1.bf16.msra.mxu0 0
        %6625 = vmatprep.subr.bf16.mxu0 0
        %6626 = vmatpush1.bf16.msra.mxu0 0
        %6627 = vmatprep.subr.bf16.mxu0 0
        %6628 = vmatpush1.bf16.msra.mxu0 0
        %6629 = vmatprep.mubr.bf16.mxu0 0
        %6630 = vmatmul.mubr.bf16.gmra.mrb[0].mxu0 %v6595
        %v6631 = vpop.f32.mrb[0].mxu0
        %v6632 = vadd.f32 0.0, %v6631
        %v6633 = vpop.f32.mrb[0].mxu0
        %v6634 = vpop.f32.mrb[0].mxu0
        %v6635 = vadd.f32 0.0, %v6634
        %v6636 = vpop.f32.mrb[0].mxu0
        %6637 = vdwg.mxu0
        %v6639 = vsel %vm5937, %v6282, 0
        %6641 = vmatprep.subr.bf16.mxu0 0
        %6642 = vmatpush1.bf16.msra.mxu0 %v5333
        %6643 = vmatprep.subr.bf16.mxu0 0
        %6644 = vmatpush1.bf16.msra.mxu0 0
        %6645 = vmatprep.subr.bf16.mxu0 0
        %6646 = vmatpush1.bf16.msra.mxu0 0
        %6647 = vmatprep.subr.bf16.mxu0 0
        %6648 = vmatpush1.bf16.msra.mxu0 0
        %6649 = vmatprep.subr.bf16.mxu0 0
        %6650 = vmatpush1.bf16.msra.mxu0 0
        %6651 = vmatprep.subr.bf16.mxu0 0
        %6652 = vmatpush1.bf16.msra.mxu0 0
        %6653 = vmatprep.subr.bf16.mxu0 0
        %6654 = vmatpush1.bf16.msra.mxu0 0
        %6655 = vmatprep.subr.bf16.mxu0 0
        %6656 = vmatpush1.bf16.msra.mxu0 0
        %6657 = vmatprep.subr.bf16.mxu0 0
        %6658 = vmatpush1.bf16.msra.mxu0 0
        %6659 = vmatprep.subr.bf16.mxu0 0
        %6660 = vmatpush1.bf16.msra.mxu0 0
        %6661 = vmatprep.subr.bf16.mxu0 0
        %6662 = vmatpush1.bf16.msra.mxu0 0
        %6663 = vmatprep.subr.bf16.mxu0 0
        %6664 = vmatpush1.bf16.msra.mxu0 0
        %6665 = vmatprep.subr.bf16.mxu0 0
        %6666 = vmatpush1.bf16.msra.mxu0 0
        %6667 = vmatprep.subr.bf16.mxu0 0
        %6668 = vmatpush1.bf16.msra.mxu0 0
        %6669 = vmatprep.subr.bf16.mxu0 0
        %6670 = vmatpush1.bf16.msra.mxu0 0
        %6671 = vmatprep.subr.bf16.mxu0 0
        %6672 = vmatpush1.bf16.msra.mxu0 0
        %6673 = vmatprep.mubr.bf16.mxu0 0
        %6674 = vmatmul.mubr.bf16.gmra.mrb[0].mxu0 %v6639
        %v6675 = vpop.f32.mrb[0].mxu0
        %v6676 = vadd.f32 0.0, %v6675
        %v6677 = vpop.f32.mrb[0].mxu0
        %v6678 = vpop.f32.mrb[0].mxu0
        %v6679 = vadd.f32 0.0, %v6678
        %v6680 = vpop.f32.mrb[0].mxu0
        %6681 = vdwg.mxu0
        %v6683 = vsel %vm5937, %v6283, 0
        %6685 = vmatprep.subr.bf16.mxu0 0
        %6686 = vmatpush1.bf16.msra.mxu0 %v5334
        %6687 = vmatprep.subr.bf16.mxu0 0
        %6688 = vmatpush1.bf16.msra.mxu0 0
        %6689 = vmatprep.subr.bf16.mxu0 0
        %6690 = vmatpush1.bf16.msra.mxu0 0
        %6691 = vmatprep.subr.bf16.mxu0 0
        %6692 = vmatpush1.bf16.msra.mxu0 0
        %6693 = vmatprep.subr.bf16.mxu0 0
        %6694 = vmatpush1.bf16.msra.mxu0 0
        %6695 = vmatprep.subr.bf16.mxu0 0
        %6696 = vmatpush1.bf16.msra.mxu0 0
        %6697 = vmatprep.subr.bf16.mxu0 0
        %6698 = vmatpush1.bf16.msra.mxu0 0
        %6699 = vmatprep.subr.bf16.mxu0 0
        %6700 = vmatpush1.bf16.msra.mxu0 0
        %6701 = vmatprep.subr.bf16.mxu0 0
        %6702 = vmatpush1.bf16.msra.mxu0 0
        %6703 = vmatprep.subr.bf16.mxu0 0
        %6704 = vmatpush1.bf16.msra.mxu0 0
        %6705 = vmatprep.subr.bf16.mxu0 0
        %6706 = vmatpush1.bf16.msra.mxu0 0
        %6707 = vmatprep.subr.bf16.mxu0 0
        %6708 = vmatpush1.bf16.msra.mxu0 0
        %6709 = vmatprep.subr.bf16.mxu0 0
        %6710 = vmatpush1.bf16.msra.mxu0 0
        %6711 = vmatprep.subr.bf16.mxu0 0
        %6712 = vmatpush1.bf16.msra.mxu0 0
        %6713 = vmatprep.subr.bf16.mxu0 0
        %6714 = vmatpush1.bf16.msra.mxu0 0
        %6715 = vmatprep.subr.bf16.mxu0 0
        %6716 = vmatpush1.bf16.msra.mxu0 0
        %6717 = vmatprep.mubr.bf16.mxu0 0
        %6718 = vmatmul.mubr.bf16.gmra.mrb[0].mxu0 %v6683
        %v6719 = vpop.f32.mrb[0].mxu0
        %v6720 = vadd.f32 0.0, %v6719
        %v6721 = vpop.f32.mrb[0].mxu0
        %v6722 = vpop.f32.mrb[0].mxu0
        %v6723 = vadd.f32 0.0, %v6722
        %v6724 = vpop.f32.mrb[0].mxu0
        %6725 = vdwg.mxu0
        %v6727 = vsel %vm5937, %v6284, 0
        %6729 = vmatprep.subr.bf16.mxu0 0
        %6730 = vmatpush1.bf16.msra.mxu0 %v5335
        %6731 = vmatprep.subr.bf16.mxu0 0
        %6732 = vmatpush1.bf16.msra.mxu0 0
        %6733 = vmatprep.subr.bf16.mxu0 0
        %6734 = vmatpush1.bf16.msra.mxu0 0
        %6735 = vmatprep.subr.bf16.mxu0 0
        %6736 = vmatpush1.bf16.msra.mxu0 0
        %6737 = vmatprep.subr.bf16.mxu0 0
        %6738 = vmatpush1.bf16.msra.mxu0 0
        %6739 = vmatprep.subr.bf16.mxu0 0
        %6740 = vmatpush1.bf16.msra.mxu0 0
        %6741 = vmatprep.subr.bf16.mxu0 0
        %6742 = vmatpush1.bf16.msra.mxu0 0
        %6743 = vmatprep.subr.bf16.mxu0 0
        %6744 = vmatpush1.bf16.msra.mxu0 0
        %6745 = vmatprep.subr.bf16.mxu0 0
        %6746 = vmatpush1.bf16.msra.mxu0 0
        %6747 = vmatprep.subr.bf16.mxu0 0
        %6748 = vmatpush1.bf16.msra.mxu0 0
        %6749 = vmatprep.subr.bf16.mxu0 0
        %6750 = vmatpush1.bf16.msra.mxu0 0
        %6751 = vmatprep.subr.bf16.mxu0 0
        %6752 = vmatpush1.bf16.msra.mxu0 0
        %6753 = vmatprep.subr.bf16.mxu0 0
        %6754 = vmatpush1.bf16.msra.mxu0 0
        %6755 = vmatprep.subr.bf16.mxu0 0
        %6756 = vmatpush1.bf16.msra.mxu0 0
        %6757 = vmatprep.subr.bf16.mxu0 0
        %6758 = vmatpush1.bf16.msra.mxu0 0
        %6759 = vmatprep.subr.bf16.mxu0 0
        %6760 = vmatpush1.bf16.msra.mxu0 0
        %6761 = vmatprep.mubr.bf16.mxu0 0
        %6762 = vmatmul.mubr.bf16.gmra.mrb[0].mxu0 %v6727
        %v6763 = vpop.f32.mrb[0].mxu0
        %v6764 = vadd.f32 0.0, %v6763
        %v6765 = vpop.f32.mrb[0].mxu0
        %v6766 = vpop.f32.mrb[0].mxu0
        %v6767 = vadd.f32 0.0, %v6766
        %v6768 = vpop.f32.mrb[0].mxu0
        %6769 = vdwg.mxu0
        %v6771 = vsel %vm5937, %v6285, 0
        %6773 = vmatprep.subr.bf16.mxu0 0
        %6774 = vmatpush1.bf16.msra.mxu0 %v5336
        %6775 = vmatprep.subr.bf16.mxu0 0
        %6776 = vmatpush1.bf16.msra.mxu0 0
        %6777 = vmatprep.subr.bf16.mxu0 0
        %6778 = vmatpush1.bf16.msra.mxu0 0
        %6779 = vmatprep.subr.bf16.mxu0 0
        %6780 = vmatpush1.bf16.msra.mxu0 0
        %6781 = vmatprep.subr.bf16.mxu0 0
        %6782 = vmatpush1.bf16.msra.mxu0 0
        %6783 = vmatprep.subr.bf16.mxu0 0
        %6784 = vmatpush1.bf16.msra.mxu0 0
        %6785 = vmatprep.subr.bf16.mxu0 0
        %6786 = vmatpush1.bf16.msra.mxu0 0
        %6787 = vmatprep.subr.bf16.mxu0 0
        %6788 = vmatpush1.bf16.msra.mxu0 0
        %6789 = vmatprep.subr.bf16.mxu0 0
        %6790 = vmatpush1.bf16.msra.mxu0 0
        %6791 = vmatprep.subr.bf16.mxu0 0
        %6792 = vmatpush1.bf16.msra.mxu0 0
        %6793 = vmatprep.subr.bf16.mxu0 0
        %6794 = vmatpush1.bf16.msra.mxu0 0
        %6795 = vmatprep.subr.bf16.mxu0 0
        %6796 = vmatpush1.bf16.msra.mxu0 0
        %6797 = vmatprep.subr.bf16.mxu0 0
        %6798 = vmatpush1.bf16.msra.mxu0 0
        %6799 = vmatprep.subr.bf16.mxu0 0
        %6800 = vmatpush1.bf16.msra.mxu0 0
        %6801 = vmatprep.subr.bf16.mxu0 0
        %6802 = vmatpush1.bf16.msra.mxu0 0
        %6803 = vmatprep.subr.bf16.mxu0 0
        %6804 = vmatpush1.bf16.msra.mxu0 0
        %6805 = vmatprep.mubr.bf16.mxu0 0
        %6806 = vmatmul.mubr.bf16.gmra.mrb[0].mxu0 %v6771
        %v6807 = vpop.f32.mrb[0].mxu0
        %v6808 = vadd.f32 0.0, %v6807
        %v6809 = vpop.f32.mrb[0].mxu0
        %v6810 = vpop.f32.mrb[0].mxu0
        %v6811 = vadd.f32 0.0, %v6810
        %v6812 = vpop.f32.mrb[0].mxu0
        %6813 = vdwg.mxu0
        %v6814 = vcombine.low %v6324, %v6412
        %v6815 = vcombine.high %v6324, %v6412
        %v6817 = vunpack.c.l.s4 1983009808
        %v6818 = vunpack.c.0.s8 %v6817
        %v6819 = vlaneseq
        %v6820 = vshrl.u32 %v6819, 7
        %v6821 = vsub.s32 %v6818, %v6820
        %v6822 = vrot.slane %v6814, %v6821
        %v6824 = vunpack.c.l.s4 1983009808
        %v6825 = vunpack.c.0.s8 %v6824
        %v6826 = vlaneseq
        %v6827 = vshrl.u32 %v6826, 7
        %v6828 = vsub.s32 %v6825, %v6827
        %v6829 = vrot.slane %v6815, %v6828
        %v6830 = vcombine.low %v6368, %v6456
        %v6831 = vcombine.high %v6368, %v6456
        %v6833 = vunpack.c.l.s4 1983009808
        %v6834 = vunpack.c.0.s8 %v6833
        %v6835 = vlaneseq
        %v6836 = vshrl.u32 %v6835, 7
        %v6837 = vsub.s32 %v6834, %v6836
        %v6838 = vrot.slane %v6830, %v6837
        %v6840 = vunpack.c.l.s4 1983009808
        %v6841 = vunpack.c.0.s8 %v6840
        %v6842 = vlaneseq
        %v6843 = vshrl.u32 %v6842, 7
        %v6844 = vsub.s32 %v6841, %v6843
        %v6845 = vrot.slane %v6831, %v6844
        %v6846 = vcombine.high %v6500, 0.0
        %v6848 = vunpack.c.l.s4 1983009808
        %v6849 = vunpack.c.0.s8 %v6848
        %v6850 = vlaneseq
        %v6851 = vshrl.u32 %v6850, 7
        %v6852 = vsub.s32 %v6849, %v6851
        %v6853 = vrot.slane %v6500, %v6852
        %v6855 = vunpack.c.l.s4 1983009808
        %v6856 = vunpack.c.0.s8 %v6855
        %v6857 = vlaneseq
        %v6858 = vshrl.u32 %v6857, 7
        %v6859 = vsub.s32 %v6856, %v6858
        %v6860 = vrot.slane %v6846, %v6859
        %v6861 = vcombine.high %v6544, 0.0
        %v6863 = vunpack.c.l.s4 1983009808
        %v6864 = vunpack.c.0.s8 %v6863
        %v6865 = vlaneseq
        %v6866 = vshrl.u32 %v6865, 7
        %v6867 = vsub.s32 %v6864, %v6866
        %v6868 = vrot.slane %v6544, %v6867
        %v6870 = vunpack.c.l.s4 1983009808
        %v6871 = vunpack.c.0.s8 %v6870
        %v6872 = vlaneseq
        %v6873 = vshrl.u32 %v6872, 7
        %v6874 = vsub.s32 %v6871, %v6873
        %v6875 = vrot.slane %v6861, %v6874
        %v6876 = vcombine.low %v6822, %v6838
        %v6877 = vcombine.high %v6822, %v6838
        %v6879 = vunpack.c.l.s4 1934713408
        %v6880 = vunpack.c.0.s8 %v6879
        %v6881 = vlaneseq
        %v6882 = vshrl.u32 %v6881, 7
        %v6883 = vsub.s32 %v6880, %v6882
        %v6884 = vrot.slane %v6876, %v6883
        %v6886 = vunpack.c.l.s4 1934713408
        %v6887 = vunpack.c.0.s8 %v6886
        %v6888 = vlaneseq
        %v6889 = vshrl.u32 %v6888, 7
        %v6890 = vsub.s32 %v6887, %v6889
        %v6891 = vrot.slane %v6877, %v6890
        %v6892 = vcombine.low %v6829, %v6845
        %v6893 = vcombine.high %v6829, %v6845
        %v6895 = vunpack.c.l.s4 1934713408
        %v6896 = vunpack.c.0.s8 %v6895
        %v6897 = vlaneseq
        %v6898 = vshrl.u32 %v6897, 7
        %v6899 = vsub.s32 %v6896, %v6898
        %v6900 = vrot.slane %v6892, %v6899
        %v6902 = vunpack.c.l.s4 1934713408
        %v6903 = vunpack.c.0.s8 %v6902
        %v6904 = vlaneseq
        %v6905 = vshrl.u32 %v6904, 7
        %v6906 = vsub.s32 %v6903, %v6905
        %v6907 = vrot.slane %v6893, %v6906
        %v6908 = vcombine.low %v6853, %v6868
        %v6909 = vcombine.high %v6853, %v6868
        %v6911 = vunpack.c.l.s4 1934713408
        %v6912 = vunpack.c.0.s8 %v6911
        %v6913 = vlaneseq
        %v6914 = vshrl.u32 %v6913, 7
        %v6915 = vsub.s32 %v6912, %v6914
        %v6916 = vrot.slane %v6908, %v6915
        %v6918 = vunpack.c.l.s4 1934713408
        %v6919 = vunpack.c.0.s8 %v6918
        %v6920 = vlaneseq
        %v6921 = vshrl.u32 %v6920, 7
        %v6922 = vsub.s32 %v6919, %v6921
        %v6923 = vrot.slane %v6909, %v6922
        %v6924 = vcombine.low %v6860, %v6875
        %v6925 = vcombine.high %v6860, %v6875
        %v6927 = vunpack.c.l.s4 1934713408
        %v6928 = vunpack.c.0.s8 %v6927
        %v6929 = vlaneseq
        %v6930 = vshrl.u32 %v6929, 7
        %v6931 = vsub.s32 %v6928, %v6930
        %v6932 = vrot.slane %v6924, %v6931
        %v6934 = vunpack.c.l.s4 1934713408
        %v6935 = vunpack.c.0.s8 %v6934
        %v6936 = vlaneseq
        %v6937 = vshrl.u32 %v6936, 7
        %v6938 = vsub.s32 %v6935, %v6937
        %v6939 = vrot.slane %v6925, %v6938
        %v6940 = vcombine.low %v6884, %v6916
        %v6941 = vcombine.high %v6884, %v6916
        %v6942 = vcombine.low %v6891, %v6923
        %v6943 = vcombine.high %v6891, %v6923
        %v6944 = vcombine.low %v6900, %v6932
        %v6945 = vcombine.high %v6900, %v6932
        %v6946 = vcombine.low %v6907, %v6939
        %v6947 = vcombine.high %v6907, %v6939
        %v6948 = vcombine.low %v6327, %v6415
        %v6949 = vcombine.high %v6327, %v6415
        %v6951 = vunpack.c.l.s4 1983009808
        %v6952 = vunpack.c.0.s8 %v6951
        %v6953 = vlaneseq
        %v6954 = vshrl.u32 %v6953, 7
        %v6955 = vsub.s32 %v6952, %v6954
        %v6956 = vrot.slane %v6948, %v6955
        %v6958 = vunpack.c.l.s4 1983009808
        %v6959 = vunpack.c.0.s8 %v6958
        %v6960 = vlaneseq
        %v6961 = vshrl.u32 %v6960, 7
        %v6962 = vsub.s32 %v6959, %v6961
        %v6963 = vrot.slane %v6949, %v6962
        %v6964 = vcombine.low %v6371, %v6459
        %v6965 = vcombine.high %v6371, %v6459
        %v6967 = vunpack.c.l.s4 1983009808
        %v6968 = vunpack.c.0.s8 %v6967
        %v6969 = vlaneseq
        %v6970 = vshrl.u32 %v6969, 7
        %v6971 = vsub.s32 %v6968, %v6970
        %v6972 = vrot.slane %v6964, %v6971
        %v6974 = vunpack.c.l.s4 1983009808
        %v6975 = vunpack.c.0.s8 %v6974
        %v6976 = vlaneseq
        %v6977 = vshrl.u32 %v6976, 7
        %v6978 = vsub.s32 %v6975, %v6977
        %v6979 = vrot.slane %v6965, %v6978
        %v6980 = vcombine.high %v6503, 0.0
        %v6982 = vunpack.c.l.s4 1983009808
        %v6983 = vunpack.c.0.s8 %v6982
        %v6984 = vlaneseq
        %v6985 = vshrl.u32 %v6984, 7
        %v6986 = vsub.s32 %v6983, %v6985
        %v6987 = vrot.slane %v6503, %v6986
        %v6989 = vunpack.c.l.s4 1983009808
        %v6990 = vunpack.c.0.s8 %v6989
        %v6991 = vlaneseq
        %v6992 = vshrl.u32 %v6991, 7
        %v6993 = vsub.s32 %v6990, %v6992
        %v6994 = vrot.slane %v6980, %v6993
        %v6995 = vcombine.high %v6547, 0.0
        %v6997 = vunpack.c.l.s4 1983009808
        %v6998 = vunpack.c.0.s8 %v6997
        %v6999 = vlaneseq
        %v7000 = vshrl.u32 %v6999, 7
        %v7001 = vsub.s32 %v6998, %v7000
        %v7002 = vrot.slane %v6547, %v7001
        %v7004 = vunpack.c.l.s4 1983009808
        %v7005 = vunpack.c.0.s8 %v7004
        %v7006 = vlaneseq
        %v7007 = vshrl.u32 %v7006, 7
        %v7008 = vsub.s32 %v7005, %v7007
        %v7009 = vrot.slane %v6995, %v7008
        %v7010 = vcombine.low %v6956, %v6972
        %v7011 = vcombine.high %v6956, %v6972
        %v7013 = vunpack.c.l.s4 1934713408
        %v7014 = vunpack.c.0.s8 %v7013
        %v7015 = vlaneseq
        %v7016 = vshrl.u32 %v7015, 7
        %v7017 = vsub.s32 %v7014, %v7016
        %v7018 = vrot.slane %v7010, %v7017
        %v7020 = vunpack.c.l.s4 1934713408
        %v7021 = vunpack.c.0.s8 %v7020
        %v7022 = vlaneseq
        %v7023 = vshrl.u32 %v7022, 7
        %v7024 = vsub.s32 %v7021, %v7023
        %v7025 = vrot.slane %v7011, %v7024
        %v7026 = vcombine.low %v6963, %v6979
        %v7027 = vcombine.high %v6963, %v6979
        %v7029 = vunpack.c.l.s4 1934713408
        %v7030 = vunpack.c.0.s8 %v7029
        %v7031 = vlaneseq
        %v7032 = vshrl.u32 %v7031, 7
        %v7033 = vsub.s32 %v7030, %v7032
        %v7034 = vrot.slane %v7026, %v7033
        %v7036 = vunpack.c.l.s4 1934713408
        %v7037 = vunpack.c.0.s8 %v7036
        %v7038 = vlaneseq
        %v7039 = vshrl.u32 %v7038, 7
        %v7040 = vsub.s32 %v7037, %v7039
        %v7041 = vrot.slane %v7027, %v7040
        %v7042 = vcombine.low %v6987, %v7002
        %v7043 = vcombine.high %v6987, %v7002
        %v7045 = vunpack.c.l.s4 1934713408
        %v7046 = vunpack.c.0.s8 %v7045
        %v7047 = vlaneseq
        %v7048 = vshrl.u32 %v7047, 7
        %v7049 = vsub.s32 %v7046, %v7048
        %v7050 = vrot.slane %v7042, %v7049
        %v7052 = vunpack.c.l.s4 1934713408
        %v7053 = vunpack.c.0.s8 %v7052
        %v7054 = vlaneseq
        %v7055 = vshrl.u32 %v7054, 7
        %v7056 = vsub.s32 %v7053, %v7055
        %v7057 = vrot.slane %v7043, %v7056
        %v7058 = vcombine.low %v6994, %v7009
        %v7059 = vcombine.high %v6994, %v7009
        %v7061 = vunpack.c.l.s4 1934713408
        %v7062 = vunpack.c.0.s8 %v7061
        %v7063 = vlaneseq
        %v7064 = vshrl.u32 %v7063, 7
        %v7065 = vsub.s32 %v7062, %v7064
        %v7066 = vrot.slane %v7058, %v7065
        %v7068 = vunpack.c.l.s4 1934713408
        %v7069 = vunpack.c.0.s8 %v7068
        %v7070 = vlaneseq
        %v7071 = vshrl.u32 %v7070, 7
        %v7072 = vsub.s32 %v7069, %v7071
        %v7073 = vrot.slane %v7059, %v7072
        %v7074 = vcombine.low %v7018, %v7050
        %v7075 = vcombine.high %v7018, %v7050
        %v7076 = vcombine.low %v7025, %v7057
        %v7077 = vcombine.high %v7025, %v7057
        %v7078 = vcombine.low %v7034, %v7066
        %v7079 = vcombine.high %v7034, %v7066
        %v7080 = vcombine.low %v7041, %v7073
        %v7081 = vcombine.high %v7041, %v7073
        %v7082 = vcombine.low %v6588, %v6676
        %v7083 = vcombine.high %v6588, %v6676
        %v7085 = vunpack.c.l.s4 1983009808
        %v7086 = vunpack.c.0.s8 %v7085
        %v7087 = vlaneseq
        %v7088 = vshrl.u32 %v7087, 7
        %v7089 = vsub.s32 %v7086, %v7088
        %v7090 = vrot.slane %v7082, %v7089
        %v7092 = vunpack.c.l.s4 1983009808
        %v7093 = vunpack.c.0.s8 %v7092
        %v7094 = vlaneseq
        %v7095 = vshrl.u32 %v7094, 7
        %v7096 = vsub.s32 %v7093, %v7095
        %v7097 = vrot.slane %v7083, %v7096
        %v7098 = vcombine.low %v6632, %v6720
        %v7099 = vcombine.high %v6632, %v6720
        %v7101 = vunpack.c.l.s4 1983009808
        %v7102 = vunpack.c.0.s8 %v7101
        %v7103 = vlaneseq
        %v7104 = vshrl.u32 %v7103, 7
        %v7105 = vsub.s32 %v7102, %v7104
        %v7106 = vrot.slane %v7098, %v7105
        %v7108 = vunpack.c.l.s4 1983009808
        %v7109 = vunpack.c.0.s8 %v7108
        %v7110 = vlaneseq
        %v7111 = vshrl.u32 %v7110, 7
        %v7112 = vsub.s32 %v7109, %v7111
        %v7113 = vrot.slane %v7099, %v7112
        %v7114 = vcombine.high %v6764, 0.0
        %v7116 = vunpack.c.l.s4 1983009808
        %v7117 = vunpack.c.0.s8 %v7116
        %v7118 = vlaneseq
        %v7119 = vshrl.u32 %v7118, 7
        %v7120 = vsub.s32 %v7117, %v7119
        %v7121 = vrot.slane %v6764, %v7120
        %v7123 = vunpack.c.l.s4 1983009808
        %v7124 = vunpack.c.0.s8 %v7123
        %v7125 = vlaneseq
        %v7126 = vshrl.u32 %v7125, 7
        %v7127 = vsub.s32 %v7124, %v7126
        %v7128 = vrot.slane %v7114, %v7127
        %v7129 = vcombine.high %v6808, 0.0
        %v7131 = vunpack.c.l.s4 1983009808
        %v7132 = vunpack.c.0.s8 %v7131
        %v7133 = vlaneseq
        %v7134 = vshrl.u32 %v7133, 7
        %v7135 = vsub.s32 %v7132, %v7134
        %v7136 = vrot.slane %v6808, %v7135
        %v7138 = vunpack.c.l.s4 1983009808
        %v7139 = vunpack.c.0.s8 %v7138
        %v7140 = vlaneseq
        %v7141 = vshrl.u32 %v7140, 7
        %v7142 = vsub.s32 %v7139, %v7141
        %v7143 = vrot.slane %v7129, %v7142
        %v7144 = vcombine.low %v7090, %v7106
        %v7145 = vcombine.high %v7090, %v7106
        %v7147 = vunpack.c.l.s4 1934713408
        %v7148 = vunpack.c.0.s8 %v7147
        %v7149 = vlaneseq
        %v7150 = vshrl.u32 %v7149, 7
        %v7151 = vsub.s32 %v7148, %v7150
        %v7152 = vrot.slane %v7144, %v7151
        %v7154 = vunpack.c.l.s4 1934713408
        %v7155 = vunpack.c.0.s8 %v7154
        %v7156 = vlaneseq
        %v7157 = vshrl.u32 %v7156, 7
        %v7158 = vsub.s32 %v7155, %v7157
        %v7159 = vrot.slane %v7145, %v7158
        %v7160 = vcombine.low %v7097, %v7113
        %v7161 = vcombine.high %v7097, %v7113
        %v7163 = vunpack.c.l.s4 1934713408
        %v7164 = vunpack.c.0.s8 %v7163
        %v7165 = vlaneseq
        %v7166 = vshrl.u32 %v7165, 7
        %v7167 = vsub.s32 %v7164, %v7166
        %v7168 = vrot.slane %v7160, %v7167
        %v7170 = vunpack.c.l.s4 1934713408
        %v7171 = vunpack.c.0.s8 %v7170
        %v7172 = vlaneseq
        %v7173 = vshrl.u32 %v7172, 7
        %v7174 = vsub.s32 %v7171, %v7173
        %v7175 = vrot.slane %v7161, %v7174
        %v7176 = vcombine.low %v7121, %v7136
        %v7177 = vcombine.high %v7121, %v7136
        %v7179 = vunpack.c.l.s4 1934713408
        %v7180 = vunpack.c.0.s8 %v7179
        %v7181 = vlaneseq
        %v7182 = vshrl.u32 %v7181, 7
        %v7183 = vsub.s32 %v7180, %v7182
        %v7184 = vrot.slane %v7176, %v7183
        %v7186 = vunpack.c.l.s4 1934713408
        %v7187 = vunpack.c.0.s8 %v7186
        %v7188 = vlaneseq
        %v7189 = vshrl.u32 %v7188, 7
        %v7190 = vsub.s32 %v7187, %v7189
        %v7191 = vrot.slane %v7177, %v7190
        %v7192 = vcombine.low %v7128, %v7143
        %v7193 = vcombine.high %v7128, %v7143
        %v7195 = vunpack.c.l.s4 1934713408
        %v7196 = vunpack.c.0.s8 %v7195
        %v7197 = vlaneseq
        %v7198 = vshrl.u32 %v7197, 7
        %v7199 = vsub.s32 %v7196, %v7198
        %v7200 = vrot.slane %v7192, %v7199
        %v7202 = vunpack.c.l.s4 1934713408
        %v7203 = vunpack.c.0.s8 %v7202
        %v7204 = vlaneseq
        %v7205 = vshrl.u32 %v7204, 7
        %v7206 = vsub.s32 %v7203, %v7205
        %v7207 = vrot.slane %v7193, %v7206
        %v7208 = vcombine.low %v7152, %v7184
        %v7209 = vcombine.high %v7152, %v7184
        %v7210 = vcombine.low %v7159, %v7191
        %v7211 = vcombine.high %v7159, %v7191
        %v7212 = vcombine.low %v7168, %v7200
        %v7213 = vcombine.high %v7168, %v7200
        %v7214 = vcombine.low %v7175, %v7207
        %v7215 = vcombine.high %v7175, %v7207
        %v7216 = vcombine.low %v6591, %v6679
        %v7217 = vcombine.high %v6591, %v6679
        %v7219 = vunpack.c.l.s4 1983009808
        %v7220 = vunpack.c.0.s8 %v7219
        %v7221 = vlaneseq
        %v7222 = vshrl.u32 %v7221, 7
        %v7223 = vsub.s32 %v7220, %v7222
        %v7224 = vrot.slane %v7216, %v7223
        %v7226 = vunpack.c.l.s4 1983009808
        %v7227 = vunpack.c.0.s8 %v7226
        %v7228 = vlaneseq
        %v7229 = vshrl.u32 %v7228, 7
        %v7230 = vsub.s32 %v7227, %v7229
        %v7231 = vrot.slane %v7217, %v7230
        %v7232 = vcombine.low %v6635, %v6723
        %v7233 = vcombine.high %v6635, %v6723
        %v7235 = vunpack.c.l.s4 1983009808
        %v7236 = vunpack.c.0.s8 %v7235
        %v7237 = vlaneseq
        %v7238 = vshrl.u32 %v7237, 7
        %v7239 = vsub.s32 %v7236, %v7238
        %v7240 = vrot.slane %v7232, %v7239
        %v7242 = vunpack.c.l.s4 1983009808
        %v7243 = vunpack.c.0.s8 %v7242
        %v7244 = vlaneseq
        %v7245 = vshrl.u32 %v7244, 7
        %v7246 = vsub.s32 %v7243, %v7245
        %v7247 = vrot.slane %v7233, %v7246
        %v7248 = vcombine.high %v6767, 0.0
        %v7250 = vunpack.c.l.s4 1983009808
        %v7251 = vunpack.c.0.s8 %v7250
        %v7252 = vlaneseq
        %v7253 = vshrl.u32 %v7252, 7
        %v7254 = vsub.s32 %v7251, %v7253
        %v7255 = vrot.slane %v6767, %v7254
        %v7257 = vunpack.c.l.s4 1983009808
        %v7258 = vunpack.c.0.s8 %v7257
        %v7259 = vlaneseq
        %v7260 = vshrl.u32 %v7259, 7
        %v7261 = vsub.s32 %v7258, %v7260
        %v7262 = vrot.slane %v7248, %v7261
        %v7263 = vcombine.high %v6811, 0.0
        %v7265 = vunpack.c.l.s4 1983009808
        %v7266 = vunpack.c.0.s8 %v7265
        %v7267 = vlaneseq
        %v7268 = vshrl.u32 %v7267, 7
        %v7269 = vsub.s32 %v7266, %v7268
        %v7270 = vrot.slane %v6811, %v7269
        %v7272 = vunpack.c.l.s4 1983009808
        %v7273 = vunpack.c.0.s8 %v7272
        %v7274 = vlaneseq
        %v7275 = vshrl.u32 %v7274, 7
        %v7276 = vsub.s32 %v7273, %v7275
        %v7277 = vrot.slane %v7263, %v7276
        %v7278 = vcombine.low %v7224, %v7240
        %v7279 = vcombine.high %v7224, %v7240
        %v7281 = vunpack.c.l.s4 1934713408
        %v7282 = vunpack.c.0.s8 %v7281
        %v7283 = vlaneseq
        %v7284 = vshrl.u32 %v7283, 7
        %v7285 = vsub.s32 %v7282, %v7284
        %v7286 = vrot.slane %v7278, %v7285
        %v7288 = vunpack.c.l.s4 1934713408
        %v7289 = vunpack.c.0.s8 %v7288
        %v7290 = vlaneseq
        %v7291 = vshrl.u32 %v7290, 7
        %v7292 = vsub.s32 %v7289, %v7291
        %v7293 = vrot.slane %v7279, %v7292
        %v7294 = vcombine.low %v7231, %v7247
        %v7295 = vcombine.high %v7231, %v7247
        %v7297 = vunpack.c.l.s4 1934713408
        %v7298 = vunpack.c.0.s8 %v7297
        %v7299 = vlaneseq
        %v7300 = vshrl.u32 %v7299, 7
        %v7301 = vsub.s32 %v7298, %v7300
        %v7302 = vrot.slane %v7294, %v7301
        %v7304 = vunpack.c.l.s4 1934713408
        %v7305 = vunpack.c.0.s8 %v7304
        %v7306 = vlaneseq
        %v7307 = vshrl.u32 %v7306, 7
        %v7308 = vsub.s32 %v7305, %v7307
        %v7309 = vrot.slane %v7295, %v7308
        %v7310 = vcombine.low %v7255, %v7270
        %v7311 = vcombine.high %v7255, %v7270
        %v7313 = vunpack.c.l.s4 1934713408
        %v7314 = vunpack.c.0.s8 %v7313
        %v7315 = vlaneseq
        %v7316 = vshrl.u32 %v7315, 7
        %v7317 = vsub.s32 %v7314, %v7316
        %v7318 = vrot.slane %v7310, %v7317
        %v7320 = vunpack.c.l.s4 1934713408
        %v7321 = vunpack.c.0.s8 %v7320
        %v7322 = vlaneseq
        %v7323 = vshrl.u32 %v7322, 7
        %v7324 = vsub.s32 %v7321, %v7323
        %v7325 = vrot.slane %v7311, %v7324
        %v7326 = vcombine.low %v7262, %v7277
        %v7327 = vcombine.high %v7262, %v7277
        %v7329 = vunpack.c.l.s4 1934713408
        %v7330 = vunpack.c.0.s8 %v7329
        %v7331 = vlaneseq
        %v7332 = vshrl.u32 %v7331, 7
        %v7333 = vsub.s32 %v7330, %v7332
        %v7334 = vrot.slane %v7326, %v7333
        %v7336 = vunpack.c.l.s4 1934713408
        %v7337 = vunpack.c.0.s8 %v7336
        %v7338 = vlaneseq
        %v7339 = vshrl.u32 %v7338, 7
        %v7340 = vsub.s32 %v7337, %v7339
        %v7341 = vrot.slane %v7327, %v7340
        %v7342 = vcombine.low %v7286, %v7318
        %v7343 = vcombine.high %v7286, %v7318
        %v7344 = vcombine.low %v7293, %v7325
        %v7345 = vcombine.high %v7293, %v7325
        %v7346 = vcombine.low %v7302, %v7334
        %v7347 = vcombine.high %v7302, %v7334
        %v7348 = vcombine.low %v7309, %v7341
        %v7349 = vcombine.high %v7309, %v7341
        %v7350 = vcombine.low %v6940, %v6942
        %v7351 = vcombine.high %v6940, %v6942
        %v7353 = vunpack.c.l.s4 1983009808
        %v7354 = vunpack.c.0.s8 %v7353
        %v7355 = vlaneseq
        %v7356 = vshrl.u32 %v7355, 7
        %v7357 = vsub.s32 %v7354, %v7356
        %v7358 = vrot.slane %v7350, %v7357
        %v7360 = vunpack.c.l.s4 1983009808
        %v7361 = vunpack.c.0.s8 %v7360
        %v7362 = vlaneseq
        %v7363 = vshrl.u32 %v7362, 7
        %v7364 = vsub.s32 %v7361, %v7363
        %v7365 = vrot.slane %v7351, %v7364
        %v7366 = vcombine.low %v6941, %v6943
        %v7367 = vcombine.high %v6941, %v6943
        %v7369 = vunpack.c.l.s4 1983009808
        %v7370 = vunpack.c.0.s8 %v7369
        %v7371 = vlaneseq
        %v7372 = vshrl.u32 %v7371, 7
        %v7373 = vsub.s32 %v7370, %v7372
        %v7374 = vrot.slane %v7366, %v7373
        %v7376 = vunpack.c.l.s4 1983009808
        %v7377 = vunpack.c.0.s8 %v7376
        %v7378 = vlaneseq
        %v7379 = vshrl.u32 %v7378, 7
        %v7380 = vsub.s32 %v7377, %v7379
        %v7381 = vrot.slane %v7367, %v7380
        %v7382 = vcombine.low %v6944, %v6946
        %v7383 = vcombine.high %v6944, %v6946
        %v7385 = vunpack.c.l.s4 1983009808
        %v7386 = vunpack.c.0.s8 %v7385
        %v7387 = vlaneseq
        %v7388 = vshrl.u32 %v7387, 7
        %v7389 = vsub.s32 %v7386, %v7388
        %v7390 = vrot.slane %v7382, %v7389
        %v7392 = vunpack.c.l.s4 1983009808
        %v7393 = vunpack.c.0.s8 %v7392
        %v7394 = vlaneseq
        %v7395 = vshrl.u32 %v7394, 7
        %v7396 = vsub.s32 %v7393, %v7395
        %v7397 = vrot.slane %v7383, %v7396
        %v7398 = vcombine.low %v6945, %v6947
        %v7399 = vcombine.high %v6945, %v6947
        %v7401 = vunpack.c.l.s4 1983009808
        %v7402 = vunpack.c.0.s8 %v7401
        %v7403 = vlaneseq
        %v7404 = vshrl.u32 %v7403, 7
        %v7405 = vsub.s32 %v7402, %v7404
        %v7406 = vrot.slane %v7398, %v7405
        %v7408 = vunpack.c.l.s4 1983009808
        %v7409 = vunpack.c.0.s8 %v7408
        %v7410 = vlaneseq
        %v7411 = vshrl.u32 %v7410, 7
        %v7412 = vsub.s32 %v7409, %v7411
        %v7413 = vrot.slane %v7399, %v7412
        %v7414 = vcombine.low %v7358, %v7374
        %v7415 = vcombine.high %v7358, %v7374
        %v7417 = vunpack.c.l.s4 1934713408
        %v7418 = vunpack.c.0.s8 %v7417
        %v7419 = vlaneseq
        %v7420 = vshrl.u32 %v7419, 7
        %v7421 = vsub.s32 %v7418, %v7420
        %v7422 = vrot.slane %v7414, %v7421
        %v7424 = vunpack.c.l.s4 1934713408
        %v7425 = vunpack.c.0.s8 %v7424
        %v7426 = vlaneseq
        %v7427 = vshrl.u32 %v7426, 7
        %v7428 = vsub.s32 %v7425, %v7427
        %v7429 = vrot.slane %v7415, %v7428
        %v7430 = vcombine.low %v7365, %v7381
        %v7432 = vunpack.c.l.s4 1934713408
        %v7433 = vunpack.c.0.s8 %v7432
        %v7434 = vlaneseq
        %v7435 = vshrl.u32 %v7434, 7
        %v7436 = vsub.s32 %v7433, %v7435
        %v7437 = vrot.slane %v7430, %v7436
        %v7438 = vcombine.low %v7390, %v7406
        %v7439 = vcombine.high %v7390, %v7406
        %v7441 = vunpack.c.l.s4 1934713408
        %v7442 = vunpack.c.0.s8 %v7441
        %v7443 = vlaneseq
        %v7444 = vshrl.u32 %v7443, 7
        %v7445 = vsub.s32 %v7442, %v7444
        %v7446 = vrot.slane %v7438, %v7445
        %v7448 = vunpack.c.l.s4 1934713408
        %v7449 = vunpack.c.0.s8 %v7448
        %v7450 = vlaneseq
        %v7451 = vshrl.u32 %v7450, 7
        %v7452 = vsub.s32 %v7449, %v7451
        %v7453 = vrot.slane %v7439, %v7452
        %v7454 = vcombine.low %v7397, %v7413
        %v7456 = vunpack.c.l.s4 1934713408
        %v7457 = vunpack.c.0.s8 %v7456
        %v7458 = vlaneseq
        %v7459 = vshrl.u32 %v7458, 7
        %v7460 = vsub.s32 %v7457, %v7459
        %v7461 = vrot.slane %v7454, %v7460
        %v7462 = vcombine.low %v7422, %v7446
        %v7463 = vcombine.high %v7422, %v7446
        %v7464 = vcombine.low %v7429, %v7453
        %v7465 = vcombine.high %v7429, %v7453
        %v7466 = vcombine.low %v7437, %v7461
        %v7467 = vcombine.high %v7437, %v7461
        %v7468 = vcombine.low %v7074, %v7076
        %v7469 = vcombine.high %v7074, %v7076
        %v7471 = vunpack.c.l.s4 1983009808
        %v7472 = vunpack.c.0.s8 %v7471
        %v7473 = vlaneseq
        %v7474 = vshrl.u32 %v7473, 7
        %v7475 = vsub.s32 %v7472, %v7474
        %v7476 = vrot.slane %v7468, %v7475
        %v7478 = vunpack.c.l.s4 1983009808
        %v7479 = vunpack.c.0.s8 %v7478
        %v7480 = vlaneseq
        %v7481 = vshrl.u32 %v7480, 7
        %v7482 = vsub.s32 %v7479, %v7481
        %v7483 = vrot.slane %v7469, %v7482
        %v7484 = vcombine.low %v7075, %v7077
        %v7485 = vcombine.high %v7075, %v7077
        %v7487 = vunpack.c.l.s4 1983009808
        %v7488 = vunpack.c.0.s8 %v7487
        %v7489 = vlaneseq
        %v7490 = vshrl.u32 %v7489, 7
        %v7491 = vsub.s32 %v7488, %v7490
        %v7492 = vrot.slane %v7484, %v7491
        %v7494 = vunpack.c.l.s4 1983009808
        %v7495 = vunpack.c.0.s8 %v7494
        %v7496 = vlaneseq
        %v7497 = vshrl.u32 %v7496, 7
        %v7498 = vsub.s32 %v7495, %v7497
        %v7499 = vrot.slane %v7485, %v7498
        %v7500 = vcombine.low %v7078, %v7080
        %v7501 = vcombine.high %v7078, %v7080
        %v7503 = vunpack.c.l.s4 1983009808
        %v7504 = vunpack.c.0.s8 %v7503
        %v7505 = vlaneseq
        %v7506 = vshrl.u32 %v7505, 7
        %v7507 = vsub.s32 %v7504, %v7506
        %v7508 = vrot.slane %v7500, %v7507
        %v7510 = vunpack.c.l.s4 1983009808
        %v7511 = vunpack.c.0.s8 %v7510
        %v7512 = vlaneseq
        %v7513 = vshrl.u32 %v7512, 7
        %v7514 = vsub.s32 %v7511, %v7513
        %v7515 = vrot.slane %v7501, %v7514
        %v7516 = vcombine.low %v7079, %v7081
        %v7517 = vcombine.high %v7079, %v7081
        %v7519 = vunpack.c.l.s4 1983009808
        %v7520 = vunpack.c.0.s8 %v7519
        %v7521 = vlaneseq
        %v7522 = vshrl.u32 %v7521, 7
        %v7523 = vsub.s32 %v7520, %v7522
        %v7524 = vrot.slane %v7516, %v7523
        %v7526 = vunpack.c.l.s4 1983009808
        %v7527 = vunpack.c.0.s8 %v7526
        %v7528 = vlaneseq
        %v7529 = vshrl.u32 %v7528, 7
        %v7530 = vsub.s32 %v7527, %v7529
        %v7531 = vrot.slane %v7517, %v7530
        %v7532 = vcombine.low %v7476, %v7492
        %v7533 = vcombine.high %v7476, %v7492
        %v7535 = vunpack.c.l.s4 1934713408
        %v7536 = vunpack.c.0.s8 %v7535
        %v7537 = vlaneseq
        %v7538 = vshrl.u32 %v7537, 7
        %v7539 = vsub.s32 %v7536, %v7538
        %v7540 = vrot.slane %v7532, %v7539
        %v7542 = vunpack.c.l.s4 1934713408
        %v7543 = vunpack.c.0.s8 %v7542
        %v7544 = vlaneseq
        %v7545 = vshrl.u32 %v7544, 7
        %v7546 = vsub.s32 %v7543, %v7545
        %v7547 = vrot.slane %v7533, %v7546
        %v7548 = vcombine.low %v7483, %v7499
        %v7550 = vunpack.c.l.s4 1934713408
        %v7551 = vunpack.c.0.s8 %v7550
        %v7552 = vlaneseq
        %v7553 = vshrl.u32 %v7552, 7
        %v7554 = vsub.s32 %v7551, %v7553
        %v7555 = vrot.slane %v7548, %v7554
        %v7556 = vcombine.low %v7508, %v7524
        %v7557 = vcombine.high %v7508, %v7524
        %v7559 = vunpack.c.l.s4 1934713408
        %v7560 = vunpack.c.0.s8 %v7559
        %v7561 = vlaneseq
        %v7562 = vshrl.u32 %v7561, 7
        %v7563 = vsub.s32 %v7560, %v7562
        %v7564 = vrot.slane %v7556, %v7563
        %v7566 = vunpack.c.l.s4 1934713408
        %v7567 = vunpack.c.0.s8 %v7566
        %v7568 = vlaneseq
        %v7569 = vshrl.u32 %v7568, 7
        %v7570 = vsub.s32 %v7567, %v7569
        %v7571 = vrot.slane %v7557, %v7570
        %v7572 = vcombine.low %v7515, %v7531
        %v7574 = vunpack.c.l.s4 1934713408
        %v7575 = vunpack.c.0.s8 %v7574
        %v7576 = vlaneseq
        %v7577 = vshrl.u32 %v7576, 7
        %v7578 = vsub.s32 %v7575, %v7577
        %v7579 = vrot.slane %v7572, %v7578
        %v7580 = vcombine.low %v7540, %v7564
        %v7581 = vcombine.high %v7540, %v7564
        %v7582 = vcombine.low %v7547, %v7571
        %v7583 = vcombine.high %v7547, %v7571
        %v7584 = vcombine.low %v7555, %v7579
        %v7585 = vcombine.high %v7555, %v7579
        %v7586 = vcombine.low %v7208, %v7210
        %v7587 = vcombine.high %v7208, %v7210
        %v7589 = vunpack.c.l.s4 1983009808
        %v7590 = vunpack.c.0.s8 %v7589
        %v7591 = vlaneseq
        %v7592 = vshrl.u32 %v7591, 7
        %v7593 = vsub.s32 %v7590, %v7592
        %v7594 = vrot.slane %v7586, %v7593
        %v7596 = vunpack.c.l.s4 1983009808
        %v7597 = vunpack.c.0.s8 %v7596
        %v7598 = vlaneseq
        %v7599 = vshrl.u32 %v7598, 7
        %v7600 = vsub.s32 %v7597, %v7599
        %v7601 = vrot.slane %v7587, %v7600
        %v7602 = vcombine.low %v7209, %v7211
        %v7603 = vcombine.high %v7209, %v7211
        %v7605 = vunpack.c.l.s4 1983009808
        %v7606 = vunpack.c.0.s8 %v7605
        %v7607 = vlaneseq
        %v7608 = vshrl.u32 %v7607, 7
        %v7609 = vsub.s32 %v7606, %v7608
        %v7610 = vrot.slane %v7602, %v7609
        %v7612 = vunpack.c.l.s4 1983009808
        %v7613 = vunpack.c.0.s8 %v7612
        %v7614 = vlaneseq
        %v7615 = vshrl.u32 %v7614, 7
        %v7616 = vsub.s32 %v7613, %v7615
        %v7617 = vrot.slane %v7603, %v7616
        %v7618 = vcombine.low %v7212, %v7214
        %v7619 = vcombine.high %v7212, %v7214
        %v7621 = vunpack.c.l.s4 1983009808
        %v7622 = vunpack.c.0.s8 %v7621
        %v7623 = vlaneseq
        %v7624 = vshrl.u32 %v7623, 7
        %v7625 = vsub.s32 %v7622, %v7624
        %v7626 = vrot.slane %v7618, %v7625
        %v7628 = vunpack.c.l.s4 1983009808
        %v7629 = vunpack.c.0.s8 %v7628
        %v7630 = vlaneseq
        %v7631 = vshrl.u32 %v7630, 7
        %v7632 = vsub.s32 %v7629, %v7631
        %v7633 = vrot.slane %v7619, %v7632
        %v7634 = vcombine.low %v7213, %v7215
        %v7635 = vcombine.high %v7213, %v7215
        %v7637 = vunpack.c.l.s4 1983009808
        %v7638 = vunpack.c.0.s8 %v7637
        %v7639 = vlaneseq
        %v7640 = vshrl.u32 %v7639, 7
        %v7641 = vsub.s32 %v7638, %v7640
        %v7642 = vrot.slane %v7634, %v7641
        %v7644 = vunpack.c.l.s4 1983009808
        %v7645 = vunpack.c.0.s8 %v7644
        %v7646 = vlaneseq
        %v7647 = vshrl.u32 %v7646, 7
        %v7648 = vsub.s32 %v7645, %v7647
        %v7649 = vrot.slane %v7635, %v7648
        %v7650 = vcombine.low %v7594, %v7610
        %v7651 = vcombine.high %v7594, %v7610
        %v7653 = vunpack.c.l.s4 1934713408
        %v7654 = vunpack.c.0.s8 %v7653
        %v7655 = vlaneseq
        %v7656 = vshrl.u32 %v7655, 7
        %v7657 = vsub.s32 %v7654, %v7656
        %v7658 = vrot.slane %v7650, %v7657
        %v7660 = vunpack.c.l.s4 1934713408
        %v7661 = vunpack.c.0.s8 %v7660
        %v7662 = vlaneseq
        %v7663 = vshrl.u32 %v7662, 7
        %v7664 = vsub.s32 %v7661, %v7663
        %v7665 = vrot.slane %v7651, %v7664
        %v7666 = vcombine.low %v7601, %v7617
        %v7668 = vunpack.c.l.s4 1934713408
        %v7669 = vunpack.c.0.s8 %v7668
        %v7670 = vlaneseq
        %v7671 = vshrl.u32 %v7670, 7
        %v7672 = vsub.s32 %v7669, %v7671
        %v7673 = vrot.slane %v7666, %v7672
        %v7674 = vcombine.low %v7626, %v7642
        %v7675 = vcombine.high %v7626, %v7642
        %v7677 = vunpack.c.l.s4 1934713408
        %v7678 = vunpack.c.0.s8 %v7677
        %v7679 = vlaneseq
        %v7680 = vshrl.u32 %v7679, 7
        %v7681 = vsub.s32 %v7678, %v7680
        %v7682 = vrot.slane %v7674, %v7681
        %v7684 = vunpack.c.l.s4 1934713408
        %v7685 = vunpack.c.0.s8 %v7684
        %v7686 = vlaneseq
        %v7687 = vshrl.u32 %v7686, 7
        %v7688 = vsub.s32 %v7685, %v7687
        %v7689 = vrot.slane %v7675, %v7688
        %v7690 = vcombine.low %v7633, %v7649
        %v7692 = vunpack.c.l.s4 1934713408
        %v7693 = vunpack.c.0.s8 %v7692
        %v7694 = vlaneseq
        %v7695 = vshrl.u32 %v7694, 7
        %v7696 = vsub.s32 %v7693, %v7695
        %v7697 = vrot.slane %v7690, %v7696
        %v7698 = vcombine.low %v7658, %v7682
        %v7699 = vcombine.high %v7658, %v7682
        %v7700 = vcombine.low %v7665, %v7689
        %v7701 = vcombine.high %v7665, %v7689
        %v7702 = vcombine.low %v7673, %v7697
        %v7703 = vcombine.high %v7673, %v7697
        %v7704 = vcombine.low %v7342, %v7344
        %v7705 = vcombine.high %v7342, %v7344
        %v7707 = vunpack.c.l.s4 1983009808
        %v7708 = vunpack.c.0.s8 %v7707
        %v7709 = vlaneseq
        %v7710 = vshrl.u32 %v7709, 7
        %v7711 = vsub.s32 %v7708, %v7710
        %v7712 = vrot.slane %v7704, %v7711
        %v7714 = vunpack.c.l.s4 1983009808
        %v7715 = vunpack.c.0.s8 %v7714
        %v7716 = vlaneseq
        %v7717 = vshrl.u32 %v7716, 7
        %v7718 = vsub.s32 %v7715, %v7717
        %v7719 = vrot.slane %v7705, %v7718
        %v7720 = vcombine.low %v7343, %v7345
        %v7721 = vcombine.high %v7343, %v7345
        %v7723 = vunpack.c.l.s4 1983009808
        %v7724 = vunpack.c.0.s8 %v7723
        %v7725 = vlaneseq
        %v7726 = vshrl.u32 %v7725, 7
        %v7727 = vsub.s32 %v7724, %v7726
        %v7728 = vrot.slane %v7720, %v7727
        %v7730 = vunpack.c.l.s4 1983009808
        %v7731 = vunpack.c.0.s8 %v7730
        %v7732 = vlaneseq
        %v7733 = vshrl.u32 %v7732, 7
        %v7734 = vsub.s32 %v7731, %v7733
        %v7735 = vrot.slane %v7721, %v7734
        %v7736 = vcombine.low %v7346, %v7348
        %v7737 = vcombine.high %v7346, %v7348
        %v7739 = vunpack.c.l.s4 1983009808
        %v7740 = vunpack.c.0.s8 %v7739
        %v7741 = vlaneseq
        %v7742 = vshrl.u32 %v7741, 7
        %v7743 = vsub.s32 %v7740, %v7742
        %v7744 = vrot.slane %v7736, %v7743
        %v7746 = vunpack.c.l.s4 1983009808
        %v7747 = vunpack.c.0.s8 %v7746
        %v7748 = vlaneseq
        %v7749 = vshrl.u32 %v7748, 7
        %v7750 = vsub.s32 %v7747, %v7749
        %v7751 = vrot.slane %v7737, %v7750
        %v7752 = vcombine.low %v7347, %v7349
        %v7753 = vcombine.high %v7347, %v7349
        %v7755 = vunpack.c.l.s4 1983009808
        %v7756 = vunpack.c.0.s8 %v7755
        %v7757 = vlaneseq
        %v7758 = vshrl.u32 %v7757, 7
        %v7759 = vsub.s32 %v7756, %v7758
        %v7760 = vrot.slane %v7752, %v7759
        %v7762 = vunpack.c.l.s4 1983009808
        %v7763 = vunpack.c.0.s8 %v7762
        %v7764 = vlaneseq
        %v7765 = vshrl.u32 %v7764, 7
        %v7766 = vsub.s32 %v7763, %v7765
        %v7767 = vrot.slane %v7753, %v7766
        %v7768 = vcombine.low %v7712, %v7728
        %v7769 = vcombine.high %v7712, %v7728
        %v7771 = vunpack.c.l.s4 1934713408
        %v7772 = vunpack.c.0.s8 %v7771
        %v7773 = vlaneseq
        %v7774 = vshrl.u32 %v7773, 7
        %v7775 = vsub.s32 %v7772, %v7774
        %v7776 = vrot.slane %v7768, %v7775
        %v7778 = vunpack.c.l.s4 1934713408
        %v7779 = vunpack.c.0.s8 %v7778
        %v7780 = vlaneseq
        %v7781 = vshrl.u32 %v7780, 7
        %v7782 = vsub.s32 %v7779, %v7781
        %v7783 = vrot.slane %v7769, %v7782
        %v7784 = vcombine.low %v7719, %v7735
        %v7786 = vunpack.c.l.s4 1934713408
        %v7787 = vunpack.c.0.s8 %v7786
        %v7788 = vlaneseq
        %v7789 = vshrl.u32 %v7788, 7
        %v7790 = vsub.s32 %v7787, %v7789
        %v7791 = vrot.slane %v7784, %v7790
        %v7792 = vcombine.low %v7744, %v7760
        %v7793 = vcombine.high %v7744, %v7760
        %v7795 = vunpack.c.l.s4 1934713408
        %v7796 = vunpack.c.0.s8 %v7795
        %v7797 = vlaneseq
        %v7798 = vshrl.u32 %v7797, 7
        %v7799 = vsub.s32 %v7796, %v7798
        %v7800 = vrot.slane %v7792, %v7799
        %v7802 = vunpack.c.l.s4 1934713408
        %v7803 = vunpack.c.0.s8 %v7802
        %v7804 = vlaneseq
        %v7805 = vshrl.u32 %v7804, 7
        %v7806 = vsub.s32 %v7803, %v7805
        %v7807 = vrot.slane %v7793, %v7806
        %v7808 = vcombine.low %v7751, %v7767
        %v7810 = vunpack.c.l.s4 1934713408
        %v7811 = vunpack.c.0.s8 %v7810
        %v7812 = vlaneseq
        %v7813 = vshrl.u32 %v7812, 7
        %v7814 = vsub.s32 %v7811, %v7813
        %v7815 = vrot.slane %v7808, %v7814
        %v7816 = vcombine.low %v7776, %v7800
        %v7817 = vcombine.high %v7776, %v7800
        %v7818 = vcombine.low %v7783, %v7807
        %v7819 = vcombine.high %v7783, %v7807
        %v7820 = vcombine.low %v7791, %v7815
        %v7821 = vcombine.high %v7791, %v7815
        %7826 = vrot.lane.b32.xlu0 %v7463, 64
        %v7827 = vpop.permute.xlu0 %7826
        %7828 = vrot.lane.b32.xlu0 %v7581, 64
        %v7829 = vpop.permute.xlu0 %7828
        %7830 = vrot.lane.b32.xlu0 %v7699, 64
        %v7831 = vpop.permute.xlu0 %7830
        %7832 = vrot.lane.b32.xlu0 %v7817, 64
        %v7833 = vpop.permute.xlu0 %7832
        %7842 = vrot.lane.b32.xlu0 %v7465, 64
        %v7843 = vpop.permute.xlu0 %7842
        %7844 = vrot.lane.b32.xlu0 %v7583, 64
        %v7845 = vpop.permute.xlu0 %7844
        %7846 = vrot.lane.b32.xlu0 %v7701, 64
        %v7847 = vpop.permute.xlu0 %7846
        %7848 = vrot.lane.b32.xlu0 %v7819, 64
        %v7849 = vpop.permute.xlu0 %7848
        %7858 = vrot.lane.b32.xlu0 %v7467, 64
        %v7859 = vpop.permute.xlu0 %7858
        %7860 = vrot.lane.b32.xlu0 %v7585, 64
        %v7861 = vpop.permute.xlu0 %7860
        %7862 = vrot.lane.b32.xlu0 %v7703, 64
        %v7863 = vpop.permute.xlu0 %7862
        %7864 = vrot.lane.b32.xlu0 %v7821, 64
        %v7865 = vpop.permute.xlu0 %7864
        %v7870 = vsel %vm5337, %v7462, %v7827
        %v7871 = vsel %vm5337, %v7580, %v7829
        %v7872 = vsel %vm5337, %v7698, %v7831
        %v7873 = vsel %vm5337, %v7816, %v7833
        %v7874 = vsel %vm5337, %v7464, %v7843
        %v7875 = vsel %vm5337, %v7582, %v7845
        %v7876 = vsel %vm5337, %v7700, %v7847
        %v7877 = vsel %vm5337, %v7818, %v7849
        %v7878 = vsel %vm5337, %v7466, %v7859
        %v7879 = vsel %vm5337, %v7584, %v7861
        %v7880 = vsel %vm5337, %v7702, %v7863
        %v7881 = vsel %vm5337, %v7820, %v7865
        %v7882 = vpack.c.bf16 %v7871, %v7870
        %v7883 = vpack.c.bf16 %v7875, %v7874
        %v7884 = vpack.c.bf16 %v7879, %v7878
        %v7885 = vpack.c.bf16 %v7873, %v7872
        %v7886 = vpack.c.bf16 %v7877, %v7876
        %v7887 = vpack.c.bf16 %v7881, %v7880
        %v7888 = vld [vmem:[#allocation7] sm:$0xff]
        %v7889 = vld [vmem:[#allocation7 + $0x8] sm:$0xf]
        %v7890 = vld [vmem:[#allocation7 + $0xc] sm:$0xff]
        %v7891 = vld [vmem:[#allocation7 + $0x14] sm:$0xf]
        %v7892 = vld [vmem:[#allocation7 + $0x18] sm:$0xff]
        %v7893 = vld [vmem:[#allocation7 + $0x20] sm:$0xf]
        %v7894 = vld [vmem:[#allocation7 + $0x24] sm:$0xff]
        %v7895 = vld [vmem:[#allocation7 + $0x2c] sm:$0xf]
        %v7896 = vld [vmem:[#allocation7 + $0x30] sm:$0xff]
        %v7897 = vld [vmem:[#allocation7 + $0x38] sm:$0xf]
        %v7898 = vld [vmem:[#allocation7 + $0x3c] sm:$0xff]
        %v7899 = vld [vmem:[#allocation7 + $0x44] sm:$0xf]
        %v7900 = vld [vmem:[#allocation7 + $0x48] sm:$0xff]
        %v7901 = vld [vmem:[#allocation7 + $0x50] sm:$0xf]
        %v7902 = vld [vmem:[#allocation7 + $0x54] sm:$0xff]
        %v7903 = vld [vmem:[#allocation7 + $0x5c] sm:$0xf]
        %v7904 = vld [vmem:[#allocation7 + $0x60] sm:$0xff]
        %v7905 = vld [vmem:[#allocation7 + $0x68] sm:$0xf]
        %v7906 = vld [vmem:[#allocation7 + $0x6c] sm:$0xff]
        %v7907 = vld [vmem:[#allocation7 + $0x74] sm:$0xf]
        %v7908 = vld [vmem:[#allocation7 + $0x78] sm:$0xff]
        %v7909 = vld [vmem:[#allocation7 + $0x80] sm:$0xf]
        %v7910 = vld [vmem:[#allocation7 + $0x84] sm:$0xff]
        %v7911 = vld [vmem:[#allocation7 + $0x8c] sm:$0xf]
        %v7912 = vld [vmem:[#allocation7 + $0x90] sm:$0xff]
        %v7913 = vld [vmem:[#allocation7 + $0x98] sm:$0xf]
        %v7914 = vld [vmem:[#allocation7 + $0x9c] sm:$0xff]
        %v7915 = vld [vmem:[#allocation7 + $0xa4] sm:$0xf]
        %v7916 = vld [vmem:[#allocation7 + $0xa8] sm:$0xff]
        %v7917 = vld [vmem:[#allocation7 + $0xb0] sm:$0xf]
        %v7918 = vld [vmem:[#allocation7 + $0xb4] sm:$0xff]
        %v7919 = vld [vmem:[#allocation7 + $0xbc] sm:$0xf]
        %v7920 = vld [vmem:[#allocation7 + $0xc0] sm:$0xff]
        %v7921 = vld [vmem:[#allocation7 + $0xc8] sm:$0xf]
        %v7922 = vld [vmem:[#allocation7 + $0xcc] sm:$0xff]
        %v7923 = vld [vmem:[#allocation7 + $0xd4] sm:$0xf]
        %v7924 = vld [vmem:[#allocation7 + $0xd8] sm:$0xff]
        %v7925 = vld [vmem:[#allocation7 + $0xe0] sm:$0xf]
        %v7926 = vld [vmem:[#allocation7 + $0xe4] sm:$0xff]
        %v7927 = vld [vmem:[#allocation7 + $0xec] sm:$0xf]
        %v7928 = vld [vmem:[#allocation7 + $0xf0] sm:$0xff]
        %v7929 = vld [vmem:[#allocation7 + $0xf8] sm:$0xf]
        %v7930 = vld [vmem:[#allocation7 + $0xfc] sm:$0xff]
        %v7931 = vld [vmem:[#allocation7 + $0x104] sm:$0xf]
        %v7932 = vld [vmem:[#allocation7 + $0x108] sm:$0xff]
        %v7933 = vld [vmem:[#allocation7 + $0x110] sm:$0xf]
        %v7934 = vld [vmem:[#allocation7 + $0x114] sm:$0xff]
        %v7935 = vld [vmem:[#allocation7 + $0x11c] sm:$0xf]
        %v7936 = vld [vmem:[#allocation7 + $0x120] sm:$0xff]
        %v7937 = vld [vmem:[#allocation7 + $0x128] sm:$0xf]
        %v7938 = vld [vmem:[#allocation7 + $0x12c] sm:$0xff]
        %v7939 = vld [vmem:[#allocation7 + $0x134] sm:$0xf]
        %v7940 = vld [vmem:[#allocation7 + $0x138] sm:$0xff]
        %v7941 = vld [vmem:[#allocation7 + $0x140] sm:$0xf]
        %v7942 = vld [vmem:[#allocation7 + $0x144] sm:$0xff]
        %v7943 = vld [vmem:[#allocation7 + $0x14c] sm:$0xf]
        %v7944 = vld [vmem:[#allocation7 + $0x150] sm:$0xff]
        %v7945 = vld [vmem:[#allocation7 + $0x158] sm:$0xf]
        %v7946 = vld [vmem:[#allocation7 + $0x15c] sm:$0xff]
        %v7947 = vld [vmem:[#allocation7 + $0x164] sm:$0xf]
        %v7948 = vld [vmem:[#allocation7 + $0x168] sm:$0xff]
        %v7949 = vld [vmem:[#allocation7 + $0x170] sm:$0xf]
        %v7950 = vld [vmem:[#allocation7 + $0x174] sm:$0xff]
        %v7951 = vld [vmem:[#allocation7 + $0x17c] sm:$0xf]
        %v7952 = vld [vmem:[#allocation7 + $0x180] sm:$0xff]
        %v7953 = vld [vmem:[#allocation7 + $0x188] sm:$0xf]
        %v7954 = vld [vmem:[#allocation7 + $0x18c] sm:$0xff]
        %v7955 = vld [vmem:[#allocation7 + $0x194] sm:$0xf]
        %v7956 = vld [vmem:[#allocation7 + $0x198] sm:$0xff]
        %v7957 = vld [vmem:[#allocation7 + $0x1a0] sm:$0xf]
        %v7958 = vld [vmem:[#allocation7 + $0x1a4] sm:$0xff]
        %v7959 = vld [vmem:[#allocation7 + $0x1ac] sm:$0xf]
        %v7960 = vld [vmem:[#allocation7 + $0x1b0] sm:$0xff]
        %v7961 = vld [vmem:[#allocation7 + $0x1b8] sm:$0xf]
        %v7962 = vld [vmem:[#allocation7 + $0x1bc] sm:$0xff]
        %v7963 = vld [vmem:[#allocation7 + $0x1c4] sm:$0xf]
        %v7964 = vld [vmem:[#allocation7 + $0x1c8] sm:$0xff]
        %v7965 = vld [vmem:[#allocation7 + $0x1d0] sm:$0xf]
        %v7966 = vld [vmem:[#allocation7 + $0x1d4] sm:$0xff]
        %v7967 = vld [vmem:[#allocation7 + $0x1dc] sm:$0xf]
        %v7968 = vld [vmem:[#allocation7 + $0x1e0] sm:$0xff]
        %v7969 = vld [vmem:[#allocation7 + $0x1e8] sm:$0xf]
        %v7970 = vld [vmem:[#allocation7 + $0x1ec] sm:$0xff]
        %v7971 = vld [vmem:[#allocation7 + $0x1f4] sm:$0xf]
        %v7972 = vld [vmem:[#allocation7 + $0x1f8] sm:$0xff]
        %v7973 = vld [vmem:[#allocation7 + $0x200] sm:$0xf]
        %v7974 = vld [vmem:[#allocation7 + $0x204] sm:$0xff]
        %v7975 = vld [vmem:[#allocation7 + $0x20c] sm:$0xf]
        %v7976 = vld [vmem:[#allocation7 + $0x210] sm:$0xff]
        %v7977 = vld [vmem:[#allocation7 + $0x218] sm:$0xf]
        %v7978 = vld [vmem:[#allocation7 + $0x21c] sm:$0xff]
        %v7979 = vld [vmem:[#allocation7 + $0x224] sm:$0xf]
        %v7980 = vld [vmem:[#allocation7 + $0x228] sm:$0xff]
        %v7981 = vld [vmem:[#allocation7 + $0x230] sm:$0xf]
        %v7982 = vld [vmem:[#allocation7 + $0x234] sm:$0xff]
        %v7983 = vld [vmem:[#allocation7 + $0x23c] sm:$0xf]
        %v7984 = vld [vmem:[%s3] sm:$0x7]
        %v7986 = vlaneseq
        %v7987 = vshrl.u32 %v7986, 7
        %v7988 = vsub.s32 0, %v7987
        %v7989 = vrot.slane %v7984, %v7988
        %v7990 = vlaneseq
        %v7991 = vshrl.u32 %v7990, 7
        %v7992 = vsub.s32 1, %v7991
        %v7993 = vrot.slane %v7984, %v7992
        %v7994 = vlaneseq
        %v7995 = vshrl.u32 %v7994, 7
        %v7996 = vsub.s32 2, %v7995
        %v7997 = vrot.slane %v7984, %v7996
        %v8097 = vunpack.c.l.b16 %v7888
        %v8098 = vunpack.c.h.b16 %v7888
        %v8099 = vunpack.c.l.b16 %v7889
        %v8100 = vunpack.c.l.b16 %v7890
        %v8101 = vunpack.c.h.b16 %v7890
        %v8102 = vunpack.c.l.b16 %v7891
        %v8103 = vunpack.c.l.b16 %v7892
        %v8104 = vunpack.c.h.b16 %v7892
        %v8105 = vunpack.c.l.b16 %v7893
        %v8106 = vunpack.c.l.b16 %v7894
        %v8107 = vunpack.c.h.b16 %v7894
        %v8108 = vunpack.c.l.b16 %v7895
        %v8109 = vunpack.c.l.b16 %v7896
        %v8110 = vunpack.c.h.b16 %v7896
        %v8111 = vunpack.c.l.b16 %v7897
        %v8112 = vunpack.c.l.b16 %v7898
        %v8113 = vunpack.c.h.b16 %v7898
        %v8114 = vunpack.c.l.b16 %v7899
        %v8115 = vunpack.c.l.b16 %v7900
        %v8116 = vunpack.c.h.b16 %v7900
        %v8117 = vunpack.c.l.b16 %v7901
        %v8118 = vunpack.c.l.b16 %v7902
        %v8119 = vunpack.c.h.b16 %v7902
        %v8120 = vunpack.c.l.b16 %v7903
        %v8121 = vunpack.c.l.b16 %v7904
        %v8122 = vunpack.c.h.b16 %v7904
        %v8123 = vunpack.c.l.b16 %v7905
        %v8124 = vunpack.c.l.b16 %v7906
        %v8125 = vunpack.c.h.b16 %v7906
        %v8126 = vunpack.c.l.b16 %v7907
        %v8127 = vunpack.c.l.b16 %v7908
        %v8128 = vunpack.c.h.b16 %v7908
        %v8129 = vunpack.c.l.b16 %v7909
        %v8130 = vunpack.c.l.b16 %v7910
        %v8131 = vunpack.c.h.b16 %v7910
        %v8132 = vunpack.c.l.b16 %v7911
        %v8133 = vunpack.c.l.b16 %v7912
        %v8134 = vunpack.c.h.b16 %v7912
        %v8135 = vunpack.c.l.b16 %v7913
        %v8136 = vunpack.c.l.b16 %v7914
        %v8137 = vunpack.c.h.b16 %v7914
        %v8138 = vunpack.c.l.b16 %v7915
        %v8139 = vunpack.c.l.b16 %v7916
        %v8140 = vunpack.c.h.b16 %v7916
        %v8141 = vunpack.c.l.b16 %v7917
        %v8142 = vunpack.c.l.b16 %v7918
        %v8143 = vunpack.c.h.b16 %v7918
        %v8144 = vunpack.c.l.b16 %v7919
        %v8145 = vunpack.c.l.b16 %v7920
        %v8146 = vunpack.c.h.b16 %v7920
        %v8147 = vunpack.c.l.b16 %v7921
        %v8148 = vunpack.c.l.b16 %v7922
        %v8149 = vunpack.c.h.b16 %v7922
        %v8150 = vunpack.c.l.b16 %v7923
        %v8151 = vunpack.c.l.b16 %v7924
        %v8152 = vunpack.c.h.b16 %v7924
        %v8153 = vunpack.c.l.b16 %v7925
        %v8154 = vunpack.c.l.b16 %v7926
        %v8155 = vunpack.c.h.b16 %v7926
        %v8156 = vunpack.c.l.b16 %v7927
        %v8157 = vunpack.c.l.b16 %v7928
        %v8158 = vunpack.c.h.b16 %v7928
        %v8159 = vunpack.c.l.b16 %v7929
        %v8160 = vunpack.c.l.b16 %v7930
        %v8161 = vunpack.c.h.b16 %v7930
        %v8162 = vunpack.c.l.b16 %v7931
        %v8163 = vunpack.c.l.b16 %v7932
        %v8164 = vunpack.c.h.b16 %v7932
        %v8165 = vunpack.c.l.b16 %v7933
        %v8166 = vunpack.c.l.b16 %v7934
        %v8167 = vunpack.c.h.b16 %v7934
        %v8168 = vunpack.c.l.b16 %v7935
        %v8169 = vunpack.c.l.b16 %v7936
        %v8170 = vunpack.c.h.b16 %v7936
        %v8171 = vunpack.c.l.b16 %v7937
        %v8172 = vunpack.c.l.b16 %v7938
        %v8173 = vunpack.c.h.b16 %v7938
        %v8174 = vunpack.c.l.b16 %v7939
        %v8175 = vunpack.c.l.b16 %v7940
        %v8176 = vunpack.c.h.b16 %v7940
        %v8177 = vunpack.c.l.b16 %v7941
        %v8178 = vunpack.c.l.b16 %v7942
        %v8179 = vunpack.c.h.b16 %v7942
        %v8180 = vunpack.c.l.b16 %v7943
        %v8181 = vunpack.c.l.b16 %v7944
        %v8182 = vunpack.c.h.b16 %v7944
        %v8183 = vunpack.c.l.b16 %v7945
        %v8184 = vunpack.c.l.b16 %v7946
        %v8185 = vunpack.c.h.b16 %v7946
        %v8186 = vunpack.c.l.b16 %v7947
        %v8187 = vunpack.c.l.b16 %v7948
        %v8188 = vunpack.c.h.b16 %v7948
        %v8189 = vunpack.c.l.b16 %v7949
        %v8190 = vunpack.c.l.b16 %v7950
        %v8191 = vunpack.c.h.b16 %v7950
        %v8192 = vunpack.c.l.b16 %v7951
        %v8193 = vunpack.c.l.b16 %v7952
        %v8194 = vunpack.c.h.b16 %v7952
        %v8195 = vunpack.c.l.b16 %v7953
        %v8196 = vunpack.c.l.b16 %v7954
        %v8197 = vunpack.c.h.b16 %v7954
        %v8198 = vunpack.c.l.b16 %v7955
        %v8199 = vunpack.c.l.b16 %v7956
        %v8200 = vunpack.c.h.b16 %v7956
        %v8201 = vunpack.c.l.b16 %v7957
        %v8202 = vunpack.c.l.b16 %v7958
        %v8203 = vunpack.c.h.b16 %v7958
        %v8204 = vunpack.c.l.b16 %v7959
        %v8205 = vunpack.c.l.b16 %v7960
        %v8206 = vunpack.c.h.b16 %v7960
        %v8207 = vunpack.c.l.b16 %v7961
        %v8208 = vunpack.c.l.b16 %v7962
        %v8209 = vunpack.c.h.b16 %v7962
        %v8210 = vunpack.c.l.b16 %v7963
        %v8211 = vunpack.c.l.b16 %v7964
        %v8212 = vunpack.c.h.b16 %v7964
        %v8213 = vunpack.c.l.b16 %v7965
        %v8214 = vunpack.c.l.b16 %v7966
        %v8215 = vunpack.c.h.b16 %v7966
        %v8216 = vunpack.c.l.b16 %v7967
        %v8217 = vunpack.c.l.b16 %v7968
        %v8218 = vunpack.c.h.b16 %v7968
        %v8219 = vunpack.c.l.b16 %v7969
        %v8220 = vunpack.c.l.b16 %v7970
        %v8221 = vunpack.c.h.b16 %v7970
        %v8222 = vunpack.c.l.b16 %v7971
        %v8223 = vunpack.c.l.b16 %v7972
        %v8224 = vunpack.c.h.b16 %v7972
        %v8225 = vunpack.c.l.b16 %v7973
        %v8226 = vunpack.c.l.b16 %v7974
        %v8227 = vunpack.c.h.b16 %v7974
        %v8228 = vunpack.c.l.b16 %v7975
        %v8229 = vunpack.c.l.b16 %v7976
        %v8230 = vunpack.c.h.b16 %v7976
        %v8231 = vunpack.c.l.b16 %v7977
        %v8232 = vunpack.c.l.b16 %v7978
        %v8233 = vunpack.c.h.b16 %v7978
        %v8234 = vunpack.c.l.b16 %v7979
        %v8235 = vunpack.c.l.b16 %v7980
        %v8236 = vunpack.c.h.b16 %v7980
        %v8237 = vunpack.c.l.b16 %v7981
        %v8238 = vunpack.c.l.b16 %v7982
        %v8239 = vunpack.c.h.b16 %v7982
        %v8240 = vunpack.c.l.b16 %v7983
        %v8241 = vpack.c.b16 %v8100, %v8097
        %v8242 = vpack.c.b16 %v8101, %v8098
        %v8243 = vpack.c.b16 %v8102, %v8099
        %v8244 = vpack.c.b16 %v8106, %v8103
        %v8245 = vpack.c.b16 %v8107, %v8104
        %v8246 = vpack.c.b16 %v8108, %v8105
        %v8247 = vpack.c.b16 %v8112, %v8109
        %v8248 = vpack.c.b16 %v8113, %v8110
        %v8249 = vpack.c.b16 %v8114, %v8111
        %v8250 = vpack.c.b16 %v8118, %v8115
        %v8251 = vpack.c.b16 %v8119, %v8116
        %v8252 = vpack.c.b16 %v8120, %v8117
        %v8253 = vpack.c.b16 %v8124, %v8121
        %v8254 = vpack.c.b16 %v8125, %v8122
        %v8255 = vpack.c.b16 %v8126, %v8123
        %v8256 = vpack.c.b16 %v8130, %v8127
        %v8257 = vpack.c.b16 %v8131, %v8128
        %v8258 = vpack.c.b16 %v8132, %v8129
        %v8259 = vpack.c.b16 %v8136, %v8133
        %v8260 = vpack.c.b16 %v8137, %v8134
        %v8261 = vpack.c.b16 %v8138, %v8135
        %v8262 = vpack.c.b16 %v8142, %v8139
        %v8263 = vpack.c.b16 %v8143, %v8140
        %v8264 = vpack.c.b16 %v8144, %v8141
        %v8265 = vpack.c.b16 %v8148, %v8145
        %v8266 = vpack.c.b16 %v8149, %v8146
        %v8267 = vpack.c.b16 %v8150, %v8147
        %v8268 = vpack.c.b16 %v8154, %v8151
        %v8269 = vpack.c.b16 %v8155, %v8152
        %v8270 = vpack.c.b16 %v8156, %v8153
        %v8271 = vpack.c.b16 %v8160, %v8157
        %v8272 = vpack.c.b16 %v8161, %v8158
        %v8273 = vpack.c.b16 %v8162, %v8159
        %v8274 = vpack.c.b16 %v8166, %v8163
        %v8275 = vpack.c.b16 %v8167, %v8164
        %v8276 = vpack.c.b16 %v8168, %v8165
        %v8277 = vpack.c.b16 %v8172, %v8169
        %v8278 = vpack.c.b16 %v8173, %v8170
        %v8279 = vpack.c.b16 %v8174, %v8171
        %v8280 = vpack.c.b16 %v8178, %v8175
        %v8281 = vpack.c.b16 %v8179, %v8176
        %v8282 = vpack.c.b16 %v8180, %v8177
        %v8283 = vpack.c.b16 %v8184, %v8181
        %v8284 = vpack.c.b16 %v8185, %v8182
        %v8285 = vpack.c.b16 %v8186, %v8183
        %v8286 = vpack.c.b16 %v8190, %v8187
        %v8287 = vpack.c.b16 %v8191, %v8188
        %v8288 = vpack.c.b16 %v8192, %v8189
        %v8289 = vpack.c.b16 %v8196, %v8193
        %v8290 = vpack.c.b16 %v8197, %v8194
        %v8291 = vpack.c.b16 %v8198, %v8195
        %v8292 = vpack.c.b16 %v8202, %v8199
        %v8293 = vpack.c.b16 %v8203, %v8200
        %v8294 = vpack.c.b16 %v8204, %v8201
        %v8295 = vpack.c.b16 %v8208, %v8205
        %v8296 = vpack.c.b16 %v8209, %v8206
        %v8297 = vpack.c.b16 %v8210, %v8207
        %v8298 = vpack.c.b16 %v8214, %v8211
        %v8299 = vpack.c.b16 %v8215, %v8212
        %v8300 = vpack.c.b16 %v8216, %v8213
        %v8301 = vpack.c.b16 %v8220, %v8217
        %v8302 = vpack.c.b16 %v8221, %v8218
        %v8303 = vpack.c.b16 %v8222, %v8219
        %v8304 = vpack.c.b16 %v8226, %v8223
        %v8305 = vpack.c.b16 %v8227, %v8224
        %v8306 = vpack.c.b16 %v8228, %v8225
        %v8307 = vpack.c.b16 %v8232, %v8229
        %v8308 = vpack.c.b16 %v8233, %v8230
        %v8309 = vpack.c.b16 %v8234, %v8231
        %v8310 = vpack.c.b16 %v8238, %v8235
        %v8311 = vpack.c.b16 %v8239, %v8236
        %v8312 = vpack.c.b16 %v8240, %v8237
        %8385 = vmatprep.subr.bf16.mxu0 %v8242
        %8386 = vmatpush1.bf16.msra.mxu0 %v8241
        %8387 = vmatprep.subr.bf16.mxu0 %v8245
        %8388 = vmatpush1.bf16.msra.mxu0 %v8244
        %8389 = vmatprep.subr.bf16.mxu0 %v8248
        %8390 = vmatpush1.bf16.msra.mxu0 %v8247
        %8391 = vmatprep.subr.bf16.mxu0 %v8251
        %8392 = vmatpush1.bf16.msra.mxu0 %v8250
        %8393 = vmatprep.subr.bf16.mxu0 %v8254
        %8394 = vmatpush1.bf16.msra.mxu0 %v8253
        %8395 = vmatprep.subr.bf16.mxu0 %v8257
        %8396 = vmatpush1.bf16.msra.mxu0 %v8256
        %8397 = vmatprep.subr.bf16.mxu0 %v8260
        %8398 = vmatpush1.bf16.msra.mxu0 %v8259
        %8399 = vmatprep.subr.bf16.mxu0 %v8263
        %8400 = vmatpush1.bf16.msra.mxu0 %v8262
        %8401 = vmatprep.subr.bf16.mxu0 %v8266
        %8402 = vmatpush1.bf16.msra.mxu0 %v8265
        %8403 = vmatprep.subr.bf16.mxu0 %v8269
        %8404 = vmatpush1.bf16.msra.mxu0 %v8268
        %8405 = vmatprep.subr.bf16.mxu0 %v8272
        %8406 = vmatpush1.bf16.msra.mxu0 %v8271
        %8407 = vmatprep.subr.bf16.mxu0 %v8275
        %8408 = vmatpush1.bf16.msra.mxu0 %v8274
        %8409 = vmatprep.subr.bf16.mxu0 %v8278
        %8410 = vmatpush1.bf16.msra.mxu0 %v8277
        %8411 = vmatprep.subr.bf16.mxu0 %v8281
        %8412 = vmatpush1.bf16.msra.mxu0 %v8280
        %8413 = vmatprep.subr.bf16.mxu0 %v8284
        %8414 = vmatpush1.bf16.msra.mxu0 %v8283
        %8415 = vmatprep.subr.bf16.mxu0 %v8287
        %8416 = vmatpush1.bf16.msra.mxu0 %v8286
        %8417 = vmatprep.mubr.bf16.mxu0 %v7883
        %8418 = vmatmul.mubr.bf16.gmra.mrb[0].mxu0 %v7882
        %v8419 = vpop.f32.mrb[0].mxu0
        %v8420 = vadd.f32 %v7989, %v8419
        %v8421 = vpop.f32.mrb[0].mxu0
        %v8422 = vadd.f32 %v7993, %v8421
        %v8423 = vpop.f32.mrb[0].mxu0
        %v8424 = vadd.f32 %v7989, %v8423
        %v8425 = vpop.f32.mrb[0].mxu0
        %v8426 = vadd.f32 %v7993, %v8425
        %8427 = vmatprep.mubr.bf16.mxu0 %v7886
        %8428 = vmatmul.mubr.bf16.gmra.mrb[0].mxu0 %v7885
        %v8429 = vpop.f32.mrb[0].mxu0
        %v8430 = vadd.f32 %v7989, %v8429
        %v8431 = vpop.f32.mrb[0].mxu0
        %v8432 = vadd.f32 %v7993, %v8431
        %v8433 = vpop.f32.mrb[0].mxu0
        %v8434 = vadd.f32 %v7989, %v8433
        %v8435 = vpop.f32.mrb[0].mxu0
        %v8436 = vadd.f32 %v7993, %v8435
        %8437 = vdwg.mxu0
        %8438 = vmatprep.subr.bf16.mxu0 %v8290
        %8439 = vmatpush1.bf16.msra.mxu0 %v8289
        %8440 = vmatprep.subr.bf16.mxu0 %v8293
        %8441 = vmatpush1.bf16.msra.mxu0 %v8292
        %8442 = vmatprep.subr.bf16.mxu0 %v8296
        %8443 = vmatpush1.bf16.msra.mxu0 %v8295
        %8444 = vmatprep.subr.bf16.mxu0 %v8299
        %8445 = vmatpush1.bf16.msra.mxu0 %v8298
        %8446 = vmatprep.subr.bf16.mxu0 %v8302
        %8447 = vmatpush1.bf16.msra.mxu0 %v8301
        %8448 = vmatprep.subr.bf16.mxu0 %v8305
        %8449 = vmatpush1.bf16.msra.mxu0 %v8304
        %8450 = vmatprep.subr.bf16.mxu0 %v8308
        %8451 = vmatpush1.bf16.msra.mxu0 %v8307
        %8452 = vmatprep.subr.bf16.mxu0 %v8311
        %8453 = vmatpush1.bf16.msra.mxu0 %v8310
        %8454 = vmatprep.subr.bf16.mxu0 0
        %8455 = vmatpush1.bf16.msra.mxu0 0
        %8456 = vmatprep.subr.bf16.mxu0 0
        %8457 = vmatpush1.bf16.msra.mxu0 0
        %8458 = vmatprep.subr.bf16.mxu0 0
        %8459 = vmatpush1.bf16.msra.mxu0 0
        %8460 = vmatprep.subr.bf16.mxu0 0
        %8461 = vmatpush1.bf16.msra.mxu0 0
        %8462 = vmatprep.subr.bf16.mxu0 0
        %8463 = vmatpush1.bf16.msra.mxu0 0
        %8464 = vmatprep.subr.bf16.mxu0 0
        %8465 = vmatpush1.bf16.msra.mxu0 0
        %8466 = vmatprep.subr.bf16.mxu0 0
        %8467 = vmatpush1.bf16.msra.mxu0 0
        %8468 = vmatprep.subr.bf16.mxu0 0
        %8469 = vmatpush1.bf16.msra.mxu0 0
        %8470 = vmatprep.mubr.bf16.mxu0 0
        %8471 = vmatmul.mubr.bf16.gmra.mrb[0].mxu0 %v7884
        %v8472 = vpop.f32.mrb[0].mxu0
        %v8473 = vadd.f32 %v8420, %v8472
        %v8474 = vpop.f32.mrb[0].mxu0
        %v8475 = vadd.f32 %v8422, %v8474
        %v8476 = vpop.f32.mrb[0].mxu0
        %v8477 = vadd.f32 %v8424, %v8476
        %v8478 = vpop.f32.mrb[0].mxu0
        %v8479 = vadd.f32 %v8426, %v8478
        %8480 = vmatprep.mubr.bf16.mxu0 0
        %8481 = vmatmul.mubr.bf16.gmra.mrb[0].mxu0 %v7887
        %v8482 = vpop.f32.mrb[0].mxu0
        %v8483 = vadd.f32 %v8430, %v8482
        %v8484 = vpop.f32.mrb[0].mxu0
        %v8485 = vadd.f32 %v8432, %v8484
        %v8486 = vpop.f32.mrb[0].mxu0
        %v8487 = vadd.f32 %v8434, %v8486
        %v8488 = vpop.f32.mrb[0].mxu0
        %v8489 = vadd.f32 %v8436, %v8488
        %8490 = vdwg.mxu0
        %8491 = vmatprep.subr.bf16.mxu0 0
        %8492 = vmatpush1.bf16.msra.mxu0 %v8243
        %8493 = vmatprep.subr.bf16.mxu0 0
        %8494 = vmatpush1.bf16.msra.mxu0 %v8246
        %8495 = vmatprep.subr.bf16.mxu0 0
        %8496 = vmatpush1.bf16.msra.mxu0 %v8249
        %8497 = vmatprep.subr.bf16.mxu0 0
        %8498 = vmatpush1.bf16.msra.mxu0 %v8252
        %8499 = vmatprep.subr.bf16.mxu0 0
        %8500 = vmatpush1.bf16.msra.mxu0 %v8255
        %8501 = vmatprep.subr.bf16.mxu0 0
        %8502 = vmatpush1.bf16.msra.mxu0 %v8258
        %8503 = vmatprep.subr.bf16.mxu0 0
        %8504 = vmatpush1.bf16.msra.mxu0 %v8261
        %8505 = vmatprep.subr.bf16.mxu0 0
        %8506 = vmatpush1.bf16.msra.mxu0 %v8264
        %8507 = vmatprep.subr.bf16.mxu0 0
        %8508 = vmatpush1.bf16.msra.mxu0 %v8267
        %8509 = vmatprep.subr.bf16.mxu0 0
        %8510 = vmatpush1.bf16.msra.mxu0 %v8270
        %8511 = vmatprep.subr.bf16.mxu0 0
        %8512 = vmatpush1.bf16.msra.mxu0 %v8273
        %8513 = vmatprep.subr.bf16.mxu0 0
        %8514 = vmatpush1.bf16.msra.mxu0 %v8276
        %8515 = vmatprep.subr.bf16.mxu0 0
        %8516 = vmatpush1.bf16.msra.mxu0 %v8279
        %8517 = vmatprep.subr.bf16.mxu0 0
        %8518 = vmatpush1.bf16.msra.mxu0 %v8282
        %8519 = vmatprep.subr.bf16.mxu0 0
        %8520 = vmatpush1.bf16.msra.mxu0 %v8285
        %8521 = vmatprep.subr.bf16.mxu0 0
        %8522 = vmatpush1.bf16.msra.mxu0 %v8288
        %8523 = vmatprep.mubr.bf16.mxu0 %v7883
        %8524 = vmatmul.mubr.bf16.gmra.mrb[0].mxu0 %v7882
        %v8525 = vpop.f32.mrb[0].mxu0
        %v8526 = vadd.f32 %v7997, %v8525
        %v8527 = vpop.f32.mrb[0].mxu0
        %v8528 = vpop.f32.mrb[0].mxu0
        %v8529 = vadd.f32 %v7997, %v8528
        %v8530 = vpop.f32.mrb[0].mxu0
        %8531 = vmatprep.mubr.bf16.mxu0 %v7886
        %8532 = vmatmul.mubr.bf16.gmra.mrb[0].mxu0 %v7885
        %v8533 = vpop.f32.mrb[0].mxu0
        %v8534 = vadd.f32 %v7997, %v8533
        %v8535 = vpop.f32.mrb[0].mxu0
        %v8536 = vpop.f32.mrb[0].mxu0
        %v8537 = vadd.f32 %v7997, %v8536
        %v8538 = vpop.f32.mrb[0].mxu0
        %8539 = vdwg.mxu0
        %8540 = vmatprep.subr.bf16.mxu0 0
        %8541 = vmatpush1.bf16.msra.mxu0 %v8291
        %8542 = vmatprep.subr.bf16.mxu0 0
        %8543 = vmatpush1.bf16.msra.mxu0 %v8294
        %8544 = vmatprep.subr.bf16.mxu0 0
        %8545 = vmatpush1.bf16.msra.mxu0 %v8297
        %8546 = vmatprep.subr.bf16.mxu0 0
        %8547 = vmatpush1.bf16.msra.mxu0 %v8300
        %8548 = vmatprep.subr.bf16.mxu0 0
        %8549 = vmatpush1.bf16.msra.mxu0 %v8303
        %8550 = vmatprep.subr.bf16.mxu0 0
        %8551 = vmatpush1.bf16.msra.mxu0 %v8306
        %8552 = vmatprep.subr.bf16.mxu0 0
        %8553 = vmatpush1.bf16.msra.mxu0 %v8309
        %8554 = vmatprep.subr.bf16.mxu0 0
        %8555 = vmatpush1.bf16.msra.mxu0 %v8312
        %8556 = vmatprep.subr.bf16.mxu0 0
        %8557 = vmatpush1.bf16.msra.mxu0 0
        %8558 = vmatprep.subr.bf16.mxu0 0
        %8559 = vmatpush1.bf16.msra.mxu0 0
        %8560 = vmatprep.subr.bf16.mxu0 0
        %8561 = vmatpush1.bf16.msra.mxu0 0
        %8562 = vmatprep.subr.bf16.mxu0 0
        %8563 = vmatpush1.bf16.msra.mxu0 0
        %8564 = vmatprep.subr.bf16.mxu0 0
        %8565 = vmatpush1.bf16.msra.mxu0 0
        %8566 = vmatprep.subr.bf16.mxu0 0
        %8567 = vmatpush1.bf16.msra.mxu0 0
        %8568 = vmatprep.subr.bf16.mxu0 0
        %8569 = vmatpush1.bf16.msra.mxu0 0
        %8570 = vmatprep.subr.bf16.mxu0 0
        %8571 = vmatpush1.bf16.msra.mxu0 0
        %8572 = vmatprep.mubr.bf16.mxu0 0
        %8573 = vmatmul.mubr.bf16.gmra.mrb[0].mxu0 %v7884
        %v8574 = vpop.f32.mrb[0].mxu0
        %v8575 = vadd.f32 %v8526, %v8574
        %v8576 = vpop.f32.mrb[0].mxu0
        %v8577 = vpop.f32.mrb[0].mxu0
        %v8578 = vadd.f32 %v8529, %v8577
        %v8579 = vpop.f32.mrb[0].mxu0
        %8580 = vmatprep.mubr.bf16.mxu0 0
        %8581 = vmatmul.mubr.bf16.gmra.mrb[0].mxu0 %v7887
        %v8582 = vpop.f32.mrb[0].mxu0
        %v8583 = vadd.f32 %v8534, %v8582
        %v8584 = vpop.f32.mrb[0].mxu0
        %v8585 = vpop.f32.mrb[0].mxu0
        %v8586 = vadd.f32 %v8537, %v8585
        %v8587 = vpop.f32.mrb[0].mxu0
        %8588 = vdwg.mxu0
        %8589 = vst [vmem:[%s245] sm:$0xff] %v8473
        %8590 = vst [vmem:[%s245 + $0x8] sm:$0xff] %v8475
        %8591 = vst [vmem:[%s245 + $0x10] sm:$0xff] %v8575
        %8592 = vst [vmem:[%s245 + $0x18] sm:$0xff] %v8477
        %8593 = vst [vmem:[%s245 + $0x20] sm:$0xff] %v8479
        %8594 = vst [vmem:[%s245 + $0x28] sm:$0xff] %v8578
        %8595 = vst [vmem:[%s245 + $0x30] sm:$0xff] %v8483
        %8596 = vst [vmem:[%s245 + $0x38] sm:$0xff] %v8485
        %8597 = vst [vmem:[%s245 + $0x40] sm:$0xff] %v8583
        %8598 = vst [vmem:[%s245 + $0x48] sm:$0xff] %v8487
        %8599 = vst [vmem:[%s245 + $0x50] sm:$0xff] %v8489
        %8600 = vst [vmem:[%s245 + $0x58] sm:$0xff] %v8586
        %s8601 = sand.u32 %s119, 1
        %s8602 = scalar_lea.sflag [#allocation4], %s8601
        %s8603 = sand.u32 %s119, 1
        %s8604 = smul.addr %s8603, 96
        %s8605 = scalar_lea.vmem [#allocation8], %s8604
        // Predicated region
        $region49: #{tpu_custom_call.1} parent=35 // pred_check
          %p8606 = pneg %p129
        $region50: #{tpu_custom_call.1} parent=35 // pred_check_branch
          %8608 = sbr.rel (%p8606) target = $region52
        $region51: #{tpu_custom_call.1} parent=35 // pred_region
          %s8609 = smul.u32 2, %s22
          %s8611 = ssub.s32 1536, 1536
          %8612 = vsyncadd %s8602, %s8611
          %s8613 = smul.addr %s8609, 6
          %s8614 = smul.addr %s8613, 128
          %s8615 = scalar_lea.hbm %s4, %s8614
          %s8616 = sshll.u32 %s8605, 4
          %s8617 = int_to_ptr.vmem [resolvable:$true] %s8616
          %8622 = dma.vmem_to_hbm [thread:$0]  %s8617, 1536, %s8615, %s8602, 384, 384, 24
        $region52: #{tpu_custom_call.1} parent=35 // pred_fallthru
          _
      $region36: #{tpu_custom_call.1} parent=5 // pred_fallthru
        _
      %p8623 = scmp.le.s32.totalorder 2, %s17
      // Predicated region
      $region53: #{tpu_custom_call.1} parent=5 // pred_check
        %p8624 = pneg %p8623
      $region54: #{tpu_custom_call.1} parent=5 // pred_check_branch
        %8626 = sbr.rel (%p8624) target = $region56
      $region55: #{tpu_custom_call.1} parent=5 // pred_region
        %s8627 = ssub.s32 %s17, 2
        // Predicated region
        $region57: #{tpu_custom_call.1} parent=55 // pred_check
          %p8628 = pneg %p135
        $region58: #{tpu_custom_call.1} parent=55 // pred_check_branch
          %8630 = sbr.rel (%p8628) target = $region60
        $region59: #{tpu_custom_call.1} parent=55 // pred_region
          %s8631 = sand.u32 %s120, 1
          %s8632 = scalar_lea.sflag [#allocation4], %s8631
          %s8633 = sand.u32 %s120, 1
          %s8634 = smul.addr %s8633, 96
          %s8635 = scalar_lea.vmem [#allocation8], %s8634
          %8636 = dma.done %s8632, 1536
        $region60: #{tpu_custom_call.1} parent=55 // pred_fallthru
          _
      $region56: #{tpu_custom_call.1} parent=5 // pred_fallthru
        _
    $region6: #{tpu_custom_call.1} parent=1 // loop_footer
      %s21 = sadd.s32 1, %s17
    $region7: #{tpu_custom_call.1} parent=1 // loop_footer_branch
      %16 = sbr.rel target = $region3
    $region8: #{tpu_custom_call.1} parent=1 // loop_exit
      _
    %8637 = vsyncpa [#allocation3], 1
    %s8638 = scalar_lea.sflag [#allocation3], 1
    %8639 = vsyncpa %s8638, 1
    %8640 = vsyncpa [#allocation6], 1
    %8641 = vsyncpa [#allocation4], 1
    %s8642 = scalar_lea.sflag [#allocation4], 1
    %8643 = vsyncpa %s8642, 1

</llo_original>
